<compile_context>
chip_gen: v6e
topology: v6e:2x2x1
jax: 0.10.0
libtpu: 0.0.40
codegen_flags: <defaults>
</compile_context>

<pallas_src>
import functools
import math

import jax
import jax.numpy as jnp
from jax import lax
from jax.experimental import pallas as pl
from jax.experimental.pallas import tpu as pltpu


MAX_ITER = 40        # SATNet's default number of mixing-method sweeps
PACK = 8             # max samples packed along lanes (8*k = 256 lanes for k = 32)
_EPS = 1e-12         # numerical guard for the v <- -g * rsqrt(||g||^2) normalisation


# --------------------------------------------------------------------------- #
# Pallas kernel: mixing-method Gauss-Seidel sweeps over the FREE variables only
# --------------------------------------------------------------------------- #
def _satnet_mix_kernel(off_ref, col_ref, ofx_ref, red_ref, bca_ref,
                       vfz_ref, vfr_ref, vout_ref,
                       c_scr, v_scr, a_scr, *, max_iter):
    """off_ref : (n_free, n_free)    Omega[free, free], diagonal zeroed        (shared)
       col_ref : (n_free, n_free, 1) same matrix, columns laid along sublanes  (shared)
       ofx_ref : (n_free, n_frozen)  Omega[free, frozen]                       (shared)
       red_ref : (PK, PACK)          0/1 per-sample segment-sum reducer        (shared)
       bca_ref : (PACK, PK)          0/1 per-sample lane broadcaster (= red.T) (shared)
       vfz_ref : (1, n_frozen, PK)   frozen unit vectors for this sample pack
       vfr_ref : (1, n_free,   PK)   initial free unit vectors for this sample pack
       vout_ref: (1, n_free,   PK)   final free unit vectors
       c_scr/v_scr/a_scr : (n_free, PK) VMEM scratch (frozen contrib / free V / grads)"""
    n_free = v_scr.shape[0]

    # Frozen variables never change -> fold their gradient contribution once (MXU).
    c_scr[...] = jnp.dot(ofx_ref[...], vfz_ref[0],
                         preferred_element_type=jnp.float32)          # (n_free, PK)
    v_scr[...] = vfr_ref[0]                                           # (n_free, PK)

    red = red_ref[...]                                                # (PK, PACK)
    bca = bca_ref[...]                                                # (PACK, PK)

    def sweep(_, carry):
        # Refresh A = Omega_ff(zero diag) @ V + C once per sweep: one efficient MXU
        # matmul (also resets any fp drift from the incremental rank-1 updates).
        a_scr[...] = c_scr[...] + jnp.dot(off_ref[...], v_scr[...],
                                          preferred_element_type=jnp.float32)
        # Fully unrolled Gauss-Seidel pass: every slice below has a STATIC offset.
        for j in range(n_free):
            g = a_scr[j:j + 1, :]                                     # (1, PK) gradient row
            # per-sample ||g||^2 -> rsqrt -> broadcast back over each sample's k lanes
            s = jnp.dot(g * g, red, preferred_element_type=jnp.float32)   # (1, PACK)
            inv = lax.rsqrt(s + _EPS)                                 # EUP
            inv_b = jnp.dot(inv, bca, preferred_element_type=jnp.float32) # (1, PK)
            v_new = -g * inv_b
            dv = v_new - v_scr[j:j + 1, :]
            v_scr[j:j + 1, :] = v_new
            if j + 1 < n_free:
                # rank-1 VPU update of the not-yet-visited rows (Omega symmetric,
                # zero diagonal); rows <= j get refreshed at the next sweep start.
                col_tail = col_ref[j, j + 1:, :]                      # (n_free-j-1, 1)
                a_scr[j + 1:, :] += col_tail * dv                     # broadcast mul-add
        return carry

    # TODO(synk): SATNet early-exits a sweep when the objective improvement < eps;
    # here we always run the full max_iter sweeps (an upper bound on its work).
    lax.fori_loop(0, max_iter, sweep, 0)

    vout_ref[0] = v_scr[...]


def _satnet_mixing_pallas(off, off_col, ofx, red, bca, vfz, vfr, max_iter=MAX_ITER):
    """Run the mixing kernel over the packed batch.  Returns final free V packs."""
    G, n_free, PK = vfr.shape
    n_frozen = vfz.shape[1]
    pack = red.shape[1]
    kernel = functools.partial(_satnet_mix_kernel, max_iter=max_iter)
    return pl.pallas_call(
        kernel,
        out_shape=jax.ShapeDtypeStruct((G, n_free, PK), jnp.float32),
        grid=(G,),
        in_specs=[
            pl.BlockSpec((n_free, n_free), lambda b: (0, 0)),         # Omega[f,f] (zero diag)
            pl.BlockSpec((n_free, n_free, 1), lambda b: (0, 0, 0)),   # columns, sublane layout
            pl.BlockSpec((n_free, n_frozen), lambda b: (0, 0)),       # Omega[f, frozen]
            pl.BlockSpec((PK, pack), lambda b: (0, 0)),               # per-sample reducer
            pl.BlockSpec((pack, PK), lambda b: (0, 0)),               # per-sample broadcaster
            pl.BlockSpec((1, n_frozen, PK), lambda b: (b, 0, 0)),     # frozen V pack
            pl.BlockSpec((1, n_free, PK), lambda b: (b, 0, 0)),       # free V pack (init)
        ],
        out_specs=pl.BlockSpec((1, n_free, PK), lambda b: (b, 0, 0)),
        scratch_shapes=[
            pltpu.VMEM((n_free, PK), jnp.float32),   # frozen contribution C
            pltpu.VMEM((n_free, PK), jnp.float32),   # free V (updated in place)
            pltpu.VMEM((n_free, PK), jnp.float32),   # A = Omega_ff @ V + C
        ],
        compiler_params=pltpu.CompilerParams(
            dimension_semantics=("parallel",)),      # independent sample packs
    )(off, off_col, ofx, red, bca, vfz, vfr)


# --------------------------------------------------------------------------- #
# SATNet / SATConv / ThreeLayersHierarchicalClassifier in JAX (glue around kernel)
# --------------------------------------------------------------------------- #
def _choose_pack(B, k, max_pack=PACK):
    """Pick the lane-pack width: big enough for dense 128-wide lanes, small enough to
    avoid solving many padded samples when the batch is tiny (conv2/conv3)."""
    min_pack = max(1, 128 // k)
    pack = max(max_pack, min_pack)
    while pack > min_pack and pack >= 2 * max(B, 1):
        pack //= 2
    return max(pack, min_pack)


def satnet_forward(S, z, n_in, aux, key, max_iter=MAX_ITER, max_pack=PACK):
    """SATNet.forward for masks of the contiguous form [truth | n_in inputs | free].
    z: (B, n) with n = n_in + out_n; the first n_in columns are the (frozen) inputs.
    (SATConv always builds its mask this way, which the kernel relies on.)"""
    B, n = z.shape
    n_tot = n + aux + 1
    assert S.shape[0] == n_tot
    n_frozen = n_in + 1                      # truth variable + inputs, contiguous prefix
    n_free = n_tot - n_frozen                # out_n output variables + aux variables

    # embedding dim used by SATNet:  k = 32 * ceil((sqrt(n_tot)+1)/32)
    k = 32 * int(math.ceil((math.sqrt(n_tot) + 1.0) / 32.0))
    pack = _choose_pack(B, k, max_pack)

    # pad the batch so it packs into groups of `pack` samples along the lane axis
    B_pad = ((B + pack - 1) // pack) * pack
    z_pad = jnp.concatenate([z, jnp.zeros((B_pad - B, n), jnp.float32)], axis=0)
    z_full = jnp.concatenate(
        [jnp.ones((B_pad, 1), jnp.float32), z_pad, jnp.zeros((B_pad, aux), jnp.float32)],
        axis=1)                                                      # (B_pad, n_tot)

    # deterministic random unit-sphere init of V (SATNet uses torch's RNG here)
    r = jax.random.normal(key, (B_pad, n_tot, k), dtype=jnp.float32)
    r = r / (jnp.linalg.norm(r, axis=-1, keepdims=True) + 1e-12)
    v0 = r[:, 0:1, :]                                                # truth direction
    proj = r - jnp.sum(r * v0, axis=-1, keepdims=True) * v0
    proj = proj / (jnp.linalg.norm(proj, axis=-1, keepdims=True) + 1e-12)
    cosz = -jnp.cos(jnp.pi * z_full)[..., None]
    sinz = jnp.sin(jnp.pi * z_full)[..., None]
    v_known = cosz * v0 + sinz * proj                                # I_z(v_truth)
    var_idx = jnp.arange(n_tot)[None, :, None]
    V_init = jnp.where(var_idx < n_frozen, v_known, r)
    V_init = V_init.at[:, 0, :].set(v0[:, 0, :])                     # exact truth vector

    # clause couplings, shared across the batch: computed ONCE here, not per grid step
    omega = S @ S.T                                                  # (n_tot, n_tot)
    omega_fx = omega[n_frozen:, :n_frozen]                           # (n_free, n_frozen)
    omega_ff = omega[n_frozen:, n_frozen:] * (1.0 - jnp.eye(n_free, dtype=jnp.float32))
    omega_col = omega_ff[:, :, None]          # symmetric: row j == column j, sublane layout

    # per-sample segment reduce / broadcast matrices (replace the old (PK,PK) kron)
    PK = pack * k
    seg_id = jnp.arange(PK, dtype=jnp.int32) // k                    # (PK,)
    red = (seg_id[:, None] == jnp.arange(pack)[None, :]).astype(jnp.float32)  # (PK, pack)
    bca = red.T                                                      # (pack, PK)

    # pack `pack` samples along lanes: (G, rows, pack*k)
    G = B_pad // pack
    def pack_rows(V):
        rows = V.shape[1]
        return V.reshape(G, pack, rows, k).transpose(0, 2, 1, 3).reshape(G, rows, PK)
    vfz = pack_rows(V_init[:, :n_frozen, :])
    vfr = pack_rows(V_init[:, n_frozen:, :])

    vout = _satnet_mixing_pallas(omega_ff, omega_col, omega_fx, red, bca, vfz, vfr,
                                 max_iter)

    # unpack, then output map: z_i = arccos(-<v_i, v_truth>) / pi for free variables
    v_free = (vout.reshape(G, n_free, pack, k)
                  .transpose(0, 2, 1, 3).reshape(B_pad, n_free, k))[:B]
    vdot = jnp.sum(v_free * v0[:B], axis=-1)                         # (B, n_free)
    z_free = jnp.arccos(jnp.clip(-vdot, -1.0, 1.0)) / jnp.pi
    # frozen (input) variables keep their value; free output variables take z_free
    return jnp.concatenate([z[:, :n_in], z_free[:, :n - n_in]], axis=1)


def sat_conv(p, x_in, key):
    """SATConv.forward: append out_n unknown variables and return their values."""
    B = x_in.shape[0]
    out_n = p['out_n']
    # mask = [ones(in_n) | zeros(out_n)] -> contiguous [frozen | free] layout
    z = jnp.concatenate([x_in, jnp.zeros((B, out_n), jnp.float32)], axis=-1)
    out = satnet_forward(p['S'], z, p['in_n'], p['aux'], key)
    return out[:, -out_n:]


def init_three_layer_params(key, num_class=10, m=200, aux=50, hidden_dim=(20, 10), stride=7):
    num_patches = ((28 - 7) // stride + 1) ** 2
    dims = [
        (49, hidden_dim[0]),
        (num_patches * hidden_dim[0], hidden_dim[1]),
        (hidden_dim[1], num_class),
    ]
    keys = jax.random.split(key, 3)
    params = {'hidden_dim': hidden_dim, 'stride': stride, 'num_patches': num_patches}
    for idx, (kk, (n_in, n_out)) in enumerate(zip(keys, dims), start=1):
        n_tot = n_in + n_out + aux + 1
        # synthetic deterministic clause matrix (SATNet init is Gaussian)
        S = jax.random.normal(kk, (n_tot, m), jnp.float32) / jnp.sqrt(jnp.float32(m))
        params[f'conv{idx}'] = dict(S=S, in_n=n_in, out_n=n_out, aux=aux, m=m)
    return params


def three_layer_forward(params, x, key):
    """ThreeLayersHierarchicalClassifier.forward"""
    b = x.shape[0]
    num_patches = params['num_patches']          # 16 for stride=7
    h0 = params['hidden_dim'][0]
    x = x.reshape(b, 784).astype(jnp.float32)
    # torch: x.unfold(-1, 49, 49).squeeze(1).permute(1, 0, 2)  -> (16, b, 49)
    patches = x.reshape(b, num_patches, 49).transpose(1, 0, 2)

    k1, k2, k3 = jax.random.split(key, 3)
    # conv1 is applied independently to each patch with shared weights; fold the
    # patch loop into the batch dimension (exactly equivalent to the torch for-loop).
    y = sat_conv(params['conv1'], patches.reshape(num_patches * b, 49), k1)   # (16*b, h0)
    # torch: y.permute(1, 0, 2).reshape(b, -1)
    y = y.reshape(num_patches, b, h0).transpose(1, 0, 2).reshape(b, num_patches * h0)
    y = sat_conv(params['conv2'], y, k2)
    y = sat_conv(params['conv3'], y, k3)
    return y


if __name__ == "__main__":
    key = jax.random.PRNGKey(0)
    pkey, xkey, vkey = jax.random.split(key, 3)
    # small instance: batch=2, MNIST-sized input (the forward hard-codes 784 = 28*28),
    # smaller-than-default m / aux to keep the demo quick (constructor parameters).
    params = init_three_layer_params(pkey, num_class=10, m=64, aux=8,
                                     hidden_dim=(20, 10), stride=7)
    x = jax.random.uniform(xkey, (2, 1, 28, 28), dtype=jnp.float32)   # NCHW, like PyTorch

    y = three_layer_forward(params, x, vkey)
    y = jax.block_until_ready(y)

    assert y.shape == (2, 10), y.shape
    assert bool(jnp.all(jnp.isfinite(y)))
    assert bool(jnp.all((y >= -1e-5) & (y <= 1.0 + 1e-5)))   # SATNet outputs are probabilities
    print("KERNEL_OK")
</pallas_src>

<mosaic_0001>
module attributes {stable_mosaic.version = 11 : i64} {
  func.func @_satnet_mix_kernel(%arg0: i32, %arg1: memref<28x28xf32, #tpu.memory_space<vmem>>, %arg2: memref<28x28x1xf32, #tpu.memory_space<vmem>>, %arg3: memref<28x50xf32, #tpu.memory_space<vmem>>, %arg4: memref<256x8xf32, #tpu.memory_space<vmem>>, %arg5: memref<8x256xf32, #tpu.memory_space<vmem>>, %arg6: memref<1x50x256xf32, #tpu.memory_space<vmem>>, %arg7: memref<1x28x256xf32, #tpu.memory_space<vmem>>, %arg8: memref<1x28x256xf32, #tpu.memory_space<vmem>>, %arg9: memref<28x256xf32, #tpu.memory_space<vmem>>, %arg10: memref<28x256xf32, #tpu.memory_space<vmem>>, %arg11: memref<28x256xf32, #tpu.memory_space<vmem>>) attributes {dimension_semantics = [#tpu.dimension_semantics<parallel>], iteration_bounds = array<i64: 4>, scalar_prefetch = 0 : i64, scratch_operands = 3 : i64, tpu.core_type = #tpu.core_type<tc>, window_params = [{pipeline_mode = #tpu.pipeline_mode<synchronous>, transform_indices = @transform_0, window_bounds = array<i64: 28, 28>}, {pipeline_mode = #tpu.pipeline_mode<synchronous>, transform_indices = @transform_1, window_bounds = array<i64: 28, 28, 1>}, {pipeline_mode = #tpu.pipeline_mode<synchronous>, transform_indices = @transform_2, window_bounds = array<i64: 28, 50>}, {pipeline_mode = #tpu.pipeline_mode<synchronous>, transform_indices = @transform_3, window_bounds = array<i64: 256, 8>}, {pipeline_mode = #tpu.pipeline_mode<synchronous>, transform_indices = @transform_4, window_bounds = array<i64: 8, 256>}, {transform_indices = @transform_5, window_bounds = array<i64: 1, 50, 256>}, {transform_indices = @transform_6, window_bounds = array<i64: 1, 28, 256>}, {transform_indices = @transform_7, window_bounds = array<i64: 1, 28, 256>}]} {
    %c0 = arith.constant 0 : index
    %c0_0 = arith.constant 0 : index
    %0 = vector.load %arg3[%c0, %c0_0] : memref<28x50xf32, #tpu.memory_space<vmem>>, vector<28x50xf32>
    %c0_1 = arith.constant 0 : index
    %c0_2 = arith.constant 0 : index
    %c0_3 = arith.constant 0 : index
    %1 = vector.load %arg6[%c0_1, %c0_2, %c0_3] : memref<1x50x256xf32, #tpu.memory_space<vmem>>, vector<1x50x256xf32>
    %2 = vector.shape_cast %1 : vector<1x50x256xf32> to vector<50x256xf32>
    %cst = arith.constant dense<0.000000e+00> : vector<28x256xf32>
    %3 = tpu.matmul %0, %2, %cst {dimension_numbers = #tpu.dot_dimension_numbers<[1], [0], [0], [1], [0, 0, 1, 1], [], []>} : vector<28x50xf32>, vector<50x256xf32>, vector<28x256xf32> -> vector<28x256xf32>
    %c0_4 = arith.constant 0 : index
    %c0_5 = arith.constant 0 : index
    %4 = vector.load %arg9[%c0_4, %c0_5] : memref<28x256xf32, #tpu.memory_space<vmem>>, vector<28x256xf32>
    tpu.vector_store %arg9[%c0_4, %c0_5], %3 {strides = array<i32>} : memref<28x256xf32, #tpu.memory_space<vmem>>, vector<28x256xf32>,
    %c0_6 = arith.constant 0 : index
    %c0_7 = arith.constant 0 : index
    %c0_8 = arith.constant 0 : index
    %5 = vector.load %arg7[%c0_6, %c0_7, %c0_8] : memref<1x28x256xf32, #tpu.memory_space<vmem>>, vector<1x28x256xf32>
    %6 = vector.shape_cast %5 : vector<1x28x256xf32> to vector<28x256xf32>
    %c0_9 = arith.constant 0 : index
    %c0_10 = arith.constant 0 : index
    %7 = vector.load %arg10[%c0_9, %c0_10] : memref<28x256xf32, #tpu.memory_space<vmem>>, vector<28x256xf32>
    tpu.vector_store %arg10[%c0_9, %c0_10], %6 {strides = array<i32>} : memref<28x256xf32, #tpu.memory_space<vmem>>, vector<28x256xf32>,
    %c0_11 = arith.constant 0 : index
    %c0_12 = arith.constant 0 : index
    %8 = vector.load %arg4[%c0_11, %c0_12] : memref<256x8xf32, #tpu.memory_space<vmem>>, vector<256x8xf32>
    %c0_13 = arith.constant 0 : index
    %c0_14 = arith.constant 0 : index
    %9 = vector.load %arg5[%c0_13, %c0_14] : memref<8x256xf32, #tpu.memory_space<vmem>>, vector<8x256xf32>
    %c0_i32 = arith.constant 0 : i32
    %c40_i32 = arith.constant 40 : i32
    %10 = arith.addi %c0_i32, %c40_i32 : i32
    %c1_i32 = arith.constant 1 : i32
    scf.for %arg12 = %c0_i32 to %10 step %c1_i32  : i32 {
      %c0_20 = arith.constant 0 : index
      %c0_21 = arith.constant 0 : index
      %15 = vector.load %arg9[%c0_20, %c0_21] : memref<28x256xf32, #tpu.memory_space<vmem>>, vector<28x256xf32>
      %c0_22 = arith.constant 0 : index
      %c0_23 = arith.constant 0 : index
      %16 = vector.load %arg1[%c0_22, %c0_23] : memref<28x28xf32, #tpu.memory_space<vmem>>, vector<28x28xf32>
      %c0_24 = arith.constant 0 : index
      %c0_25 = arith.constant 0 : index
      %17 = vector.load %arg10[%c0_24, %c0_25] : memref<28x256xf32, #tpu.memory_space<vmem>>, vector<28x256xf32>
      %cst_26 = arith.constant dense<0.000000e+00> : vector<28x256xf32>
      %18 = tpu.matmul %16, %17, %cst_26 {dimension_numbers = #tpu.dot_dimension_numbers<[1], [0], [0], [1], [0, 0, 1, 1], [], []>} : vector<28x28xf32>, vector<28x256xf32>, vector<28x256xf32> -> vector<28x256xf32>
      %19 = arith.addf %15, %18 : vector<28x256xf32>
      %c0_27 = arith.constant 0 : index
      %c0_28 = arith.constant 0 : index
      %20 = vector.load %arg11[%c0_27, %c0_28] : memref<28x256xf32, #tpu.memory_space<vmem>>, vector<28x256xf32>
      tpu.vector_store %arg11[%c0_27, %c0_28], %19 {strides = array<i32>} : memref<28x256xf32, #tpu.memory_space<vmem>>, vector<28x256xf32>,
      %c0_29 = arith.constant 0 : index
      %c0_30 = arith.constant 0 : index
      %21 = vector.load %arg11[%c0_29, %c0_30] : memref<28x256xf32, #tpu.memory_space<vmem>>, vector<1x256xf32>
      %22 = arith.mulf %21, %21 : vector<1x256xf32>
      %cst_31 = arith.constant dense<0.000000e+00> : vector<1x8xf32>
      %23 = tpu.matmul %22, %8, %cst_31 {dimension_numbers = #tpu.dot_dimension_numbers<[1], [0], [0], [1], [0, 0, 1, 1], [], []>} : vector<1x256xf32>, vector<256x8xf32>, vector<1x8xf32> -> vector<1x8xf32>
      %cst_32 = arith.constant 9.99999996E-13 : f32
      %24 = vector.broadcast %cst_32 : f32 to vector<1x8xf32>
      %25 = arith.addf %23, %24 : vector<1x8xf32>
      %26 = math.rsqrt %25 : vector<1x8xf32>
      %cst_33 = arith.constant dense<0.000000e+00> : vector<1x256xf32>
      %27 = tpu.matmul %26, %9, %cst_33 {dimension_numbers = #tpu.dot_dimension_numbers<[1], [0], [0], [1], [0, 0, 1, 1], [], []>} : vector<1x8xf32>, vector<8x256xf32>, vector<1x256xf32> -> vector<1x256xf32>
      %cst_34 = arith.constant 0.000000e+00 : f32
      %28 = vector.broadcast %cst_34 : f32 to vector<1x256xf32>
      %29 = arith.subf %28, %21 : vector<1x256xf32>
      %30 = arith.mulf %29, %27 : vector<1x256xf32>
      %c0_35 = arith.constant 0 : index
      %c0_36 = arith.constant 0 : index
      %31 = vector.load %arg10[%c0_35, %c0_36] : memref<28x256xf32, #tpu.memory_space<vmem>>, vector<1x256xf32>
      %32 = arith.subf %30, %31 : vector<1x256xf32>
      %c0_37 = arith.constant 0 : index
      %c0_38 = arith.constant 0 : index
      %33 = vector.load %arg10[%c0_37, %c0_38] : memref<28x256xf32, #tpu.memory_space<vmem>>, vector<1x256xf32>
      tpu.vector_store %arg10[%c0_37, %c0_38], %30 {strides = array<i32>} : memref<28x256xf32, #tpu.memory_space<vmem>>, vector<1x256xf32>,
      %c0_39 = arith.constant 0 : index
      %c1 = arith.constant 1 : index
      %c0_40 = arith.constant 0 : index
      %34 = vector.load %arg2[%c0_39, %c1, %c0_40] : memref<28x28x1xf32, #tpu.memory_space<vmem>>, vector<1x27x1xf32>
      %35 = vector.shape_cast %34 : vector<1x27x1xf32> to vector<27x1xf32>
      %c1_41 = arith.constant 1 : index
      %c0_42 = arith.constant 0 : index
      %36 = vector.load %arg11[%c1_41, %c0_42] : memref<28x256xf32, #tpu.memory_space<vmem>>, vector<27x256xf32>
      %37 = vector.broadcast %35 : vector<27x1xf32> to vector<27x256xf32>
      %38 = vector.broadcast %32 : vector<1x256xf32> to vector<27x256xf32>
      %39 = arith.mulf %37, %38 : vector<27x256xf32>
      %40 = arith.addf %36, %39 : vector<27x256xf32>
      %c1_43 = arith.constant 1 : index
      %c0_44 = arith.constant 0 : index
      %41 = vector.load %arg11[%c1_43, %c0_44] : memref<28x256xf32, #tpu.memory_space<vmem>>, vector<27x256xf32>
      tpu.vector_store %arg11[%c1_43, %c0_44], %40 {strides = array<i32>} : memref<28x256xf32, #tpu.memory_space<vmem>>, vector<27x256xf32>,
      %c1_45 = arith.constant 1 : index
      %c0_46 = arith.constant 0 : index
      %42 = vector.load %arg11[%c1_45, %c0_46] : memref<28x256xf32, #tpu.memory_space<vmem>>, vector<1x256xf32>
      %43 = arith.mulf %42, %42 : vector<1x256xf32>
      %cst_47 = arith.constant dense<0.000000e+00> : vector<1x8xf32>
      %44 = tpu.matmul %43, %8, %cst_47 {dimension_numbers = #tpu.dot_dimension_numbers<[1], [0], [0], [1], [0, 0, 1, 1], [], []>} : vector<1x256xf32>, vector<256x8xf32>, vector<1x8xf32> -> vector<1x8xf32>
      %cst_48 = arith.constant 9.99999996E-13 : f32
      %45 = vector.broadcast %cst_48 : f32 to vector<1x8xf32>
      %46 = arith.addf %44, %45 : vector<1x8xf32>
      %47 = math.rsqrt %46 : vector<1x8xf32>
      %cst_49 = arith.constant dense<0.000000e+00> : vector<1x256xf32>
      %48 = tpu.matmul %47, %9, %cst_49 {dimension_numbers = #tpu.dot_dimension_numbers<[1], [0], [0], [1], [0, 0, 1, 1], [], []>} : vector<1x8xf32>, vector<8x256xf32>, vector<1x256xf32> -> vector<1x256xf32>
      %cst_50 = arith.constant 0.000000e+00 : f32
      %49 = vector.broadcast %cst_50 : f32 to vector<1x256xf32>
      %50 = arith.subf %49, %42 : vector<1x256xf32>
      %51 = arith.mulf %50, %48 : vector<1x256xf32>
      %c1_51 = arith.constant 1 : index
      %c0_52 = arith.constant 0 : index
      %52 = vector.load %arg10[%c1_51, %c0_52] : memref<28x256xf32, #tpu.memory_space<vmem>>, vector<1x256xf32>
      %53 = arith.subf %51, %52 : vector<1x256xf32>
      %c1_53 = arith.constant 1 : index
      %c0_54 = arith.constant 0 : index
      %54 = vector.load %arg10[%c1_53, %c0_54] : memref<28x256xf32, #tpu.memory_space<vmem>>, vector<1x256xf32>
      tpu.vector_store %arg10[%c1_53, %c0_54], %51 {strides = array<i32>} : memref<28x256xf32, #tpu.memory_space<vmem>>, vector<1x256xf32>,
      %c1_55 = arith.constant 1 : index
      %c2 = arith.constant 2 : index
      %c0_56 = arith.constant 0 : index
      %55 = vector.load %arg2[%c1_55, %c2, %c0_56] : memref<28x28x1xf32, #tpu.memory_space<vmem>>, vector<1x26x1xf32>
      %56 = vector.shape_cast %55 : vector<1x26x1xf32> to vector<26x1xf32>
      %c2_57 = arith.constant 2 : index
      %c0_58 = arith.constant 0 : index
      %57 = vector.load %arg11[%c2_57, %c0_58] : memref<28x256xf32, #tpu.memory_space<vmem>>, vector<26x256xf32>
      %58 = vector.broadcast %56 : vector<26x1xf32> to vector<26x256xf32>
      %59 = vector.broadcast %53 : vector<1x256xf32> to vector<26x256xf32>
      %60 = arith.mulf %58, %59 : vector<26x256xf32>
      %61 = arith.addf %57, %60 : vector<26x256xf32>
      %c2_59 = arith.constant 2 : index
      %c0_60 = arith.constant 0 : index
      %62 = vector.load %arg11[%c2_59, %c0_60] : memref<28x256xf32, #tpu.memory_space<vmem>>, vector<26x256xf32>
      tpu.vector_store %arg11[%c2_59, %c0_60], %61 {strides = array<i32>} : memref<28x256xf32, #tpu.memory_space<vmem>>, vector<26x256xf32>,
      %c2_61 = arith.constant 2 : index
      %c0_62 = arith.constant 0 : index
      %63 = vector.load %arg11[%c2_61, %c0_62] : memref<28x256xf32, #tpu.memory_space<vmem>>, vector<1x256xf32>
      %64 = arith.mulf %63, %63 : vector<1x256xf32>
      %cst_63 = arith.constant dense<0.000000e+00> : vector<1x8xf32>
      %65 = tpu.matmul %64, %8, %cst_63 {dimension_numbers = #tpu.dot_dimension_numbers<[1], [0], [0], [1], [0, 0, 1, 1], [], []>} : vector<1x256xf32>, vector<256x8xf32>, vector<1x8xf32> -> vector<1x8xf32>
      %cst_64 = arith.constant 9.99999996E-13 : f32
      %66 = vector.broadcast %cst_64 : f32 to vector<1x8xf32>
      %67 = arith.addf %65, %66 : vector<1x8xf32>
      %68 = math.rsqrt %67 : vector<1x8xf32>
      %cst_65 = arith.constant dense<0.000000e+00> : vector<1x256xf32>
      %69 = tpu.matmul %68, %9, %cst_65 {dimension_numbers = #tpu.dot_dimension_numbers<[1], [0], [0], [1], [0, 0, 1, 1], [], []>} : vector<1x8xf32>, vector<8x256xf32>, vector<1x256xf32> -> vector<1x256xf32>
      %cst_66 = arith.constant 0.000000e+00 : f32
      %70 = vector.broadcast %cst_66 : f32 to vector<1x256xf32>
      %71 = arith.subf %70, %63 : vector<1x256xf32>
      %72 = arith.mulf %71, %69 : vector<1x256xf32>
      %c2_67 = arith.constant 2 : index
      %c0_68 = arith.constant 0 : index
      %73 = vector.load %arg10[%c2_67, %c0_68] : memref<28x256xf32, #tpu.memory_space<vmem>>, vector<1x256xf32>
      %74 = arith.subf %72, %73 : vector<1x256xf32>
      %c2_69 = arith.constant 2 : index
      %c0_70 = arith.constant 0 : index
      %75 = vector.load %arg10[%c2_69, %c0_70] : memref<28x256xf32, #tpu.memory_space<vmem>>, vector<1x256xf32>
      tpu.vector_store %arg10[%c2_69, %c0_70], %72 {strides = array<i32>} : memref<28x256xf32, #tpu.memory_space<vmem>>, vector<1x256xf32>,
      %c2_71 = arith.constant 2 : index
      %c3 = arith.constant 3 : index
      %c0_72 = arith.constant 0 : index
      %76 = vector.load %arg2[%c2_71, %c3, %c0_72] : memref<28x28x1xf32, #tpu.memory_space<vmem>>, vector<1x25x1xf32>
      %77 = vector.shape_cast %76 : vector<1x25x1xf32> to vector<25x1xf32>
      %c3_73 = arith.constant 3 : index
      %c0_74 = arith.constant 0 : index
      %78 = vector.load %arg11[%c3_73, %c0_74] : memref<28x256xf32, #tpu.memory_space<vmem>>, vector<25x256xf32>
      %79 = vector.broadcast %77 : vector<25x1xf32> to vector<25x256xf32>
      %80 = vector.broadcast %74 : vector<1x256xf32> to vector<25x256xf32>
      %81 = arith.mulf %79, %80 : vector<25x256xf32>
      %82 = arith.addf %78, %81 : vector<25x256xf32>
      %c3_75 = arith.constant 3 : index
      %c0_76 = arith.constant 0 : index
      %83 = vector.load %arg11[%c3_75, %c0_76] : memref<28x256xf32, #tpu.memory_space<vmem>>, vector<25x256xf32>
      tpu.vector_store %arg11[%c3_75, %c0_76], %82 {strides = array<i32>} : memref<28x256xf32, #tpu.memory_space<vmem>>, vector<25x256xf32>,
      %c3_77 = arith.constant 3 : index
      %c0_78 = arith.constant 0 : index
      %84 = vector.load %arg11[%c3_77, %c0_78] : memref<28x256xf32, #tpu.memory_space<vmem>>, vector<1x256xf32>
      %85 = arith.mulf %84, %84 : vector<1x256xf32>
      %cst_79 = arith.constant dense<0.000000e+00> : vector<1x8xf32>
      %86 = tpu.matmul %85, %8, %cst_79 {dimension_numbers = #tpu.dot_dimension_numbers<[1], [0], [0], [1], [0, 0, 1, 1], [], []>} : vector<1x256xf32>, vector<256x8xf32>, vector<1x8xf32> -> vector<1x8xf32>
      %cst_80 = arith.constant 9.99999996E-13 : f32
      %87 = vector.broadcast %cst_80 : f32 to vector<1x8xf32>
      %88 = arith.addf %86, %87 : vector<1x8xf32>
      %89 = math.rsqrt %88 : vector<1x8xf32>
      %cst_81 = arith.constant dense<0.000000e+00> : vector<1x256xf32>
      %90 = tpu.matmul %89, %9, %cst_81 {dimension_numbers = #tpu.dot_dimension_numbers<[1], [0], [0], [1], [0, 0, 1, 1], [], []>} : vector<1x8xf32>, vector<8x256xf32>, vector<1x256xf32> -> vector<1x256xf32>
      %cst_82 = arith.constant 0.000000e+00 : f32
      %91 = vector.broadcast %cst_82 : f32 to vector<1x256xf32>
      %92 = arith.subf %91, %84 : vector<1x256xf32>
      %93 = arith.mulf %92, %90 : vector<1x256xf32>
      %c3_83 = arith.constant 3 : index
      %c0_84 = arith.constant 0 : index
      %94 = vector.load %arg10[%c3_83, %c0_84] : memref<28x256xf32, #tpu.memory_space<vmem>>, vector<1x256xf32>
      %95 = arith.subf %93, %94 : vector<1x256xf32>
      %c3_85 = arith.constant 3 : index
      %c0_86 = arith.constant 0 : index
      %96 = vector.load %arg10[%c3_85, %c0_86] : memref<28x256xf32, #tpu.memory_space<vmem>>, vector<1x256xf32>
      tpu.vector_store %arg10[%c3_85, %c0_86], %93 {strides = array<i32>} : memref<28x256xf32, #tpu.memory_space<vmem>>, vector<1x256xf32>,
      %c3_87 = arith.constant 3 : index
      %c4 = arith.constant 4 : index
      %c0_88 = arith.constant 0 : index
      %97 = vector.load %arg2[%c3_87, %c4, %c0_88] : memref<28x28x1xf32, #tpu.memory_space<vmem>>, vector<1x24x1xf32>
      %98 = vector.shape_cast %97 : vector<1x24x1xf32> to vector<24x1xf32>
      %c4_89 = arith.constant 4 : index
      %c0_90 = arith.constant 0 : index
      %99 = vector.load %arg11[%c4_89, %c0_90] : memref<28x256xf32, #tpu.memory_space<vmem>>, vector<24x256xf32>
      %100 = vector.broadcast %98 : vector<24x1xf32> to vector<24x256xf32>
      %101 = vector.broadcast %95 : vector<1x256xf32> to vector<24x256xf32>
      %102 = arith.mulf %100, %101 : vector<24x256xf32>
      %103 = arith.addf %99, %102 : vector<24x256xf32>
      %c4_91 = arith.constant 4 : index
      %c0_92 = arith.constant 0 : index
      %104 = vector.load %arg11[%c4_91, %c0_92] : memref<28x256xf32, #tpu.memory_space<vmem>>, vector<24x256xf32>
      tpu.vector_store %arg11[%c4_91, %c0_92], %103 {strides = array<i32>} : memref<28x256xf32, #tpu.memory_space<vmem>>, vector<24x256xf32>,
      %c4_93 = arith.constant 4 : index
      %c0_94 = arith.constant 0 : index
      %105 = vector.load %arg11[%c4_93, %c0_94] : memref<28x256xf32, #tpu.memory_space<vmem>>, vector<1x256xf32>
      %106 = arith.mulf %105, %105 : vector<1x256xf32>
      %cst_95 = arith.constant dense<0.000000e+00> : vector<1x8xf32>
      %107 = tpu.matmul %106, %8, %cst_95 {dimension_numbers = #tpu.dot_dimension_numbers<[1], [0], [0], [1], [0, 0, 1, 1], [], []>} : vector<1x256xf32>, vector<256x8xf32>, vector<1x8xf32> -> vector<1x8xf32>
      %cst_96 = arith.constant 9.99999996E-13 : f32
      %108 = vector.broadcast %cst_96 : f32 to vector<1x8xf32>
      %109 = arith.addf %107, %108 : vector<1x8xf32>
      %110 = math.rsqrt %109 : vector<1x8xf32>
      %cst_97 = arith.constant dense<0.000000e+00> : vector<1x256xf32>
      %111 = tpu.matmul %110, %9, %cst_97 {dimension_numbers = #tpu.dot_dimension_numbers<[1], [0], [0], [1], [0, 0, 1, 1], [], []>} : vector<1x8xf32>, vector<8x256xf32>, vector<1x256xf32> -> vector<1x256xf32>
      %cst_98 = arith.constant 0.000000e+00 : f32
      %112 = vector.broadcast %cst_98 : f32 to vector<1x256xf32>
      %113 = arith.subf %112, %105 : vector<1x256xf32>
      %114 = arith.mulf %113, %111 : vector<1x256xf32>
      %c4_99 = arith.constant 4 : index
      %c0_100 = arith.constant 0 : index
      %115 = vector.load %arg10[%c4_99, %c0_100] : memref<28x256xf32, #tpu.memory_space<vmem>>, vector<1x256xf32>
      %116 = arith.subf %114, %115 : vector<1x256xf32>
      %c4_101 = arith.constant 4 : index
      %c0_102 = arith.constant 0 : index
      %117 = vector.load %arg10[%c4_101, %c0_102] : memref<28x256xf32, #tpu.memory_space<vmem>>, vector<1x256xf32>
      tpu.vector_store %arg10[%c4_101, %c0_102], %114 {strides = array<i32>} : memref<28x256xf32, #tpu.memory_space<vmem>>, vector<1x256xf32>,
      %c4_103 = arith.constant 4 : index
      %c5 = arith.constant 5 : index
      %c0_104 = arith.constant 0 : index
      %118 = vector.load %arg2[%c4_103, %c5, %c0_104] : memref<28x28x1xf32, #tpu.memory_space<vmem>>, vector<1x23x1xf32>
      %119 = vector.shape_cast %118 : vector<1x23x1xf32> to vector<23x1xf32>
      %c5_105 = arith.constant 5 : index
      %c0_106 = arith.constant 0 : index
      %120 = vector.load %arg11[%c5_105, %c0_106] : memref<28x256xf32, #tpu.memory_space<vmem>>, vector<23x256xf32>
      %121 = vector.broadcast %119 : vector<23x1xf32> to vector<23x256xf32>
      %122 = vector.broadcast %116 : vector<1x256xf32> to vector<23x256xf32>
      %123 = arith.mulf %121, %122 : vector<23x256xf32>
      %124 = arith.addf %120, %123 : vector<23x256xf32>
      %c5_107 = arith.constant 5 : index
      %c0_108 = arith.constant 0 : index
      %125 = vector.load %arg11[%c5_107, %c0_108] : memref<28x256xf32, #tpu.memory_space<vmem>>, vector<23x256xf32>
      tpu.vector_store %arg11[%c5_107, %c0_108], %124 {strides = array<i32>} : memref<28x256xf32, #tpu.memory_space<vmem>>, vector<23x256xf32>,
      %c5_109 = arith.constant 5 : index
      %c0_110 = arith.constant 0 : index
      %126 = vector.load %arg11[%c5_109, %c0_110] : memref<28x256xf32, #tpu.memory_space<vmem>>, vector<1x256xf32>
      %127 = arith.mulf %126, %126 : vector<1x256xf32>
      %cst_111 = arith.constant dense<0.000000e+00> : vector<1x8xf32>
      %128 = tpu.matmul %127, %8, %cst_111 {dimension_numbers = #tpu.dot_dimension_numbers<[1], [0], [0], [1], [0, 0, 1, 1], [], []>} : vector<1x256xf32>, vector<256x8xf32>, vector<1x8xf32> -> vector<1x8xf32>
      %cst_112 = arith.constant 9.99999996E-13 : f32
      %129 = vector.broadcast %cst_112 : f32 to vector<1x8xf32>
      %130 = arith.addf %128, %129 : vector<1x8xf32>
      %131 = math.rsqrt %130 : vector<1x8xf32>
      %cst_113 = arith.constant dense<0.000000e+00> : vector<1x256xf32>
      %132 = tpu.matmul %131, %9, %cst_113 {dimension_numbers = #tpu.dot_dimension_numbers<[1], [0], [0], [1], [0, 0, 1, 1], [], []>} : vector<1x8xf32>, vector<8x256xf32>, vector<1x256xf32> -> vector<1x256xf32>
      %cst_114 = arith.constant 0.000000e+00 : f32
      %133 = vector.broadcast %cst_114 : f32 to vector<1x256xf32>
      %134 = arith.subf %133, %126 : vector<1x256xf32>
      %135 = arith.mulf %134, %132 : vector<1x256xf32>
      %c5_115 = arith.constant 5 : index
      %c0_116 = arith.constant 0 : index
      %136 = vector.load %arg10[%c5_115, %c0_116] : memref<28x256xf32, #tpu.memory_space<vmem>>, vector<1x256xf32>
      %137 = arith.subf %135, %136 : vector<1x256xf32>
      %c5_117 = arith.constant 5 : index
      %c0_118 = arith.constant 0 : index
      %138 = vector.load %arg10[%c5_117, %c0_118] : memref<28x256xf32, #tpu.memory_space<vmem>>, vector<1x256xf32>
      tpu.vector_store %arg10[%c5_117, %c0_118], %135 {strides = array<i32>} : memref<28x256xf32, #tpu.memory_space<vmem>>, vector<1x256xf32>,
      %c5_119 = arith.constant 5 : index
      %c6 = arith.constant 6 : index
      %c0_120 = arith.constant 0 : index
      %139 = vector.load %arg2[%c5_119, %c6, %c0_120] : memref<28x28x1xf32, #tpu.memory_space<vmem>>, vector<1x22x1xf32>
      %140 = vector.shape_cast %139 : vector<1x22x1xf32> to vector<22x1xf32>
      %c6_121 = arith.constant 6 : index
      %c0_122 = arith.constant 0 : index
      %141 = vector.load %arg11[%c6_121, %c0_122] : memref<28x256xf32, #tpu.memory_space<vmem>>, vector<22x256xf32>
      %142 = vector.broadcast %140 : vector<22x1xf32> to vector<22x256xf32>
      %143 = vector.broadcast %137 : vector<1x256xf32> to vector<22x256xf32>
      %144 = arith.mulf %142, %143 : vector<22x256xf32>
      %145 = arith.addf %141, %144 : vector<22x256xf32>
      %c6_123 = arith.constant 6 : index
      %c0_124 = arith.constant 0 : index
      %146 = vector.load %arg11[%c6_123, %c0_124] : memref<28x256xf32, #tpu.memory_space<vmem>>, vector<22x256xf32>
      tpu.vector_store %arg11[%c6_123, %c0_124], %145 {strides = array<i32>} : memref<28x256xf32, #tpu.memory_space<vmem>>, vector<22x256xf32>,
      %c6_125 = arith.constant 6 : index
      %c0_126 = arith.constant 0 : index
      %147 = vector.load %arg11[%c6_125, %c0_126] : memref<28x256xf32, #tpu.memory_space<vmem>>, vector<1x256xf32>
      %148 = arith.mulf %147, %147 : vector<1x256xf32>
      %cst_127 = arith.constant dense<0.000000e+00> : vector<1x8xf32>
      %149 = tpu.matmul %148, %8, %cst_127 {dimension_numbers = #tpu.dot_dimension_numbers<[1], [0], [0], [1], [0, 0, 1, 1], [], []>} : vector<1x256xf32>, vector<256x8xf32>, vector<1x8xf32> -> vector<1x8xf32>
      %cst_128 = arith.constant 9.99999996E-13 : f32
      %150 = vector.broadcast %cst_128 : f32 to vector<1x8xf32>
      %151 = arith.addf %149, %150 : vector<1x8xf32>
      %152 = math.rsqrt %151 : vector<1x8xf32>
      %cst_129 = arith.constant dense<0.000000e+00> : vector<1x256xf32>
      %153 = tpu.matmul %152, %9, %cst_129 {dimension_numbers = #tpu.dot_dimension_numbers<[1], [0], [0], [1], [0, 0, 1, 1], [], []>} : vector<1x8xf32>, vector<8x256xf32>, vector<1x256xf32> -> vector<1x256xf32>
      %cst_130 = arith.constant 0.000000e+00 : f32
      %154 = vector.broadcast %cst_130 : f32 to vector<1x256xf32>
      %155 = arith.subf %154, %147 : vector<1x256xf32>
      %156 = arith.mulf %155, %153 : vector<1x256xf32>
      %c6_131 = arith.constant 6 : index
      %c0_132 = arith.constant 0 : index
      %157 = vector.load %arg10[%c6_131, %c0_132] : memref<28x256xf32, #tpu.memory_space<vmem>>, vector<1x256xf32>
      %158 = arith.subf %156, %157 : vector<1x256xf32>
      %c6_133 = arith.constant 6 : index
      %c0_134 = arith.constant 0 : index
      %159 = vector.load %arg10[%c6_133, %c0_134] : memref<28x256xf32, #tpu.memory_space<vmem>>, vector<1x256xf32>
      tpu.vector_store %arg10[%c6_133, %c0_134], %156 {strides = array<i32>} : memref<28x256xf32, #tpu.memory_space<vmem>>, vector<1x256xf32>,
      %c6_135 = arith.constant 6 : index
      %c7 = arith.constant 7 : index
      %c0_136 = arith.constant 0 : index
      %160 = vector.load %arg2[%c6_135, %c7, %c0_136] : memref<28x28x1xf32, #tpu.memory_space<vmem>>, vector<1x21x1xf32>
      %161 = vector.shape_cast %160 : vector<1x21x1xf32> to vector<21x1xf32>
      %c7_137 = arith.constant 7 : index
      %c0_138 = arith.constant 0 : index
      %162 = vector.load %arg11[%c7_137, %c0_138] : memref<28x256xf32, #tpu.memory_space<vmem>>, vector<21x256xf32>
      %163 = vector.broadcast %161 : vector<21x1xf32> to vector<21x256xf32>
      %164 = vector.broadcast %158 : vector<1x256xf32> to vector<21x256xf32>
      %165 = arith.mulf %163, %164 : vector<21x256xf32>
      %166 = arith.addf %162, %165 : vector<21x256xf32>
      %c7_139 = arith.constant 7 : index
      %c0_140 = arith.constant 0 : index
      %167 = vector.load %arg11[%c7_139, %c0_140] : memref<28x256xf32, #tpu.memory_space<vmem>>, vector<21x256xf32>
      tpu.vector_store %arg11[%c7_139, %c0_140], %166 {strides = array<i32>} : memref<28x256xf32, #tpu.memory_space<vmem>>, vector<21x256xf32>,
      %c7_141 = arith.constant 7 : index
      %c0_142 = arith.constant 0 : index
      %168 = vector.load %arg11[%c7_141, %c0_142] : memref<28x256xf32, #tpu.memory_space<vmem>>, vector<1x256xf32>
      %169 = arith.mulf %168, %168 : vector<1x256xf32>
      %cst_143 = arith.constant dense<0.000000e+00> : vector<1x8xf32>
      %170 = tpu.matmul %169, %8, %cst_143 {dimension_numbers = #tpu.dot_dimension_numbers<[1], [0], [0], [1], [0, 0, 1, 1], [], []>} : vector<1x256xf32>, vector<256x8xf32>, vector<1x8xf32> -> vector<1x8xf32>
      %cst_144 = arith.constant 9.99999996E-13 : f32
      %171 = vector.broadcast %cst_144 : f32 to vector<1x8xf32>
      %172 = arith.addf %170, %171 : vector<1x8xf32>
      %173 = math.rsqrt %172 : vector<1x8xf32>
      %cst_145 = arith.constant dense<0.000000e+00> : vector<1x256xf32>
      %174 = tpu.matmul %173, %9, %cst_145 {dimension_numbers = #tpu.dot_dimension_numbers<[1], [0], [0], [1], [0, 0, 1, 1], [], []>} : vector<1x8xf32>, vector<8x256xf32>, vector<1x256xf32> -> vector<1x256xf32>
      %cst_146 = arith.constant 0.000000e+00 : f32
      %175 = vector.broadcast %cst_146 : f32 to vector<1x256xf32>
      %176 = arith.subf %175, %168 : vector<1x256xf32>
      %177 = arith.mulf %176, %174 : vector<1x256xf32>
      %c7_147 = arith.constant 7 : index
      %c0_148 = arith.constant 0 : index
      %178 = vector.load %arg10[%c7_147, %c0_148] : memref<28x256xf32, #tpu.memory_space<vmem>>, vector<1x256xf32>
      %179 = arith.subf %177, %178 : vector<1x256xf32>
      %c7_149 = arith.constant 7 : index
      %c0_150 = arith.constant 0 : index
      %180 = vector.load %arg10[%c7_149, %c0_150] : memref<28x256xf32, #tpu.memory_space<vmem>>, vector<1x256xf32>
      tpu.vector_store %arg10[%c7_149, %c0_150], %177 {strides = array<i32>} : memref<28x256xf32, #tpu.memory_space<vmem>>, vector<1x256xf32>,
      %c7_151 = arith.constant 7 : index
      %c8 = arith.constant 8 : index
      %c0_152 = arith.constant 0 : index
      %181 = vector.load %arg2[%c7_151, %c8, %c0_152] : memref<28x28x1xf32, #tpu.memory_space<vmem>>, vector<1x20x1xf32>
      %182 = vector.shape_cast %181 : vector<1x20x1xf32> to vector<20x1xf32>
      %c8_153 = arith.constant 8 : index
      %c0_154 = arith.constant 0 : index
      %183 = vector.load %arg11[%c8_153, %c0_154] : memref<28x256xf32, #tpu.memory_space<vmem>>, vector<20x256xf32>
      %184 = vector.broadcast %182 : vector<20x1xf32> to vector<20x256xf32>
      %185 = vector.broadcast %179 : vector<1x256xf32> to vector<20x256xf32>
      %186 = arith.mulf %184, %185 : vector<20x256xf32>
      %187 = arith.addf %183, %186 : vector<20x256xf32>
      %c8_155 = arith.constant 8 : index
      %c0_156 = arith.constant 0 : index
      %188 = vector.load %arg11[%c8_155, %c0_156] : memref<28x256xf32, #tpu.memory_space<vmem>>, vector<20x256xf32>
      tpu.vector_store %arg11[%c8_155, %c0_156], %187 {strides = array<i32>} : memref<28x256xf32, #tpu.memory_space<vmem>>, vector<20x256xf32>,
      %c8_157 = arith.constant 8 : index
      %c0_158 = arith.constant 0 : index
      %189 = vector.load %arg11[%c8_157, %c0_158] : memref<28x256xf32, #tpu.memory_space<vmem>>, vector<1x256xf32>
      %190 = arith.mulf %189, %189 : vector<1x256xf32>
      %cst_159 = arith.constant dense<0.000000e+00> : vector<1x8xf32>
      %191 = tpu.matmul %190, %8, %cst_159 {dimension_numbers = #tpu.dot_dimension_numbers<[1], [0], [0], [1], [0, 0, 1, 1], [], []>} : vector<1x256xf32>, vector<256x8xf32>, vector<1x8xf32> -> vector<1x8xf32>
      %cst_160 = arith.constant 9.99999996E-13 : f32
      %192 = vector.broadcast %cst_160 : f32 to vector<1x8xf32>
      %193 = arith.addf %191, %192 : vector<1x8xf32>
      %194 = math.rsqrt %193 : vector<1x8xf32>
      %cst_161 = arith.constant dense<0.000000e+00> : vector<1x256xf32>
      %195 = tpu.matmul %194, %9, %cst_161 {dimension_numbers = #tpu.dot_dimension_numbers<[1], [0], [0], [1], [0, 0, 1, 1], [], []>} : vector<1x8xf32>, vector<8x256xf32>, vector<1x256xf32> -> vector<1x256xf32>
      %cst_162 = arith.constant 0.000000e+00 : f32
      %196 = vector.broadcast %cst_162 : f32 to vector<1x256xf32>
      %197 = arith.subf %196, %189 : vector<1x256xf32>
      %198 = arith.mulf %197, %195 : vector<1x256xf32>
      %c8_163 = arith.constant 8 : index
      %c0_164 = arith.constant 0 : index
      %199 = vector.load %arg10[%c8_163, %c0_164] : memref<28x256xf32, #tpu.memory_space<vmem>>, vector<1x256xf32>
      %200 = arith.subf %198, %199 : vector<1x256xf32>
      %c8_165 = arith.constant 8 : index
      %c0_166 = arith.constant 0 : index
      %201 = vector.load %arg10[%c8_165, %c0_166] : memref<28x256xf32, #tpu.memory_space<vmem>>, vector<1x256xf32>
      tpu.vector_store %arg10[%c8_165, %c0_166], %198 {strides = array<i32>} : memref<28x256xf32, #tpu.memory_space<vmem>>, vector<1x256xf32>,
      %c8_167 = arith.constant 8 : index
      %c9 = arith.constant 9 : index
      %c0_168 = arith.constant 0 : index
      %202 = vector.load %arg2[%c8_167, %c9, %c0_168] : memref<28x28x1xf32, #tpu.memory_space<vmem>>, vector<1x19x1xf32>
      %203 = vector.shape_cast %202 : vector<1x19x1xf32> to vector<19x1xf32>
      %c9_169 = arith.constant 9 : index
      %c0_170 = arith.constant 0 : index
      %204 = vector.load %arg11[%c9_169, %c0_170] : memref<28x256xf32, #tpu.memory_space<vmem>>, vector<19x256xf32>
      %205 = vector.broadcast %203 : vector<19x1xf32> to vector<19x256xf32>
      %206 = vector.broadcast %200 : vector<1x256xf32> to vector<19x256xf32>
      %207 = arith.mulf %205, %206 : vector<19x256xf32>
      %208 = arith.addf %204, %207 : vector<19x256xf32>
      %c9_171 = arith.constant 9 : index
      %c0_172 = arith.constant 0 : index
      %209 = vector.load %arg11[%c9_171, %c0_172] : memref<28x256xf32, #tpu.memory_space<vmem>>, vector<19x256xf32>
      tpu.vector_store %arg11[%c9_171, %c0_172], %208 {strides = array<i32>} : memref<28x256xf32, #tpu.memory_space<vmem>>, vector<19x256xf32>,
      %c9_173 = arith.constant 9 : index
      %c0_174 = arith.constant 0 : index
      %210 = vector.load %arg11[%c9_173, %c0_174] : memref<28x256xf32, #tpu.memory_space<vmem>>, vector<1x256xf32>
      %211 = arith.mulf %210, %210 : vector<1x256xf32>
      %cst_175 = arith.constant dense<0.000000e+00> : vector<1x8xf32>
      %212 = tpu.matmul %211, %8, %cst_175 {dimension_numbers = #tpu.dot_dimension_numbers<[1], [0], [0], [1], [0, 0, 1, 1], [], []>} : vector<1x256xf32>, vector<256x8xf32>, vector<1x8xf32> -> vector<1x8xf32>
      %cst_176 = arith.constant 9.99999996E-13 : f32
      %213 = vector.broadcast %cst_176 : f32 to vector<1x8xf32>
      %214 = arith.addf %212, %213 : vector<1x8xf32>
      %215 = math.rsqrt %214 : vector<1x8xf32>
      %cst_177 = arith.constant dense<0.000000e+00> : vector<1x256xf32>
      %216 = tpu.matmul %215, %9, %cst_177 {dimension_numbers = #tpu.dot_dimension_numbers<[1], [0], [0], [1], [0, 0, 1, 1], [], []>} : vector<1x8xf32>, vector<8x256xf32>, vector<1x256xf32> -> vector<1x256xf32>
      %cst_178 = arith.constant 0.000000e+00 : f32
      %217 = vector.broadcast %cst_178 : f32 to vector<1x256xf32>
      %218 = arith.subf %217, %210 : vector<1x256xf32>
      %219 = arith.mulf %218, %216 : vector<1x256xf32>
      %c9_179 = arith.constant 9 : index
      %c0_180 = arith.constant 0 : index
      %220 = vector.load %arg10[%c9_179, %c0_180] : memref<28x256xf32, #tpu.memory_space<vmem>>, vector<1x256xf32>
      %221 = arith.subf %219, %220 : vector<1x256xf32>
      %c9_181 = arith.constant 9 : index
      %c0_182 = arith.constant 0 : index
      %222 = vector.load %arg10[%c9_181, %c0_182] : memref<28x256xf32, #tpu.memory_space<vmem>>, vector<1x256xf32>
      tpu.vector_store %arg10[%c9_181, %c0_182], %219 {strides = array<i32>} : memref<28x256xf32, #tpu.memory_space<vmem>>, vector<1x256xf32>,
      %c9_183 = arith.constant 9 : index
      %c10 = arith.constant 10 : index
      %c0_184 = arith.constant 0 : index
      %223 = vector.load %arg2[%c9_183, %c10, %c0_184] : memref<28x28x1xf32, #tpu.memory_space<vmem>>, vector<1x18x1xf32>
      %224 = vector.shape_cast %223 : vector<1x18x1xf32> to vector<18x1xf32>
      %c10_185 = arith.constant 10 : index
      %c0_186 = arith.constant 0 : index
      %225 = vector.load %arg11[%c10_185, %c0_186] : memref<28x256xf32, #tpu.memory_space<vmem>>, vector<18x256xf32>
      %226 = vector.broadcast %224 : vector<18x1xf32> to vector<18x256xf32>
      %227 = vector.broadcast %221 : vector<1x256xf32> to vector<18x256xf32>
      %228 = arith.mulf %226, %227 : vector<18x256xf32>
      %229 = arith.addf %225, %228 : vector<18x256xf32>
      %c10_187 = arith.constant 10 : index
      %c0_188 = arith.constant 0 : index
      %230 = vector.load %arg11[%c10_187, %c0_188] : memref<28x256xf32, #tpu.memory_space<vmem>>, vector<18x256xf32>
      tpu.vector_store %arg11[%c10_187, %c0_188], %229 {strides = array<i32>} : memref<28x256xf32, #tpu.memory_space<vmem>>, vector<18x256xf32>,
      %c10_189 = arith.constant 10 : index
      %c0_190 = arith.constant 0 : index
      %231 = vector.load %arg11[%c10_189, %c0_190] : memref<28x256xf32, #tpu.memory_space<vmem>>, vector<1x256xf32>
      %232 = arith.mulf %231, %231 : vector<1x256xf32>
      %cst_191 = arith.constant dense<0.000000e+00> : vector<1x8xf32>
      %233 = tpu.matmul %232, %8, %cst_191 {dimension_numbers = #tpu.dot_dimension_numbers<[1], [0], [0], [1], [0, 0, 1, 1], [], []>} : vector<1x256xf32>, vector<256x8xf32>, vector<1x8xf32> -> vector<1x8xf32>
      %cst_192 = arith.constant 9.99999996E-13 : f32
      %234 = vector.broadcast %cst_192 : f32 to vector<1x8xf32>
      %235 = arith.addf %233, %234 : vector<1x8xf32>
      %236 = math.rsqrt %235 : vector<1x8xf32>
      %cst_193 = arith.constant dense<0.000000e+00> : vector<1x256xf32>
      %237 = tpu.matmul %236, %9, %cst_193 {dimension_numbers = #tpu.dot_dimension_numbers<[1], [0], [0], [1], [0, 0, 1, 1], [], []>} : vector<1x8xf32>, vector<8x256xf32>, vector<1x256xf32> -> vector<1x256xf32>
      %cst_194 = arith.constant 0.000000e+00 : f32
      %238 = vector.broadcast %cst_194 : f32 to vector<1x256xf32>
      %239 = arith.subf %238, %231 : vector<1x256xf32>
      %240 = arith.mulf %239, %237 : vector<1x256xf32>
      %c10_195 = arith.constant 10 : index
      %c0_196 = arith.constant 0 : index
      %241 = vector.load %arg10[%c10_195, %c0_196] : memref<28x256xf32, #tpu.memory_space<vmem>>, vector<1x256xf32>
      %242 = arith.subf %240, %241 : vector<1x256xf32>
      %c10_197 = arith.constant 10 : index
      %c0_198 = arith.constant 0 : index
      %243 = vector.load %arg10[%c10_197, %c0_198] : memref<28x256xf32, #tpu.memory_space<vmem>>, vector<1x256xf32>
      tpu.vector_store %arg10[%c10_197, %c0_198], %240 {strides = array<i32>} : memref<28x256xf32, #tpu.memory_space<vmem>>, vector<1x256xf32>,
      %c10_199 = arith.constant 10 : index
      %c11 = arith.constant 11 : index
      %c0_200 = arith.constant 0 : index
      %244 = vector.load %arg2[%c10_199, %c11, %c0_200] : memref<28x28x1xf32, #tpu.memory_space<vmem>>, vector<1x17x1xf32>
      %245 = vector.shape_cast %244 : vector<1x17x1xf32> to vector<17x1xf32>
      %c11_201 = arith.constant 11 : index
      %c0_202 = arith.constant 0 : index
      %246 = vector.load %arg11[%c11_201, %c0_202] : memref<28x256xf32, #tpu.memory_space<vmem>>, vector<17x256xf32>
      %247 = vector.broadcast %245 : vector<17x1xf32> to vector<17x256xf32>
      %248 = vector.broadcast %242 : vector<1x256xf32> to vector<17x256xf32>
      %249 = arith.mulf %247, %248 : vector<17x256xf32>
      %250 = arith.addf %246, %249 : vector<17x256xf32>
      %c11_203 = arith.constant 11 : index
      %c0_204 = arith.constant 0 : index
      %251 = vector.load %arg11[%c11_203, %c0_204] : memref<28x256xf32, #tpu.memory_space<vmem>>, vector<17x256xf32>
      tpu.vector_store %arg11[%c11_203, %c0_204], %250 {strides = array<i32>} : memref<28x256xf32, #tpu.memory_space<vmem>>, vector<17x256xf32>,
      %c11_205 = arith.constant 11 : index
      %c0_206 = arith.constant 0 : index
      %252 = vector.load %arg11[%c11_205, %c0_206] : memref<28x256xf32, #tpu.memory_space<vmem>>, vector<1x256xf32>
      %253 = arith.mulf %252, %252 : vector<1x256xf32>
      %cst_207 = arith.constant dense<0.000000e+00> : vector<1x8xf32>
      %254 = tpu.matmul %253, %8, %cst_207 {dimension_numbers = #tpu.dot_dimension_numbers<[1], [0], [0], [1], [0, 0, 1, 1], [], []>} : vector<1x256xf32>, vector<256x8xf32>, vector<1x8xf32> -> vector<1x8xf32>
      %cst_208 = arith.constant 9.99999996E-13 : f32
      %255 = vector.broadcast %cst_208 : f32 to vector<1x8xf32>
      %256 = arith.addf %254, %255 : vector<1x8xf32>
      %257 = math.rsqrt %256 : vector<1x8xf32>
      %cst_209 = arith.constant dense<0.000000e+00> : vector<1x256xf32>
      %258 = tpu.matmul %257, %9, %cst_209 {dimension_numbers = #tpu.dot_dimension_numbers<[1], [0], [0], [1], [0, 0, 1, 1], [], []>} : vector<1x8xf32>, vector<8x256xf32>, vector<1x256xf32> -> vector<1x256xf32>
      %cst_210 = arith.constant 0.000000e+00 : f32
      %259 = vector.broadcast %cst_210 : f32 to vector<1x256xf32>
      %260 = arith.subf %259, %252 : vector<1x256xf32>
      %261 = arith.mulf %260, %258 : vector<1x256xf32>
      %c11_211 = arith.constant 11 : index
      %c0_212 = arith.constant 0 : index
      %262 = vector.load %arg10[%c11_211, %c0_212] : memref<28x256xf32, #tpu.memory_space<vmem>>, vector<1x256xf32>
      %263 = arith.subf %261, %262 : vector<1x256xf32>
      %c11_213 = arith.constant 11 : index
      %c0_214 = arith.constant 0 : index
      %264 = vector.load %arg10[%c11_213, %c0_214] : memref<28x256xf32, #tpu.memory_space<vmem>>, vector<1x256xf32>
      tpu.vector_store %arg10[%c11_213, %c0_214], %261 {strides = array<i32>} : memref<28x256xf32, #tpu.memory_space<vmem>>, vector<1x256xf32>,
      %c11_215 = arith.constant 11 : index
      %c12 = arith.constant 12 : index
      %c0_216 = arith.constant 0 : index
      %265 = vector.load %arg2[%c11_215, %c12, %c0_216] : memref<28x28x1xf32, #tpu.memory_space<vmem>>, vector<1x16x1xf32>
      %266 = vector.shape_cast %265 : vector<1x16x1xf32> to vector<16x1xf32>
      %c12_217 = arith.constant 12 : index
      %c0_218 = arith.constant 0 : index
      %267 = vector.load %arg11[%c12_217, %c0_218] : memref<28x256xf32, #tpu.memory_space<vmem>>, vector<16x256xf32>
      %268 = vector.broadcast %266 : vector<16x1xf32> to vector<16x256xf32>
      %269 = vector.broadcast %263 : vector<1x256xf32> to vector<16x256xf32>
      %270 = arith.mulf %268, %269 : vector<16x256xf32>
      %271 = arith.addf %267, %270 : vector<16x256xf32>
      %c12_219 = arith.constant 12 : index
      %c0_220 = arith.constant 0 : index
      %272 = vector.load %arg11[%c12_219, %c0_220] : memref<28x256xf32, #tpu.memory_space<vmem>>, vector<16x256xf32>
      tpu.vector_store %arg11[%c12_219, %c0_220], %271 {strides = array<i32>} : memref<28x256xf32, #tpu.memory_space<vmem>>, vector<16x256xf32>,
      %c12_221 = arith.constant 12 : index
      %c0_222 = arith.constant 0 : index
      %273 = vector.load %arg11[%c12_221, %c0_222] : memref<28x256xf32, #tpu.memory_space<vmem>>, vector<1x256xf32>
      %274 = arith.mulf %273, %273 : vector<1x256xf32>
      %cst_223 = arith.constant dense<0.000000e+00> : vector<1x8xf32>
      %275 = tpu.matmul %274, %8, %cst_223 {dimension_numbers = #tpu.dot_dimension_numbers<[1], [0], [0], [1], [0, 0, 1, 1], [], []>} : vector<1x256xf32>, vector<256x8xf32>, vector<1x8xf32> -> vector<1x8xf32>
      %cst_224 = arith.constant 9.99999996E-13 : f32
      %276 = vector.broadcast %cst_224 : f32 to vector<1x8xf32>
      %277 = arith.addf %275, %276 : vector<1x8xf32>
      %278 = math.rsqrt %277 : vector<1x8xf32>
      %cst_225 = arith.constant dense<0.000000e+00> : vector<1x256xf32>
      %279 = tpu.matmul %278, %9, %cst_225 {dimension_numbers = #tpu.dot_dimension_numbers<[1], [0], [0], [1], [0, 0, 1, 1], [], []>} : vector<1x8xf32>, vector<8x256xf32>, vector<1x256xf32> -> vector<1x256xf32>
      %cst_226 = arith.constant 0.000000e+00 : f32
      %280 = vector.broadcast %cst_226 : f32 to vector<1x256xf32>
      %281 = arith.subf %280, %273 : vector<1x256xf32>
      %282 = arith.mulf %281, %279 : vector<1x256xf32>
      %c12_227 = arith.constant 12 : index
      %c0_228 = arith.constant 0 : index
      %283 = vector.load %arg10[%c12_227, %c0_228] : memref<28x256xf32, #tpu.memory_space<vmem>>, vector<1x256xf32>
      %284 = arith.subf %282, %283 : vector<1x256xf32>
      %c12_229 = arith.constant 12 : index
      %c0_230 = arith.constant 0 : index
      %285 = vector.load %arg10[%c12_229, %c0_230] : memref<28x256xf32, #tpu.memory_space<vmem>>, vector<1x256xf32>
      tpu.vector_store %arg10[%c12_229, %c0_230], %282 {strides = array<i32>} : memref<28x256xf32, #tpu.memory_space<vmem>>, vector<1x256xf32>,
      %c12_231 = arith.constant 12 : index
      %c13 = arith.constant 13 : index
      %c0_232 = arith.constant 0 : index
      %286 = vector.load %arg2[%c12_231, %c13, %c0_232] : memref<28x28x1xf32, #tpu.memory_space<vmem>>, vector<1x15x1xf32>
      %287 = vector.shape_cast %286 : vector<1x15x1xf32> to vector<15x1xf32>
      %c13_233 = arith.constant 13 : index
      %c0_234 = arith.constant 0 : index
      %288 = vector.load %arg11[%c13_233, %c0_234] : memref<28x256xf32, #tpu.memory_space<vmem>>, vector<15x256xf32>
      %289 = vector.broadcast %287 : vector<15x1xf32> to vector<15x256xf32>
      %290 = vector.broadcast %284 : vector<1x256xf32> to vector<15x256xf32>
      %291 = arith.mulf %289, %290 : vector<15x256xf32>
      %292 = arith.addf %288, %291 : vector<15x256xf32>
      %c13_235 = arith.constant 13 : index
      %c0_236 = arith.constant 0 : index
      %293 = vector.load %arg11[%c13_235, %c0_236] : memref<28x256xf32, #tpu.memory_space<vmem>>, vector<15x256xf32>
      tpu.vector_store %arg11[%c13_235, %c0_236], %292 {strides = array<i32>} : memref<28x256xf32, #tpu.memory_space<vmem>>, vector<15x256xf32>,
      %c13_237 = arith.constant 13 : index
      %c0_238 = arith.constant 0 : index
      %294 = vector.load %arg11[%c13_237, %c0_238] : memref<28x256xf32, #tpu.memory_space<vmem>>, vector<1x256xf32>
      %295 = arith.mulf %294, %294 : vector<1x256xf32>
      %cst_239 = arith.constant dense<0.000000e+00> : vector<1x8xf32>
      %296 = tpu.matmul %295, %8, %cst_239 {dimension_numbers = #tpu.dot_dimension_numbers<[1], [0], [0], [1], [0, 0, 1, 1], [], []>} : vector<1x256xf32>, vector<256x8xf32>, vector<1x8xf32> -> vector<1x8xf32>
      %cst_240 = arith.constant 9.99999996E-13 : f32
      %297 = vector.broadcast %cst_240 : f32 to vector<1x8xf32>
      %298 = arith.addf %296, %297 : vector<1x8xf32>
      %299 = math.rsqrt %298 : vector<1x8xf32>
      %cst_241 = arith.constant dense<0.000000e+00> : vector<1x256xf32>
      %300 = tpu.matmul %299, %9, %cst_241 {dimension_numbers = #tpu.dot_dimension_numbers<[1], [0], [0], [1], [0, 0, 1, 1], [], []>} : vector<1x8xf32>, vector<8x256xf32>, vector<1x256xf32> -> vector<1x256xf32>
      %cst_242 = arith.constant 0.000000e+00 : f32
      %301 = vector.broadcast %cst_242 : f32 to vector<1x256xf32>
      %302 = arith.subf %301, %294 : vector<1x256xf32>
      %303 = arith.mulf %302, %300 : vector<1x256xf32>
      %c13_243 = arith.constant 13 : index
      %c0_244 = arith.constant 0 : index
      %304 = vector.load %arg10[%c13_243, %c0_244] : memref<28x256xf32, #tpu.memory_space<vmem>>, vector<1x256xf32>
      %305 = arith.subf %303, %304 : vector<1x256xf32>
      %c13_245 = arith.constant 13 : index
      %c0_246 = arith.constant 0 : index
      %306 = vector.load %arg10[%c13_245, %c0_246] : memref<28x256xf32, #tpu.memory_space<vmem>>, vector<1x256xf32>
      tpu.vector_store %arg10[%c13_245, %c0_246], %303 {strides = array<i32>} : memref<28x256xf32, #tpu.memory_space<vmem>>, vector<1x256xf32>,
      %c13_247 = arith.constant 13 : index
      %c14 = arith.constant 14 : index
      %c0_248 = arith.constant 0 : index
      %307 = vector.load %arg2[%c13_247, %c14, %c0_248] : memref<28x28x1xf32, #tpu.memory_space<vmem>>, vector<1x14x1xf32>
      %308 = vector.shape_cast %307 : vector<1x14x1xf32> to vector<14x1xf32>
      %c14_249 = arith.constant 14 : index
      %c0_250 = arith.constant 0 : index
      %309 = vector.load %arg11[%c14_249, %c0_250] : memref<28x256xf32, #tpu.memory_space<vmem>>, vector<14x256xf32>
      %310 = vector.broadcast %308 : vector<14x1xf32> to vector<14x256xf32>
      %311 = vector.broadcast %305 : vector<1x256xf32> to vector<14x256xf32>
      %312 = arith.mulf %310, %311 : vector<14x256xf32>
      %313 = arith.addf %309, %312 : vector<14x256xf32>
      %c14_251 = arith.constant 14 : index
      %c0_252 = arith.constant 0 : index
      %314 = vector.load %arg11[%c14_251, %c0_252] : memref<28x256xf32, #tpu.memory_space<vmem>>, vector<14x256xf32>
      tpu.vector_store %arg11[%c14_251, %c0_252], %313 {strides = array<i32>} : memref<28x256xf32, #tpu.memory_space<vmem>>, vector<14x256xf32>,
      %c14_253 = arith.constant 14 : index
      %c0_254 = arith.constant 0 : index
      %315 = vector.load %arg11[%c14_253, %c0_254] : memref<28x256xf32, #tpu.memory_space<vmem>>, vector<1x256xf32>
      %316 = arith.mulf %315, %315 : vector<1x256xf32>
      %cst_255 = arith.constant dense<0.000000e+00> : vector<1x8xf32>
      %317 = tpu.matmul %316, %8, %cst_255 {dimension_numbers = #tpu.dot_dimension_numbers<[1], [0], [0], [1], [0, 0, 1, 1], [], []>} : vector<1x256xf32>, vector<256x8xf32>, vector<1x8xf32> -> vector<1x8xf32>
      %cst_256 = arith.constant 9.99999996E-13 : f32
      %318 = vector.broadcast %cst_256 : f32 to vector<1x8xf32>
      %319 = arith.addf %317, %318 : vector<1x8xf32>
      %320 = math.rsqrt %319 : vector<1x8xf32>
      %cst_257 = arith.constant dense<0.000000e+00> : vector<1x256xf32>
      %321 = tpu.matmul %320, %9, %cst_257 {dimension_numbers = #tpu.dot_dimension_numbers<[1], [0], [0], [1], [0, 0, 1, 1], [], []>} : vector<1x8xf32>, vector<8x256xf32>, vector<1x256xf32> -> vector<1x256xf32>
      %cst_258 = arith.constant 0.000000e+00 : f32
      %322 = vector.broadcast %cst_258 : f32 to vector<1x256xf32>
      %323 = arith.subf %322, %315 : vector<1x256xf32>
      %324 = arith.mulf %323, %321 : vector<1x256xf32>
      %c14_259 = arith.constant 14 : index
      %c0_260 = arith.constant 0 : index
      %325 = vector.load %arg10[%c14_259, %c0_260] : memref<28x256xf32, #tpu.memory_space<vmem>>, vector<1x256xf32>
      %326 = arith.subf %324, %325 : vector<1x256xf32>
      %c14_261 = arith.constant 14 : index
      %c0_262 = arith.constant 0 : index
      %327 = vector.load %arg10[%c14_261, %c0_262] : memref<28x256xf32, #tpu.memory_space<vmem>>, vector<1x256xf32>
      tpu.vector_store %arg10[%c14_261, %c0_262], %324 {strides = array<i32>} : memref<28x256xf32, #tpu.memory_space<vmem>>, vector<1x256xf32>,
      %c14_263 = arith.constant 14 : index
      %c15 = arith.constant 15 : index
      %c0_264 = arith.constant 0 : index
      %328 = vector.load %arg2[%c14_263, %c15, %c0_264] : memref<28x28x1xf32, #tpu.memory_space<vmem>>, vector<1x13x1xf32>
      %329 = vector.shape_cast %328 : vector<1x13x1xf32> to vector<13x1xf32>
      %c15_265 = arith.constant 15 : index
      %c0_266 = arith.constant 0 : index
      %330 = vector.load %arg11[%c15_265, %c0_266] : memref<28x256xf32, #tpu.memory_space<vmem>>, vector<13x256xf32>
      %331 = vector.broadcast %329 : vector<13x1xf32> to vector<13x256xf32>
      %332 = vector.broadcast %326 : vector<1x256xf32> to vector<13x256xf32>
      %333 = arith.mulf %331, %332 : vector<13x256xf32>
      %334 = arith.addf %330, %333 : vector<13x256xf32>
      %c15_267 = arith.constant 15 : index
      %c0_268 = arith.constant 0 : index
      %335 = vector.load %arg11[%c15_267, %c0_268] : memref<28x256xf32, #tpu.memory_space<vmem>>, vector<13x256xf32>
      tpu.vector_store %arg11[%c15_267, %c0_268], %334 {strides = array<i32>} : memref<28x256xf32, #tpu.memory_space<vmem>>, vector<13x256xf32>,
      %c15_269 = arith.constant 15 : index
      %c0_270 = arith.constant 0 : index
      %336 = vector.load %arg11[%c15_269, %c0_270] : memref<28x256xf32, #tpu.memory_space<vmem>>, vector<1x256xf32>
      %337 = arith.mulf %336, %336 : vector<1x256xf32>
      %cst_271 = arith.constant dense<0.000000e+00> : vector<1x8xf32>
      %338 = tpu.matmul %337, %8, %cst_271 {dimension_numbers = #tpu.dot_dimension_numbers<[1], [0], [0], [1], [0, 0, 1, 1], [], []>} : vector<1x256xf32>, vector<256x8xf32>, vector<1x8xf32> -> vector<1x8xf32>
      %cst_272 = arith.constant 9.99999996E-13 : f32
      %339 = vector.broadcast %cst_272 : f32 to vector<1x8xf32>
      %340 = arith.addf %338, %339 : vector<1x8xf32>
      %341 = math.rsqrt %340 : vector<1x8xf32>
      %cst_273 = arith.constant dense<0.000000e+00> : vector<1x256xf32>
      %342 = tpu.matmul %341, %9, %cst_273 {dimension_numbers = #tpu.dot_dimension_numbers<[1], [0], [0], [1], [0, 0, 1, 1], [], []>} : vector<1x8xf32>, vector<8x256xf32>, vector<1x256xf32> -> vector<1x256xf32>
      %cst_274 = arith.constant 0.000000e+00 : f32
      %343 = vector.broadcast %cst_274 : f32 to vector<1x256xf32>
      %344 = arith.subf %343, %336 : vector<1x256xf32>
      %345 = arith.mulf %344, %342 : vector<1x256xf32>
      %c15_275 = arith.constant 15 : index
      %c0_276 = arith.constant 0 : index
      %346 = vector.load %arg10[%c15_275, %c0_276] : memref<28x256xf32, #tpu.memory_space<vmem>>, vector<1x256xf32>
      %347 = arith.subf %345, %346 : vector<1x256xf32>
      %c15_277 = arith.constant 15 : index
      %c0_278 = arith.constant 0 : index
      %348 = vector.load %arg10[%c15_277, %c0_278] : memref<28x256xf32, #tpu.memory_space<vmem>>, vector<1x256xf32>
      tpu.vector_store %arg10[%c15_277, %c0_278], %345 {strides = array<i32>} : memref<28x256xf32, #tpu.memory_space<vmem>>, vector<1x256xf32>,
      %c15_279 = arith.constant 15 : index
      %c16 = arith.constant 16 : index
      %c0_280 = arith.constant 0 : index
      %349 = vector.load %arg2[%c15_279, %c16, %c0_280] : memref<28x28x1xf32, #tpu.memory_space<vmem>>, vector<1x12x1xf32>
      %350 = vector.shape_cast %349 : vector<1x12x1xf32> to vector<12x1xf32>
      %c16_281 = arith.constant 16 : index
      %c0_282 = arith.constant 0 : index
      %351 = vector.load %arg11[%c16_281, %c0_282] : memref<28x256xf32, #tpu.memory_space<vmem>>, vector<12x256xf32>
      %352 = vector.broadcast %350 : vector<12x1xf32> to vector<12x256xf32>
      %353 = vector.broadcast %347 : vector<1x256xf32> to vector<12x256xf32>
      %354 = arith.mulf %352, %353 : vector<12x256xf32>
      %355 = arith.addf %351, %354 : vector<12x256xf32>
      %c16_283 = arith.constant 16 : index
      %c0_284 = arith.constant 0 : index
      %356 = vector.load %arg11[%c16_283, %c0_284] : memref<28x256xf32, #tpu.memory_space<vmem>>, vector<12x256xf32>
      tpu.vector_store %arg11[%c16_283, %c0_284], %355 {strides = array<i32>} : memref<28x256xf32, #tpu.memory_space<vmem>>, vector<12x256xf32>,
      %c16_285 = arith.constant 16 : index
      %c0_286 = arith.constant 0 : index
      %357 = vector.load %arg11[%c16_285, %c0_286] : memref<28x256xf32, #tpu.memory_space<vmem>>, vector<1x256xf32>
      %358 = arith.mulf %357, %357 : vector<1x256xf32>
      %cst_287 = arith.constant dense<0.000000e+00> : vector<1x8xf32>
      %359 = tpu.matmul %358, %8, %cst_287 {dimension_numbers = #tpu.dot_dimension_numbers<[1], [0], [0], [1], [0, 0, 1, 1], [], []>} : vector<1x256xf32>, vector<256x8xf32>, vector<1x8xf32> -> vector<1x8xf32>
      %cst_288 = arith.constant 9.99999996E-13 : f32
      %360 = vector.broadcast %cst_288 : f32 to vector<1x8xf32>
      %361 = arith.addf %359, %360 : vector<1x8xf32>
      %362 = math.rsqrt %361 : vector<1x8xf32>
      %cst_289 = arith.constant dense<0.000000e+00> : vector<1x256xf32>
      %363 = tpu.matmul %362, %9, %cst_289 {dimension_numbers = #tpu.dot_dimension_numbers<[1], [0], [0], [1], [0, 0, 1, 1], [], []>} : vector<1x8xf32>, vector<8x256xf32>, vector<1x256xf32> -> vector<1x256xf32>
      %cst_290 = arith.constant 0.000000e+00 : f32
      %364 = vector.broadcast %cst_290 : f32 to vector<1x256xf32>
      %365 = arith.subf %364, %357 : vector<1x256xf32>
      %366 = arith.mulf %365, %363 : vector<1x256xf32>
      %c16_291 = arith.constant 16 : index
      %c0_292 = arith.constant 0 : index
      %367 = vector.load %arg10[%c16_291, %c0_292] : memref<28x256xf32, #tpu.memory_space<vmem>>, vector<1x256xf32>
      %368 = arith.subf %366, %367 : vector<1x256xf32>
      %c16_293 = arith.constant 16 : index
      %c0_294 = arith.constant 0 : index
      %369 = vector.load %arg10[%c16_293, %c0_294] : memref<28x256xf32, #tpu.memory_space<vmem>>, vector<1x256xf32>
      tpu.vector_store %arg10[%c16_293, %c0_294], %366 {strides = array<i32>} : memref<28x256xf32, #tpu.memory_space<vmem>>, vector<1x256xf32>,
      %c16_295 = arith.constant 16 : index
      %c17 = arith.constant 17 : index
      %c0_296 = arith.constant 0 : index
      %370 = vector.load %arg2[%c16_295, %c17, %c0_296] : memref<28x28x1xf32, #tpu.memory_space<vmem>>, vector<1x11x1xf32>
      %371 = vector.shape_cast %370 : vector<1x11x1xf32> to vector<11x1xf32>
      %c17_297 = arith.constant 17 : index
      %c0_298 = arith.constant 0 : index
      %372 = vector.load %arg11[%c17_297, %c0_298] : memref<28x256xf32, #tpu.memory_space<vmem>>, vector<11x256xf32>
      %373 = vector.broadcast %371 : vector<11x1xf32> to vector<11x256xf32>
      %374 = vector.broadcast %368 : vector<1x256xf32> to vector<11x256xf32>
      %375 = arith.mulf %373, %374 : vector<11x256xf32>
      %376 = arith.addf %372, %375 : vector<11x256xf32>
      %c17_299 = arith.constant 17 : index
      %c0_300 = arith.constant 0 : index
      %377 = vector.load %arg11[%c17_299, %c0_300] : memref<28x256xf32, #tpu.memory_space<vmem>>, vector<11x256xf32>
      tpu.vector_store %arg11[%c17_299, %c0_300], %376 {strides = array<i32>} : memref<28x256xf32, #tpu.memory_space<vmem>>, vector<11x256xf32>,
      %c17_301 = arith.constant 17 : index
      %c0_302 = arith.constant 0 : index
      %378 = vector.load %arg11[%c17_301, %c0_302] : memref<28x256xf32, #tpu.memory_space<vmem>>, vector<1x256xf32>
      %379 = arith.mulf %378, %378 : vector<1x256xf32>
      %cst_303 = arith.constant dense<0.000000e+00> : vector<1x8xf32>
      %380 = tpu.matmul %379, %8, %cst_303 {dimension_numbers = #tpu.dot_dimension_numbers<[1], [0], [0], [1], [0, 0, 1, 1], [], []>} : vector<1x256xf32>, vector<256x8xf32>, vector<1x8xf32> -> vector<1x8xf32>
      %cst_304 = arith.constant 9.99999996E-13 : f32
      %381 = vector.broadcast %cst_304 : f32 to vector<1x8xf32>
      %382 = arith.addf %380, %381 : vector<1x8xf32>
      %383 = math.rsqrt %382 : vector<1x8xf32>
      %cst_305 = arith.constant dense<0.000000e+00> : vector<1x256xf32>
      %384 = tpu.matmul %383, %9, %cst_305 {dimension_numbers = #tpu.dot_dimension_numbers<[1], [0], [0], [1], [0, 0, 1, 1], [], []>} : vector<1x8xf32>, vector<8x256xf32>, vector<1x256xf32> -> vector<1x256xf32>
      %cst_306 = arith.constant 0.000000e+00 : f32
      %385 = vector.broadcast %cst_306 : f32 to vector<1x256xf32>
      %386 = arith.subf %385, %378 : vector<1x256xf32>
      %387 = arith.mulf %386, %384 : vector<1x256xf32>
      %c17_307 = arith.constant 17 : index
      %c0_308 = arith.constant 0 : index
      %388 = vector.load %arg10[%c17_307, %c0_308] : memref<28x256xf32, #tpu.memory_space<vmem>>, vector<1x256xf32>
      %389 = arith.subf %387, %388 : vector<1x256xf32>
      %c17_309 = arith.constant 17 : index
      %c0_310 = arith.constant 0 : index
      %390 = vector.load %arg10[%c17_309, %c0_310] : memref<28x256xf32, #tpu.memory_space<vmem>>, vector<1x256xf32>
      tpu.vector_store %arg10[%c17_309, %c0_310], %387 {strides = array<i32>} : memref<28x256xf32, #tpu.memory_space<vmem>>, vector<1x256xf32>,
      %c17_311 = arith.constant 17 : index
      %c18 = arith.constant 18 : index
      %c0_312 = arith.constant 0 : index
      %391 = vector.load %arg2[%c17_311, %c18, %c0_312] : memref<28x28x1xf32, #tpu.memory_space<vmem>>, vector<1x10x1xf32>
      %392 = vector.shape_cast %391 : vector<1x10x1xf32> to vector<10x1xf32>
      %c18_313 = arith.constant 18 : index
      %c0_314 = arith.constant 0 : index
      %393 = vector.load %arg11[%c18_313, %c0_314] : memref<28x256xf32, #tpu.memory_space<vmem>>, vector<10x256xf32>
      %394 = vector.broadcast %392 : vector<10x1xf32> to vector<10x256xf32>
      %395 = vector.broadcast %389 : vector<1x256xf32> to vector<10x256xf32>
      %396 = arith.mulf %394, %395 : vector<10x256xf32>
      %397 = arith.addf %393, %396 : vector<10x256xf32>
      %c18_315 = arith.constant 18 : index
      %c0_316 = arith.constant 0 : index
      %398 = vector.load %arg11[%c18_315, %c0_316] : memref<28x256xf32, #tpu.memory_space<vmem>>, vector<10x256xf32>
      tpu.vector_store %arg11[%c18_315, %c0_316], %397 {strides = array<i32>} : memref<28x256xf32, #tpu.memory_space<vmem>>, vector<10x256xf32>,
      %c18_317 = arith.constant 18 : index
      %c0_318 = arith.constant 0 : index
      %399 = vector.load %arg11[%c18_317, %c0_318] : memref<28x256xf32, #tpu.memory_space<vmem>>, vector<1x256xf32>
      %400 = arith.mulf %399, %399 : vector<1x256xf32>
      %cst_319 = arith.constant dense<0.000000e+00> : vector<1x8xf32>
      %401 = tpu.matmul %400, %8, %cst_319 {dimension_numbers = #tpu.dot_dimension_numbers<[1], [0], [0], [1], [0, 0, 1, 1], [], []>} : vector<1x256xf32>, vector<256x8xf32>, vector<1x8xf32> -> vector<1x8xf32>
      %cst_320 = arith.constant 9.99999996E-13 : f32
      %402 = vector.broadcast %cst_320 : f32 to vector<1x8xf32>
      %403 = arith.addf %401, %402 : vector<1x8xf32>
      %404 = math.rsqrt %403 : vector<1x8xf32>
      %cst_321 = arith.constant dense<0.000000e+00> : vector<1x256xf32>
      %405 = tpu.matmul %404, %9, %cst_321 {dimension_numbers = #tpu.dot_dimension_numbers<[1], [0], [0], [1], [0, 0, 1, 1], [], []>} : vector<1x8xf32>, vector<8x256xf32>, vector<1x256xf32> -> vector<1x256xf32>
      %cst_322 = arith.constant 0.000000e+00 : f32
      %406 = vector.broadcast %cst_322 : f32 to vector<1x256xf32>
      %407 = arith.subf %406, %399 : vector<1x256xf32>
      %408 = arith.mulf %407, %405 : vector<1x256xf32>
      %c18_323 = arith.constant 18 : index
      %c0_324 = arith.constant 0 : index
      %409 = vector.load %arg10[%c18_323, %c0_324] : memref<28x256xf32, #tpu.memory_space<vmem>>, vector<1x256xf32>
      %410 = arith.subf %408, %409 : vector<1x256xf32>
      %c18_325 = arith.constant 18 : index
      %c0_326 = arith.constant 0 : index
      %411 = vector.load %arg10[%c18_325, %c0_326] : memref<28x256xf32, #tpu.memory_space<vmem>>, vector<1x256xf32>
      tpu.vector_store %arg10[%c18_325, %c0_326], %408 {strides = array<i32>} : memref<28x256xf32, #tpu.memory_space<vmem>>, vector<1x256xf32>,
      %c18_327 = arith.constant 18 : index
      %c19 = arith.constant 19 : index
      %c0_328 = arith.constant 0 : index
      %412 = vector.load %arg2[%c18_327, %c19, %c0_328] : memref<28x28x1xf32, #tpu.memory_space<vmem>>, vector<1x9x1xf32>
      %413 = vector.shape_cast %412 : vector<1x9x1xf32> to vector<9x1xf32>
      %c19_329 = arith.constant 19 : index
      %c0_330 = arith.constant 0 : index
      %414 = vector.load %arg11[%c19_329, %c0_330] : memref<28x256xf32, #tpu.memory_space<vmem>>, vector<9x256xf32>
      %415 = vector.broadcast %413 : vector<9x1xf32> to vector<9x256xf32>
      %416 = vector.broadcast %410 : vector<1x256xf32> to vector<9x256xf32>
      %417 = arith.mulf %415, %416 : vector<9x256xf32>
      %418 = arith.addf %414, %417 : vector<9x256xf32>
      %c19_331 = arith.constant 19 : index
      %c0_332 = arith.constant 0 : index
      %419 = vector.load %arg11[%c19_331, %c0_332] : memref<28x256xf32, #tpu.memory_space<vmem>>, vector<9x256xf32>
      tpu.vector_store %arg11[%c19_331, %c0_332], %418 {strides = array<i32>} : memref<28x256xf32, #tpu.memory_space<vmem>>, vector<9x256xf32>,
      %c19_333 = arith.constant 19 : index
      %c0_334 = arith.constant 0 : index
      %420 = vector.load %arg11[%c19_333, %c0_334] : memref<28x256xf32, #tpu.memory_space<vmem>>, vector<1x256xf32>
      %421 = arith.mulf %420, %420 : vector<1x256xf32>
      %cst_335 = arith.constant dense<0.000000e+00> : vector<1x8xf32>
      %422 = tpu.matmul %421, %8, %cst_335 {dimension_numbers = #tpu.dot_dimension_numbers<[1], [0], [0], [1], [0, 0, 1, 1], [], []>} : vector<1x256xf32>, vector<256x8xf32>, vector<1x8xf32> -> vector<1x8xf32>
      %cst_336 = arith.constant 9.99999996E-13 : f32
      %423 = vector.broadcast %cst_336 : f32 to vector<1x8xf32>
      %424 = arith.addf %422, %423 : vector<1x8xf32>
      %425 = math.rsqrt %424 : vector<1x8xf32>
      %cst_337 = arith.constant dense<0.000000e+00> : vector<1x256xf32>
      %426 = tpu.matmul %425, %9, %cst_337 {dimension_numbers = #tpu.dot_dimension_numbers<[1], [0], [0], [1], [0, 0, 1, 1], [], []>} : vector<1x8xf32>, vector<8x256xf32>, vector<1x256xf32> -> vector<1x256xf32>
      %cst_338 = arith.constant 0.000000e+00 : f32
      %427 = vector.broadcast %cst_338 : f32 to vector<1x256xf32>
      %428 = arith.subf %427, %420 : vector<1x256xf32>
      %429 = arith.mulf %428, %426 : vector<1x256xf32>
      %c19_339 = arith.constant 19 : index
      %c0_340 = arith.constant 0 : index
      %430 = vector.load %arg10[%c19_339, %c0_340] : memref<28x256xf32, #tpu.memory_space<vmem>>, vector<1x256xf32>
      %431 = arith.subf %429, %430 : vector<1x256xf32>
      %c19_341 = arith.constant 19 : index
      %c0_342 = arith.constant 0 : index
      %432 = vector.load %arg10[%c19_341, %c0_342] : memref<28x256xf32, #tpu.memory_space<vmem>>, vector<1x256xf32>
      tpu.vector_store %arg10[%c19_341, %c0_342], %429 {strides = array<i32>} : memref<28x256xf32, #tpu.memory_space<vmem>>, vector<1x256xf32>,
      %c19_343 = arith.constant 19 : index
      %c20 = arith.constant 20 : index
      %c0_344 = arith.constant 0 : index
      %433 = vector.load %arg2[%c19_343, %c20, %c0_344] : memref<28x28x1xf32, #tpu.memory_space<vmem>>, vector<1x8x1xf32>
      %434 = vector.shape_cast %433 : vector<1x8x1xf32> to vector<8x1xf32>
      %c20_345 = arith.constant 20 : index
      %c0_346 = arith.constant 0 : index
      %435 = vector.load %arg11[%c20_345, %c0_346] : memref<28x256xf32, #tpu.memory_space<vmem>>, vector<8x256xf32>
      %436 = vector.broadcast %434 : vector<8x1xf32> to vector<8x256xf32>
      %437 = vector.broadcast %431 : vector<1x256xf32> to vector<8x256xf32>
      %438 = arith.mulf %436, %437 : vector<8x256xf32>
      %439 = arith.addf %435, %438 : vector<8x256xf32>
      %c20_347 = arith.constant 20 : index
      %c0_348 = arith.constant 0 : index
      %440 = vector.load %arg11[%c20_347, %c0_348] : memref<28x256xf32, #tpu.memory_space<vmem>>, vector<8x256xf32>
      tpu.vector_store %arg11[%c20_347, %c0_348], %439 {strides = array<i32>} : memref<28x256xf32, #tpu.memory_space<vmem>>, vector<8x256xf32>,
      %c20_349 = arith.constant 20 : index
      %c0_350 = arith.constant 0 : index
      %441 = vector.load %arg11[%c20_349, %c0_350] : memref<28x256xf32, #tpu.memory_space<vmem>>, vector<1x256xf32>
      %442 = arith.mulf %441, %441 : vector<1x256xf32>
      %cst_351 = arith.constant dense<0.000000e+00> : vector<1x8xf32>
      %443 = tpu.matmul %442, %8, %cst_351 {dimension_numbers = #tpu.dot_dimension_numbers<[1], [0], [0], [1], [0, 0, 1, 1], [], []>} : vector<1x256xf32>, vector<256x8xf32>, vector<1x8xf32> -> vector<1x8xf32>
      %cst_352 = arith.constant 9.99999996E-13 : f32
      %444 = vector.broadcast %cst_352 : f32 to vector<1x8xf32>
      %445 = arith.addf %443, %444 : vector<1x8xf32>
      %446 = math.rsqrt %445 : vector<1x8xf32>
      %cst_353 = arith.constant dense<0.000000e+00> : vector<1x256xf32>
      %447 = tpu.matmul %446, %9, %cst_353 {dimension_numbers = #tpu.dot_dimension_numbers<[1], [0], [0], [1], [0, 0, 1, 1], [], []>} : vector<1x8xf32>, vector<8x256xf32>, vector<1x256xf32> -> vector<1x256xf32>
      %cst_354 = arith.constant 0.000000e+00 : f32
      %448 = vector.broadcast %cst_354 : f32 to vector<1x256xf32>
      %449 = arith.subf %448, %441 : vector<1x256xf32>
      %450 = arith.mulf %449, %447 : vector<1x256xf32>
      %c20_355 = arith.constant 20 : index
      %c0_356 = arith.constant 0 : index
      %451 = vector.load %arg10[%c20_355, %c0_356] : memref<28x256xf32, #tpu.memory_space<vmem>>, vector<1x256xf32>
      %452 = arith.subf %450, %451 : vector<1x256xf32>
      %c20_357 = arith.constant 20 : index
      %c0_358 = arith.constant 0 : index
      %453 = vector.load %arg10[%c20_357, %c0_358] : memref<28x256xf32, #tpu.memory_space<vmem>>, vector<1x256xf32>
      tpu.vector_store %arg10[%c20_357, %c0_358], %450 {strides = array<i32>} : memref<28x256xf32, #tpu.memory_space<vmem>>, vector<1x256xf32>,
      %c20_359 = arith.constant 20 : index
      %c21 = arith.constant 21 : index
      %c0_360 = arith.constant 0 : index
      %454 = vector.load %arg2[%c20_359, %c21, %c0_360] : memref<28x28x1xf32, #tpu.memory_space<vmem>>, vector<1x7x1xf32>
      %455 = vector.shape_cast %454 : vector<1x7x1xf32> to vector<7x1xf32>
      %c21_361 = arith.constant 21 : index
      %c0_362 = arith.constant 0 : index
      %456 = vector.load %arg11[%c21_361, %c0_362] : memref<28x256xf32, #tpu.memory_space<vmem>>, vector<7x256xf32>
      %457 = vector.broadcast %455 : vector<7x1xf32> to vector<7x256xf32>
      %458 = vector.broadcast %452 : vector<1x256xf32> to vector<7x256xf32>
      %459 = arith.mulf %457, %458 : vector<7x256xf32>
      %460 = arith.addf %456, %459 : vector<7x256xf32>
      %c21_363 = arith.constant 21 : index
      %c0_364 = arith.constant 0 : index
      %461 = vector.load %arg11[%c21_363, %c0_364] : memref<28x256xf32, #tpu.memory_space<vmem>>, vector<7x256xf32>
      tpu.vector_store %arg11[%c21_363, %c0_364], %460 {strides = array<i32>} : memref<28x256xf32, #tpu.memory_space<vmem>>, vector<7x256xf32>,
      %c21_365 = arith.constant 21 : index
      %c0_366 = arith.constant 0 : index
      %462 = vector.load %arg11[%c21_365, %c0_366] : memref<28x256xf32, #tpu.memory_space<vmem>>, vector<1x256xf32>
      %463 = arith.mulf %462, %462 : vector<1x256xf32>
      %cst_367 = arith.constant dense<0.000000e+00> : vector<1x8xf32>
      %464 = tpu.matmul %463, %8, %cst_367 {dimension_numbers = #tpu.dot_dimension_numbers<[1], [0], [0], [1], [0, 0, 1, 1], [], []>} : vector<1x256xf32>, vector<256x8xf32>, vector<1x8xf32> -> vector<1x8xf32>
      %cst_368 = arith.constant 9.99999996E-13 : f32
      %465 = vector.broadcast %cst_368 : f32 to vector<1x8xf32>
      %466 = arith.addf %464, %465 : vector<1x8xf32>
      %467 = math.rsqrt %466 : vector<1x8xf32>
      %cst_369 = arith.constant dense<0.000000e+00> : vector<1x256xf32>
      %468 = tpu.matmul %467, %9, %cst_369 {dimension_numbers = #tpu.dot_dimension_numbers<[1], [0], [0], [1], [0, 0, 1, 1], [], []>} : vector<1x8xf32>, vector<8x256xf32>, vector<1x256xf32> -> vector<1x256xf32>
      %cst_370 = arith.constant 0.000000e+00 : f32
      %469 = vector.broadcast %cst_370 : f32 to vector<1x256xf32>
      %470 = arith.subf %469, %462 : vector<1x256xf32>
      %471 = arith.mulf %470, %468 : vector<1x256xf32>
      %c21_371 = arith.constant 21 : index
      %c0_372 = arith.constant 0 : index
      %472 = vector.load %arg10[%c21_371, %c0_372] : memref<28x256xf32, #tpu.memory_space<vmem>>, vector<1x256xf32>
      %473 = arith.subf %471, %472 : vector<1x256xf32>
      %c21_373 = arith.constant 21 : index
      %c0_374 = arith.constant 0 : index
      %474 = vector.load %arg10[%c21_373, %c0_374] : memref<28x256xf32, #tpu.memory_space<vmem>>, vector<1x256xf32>
      tpu.vector_store %arg10[%c21_373, %c0_374], %471 {strides = array<i32>} : memref<28x256xf32, #tpu.memory_space<vmem>>, vector<1x256xf32>,
      %c21_375 = arith.constant 21 : index
      %c22 = arith.constant 22 : index
      %c0_376 = arith.constant 0 : index
      %475 = vector.load %arg2[%c21_375, %c22, %c0_376] : memref<28x28x1xf32, #tpu.memory_space<vmem>>, vector<1x6x1xf32>
      %476 = vector.shape_cast %475 : vector<1x6x1xf32> to vector<6x1xf32>
      %c22_377 = arith.constant 22 : index
      %c0_378 = arith.constant 0 : index
      %477 = vector.load %arg11[%c22_377, %c0_378] : memref<28x256xf32, #tpu.memory_space<vmem>>, vector<6x256xf32>
      %478 = vector.broadcast %476 : vector<6x1xf32> to vector<6x256xf32>
      %479 = vector.broadcast %473 : vector<1x256xf32> to vector<6x256xf32>
      %480 = arith.mulf %478, %479 : vector<6x256xf32>
      %481 = arith.addf %477, %480 : vector<6x256xf32>
      %c22_379 = arith.constant 22 : index
      %c0_380 = arith.constant 0 : index
      %482 = vector.load %arg11[%c22_379, %c0_380] : memref<28x256xf32, #tpu.memory_space<vmem>>, vector<6x256xf32>
      tpu.vector_store %arg11[%c22_379, %c0_380], %481 {strides = array<i32>} : memref<28x256xf32, #tpu.memory_space<vmem>>, vector<6x256xf32>,
      %c22_381 = arith.constant 22 : index
      %c0_382 = arith.constant 0 : index
      %483 = vector.load %arg11[%c22_381, %c0_382] : memref<28x256xf32, #tpu.memory_space<vmem>>, vector<1x256xf32>
      %484 = arith.mulf %483, %483 : vector<1x256xf32>
      %cst_383 = arith.constant dense<0.000000e+00> : vector<1x8xf32>
      %485 = tpu.matmul %484, %8, %cst_383 {dimension_numbers = #tpu.dot_dimension_numbers<[1], [0], [0], [1], [0, 0, 1, 1], [], []>} : vector<1x256xf32>, vector<256x8xf32>, vector<1x8xf32> -> vector<1x8xf32>
      %cst_384 = arith.constant 9.99999996E-13 : f32
      %486 = vector.broadcast %cst_384 : f32 to vector<1x8xf32>
      %487 = arith.addf %485, %486 : vector<1x8xf32>
      %488 = math.rsqrt %487 : vector<1x8xf32>
      %cst_385 = arith.constant dense<0.000000e+00> : vector<1x256xf32>
      %489 = tpu.matmul %488, %9, %cst_385 {dimension_numbers = #tpu.dot_dimension_numbers<[1], [0], [0], [1], [0, 0, 1, 1], [], []>} : vector<1x8xf32>, vector<8x256xf32>, vector<1x256xf32> -> vector<1x256xf32>
      %cst_386 = arith.constant 0.000000e+00 : f32
      %490 = vector.broadcast %cst_386 : f32 to vector<1x256xf32>
      %491 = arith.subf %490, %483 : vector<1x256xf32>
      %492 = arith.mulf %491, %489 : vector<1x256xf32>
      %c22_387 = arith.constant 22 : index
      %c0_388 = arith.constant 0 : index
      %493 = vector.load %arg10[%c22_387, %c0_388] : memref<28x256xf32, #tpu.memory_space<vmem>>, vector<1x256xf32>
      %494 = arith.subf %492, %493 : vector<1x256xf32>
      %c22_389 = arith.constant 22 : index
      %c0_390 = arith.constant 0 : index
      %495 = vector.load %arg10[%c22_389, %c0_390] : memref<28x256xf32, #tpu.memory_space<vmem>>, vector<1x256xf32>
      tpu.vector_store %arg10[%c22_389, %c0_390], %492 {strides = array<i32>} : memref<28x256xf32, #tpu.memory_space<vmem>>, vector<1x256xf32>,
      %c22_391 = arith.constant 22 : index
      %c23 = arith.constant 23 : index
      %c0_392 = arith.constant 0 : index
      %496 = vector.load %arg2[%c22_391, %c23, %c0_392] : memref<28x28x1xf32, #tpu.memory_space<vmem>>, vector<1x5x1xf32>
      %497 = vector.shape_cast %496 : vector<1x5x1xf32> to vector<5x1xf32>
      %c23_393 = arith.constant 23 : index
      %c0_394 = arith.constant 0 : index
      %498 = vector.load %arg11[%c23_393, %c0_394] : memref<28x256xf32, #tpu.memory_space<vmem>>, vector<5x256xf32>
      %499 = vector.broadcast %497 : vector<5x1xf32> to vector<5x256xf32>
      %500 = vector.broadcast %494 : vector<1x256xf32> to vector<5x256xf32>
      %501 = arith.mulf %499, %500 : vector<5x256xf32>
      %502 = arith.addf %498, %501 : vector<5x256xf32>
      %c23_395 = arith.constant 23 : index
      %c0_396 = arith.constant 0 : index
      %503 = vector.load %arg11[%c23_395, %c0_396] : memref<28x256xf32, #tpu.memory_space<vmem>>, vector<5x256xf32>
      tpu.vector_store %arg11[%c23_395, %c0_396], %502 {strides = array<i32>} : memref<28x256xf32, #tpu.memory_space<vmem>>, vector<5x256xf32>,
      %c23_397 = arith.constant 23 : index
      %c0_398 = arith.constant 0 : index
      %504 = vector.load %arg11[%c23_397, %c0_398] : memref<28x256xf32, #tpu.memory_space<vmem>>, vector<1x256xf32>
      %505 = arith.mulf %504, %504 : vector<1x256xf32>
      %cst_399 = arith.constant dense<0.000000e+00> : vector<1x8xf32>
      %506 = tpu.matmul %505, %8, %cst_399 {dimension_numbers = #tpu.dot_dimension_numbers<[1], [0], [0], [1], [0, 0, 1, 1], [], []>} : vector<1x256xf32>, vector<256x8xf32>, vector<1x8xf32> -> vector<1x8xf32>
      %cst_400 = arith.constant 9.99999996E-13 : f32
      %507 = vector.broadcast %cst_400 : f32 to vector<1x8xf32>
      %508 = arith.addf %506, %507 : vector<1x8xf32>
      %509 = math.rsqrt %508 : vector<1x8xf32>
      %cst_401 = arith.constant dense<0.000000e+00> : vector<1x256xf32>
      %510 = tpu.matmul %509, %9, %cst_401 {dimension_numbers = #tpu.dot_dimension_numbers<[1], [0], [0], [1], [0, 0, 1, 1], [], []>} : vector<1x8xf32>, vector<8x256xf32>, vector<1x256xf32> -> vector<1x256xf32>
      %cst_402 = arith.constant 0.000000e+00 : f32
      %511 = vector.broadcast %cst_402 : f32 to vector<1x256xf32>
      %512 = arith.subf %511, %504 : vector<1x256xf32>
      %513 = arith.mulf %512, %510 : vector<1x256xf32>
      %c23_403 = arith.constant 23 : index
      %c0_404 = arith.constant 0 : index
      %514 = vector.load %arg10[%c23_403, %c0_404] : memref<28x256xf32, #tpu.memory_space<vmem>>, vector<1x256xf32>
      %515 = arith.subf %513, %514 : vector<1x256xf32>
      %c23_405 = arith.constant 23 : index
      %c0_406 = arith.constant 0 : index
      %516 = vector.load %arg10[%c23_405, %c0_406] : memref<28x256xf32, #tpu.memory_space<vmem>>, vector<1x256xf32>
      tpu.vector_store %arg10[%c23_405, %c0_406], %513 {strides = array<i32>} : memref<28x256xf32, #tpu.memory_space<vmem>>, vector<1x256xf32>,
      %c23_407 = arith.constant 23 : index
      %c24 = arith.constant 24 : index
      %c0_408 = arith.constant 0 : index
      %517 = vector.load %arg2[%c23_407, %c24, %c0_408] : memref<28x28x1xf32, #tpu.memory_space<vmem>>, vector<1x4x1xf32>
      %518 = vector.shape_cast %517 : vector<1x4x1xf32> to vector<4x1xf32>
      %c24_409 = arith.constant 24 : index
      %c0_410 = arith.constant 0 : index
      %519 = vector.load %arg11[%c24_409, %c0_410] : memref<28x256xf32, #tpu.memory_space<vmem>>, vector<4x256xf32>
      %520 = vector.broadcast %518 : vector<4x1xf32> to vector<4x256xf32>
      %521 = vector.broadcast %515 : vector<1x256xf32> to vector<4x256xf32>
      %522 = arith.mulf %520, %521 : vector<4x256xf32>
      %523 = arith.addf %519, %522 : vector<4x256xf32>
      %c24_411 = arith.constant 24 : index
      %c0_412 = arith.constant 0 : index
      %524 = vector.load %arg11[%c24_411, %c0_412] : memref<28x256xf32, #tpu.memory_space<vmem>>, vector<4x256xf32>
      tpu.vector_store %arg11[%c24_411, %c0_412], %523 {strides = array<i32>} : memref<28x256xf32, #tpu.memory_space<vmem>>, vector<4x256xf32>,
      %c24_413 = arith.constant 24 : index
      %c0_414 = arith.constant 0 : index
      %525 = vector.load %arg11[%c24_413, %c0_414] : memref<28x256xf32, #tpu.memory_space<vmem>>, vector<1x256xf32>
      %526 = arith.mulf %525, %525 : vector<1x256xf32>
      %cst_415 = arith.constant dense<0.000000e+00> : vector<1x8xf32>
      %527 = tpu.matmul %526, %8, %cst_415 {dimension_numbers = #tpu.dot_dimension_numbers<[1], [0], [0], [1], [0, 0, 1, 1], [], []>} : vector<1x256xf32>, vector<256x8xf32>, vector<1x8xf32> -> vector<1x8xf32>
      %cst_416 = arith.constant 9.99999996E-13 : f32
      %528 = vector.broadcast %cst_416 : f32 to vector<1x8xf32>
      %529 = arith.addf %527, %528 : vector<1x8xf32>
      %530 = math.rsqrt %529 : vector<1x8xf32>
      %cst_417 = arith.constant dense<0.000000e+00> : vector<1x256xf32>
      %531 = tpu.matmul %530, %9, %cst_417 {dimension_numbers = #tpu.dot_dimension_numbers<[1], [0], [0], [1], [0, 0, 1, 1], [], []>} : vector<1x8xf32>, vector<8x256xf32>, vector<1x256xf32> -> vector<1x256xf32>
      %cst_418 = arith.constant 0.000000e+00 : f32
      %532 = vector.broadcast %cst_418 : f32 to vector<1x256xf32>
      %533 = arith.subf %532, %525 : vector<1x256xf32>
      %534 = arith.mulf %533, %531 : vector<1x256xf32>
      %c24_419 = arith.constant 24 : index
      %c0_420 = arith.constant 0 : index
      %535 = vector.load %arg10[%c24_419, %c0_420] : memref<28x256xf32, #tpu.memory_space<vmem>>, vector<1x256xf32>
      %536 = arith.subf %534, %535 : vector<1x256xf32>
      %c24_421 = arith.constant 24 : index
      %c0_422 = arith.constant 0 : index
      %537 = vector.load %arg10[%c24_421, %c0_422] : memref<28x256xf32, #tpu.memory_space<vmem>>, vector<1x256xf32>
      tpu.vector_store %arg10[%c24_421, %c0_422], %534 {strides = array<i32>} : memref<28x256xf32, #tpu.memory_space<vmem>>, vector<1x256xf32>,
      %c24_423 = arith.constant 24 : index
      %c25 = arith.constant 25 : index
      %c0_424 = arith.constant 0 : index
      %538 = vector.load %arg2[%c24_423, %c25, %c0_424] : memref<28x28x1xf32, #tpu.memory_space<vmem>>, vector<1x3x1xf32>
      %539 = vector.shape_cast %538 : vector<1x3x1xf32> to vector<3x1xf32>
      %c25_425 = arith.constant 25 : index
      %c0_426 = arith.constant 0 : index
      %540 = vector.load %arg11[%c25_425, %c0_426] : memref<28x256xf32, #tpu.memory_space<vmem>>, vector<3x256xf32>
      %541 = vector.broadcast %539 : vector<3x1xf32> to vector<3x256xf32>
      %542 = vector.broadcast %536 : vector<1x256xf32> to vector<3x256xf32>
      %543 = arith.mulf %541, %542 : vector<3x256xf32>
      %544 = arith.addf %540, %543 : vector<3x256xf32>
      %c25_427 = arith.constant 25 : index
      %c0_428 = arith.constant 0 : index
      %545 = vector.load %arg11[%c25_427, %c0_428] : memref<28x256xf32, #tpu.memory_space<vmem>>, vector<3x256xf32>
      tpu.vector_store %arg11[%c25_427, %c0_428], %544 {strides = array<i32>} : memref<28x256xf32, #tpu.memory_space<vmem>>, vector<3x256xf32>,
      %c25_429 = arith.constant 25 : index
      %c0_430 = arith.constant 0 : index
      %546 = vector.load %arg11[%c25_429, %c0_430] : memref<28x256xf32, #tpu.memory_space<vmem>>, vector<1x256xf32>
      %547 = arith.mulf %546, %546 : vector<1x256xf32>
      %cst_431 = arith.constant dense<0.000000e+00> : vector<1x8xf32>
      %548 = tpu.matmul %547, %8, %cst_431 {dimension_numbers = #tpu.dot_dimension_numbers<[1], [0], [0], [1], [0, 0, 1, 1], [], []>} : vector<1x256xf32>, vector<256x8xf32>, vector<1x8xf32> -> vector<1x8xf32>
      %cst_432 = arith.constant 9.99999996E-13 : f32
      %549 = vector.broadcast %cst_432 : f32 to vector<1x8xf32>
      %550 = arith.addf %548, %549 : vector<1x8xf32>
      %551 = math.rsqrt %550 : vector<1x8xf32>
      %cst_433 = arith.constant dense<0.000000e+00> : vector<1x256xf32>
      %552 = tpu.matmul %551, %9, %cst_433 {dimension_numbers = #tpu.dot_dimension_numbers<[1], [0], [0], [1], [0, 0, 1, 1], [], []>} : vector<1x8xf32>, vector<8x256xf32>, vector<1x256xf32> -> vector<1x256xf32>
      %cst_434 = arith.constant 0.000000e+00 : f32
      %553 = vector.broadcast %cst_434 : f32 to vector<1x256xf32>
      %554 = arith.subf %553, %546 : vector<1x256xf32>
      %555 = arith.mulf %554, %552 : vector<1x256xf32>
      %c25_435 = arith.constant 25 : index
      %c0_436 = arith.constant 0 : index
      %556 = vector.load %arg10[%c25_435, %c0_436] : memref<28x256xf32, #tpu.memory_space<vmem>>, vector<1x256xf32>
      %557 = arith.subf %555, %556 : vector<1x256xf32>
      %c25_437 = arith.constant 25 : index
      %c0_438 = arith.constant 0 : index
      %558 = vector.load %arg10[%c25_437, %c0_438] : memref<28x256xf32, #tpu.memory_space<vmem>>, vector<1x256xf32>
      tpu.vector_store %arg10[%c25_437, %c0_438], %555 {strides = array<i32>} : memref<28x256xf32, #tpu.memory_space<vmem>>, vector<1x256xf32>,
      %c25_439 = arith.constant 25 : index
      %c26 = arith.constant 26 : index
      %c0_440 = arith.constant 0 : index
      %559 = vector.load %arg2[%c25_439, %c26, %c0_440] : memref<28x28x1xf32, #tpu.memory_space<vmem>>, vector<1x2x1xf32>
      %560 = vector.shape_cast %559 : vector<1x2x1xf32> to vector<2x1xf32>
      %c26_441 = arith.constant 26 : index
      %c0_442 = arith.constant 0 : index
      %561 = vector.load %arg11[%c26_441, %c0_442] : memref<28x256xf32, #tpu.memory_space<vmem>>, vector<2x256xf32>
      %562 = vector.broadcast %560 : vector<2x1xf32> to vector<2x256xf32>
      %563 = vector.broadcast %557 : vector<1x256xf32> to vector<2x256xf32>
      %564 = arith.mulf %562, %563 : vector<2x256xf32>
      %565 = arith.addf %561, %564 : vector<2x256xf32>
      %c26_443 = arith.constant 26 : index
      %c0_444 = arith.constant 0 : index
      %566 = vector.load %arg11[%c26_443, %c0_444] : memref<28x256xf32, #tpu.memory_space<vmem>>, vector<2x256xf32>
      tpu.vector_store %arg11[%c26_443, %c0_444], %565 {strides = array<i32>} : memref<28x256xf32, #tpu.memory_space<vmem>>, vector<2x256xf32>,
      %c26_445 = arith.constant 26 : index
      %c0_446 = arith.constant 0 : index
      %567 = vector.load %arg11[%c26_445, %c0_446] : memref<28x256xf32, #tpu.memory_space<vmem>>, vector<1x256xf32>
      %568 = arith.mulf %567, %567 : vector<1x256xf32>
      %cst_447 = arith.constant dense<0.000000e+00> : vector<1x8xf32>
      %569 = tpu.matmul %568, %8, %cst_447 {dimension_numbers = #tpu.dot_dimension_numbers<[1], [0], [0], [1], [0, 0, 1, 1], [], []>} : vector<1x256xf32>, vector<256x8xf32>, vector<1x8xf32> -> vector<1x8xf32>
      %cst_448 = arith.constant 9.99999996E-13 : f32
      %570 = vector.broadcast %cst_448 : f32 to vector<1x8xf32>
      %571 = arith.addf %569, %570 : vector<1x8xf32>
      %572 = math.rsqrt %571 : vector<1x8xf32>
      %cst_449 = arith.constant dense<0.000000e+00> : vector<1x256xf32>
      %573 = tpu.matmul %572, %9, %cst_449 {dimension_numbers = #tpu.dot_dimension_numbers<[1], [0], [0], [1], [0, 0, 1, 1], [], []>} : vector<1x8xf32>, vector<8x256xf32>, vector<1x256xf32> -> vector<1x256xf32>
      %cst_450 = arith.constant 0.000000e+00 : f32
      %574 = vector.broadcast %cst_450 : f32 to vector<1x256xf32>
      %575 = arith.subf %574, %567 : vector<1x256xf32>
      %576 = arith.mulf %575, %573 : vector<1x256xf32>
      %c26_451 = arith.constant 26 : index
      %c0_452 = arith.constant 0 : index
      %577 = vector.load %arg10[%c26_451, %c0_452] : memref<28x256xf32, #tpu.memory_space<vmem>>, vector<1x256xf32>
      %578 = arith.subf %576, %577 : vector<1x256xf32>
      %c26_453 = arith.constant 26 : index
      %c0_454 = arith.constant 0 : index
      %579 = vector.load %arg10[%c26_453, %c0_454] : memref<28x256xf32, #tpu.memory_space<vmem>>, vector<1x256xf32>
      tpu.vector_store %arg10[%c26_453, %c0_454], %576 {strides = array<i32>} : memref<28x256xf32, #tpu.memory_space<vmem>>, vector<1x256xf32>,
      %c26_455 = arith.constant 26 : index
      %c27 = arith.constant 27 : index
      %c0_456 = arith.constant 0 : index
      %580 = vector.load %arg2[%c26_455, %c27, %c0_456] : memref<28x28x1xf32, #tpu.memory_space<vmem>>, vector<1x1x1xf32>
      %581 = vector.shape_cast %580 : vector<1x1x1xf32> to vector<1x1xf32>
      %c27_457 = arith.constant 27 : index
      %c0_458 = arith.constant 0 : index
      %582 = vector.load %arg11[%c27_457, %c0_458] : memref<28x256xf32, #tpu.memory_space<vmem>>, vector<1x256xf32>
      %583 = vector.broadcast %581 : vector<1x1xf32> to vector<1x256xf32>
      %584 = arith.mulf %583, %578 : vector<1x256xf32>
      %585 = arith.addf %582, %584 : vector<1x256xf32>
      %c27_459 = arith.constant 27 : index
      %c0_460 = arith.constant 0 : index
      %586 = vector.load %arg11[%c27_459, %c0_460] : memref<28x256xf32, #tpu.memory_space<vmem>>, vector<1x256xf32>
      tpu.vector_store %arg11[%c27_459, %c0_460], %585 {strides = array<i32>} : memref<28x256xf32, #tpu.memory_space<vmem>>, vector<1x256xf32>,
      %c27_461 = arith.constant 27 : index
      %c0_462 = arith.constant 0 : index
      %587 = vector.load %arg11[%c27_461, %c0_462] : memref<28x256xf32, #tpu.memory_space<vmem>>, vector<1x256xf32>
      %588 = arith.mulf %587, %587 : vector<1x256xf32>
      %cst_463 = arith.constant dense<0.000000e+00> : vector<1x8xf32>
      %589 = tpu.matmul %588, %8, %cst_463 {dimension_numbers = #tpu.dot_dimension_numbers<[1], [0], [0], [1], [0, 0, 1, 1], [], []>} : vector<1x256xf32>, vector<256x8xf32>, vector<1x8xf32> -> vector<1x8xf32>
      %cst_464 = arith.constant 9.99999996E-13 : f32
      %590 = vector.broadcast %cst_464 : f32 to vector<1x8xf32>
      %591 = arith.addf %589, %590 : vector<1x8xf32>
      %592 = math.rsqrt %591 : vector<1x8xf32>
      %cst_465 = arith.constant dense<0.000000e+00> : vector<1x256xf32>
      %593 = tpu.matmul %592, %9, %cst_465 {dimension_numbers = #tpu.dot_dimension_numbers<[1], [0], [0], [1], [0, 0, 1, 1], [], []>} : vector<1x8xf32>, vector<8x256xf32>, vector<1x256xf32> -> vector<1x256xf32>
      %cst_466 = arith.constant 0.000000e+00 : f32
      %594 = vector.broadcast %cst_466 : f32 to vector<1x256xf32>
      %595 = arith.subf %594, %587 : vector<1x256xf32>
      %596 = arith.mulf %595, %593 : vector<1x256xf32>
      %c27_467 = arith.constant 27 : index
      %c0_468 = arith.constant 0 : index
      %597 = vector.load %arg10[%c27_467, %c0_468] : memref<28x256xf32, #tpu.memory_space<vmem>>, vector<1x256xf32>
      tpu.vector_store %arg10[%c27_467, %c0_468], %596 {strides = array<i32>} : memref<28x256xf32, #tpu.memory_space<vmem>>, vector<1x256xf32>,
    }
    %c0_15 = arith.constant 0 : index
    %c0_16 = arith.constant 0 : index
    %11 = vector.load %arg10[%c0_15, %c0_16] : memref<28x256xf32, #tpu.memory_space<vmem>>, vector<28x256xf32>
    %c0_17 = arith.constant 0 : index
    %c0_18 = arith.constant 0 : index
    %c0_19 = arith.constant 0 : index
    %12 = vector.load %arg8[%c0_17, %c0_18, %c0_19] : memref<1x28x256xf32, #tpu.memory_space<vmem>>, vector<1x28x256xf32>
    %13 = vector.shape_cast %12 : vector<1x28x256xf32> to vector<28x256xf32>
    %14 = vector.shape_cast %11 : vector<28x256xf32> to vector<1x28x256xf32>
    tpu.vector_store %arg8[%c0_17, %c0_18, %c0_19], %14 {strides = array<i32>} : memref<1x28x256xf32, #tpu.memory_space<vmem>>, vector<1x28x256xf32>,
    return
  }
  func.func @transform_0(%arg0: i32) -> (i32, i32) {
    %c0_i32 = arith.constant 0 : i32
    %c0_i32_0 = arith.constant 0 : i32
    %c0_i32_1 = arith.constant 0 : i32
    return %c0_i32, %c0_i32_0 : i32, i32
  }
  func.func @transform_1(%arg0: i32) -> (i32, i32, i32) {
    %c0_i32 = arith.constant 0 : i32
    %c0_i32_0 = arith.constant 0 : i32
    %c0_i32_1 = arith.constant 0 : i32
    %c0_i32_2 = arith.constant 0 : i32
    return %c0_i32, %c0_i32_0, %c0_i32_1 : i32, i32, i32
  }
  func.func @transform_2(%arg0: i32) -> (i32, i32) {
    %c0_i32 = arith.constant 0 : i32
    %c0_i32_0 = arith.constant 0 : i32
    %c0_i32_1 = arith.constant 0 : i32
    return %c0_i32, %c0_i32_0 : i32, i32
  }
  func.func @transform_3(%arg0: i32) -> (i32, i32) {
    %c0_i32 = arith.constant 0 : i32
    %c0_i32_0 = arith.constant 0 : i32
    %c0_i32_1 = arith.constant 0 : i32
    return %c0_i32, %c0_i32_0 : i32, i32
  }
  func.func @transform_4(%arg0: i32) -> (i32, i32) {
    %c0_i32 = arith.constant 0 : i32
    %c0_i32_0 = arith.constant 0 : i32
    %c0_i32_1 = arith.constant 0 : i32
    return %c0_i32, %c0_i32_0 : i32, i32
  }
  func.func @transform_5(%arg0: i32) -> (i32, i32, i32) {
    %c0_i32 = arith.constant 0 : i32
    %c0_i32_0 = arith.constant 0 : i32
    %c0_i32_1 = arith.constant 0 : i32
    return %arg0, %c0_i32, %c0_i32_0 : i32, i32, i32
  }
  func.func @transform_6(%arg0: i32) -> (i32, i32, i32) {
    %c0_i32 = arith.constant 0 : i32
    %c0_i32_0 = arith.constant 0 : i32
    %c0_i32_1 = arith.constant 0 : i32
    return %arg0, %c0_i32, %c0_i32_0 : i32, i32, i32
  }
  func.func @transform_7(%arg0: i32) -> (i32, i32, i32) {
    %c0_i32 = arith.constant 0 : i32
    %c0_i32_0 = arith.constant 0 : i32
    %c0_i32_1 = arith.constant 0 : i32
    return %arg0, %c0_i32, %c0_i32_0 : i32, i32, i32
  }
}

</mosaic_0001>

<llo_original>
// kernel: tpu_custom_call.1
$region0: #{tpu_custom_call.1}
  #allocation0 [shape = 'u32[]', space=smem, size = 0x4, offset = 0x4, fixed_abs, tag = 'smem constant byte address 0x4 - core index']
  #allocation1 [shape = 'u32[144,128]{1,0:T(1,128)}', space=vmem, size = 0x12000, scoped, tag = 'internal scratch']
  #allocation2 [shape = 'f32[28,256]{1,0:T(8,128)}', space=vmem, size = 0x8000, scoped, tag = 'scratch operand']
  #allocation3 [shape = 'f32[28,256]{1,0:T(8,128)}', space=vmem, size = 0x8000, scoped, tag = 'scratch operand']
  #allocation4 [shape = 'f32[28,256]{1,0:T(8,128)}', space=vmem, size = 0x8000, scoped, tag = 'scratch operand']
  %s0 = inlined_call_operand.vmem [shape: f32[28,28], index: 0, kind: input, shape index: {}]
  %s1 = inlined_call_operand.vmem [shape: f32[28,28,1], index: 1, kind: input, shape index: {}]
  %s2 = inlined_call_operand.vmem [shape: f32[28,50], index: 2, kind: input, shape index: {}]
  %s3 = inlined_call_operand.vmem [shape: f32[256,8], index: 3, kind: input, shape index: {}]
  %s4 = inlined_call_operand.vmem [shape: f32[8,256], index: 4, kind: input, shape index: {}]
  %s5 = inlined_call_operand.vmem [shape: f32[4,50,256], index: 5, kind: input, shape index: {}]
  %s6 = inlined_call_operand.vmem [shape: f32[4,28,256], index: 6, kind: input, shape index: {}]
  %s7 = inlined_call_operand.vmem [shape: f32[4,28,256], index: 7, kind: output, shape index: {}]
  %s8 = sld [smem:[#allocation0]]
  $region68: #{tpu_custom_call.1} parent=0
    _
  %s10 = ssub.s32 1, %s8
  %s11 = scalar_select 0, %s10, %s8
  loop: start=0, step=1, limit=6
  $region2: #{tpu_custom_call.1} parent=0 // loop_pre_header
    _
  $region3: #{tpu_custom_call.1} parent=0 // loop_header
    %s13 = sphi 0, %s17
    %p14 = scmp.ge.s32.totalorder %s13, 6
    %s21 = sphi 0, %s21
    %s23 = sphi 0, %s21
    %s24 = sphi 0, %s23
    %s38 = sphi 0, %s24
    %s42 = sphi 0, %s42
    %s44 = sphi 0, %s42
    %s45 = sphi 0, %s44
    %s59 = sphi 0, %s45
    %s63 = sphi 0, %s63
    %s65 = sphi 0, %s63
    %s66 = sphi 0, %s65
    %s80 = sphi 0, %s66
    %s84 = sphi 0, %s84
    %s86 = sphi 0, %s84
    %s87 = sphi 0, %s86
    %s101 = sphi 0, %s87
    %s105 = sphi 0, %s105
    %s107 = sphi 0, %s105
    %s108 = sphi 0, %s107
    %s122 = sphi 0, %s108
    %s128 = sphi 0, %s130
    %s131 = sphi 0, %s128
    %s132 = sphi 0, %s131
    %s148 = sphi 0, %s132
    %s154 = sphi 0, %s156
    %s157 = sphi 0, %s154
    %s158 = sphi 0, %s157
    %s174 = sphi 0, %s158
    %s180 = sphi 0, %s182
    %s183 = sphi 0, %s180
    %s184 = sphi 0, %s183
    %s200 = sphi 0, %s184
  $region4: #{tpu_custom_call.1} parent=0 // loop_header_branch
    %16 = sbr.rel (%p14) target = $region8
  $region5: #{tpu_custom_call.1} parent=0 // loop_body
    %s18 = ssub.s32 %s13, 1
    %s19 = ssub.s32 %s13, 2
    %s20 = sadd.s32 %s13, 1
    %s22 = sadd.s32 %s21, 1
    %p25 = scmp.eq.s32.totalorder %s13, 3
    %p26 = scmp.ne.s32.totalorder %s21, %s23
    %p27 = scmp.eq.s32.totalorder %s13, 0
    %p28 = por %p26, %p27
    %p29 = scmp.ne.s32.totalorder %s21, %s23
    %p30 = scmp.eq.s32.totalorder %s18, 3
    %p31 = por %p29, %p30
    %p32 = scmp.ne.s32.totalorder %s23, %s24
    %p33 = scmp.eq.s32.totalorder %s18, 0
    %p34 = por %p32, %p33
    %p35 = scmp.ne.s32.totalorder %s23, %s24
    %p36 = scmp.eq.s32.totalorder %s19, 3
    %p37 = por %p35, %p36
    %p39 = scmp.ne.s32.totalorder %s24, %s38
    %p40 = scmp.eq.s32.totalorder %s19, 0
    %p41 = por %p39, %p40
    %s43 = sadd.s32 %s42, 1
    %p46 = scmp.eq.s32.totalorder %s13, 3
    %p47 = scmp.ne.s32.totalorder %s42, %s44
    %p48 = scmp.eq.s32.totalorder %s13, 0
    %p49 = por %p47, %p48
    %p50 = scmp.ne.s32.totalorder %s42, %s44
    %p51 = scmp.eq.s32.totalorder %s18, 3
    %p52 = por %p50, %p51
    %p53 = scmp.ne.s32.totalorder %s44, %s45
    %p54 = scmp.eq.s32.totalorder %s18, 0
    %p55 = por %p53, %p54
    %p56 = scmp.ne.s32.totalorder %s44, %s45
    %p57 = scmp.eq.s32.totalorder %s19, 3
    %p58 = por %p56, %p57
    %p60 = scmp.ne.s32.totalorder %s45, %s59
    %p61 = scmp.eq.s32.totalorder %s19, 0
    %p62 = por %p60, %p61
    %s64 = sadd.s32 %s63, 1
    %p67 = scmp.eq.s32.totalorder %s13, 3
    %p68 = scmp.ne.s32.totalorder %s63, %s65
    %p69 = scmp.eq.s32.totalorder %s13, 0
    %p70 = por %p68, %p69
    %p71 = scmp.ne.s32.totalorder %s63, %s65
    %p72 = scmp.eq.s32.totalorder %s18, 3
    %p73 = por %p71, %p72
    %p74 = scmp.ne.s32.totalorder %s65, %s66
    %p75 = scmp.eq.s32.totalorder %s18, 0
    %p76 = por %p74, %p75
    %p77 = scmp.ne.s32.totalorder %s65, %s66
    %p78 = scmp.eq.s32.totalorder %s19, 3
    %p79 = por %p77, %p78
    %p81 = scmp.ne.s32.totalorder %s66, %s80
    %p82 = scmp.eq.s32.totalorder %s19, 0
    %p83 = por %p81, %p82
    %s85 = sadd.s32 %s84, 1
    %p88 = scmp.eq.s32.totalorder %s13, 3
    %p89 = scmp.ne.s32.totalorder %s84, %s86
    %p90 = scmp.eq.s32.totalorder %s13, 0
    %p91 = por %p89, %p90
    %p92 = scmp.ne.s32.totalorder %s84, %s86
    %p93 = scmp.eq.s32.totalorder %s18, 3
    %p94 = por %p92, %p93
    %p95 = scmp.ne.s32.totalorder %s86, %s87
    %p96 = scmp.eq.s32.totalorder %s18, 0
    %p97 = por %p95, %p96
    %p98 = scmp.ne.s32.totalorder %s86, %s87
    %p99 = scmp.eq.s32.totalorder %s19, 3
    %p100 = por %p98, %p99
    %p102 = scmp.ne.s32.totalorder %s87, %s101
    %p103 = scmp.eq.s32.totalorder %s19, 0
    %p104 = por %p102, %p103
    %s106 = sadd.s32 %s105, 1
    %p109 = scmp.eq.s32.totalorder %s13, 3
    %p110 = scmp.ne.s32.totalorder %s105, %s107
    %p111 = scmp.eq.s32.totalorder %s13, 0
    %p112 = por %p110, %p111
    %p113 = scmp.ne.s32.totalorder %s105, %s107
    %p114 = scmp.eq.s32.totalorder %s18, 3
    %p115 = por %p113, %p114
    %p116 = scmp.ne.s32.totalorder %s107, %s108
    %p117 = scmp.eq.s32.totalorder %s18, 0
    %p118 = por %p116, %p117
    %p119 = scmp.ne.s32.totalorder %s107, %s108
    %p120 = scmp.eq.s32.totalorder %s19, 3
    %p121 = por %p119, %p120
    %p123 = scmp.ne.s32.totalorder %s108, %s122
    %p124 = scmp.eq.s32.totalorder %s19, 0
    %p125 = por %p123, %p124
    %s126 = ssub.s32 %s13, %s20
    %p127 = scmp.eq.s32.totalorder %s126, 0
    %s129 = sadd.s32 %s128, 1
    %s130 = scalar_select %p127, %s128, %s129
    %p133 = pneg %p127
    %p134 = scmp.eq.s32.totalorder %s13, 3
    %p135 = por %p133, %p134
    %p136 = scmp.ne.s32.totalorder %s128, %s131
    %p137 = scmp.eq.s32.totalorder %s13, 0
    %p138 = por %p136, %p137
    %p139 = scmp.ne.s32.totalorder %s128, %s131
    %p140 = scmp.eq.s32.totalorder %s18, 3
    %p141 = por %p139, %p140
    %p142 = scmp.ne.s32.totalorder %s131, %s132
    %p143 = scmp.eq.s32.totalorder %s18, 0
    %p144 = por %p142, %p143
    %p145 = scmp.ne.s32.totalorder %s131, %s132
    %p146 = scmp.eq.s32.totalorder %s19, 3
    %p147 = por %p145, %p146
    %p149 = scmp.ne.s32.totalorder %s132, %s148
    %p150 = scmp.eq.s32.totalorder %s19, 0
    %p151 = por %p149, %p150
    %s152 = ssub.s32 %s13, %s20
    %p153 = scmp.eq.s32.totalorder %s152, 0
    %s155 = sadd.s32 %s154, 1
    %s156 = scalar_select %p153, %s154, %s155
    %p159 = pneg %p153
    %p160 = scmp.eq.s32.totalorder %s13, 3
    %p161 = por %p159, %p160
    %p162 = scmp.ne.s32.totalorder %s154, %s157
    %p163 = scmp.eq.s32.totalorder %s13, 0
    %p164 = por %p162, %p163
    %p165 = scmp.ne.s32.totalorder %s154, %s157
    %p166 = scmp.eq.s32.totalorder %s18, 3
    %p167 = por %p165, %p166
    %p168 = scmp.ne.s32.totalorder %s157, %s158
    %p169 = scmp.eq.s32.totalorder %s18, 0
    %p170 = por %p168, %p169
    %p171 = scmp.ne.s32.totalorder %s157, %s158
    %p172 = scmp.eq.s32.totalorder %s19, 3
    %p173 = por %p171, %p172
    %p175 = scmp.ne.s32.totalorder %s158, %s174
    %p176 = scmp.eq.s32.totalorder %s19, 0
    %p177 = por %p175, %p176
    %s178 = ssub.s32 %s13, %s20
    %p179 = scmp.eq.s32.totalorder %s178, 0
    %s181 = sadd.s32 %s180, 1
    %s182 = scalar_select %p179, %s180, %s181
    %p185 = pneg %p179
    %p186 = scmp.eq.s32.totalorder %s13, 3
    %p187 = por %p185, %p186
    %p188 = scmp.ne.s32.totalorder %s180, %s183
    %p189 = scmp.eq.s32.totalorder %s13, 0
    %p190 = por %p188, %p189
    %p191 = scmp.ne.s32.totalorder %s180, %s183
    %p192 = scmp.eq.s32.totalorder %s18, 3
    %p193 = por %p191, %p192
    %p194 = scmp.ne.s32.totalorder %s183, %s184
    %p195 = scmp.eq.s32.totalorder %s18, 0
    %p196 = por %p194, %p195
    %p197 = scmp.ne.s32.totalorder %s183, %s184
    %p198 = scmp.eq.s32.totalorder %s19, 3
    %p199 = por %p197, %p198
    %p201 = scmp.ne.s32.totalorder %s184, %s200
    %p202 = scmp.eq.s32.totalorder %s19, 0
    %p203 = por %p201, %p202
    %p204 = scmp.le.s32.totalorder 1, %s13
    %p205 = scmp.lt.s32.totalorder %s13, 5
    %p206 = pnand %p204, %p205
    %p207 = pneg %p206
    // Predicated region
    $region9: #{tpu_custom_call.1} parent=5 // pred_check
      _
    $region10: #{tpu_custom_call.1} parent=5 // pred_check_branch
      %209 = sbr.rel (%p206) target = $region12
    $region11: #{tpu_custom_call.1} parent=5 // pred_region
      %s210 = ssub.s32 %s13, 1
      // Predicated region
      $region13: #{tpu_custom_call.1} parent=11 // pred_check
        %p211 = pneg %p34
      $region14: #{tpu_custom_call.1} parent=11 // pred_check_branch
        %213 = sbr.rel (%p211) target = $region16
      $region15: #{tpu_custom_call.1} parent=11 // pred_region
        _
      $region16: #{tpu_custom_call.1} parent=11 // pred_fallthru
        _
      // Predicated region
      $region17: #{tpu_custom_call.1} parent=11 // pred_check
        %p214 = pneg %p55
      $region18: #{tpu_custom_call.1} parent=11 // pred_check_branch
        %216 = sbr.rel (%p214) target = $region20
      $region19: #{tpu_custom_call.1} parent=11 // pred_region
        _
      $region20: #{tpu_custom_call.1} parent=11 // pred_fallthru
        _
      // Predicated region
      $region21: #{tpu_custom_call.1} parent=11 // pred_check
        %p217 = pneg %p76
      $region22: #{tpu_custom_call.1} parent=11 // pred_check_branch
        %219 = sbr.rel (%p217) target = $region24
      $region23: #{tpu_custom_call.1} parent=11 // pred_region
        _
      $region24: #{tpu_custom_call.1} parent=11 // pred_fallthru
        _
      // Predicated region
      $region25: #{tpu_custom_call.1} parent=11 // pred_check
        %p220 = pneg %p97
      $region26: #{tpu_custom_call.1} parent=11 // pred_check_branch
        %222 = sbr.rel (%p220) target = $region28
      $region27: #{tpu_custom_call.1} parent=11 // pred_region
        _
      $region28: #{tpu_custom_call.1} parent=11 // pred_fallthru
        _
      // Predicated region
      $region29: #{tpu_custom_call.1} parent=11 // pred_check
        %p223 = pneg %p118
      $region30: #{tpu_custom_call.1} parent=11 // pred_check_branch
        %225 = sbr.rel (%p223) target = $region32
      $region31: #{tpu_custom_call.1} parent=11 // pred_region
        _
      $region32: #{tpu_custom_call.1} parent=11 // pred_fallthru
        _
    $region12: #{tpu_custom_call.1} parent=5 // pred_fallthru
      _
    %p226 = scmp.lt.s32.totalorder %s13, 4
    // Predicated region
    $region33: #{tpu_custom_call.1} parent=5 // pred_check
      %p227 = pneg %p226
    $region34: #{tpu_custom_call.1} parent=5 // pred_check_branch
      %229 = sbr.rel (%p227) target = $region36
    $region35: #{tpu_custom_call.1} parent=5 // pred_region
      // Predicated region
      $region37: #{tpu_custom_call.1} parent=35 // pred_check
        %p230 = pneg %p138
      $region38: #{tpu_custom_call.1} parent=35 // pred_check_branch
        %232 = sbr.rel (%p230) target = $region40
      $region39: #{tpu_custom_call.1} parent=35 // pred_region
        %p233 = scmp.lt.s32.totalorder %s13, 3
        %s234 = scalar_select %p233, %s13, 3
        %s235 = smul.addr %s234, 14
        %s236 = smul.addr %s235, 8
        %s237 = scalar_lea.vmem %s5, %s236
      $region40: #{tpu_custom_call.1} parent=35 // pred_fallthru
        _
      // Predicated region
      $region41: #{tpu_custom_call.1} parent=35 // pred_check
        %p238 = pneg %p164
      $region42: #{tpu_custom_call.1} parent=35 // pred_check_branch
        %240 = sbr.rel (%p238) target = $region44
      $region43: #{tpu_custom_call.1} parent=35 // pred_region
        %p241 = scmp.lt.s32.totalorder %s13, 3
        %s242 = scalar_select %p241, %s13, 3
        %s243 = smul.addr %s242, 8
        %s244 = smul.addr %s243, 8
        %s245 = scalar_lea.vmem %s6, %s244
      $region44: #{tpu_custom_call.1} parent=35 // pred_fallthru
        _
    $region36: #{tpu_custom_call.1} parent=5 // pred_fallthru
      _
    %p246 = scmp.le.s32.totalorder 1, %s13
    %p247 = scmp.lt.s32.totalorder %s13, 5
    %p248 = pnand %p246, %p247
    %p249 = pneg %p248
    // Predicated region
    $region45: #{tpu_custom_call.1} parent=5 // pred_check
      _
    $region46: #{tpu_custom_call.1} parent=5 // pred_check_branch
      %251 = sbr.rel (%p248) target = $region48
    $region47: #{tpu_custom_call.1} parent=5 // pred_region
      %s252 = ssub.s32 %s13, 1
      %p253 = pneg %p34
      %p254 = pneg %p31
      %p255 = pneg %p55
      %p256 = pneg %p52
      %p257 = pneg %p76
      %p258 = pneg %p73
      %p259 = pneg %p97
      %p260 = pneg %p94
      %p261 = pneg %p118
      %p262 = pneg %p115
      %p263 = scmp.lt.s32.totalorder %s18, 3
      %s264 = scalar_select %p263, %s18, 3
      %s265 = smul.addr %s264, 14
      %s266 = smul.addr %s265, 8
      %s267 = scalar_lea.vmem %s5, %s266
      %p268 = pneg %p144
      %p269 = pneg %p141
      %p270 = scmp.lt.s32.totalorder %s18, 3
      %s271 = scalar_select %p270, %s18, 3
      %s272 = smul.addr %s271, 8
      %s273 = smul.addr %s272, 8
      %s274 = scalar_lea.vmem %s6, %s273
      %p275 = pneg %p170
      %p276 = pneg %p167
      %p277 = pneg %p196
      %p278 = pneg %p193
      %p279 = scmp.lt.s32.totalorder %s18, 3
      %s280 = scalar_select %p279, %s18, 3
      %s281 = smul.addr %s280, 8
      %s282 = smul.addr %s281, 8
      %s283 = scalar_lea.vmem %s7, %s282
      %p284 = scmp.lt.s32.totalorder %s18, 3
      %s285 = scalar_select %p284, %s18, 3
      %s286 = smul.addr %s285, 14
      %s287 = smul.addr %s286, 8
      %s288 = scalar_lea.vmem %s5, %s287
      %p289 = scmp.lt.s32.totalorder %s18, 3
      %s290 = scalar_select %p289, %s18, 3
      %s291 = smul.addr %s290, 8
      %s292 = smul.addr %s291, 8
      %s293 = scalar_lea.vmem %s6, %s292
      %p294 = scmp.lt.s32.totalorder %s18, 3
      %s295 = scalar_select %p294, %s18, 3
      %s296 = smul.addr %s295, 8
      %s297 = smul.addr %s296, 8
      %s298 = scalar_lea.vmem %s7, %s297
      %v299 = vld [vmem:[%s2] sm:$0xff]
      %v300 = vld [vmem:[%s2 + $0x8] sm:$0xff]
      %v301 = vld [vmem:[%s2 + $0x10] sm:$0xff]
      %v302 = vld [vmem:[%s2 + $0x18] sm:$0xf]
      %v303 = vld [vmem:[%s288] sm:$0xff]
      %v304 = vld [vmem:[%s288 + $0x8] sm:$0xff]
      %v305 = vld [vmem:[%s288 + $0x10] sm:$0xff]
      %v306 = vld [vmem:[%s288 + $0x18] sm:$0xff]
      %v307 = vld [vmem:[%s288 + $0x20] sm:$0xff]
      %v308 = vld [vmem:[%s288 + $0x28] sm:$0xff]
      %v309 = vld [vmem:[%s288 + $0x30] sm:$0xff]
      %v310 = vld [vmem:[%s288 + $0x38] sm:$0xff]
      %v311 = vld [vmem:[%s288 + $0x40] sm:$0xff]
      %v312 = vld [vmem:[%s288 + $0x48] sm:$0xff]
      %v313 = vld [vmem:[%s288 + $0x50] sm:$0xff]
      %v314 = vld [vmem:[%s288 + $0x58] sm:$0xff]
      %v315 = vld [vmem:[%s288 + $0x60] sm:$0x3]
      %v316 = vld [vmem:[%s288 + $0x68] sm:$0x3]
      %vm317 = vcmask 408576
      %v319 = vsel %vm317, %v299, 0
      %v322 = vsel %vm317, %v300, 0
      %v325 = vsel %vm317, %v301, 0
      %v328 = vsel %vm317, %v302, 0
      %vm330 = vcmask 1041408
      %v332 = vsel %vm330, %v315, 0
      %v335 = vsel %vm330, %v316, 0
      %337 = vmatprep.subr.mxu0 0.0
      %338 = vmatpush1.msra.mxu0 0.0
      %339 = vmatprep.subr.mxu0 0.0
      %340 = vmatpush1.msra.mxu0 0.0
      %341 = vmatprep.subr.mxu0 0.0
      %342 = vmatpush1.msra.mxu0 0.0
      %343 = vmatprep.subr.mxu0 0.0
      %344 = vmatpush1.msra.mxu0 0.0
      %345 = vmatprep.subr.mxu0 0.0
      %346 = vmatpush1.msra.mxu0 0.0
      %347 = vmatprep.subr.mxu0 0.0
      %348 = vmatpush1.msra.mxu0 0.0
      %349 = vmatprep.subr.mxu0 0.0
      %350 = vmatpush1.msra.mxu0 0.0
      %351 = vmatprep.subr.mxu0 0.0
      %352 = vmatpush1.msra.mxu0 0.0
      %353 = vmatprep.subr.mxu0 0.0
      %354 = vmatpush1.msra.mxu0 0.0
      %355 = vmatprep.subr.mxu0 %v335
      %356 = vmatpush1.msra.mxu0 %v332
      %357 = vmatprep.subr.mxu0 %v314
      %358 = vmatpush1.msra.mxu0 %v313
      %359 = vmatprep.subr.mxu0 %v312
      %360 = vmatpush1.msra.mxu0 %v311
      %361 = vmatprep.subr.mxu0 %v310
      %362 = vmatpush1.msra.mxu0 %v309
      %363 = vmatprep.subr.mxu0 %v308
      %364 = vmatpush1.msra.mxu0 %v307
      %365 = vmatprep.subr.mxu0 %v306
      %366 = vmatpush1.msra.mxu0 %v305
      %367 = vmatprep.subr.mxu0 %v304
      %368 = vmatpush1.msra.mxu0 %v303
      %369 = vmatprep.subr.mxu0 0.0
      %370 = vmatpush2.msra.mxu0 0.0
      %371 = vmatprep.subr.mxu0 0.0
      %372 = vmatpush2.msra.mxu0 0.0
      %373 = vmatprep.subr.mxu0 0.0
      %374 = vmatpush2.msra.mxu0 0.0
      %375 = vmatprep.subr.mxu0 0.0
      %376 = vmatpush2.msra.mxu0 0.0
      %377 = vmatprep.subr.mxu0 0.0
      %378 = vmatpush2.msra.mxu0 0.0
      %379 = vmatprep.subr.mxu0 0.0
      %380 = vmatpush2.msra.mxu0 0.0
      %381 = vmatprep.subr.mxu0 0.0
      %382 = vmatpush2.msra.mxu0 0.0
      %383 = vmatprep.subr.mxu0 0.0
      %384 = vmatpush2.msra.mxu0 0.0
      %385 = vmatprep.subr.mxu0 0.0
      %386 = vmatpush2.msra.mxu0 0.0
      %387 = vmatprep.subr.mxu0 0.0
      %388 = vmatpush2.msra.mxu0 0.0
      %389 = vmatprep.subr.mxu0 0.0
      %390 = vmatpush2.msra.mxu0 0.0
      %391 = vmatprep.subr.mxu0 0.0
      %392 = vmatpush2.msra.mxu0 0.0
      %393 = vmatprep.subr.mxu0 0.0
      %394 = vmatpush2.msra.mxu0 0.0
      %395 = vmatprep.subr.mxu0 0.0
      %396 = vmatpush2.msra.mxu0 0.0
      %397 = vmatprep.subr.mxu0 0.0
      %398 = vmatpush2.msra.mxu0 0.0
      %399 = vmatprep.subr.mxu0 0.0
      %400 = vmatpush2.msra.mxu0 0.0
      %401 = vmatprep.mubr.f32.mxu0 0.0
      %402 = vmatmul.mubr.f32.gmra.mxu0 %v319
      %v403 = vpop.f32.mrf.mxu0
      %v404 = vadd.f32 0.0, %v403
      %v405 = vpop.f32.mrf.mxu0
      %v406 = vadd.f32 0.0, %v405
      %407 = vmatprep.mubr.f32.mxu0 0.0
      %408 = vmatmul.mubr.f32.gmra.mxu0 %v322
      %v409 = vpop.f32.mrf.mxu0
      %v410 = vadd.f32 0.0, %v409
      %v411 = vpop.f32.mrf.mxu0
      %v412 = vadd.f32 0.0, %v411
      %413 = vmatprep.mubr.f32.mxu0 0.0
      %414 = vmatmul.mubr.f32.gmra.mxu0 %v325
      %v415 = vpop.f32.mrf.mxu0
      %v416 = vadd.f32 0.0, %v415
      %v417 = vpop.f32.mrf.mxu0
      %v418 = vadd.f32 0.0, %v417
      %419 = vmatprep.mubr.f32.mxu0 0.0
      %420 = vmatmul.mubr.f32.gmra.mxu0 %v328
      %v421 = vpop.f32.mrf.mxu0
      %v422 = vadd.f32 0.0, %v421
      %v423 = vpop.f32.mrf.mxu0
      %v424 = vadd.f32 0.0, %v423
      %425 = vdwg.mxu0
      %426 = vst [vmem:[#allocation2] sm:$0xff] %v404
      %427 = vst [vmem:[#allocation2 + $0x8] sm:$0xff] %v406
      %428 = vst [vmem:[#allocation2 + $0x10] sm:$0xff] %v410
      %429 = vst [vmem:[#allocation2 + $0x18] sm:$0xff] %v412
      %430 = vst [vmem:[#allocation2 + $0x20] sm:$0xff] %v416
      %431 = vst [vmem:[#allocation2 + $0x28] sm:$0xff] %v418
      %432 = vst [vmem:[#allocation2 + $0x30] sm:$0xf] %v422
      %433 = vst [vmem:[#allocation2 + $0x38] sm:$0xf] %v424
      %v434 = vld [vmem:[%s293] sm:$0xff]
      %v435 = vld [vmem:[%s293 + $0x8] sm:$0xff]
      %v436 = vld [vmem:[%s293 + $0x10] sm:$0xff]
      %v437 = vld [vmem:[%s293 + $0x18] sm:$0xff]
      %v438 = vld [vmem:[%s293 + $0x20] sm:$0xff]
      %v439 = vld [vmem:[%s293 + $0x28] sm:$0xff]
      %v440 = vld [vmem:[%s293 + $0x30] sm:$0xf]
      %v441 = vld [vmem:[%s293 + $0x38] sm:$0xf]
      %442 = vst [vmem:[#allocation3] sm:$0xff] %v434
      %443 = vst [vmem:[#allocation3 + $0x8] sm:$0xff] %v435
      %444 = vst [vmem:[#allocation3 + $0x10] sm:$0xff] %v436
      %445 = vst [vmem:[#allocation3 + $0x18] sm:$0xff] %v437
      %446 = vst [vmem:[#allocation3 + $0x20] sm:$0xff] %v438
      %447 = vst [vmem:[#allocation3 + $0x28] sm:$0xff] %v439
      %448 = vst [vmem:[#allocation3 + $0x30] sm:$0xf] %v440
      %449 = vst [vmem:[#allocation3 + $0x38] sm:$0xf] %v441
      %v450 = vld [vmem:[%s3] sm:$0xff]
      %v451 = vld [vmem:[%s3 + $0x8] sm:$0xff]
      %v452 = vld [vmem:[%s3 + $0x10] sm:$0xff]
      %v453 = vld [vmem:[%s3 + $0x18] sm:$0xff]
      %v454 = vld [vmem:[%s3 + $0x20] sm:$0xff]
      %v455 = vld [vmem:[%s3 + $0x28] sm:$0xff]
      %v456 = vld [vmem:[%s3 + $0x30] sm:$0xff]
      %v457 = vld [vmem:[%s3 + $0x38] sm:$0xff]
      %v458 = vld [vmem:[%s3 + $0x40] sm:$0xff]
      %v459 = vld [vmem:[%s3 + $0x48] sm:$0xff]
      %v460 = vld [vmem:[%s3 + $0x50] sm:$0xff]
      %v461 = vld [vmem:[%s3 + $0x58] sm:$0xff]
      %v462 = vld [vmem:[%s3 + $0x60] sm:$0xff]
      %v463 = vld [vmem:[%s3 + $0x68] sm:$0xff]
      %v464 = vld [vmem:[%s3 + $0x70] sm:$0xff]
      %v465 = vld [vmem:[%s3 + $0x78] sm:$0xff]
      %v466 = vld [vmem:[%s3 + $0x80] sm:$0xff]
      %v467 = vld [vmem:[%s3 + $0x88] sm:$0xff]
      %v468 = vld [vmem:[%s3 + $0x90] sm:$0xff]
      %v469 = vld [vmem:[%s3 + $0x98] sm:$0xff]
      %v470 = vld [vmem:[%s3 + $0xa0] sm:$0xff]
      %v471 = vld [vmem:[%s3 + $0xa8] sm:$0xff]
      %v472 = vld [vmem:[%s3 + $0xb0] sm:$0xff]
      %v473 = vld [vmem:[%s3 + $0xb8] sm:$0xff]
      %v474 = vld [vmem:[%s3 + $0xc0] sm:$0xff]
      %v475 = vld [vmem:[%s3 + $0xc8] sm:$0xff]
      %v476 = vld [vmem:[%s3 + $0xd0] sm:$0xff]
      %v477 = vld [vmem:[%s3 + $0xd8] sm:$0xff]
      %v478 = vld [vmem:[%s3 + $0xe0] sm:$0xff]
      %v479 = vld [vmem:[%s3 + $0xe8] sm:$0xff]
      %v480 = vld [vmem:[%s3 + $0xf0] sm:$0xff]
      %v481 = vld [vmem:[%s3 + $0xf8] sm:$0xff]
      %v482 = vld [vmem:[%s4] sm:$0xff]
      %v483 = vld [vmem:[%s4 + $0x8] sm:$0xff]
      loop: start=0, step=1, limit=40
      $region49: #{tpu_custom_call.1} parent=47 // loop_pre_header
        _
      $region50: #{tpu_custom_call.1} parent=47 // loop_header
        %s485 = sphi 0, %s489
        %p486 = scmp.ge.s32.totalorder %s485, 40
      $region51: #{tpu_custom_call.1} parent=47 // loop_header_branch
        %488 = sbr.rel (%p486) target = $region55
      $region52: #{tpu_custom_call.1} parent=47 // loop_body
        %v490 = vld [vmem:[#allocation2] sm:$0xff]
        %v491 = vld [vmem:[#allocation2 + $0x8] sm:$0xff]
        %v492 = vld [vmem:[#allocation2 + $0x10] sm:$0xff]
        %v493 = vld [vmem:[#allocation2 + $0x18] sm:$0xff]
        %v494 = vld [vmem:[#allocation2 + $0x20] sm:$0xff]
        %v495 = vld [vmem:[#allocation2 + $0x28] sm:$0xff]
        %v496 = vld [vmem:[#allocation2 + $0x30] sm:$0xf]
        %v497 = vld [vmem:[#allocation2 + $0x38] sm:$0xf]
        %v498 = vld [vmem:[%s0] sm:$0xff]
        %v499 = vld [vmem:[%s0 + $0x8] sm:$0xff]
        %v500 = vld [vmem:[%s0 + $0x10] sm:$0xff]
        %v501 = vld [vmem:[%s0 + $0x18] sm:$0xf]
        %v502 = vld [vmem:[#allocation3] sm:$0xff]
        %v503 = vld [vmem:[#allocation3 + $0x8] sm:$0xff]
        %v504 = vld [vmem:[#allocation3 + $0x10] sm:$0xff]
        %v505 = vld [vmem:[#allocation3 + $0x18] sm:$0xff]
        %v506 = vld [vmem:[#allocation3 + $0x20] sm:$0xff]
        %v507 = vld [vmem:[#allocation3 + $0x28] sm:$0xff]
        %v508 = vld [vmem:[#allocation3 + $0x30] sm:$0xf]
        %v509 = vld [vmem:[#allocation3 + $0x38] sm:$0xf]
        %vm510 = vcmask 228352
        %v512 = vsel %vm510, %v498, 0
        %v515 = vsel %vm510, %v499, 0
        %v518 = vsel %vm510, %v500, 0
        %v521 = vsel %vm510, %v501, 0
        %vm523 = vcmask 1043456
        %v525 = vsel %vm523, %v508, 0
        %v528 = vsel %vm523, %v509, 0
        %530 = vmatprep.subr.mxu0 0.0
        %531 = vmatpush1.msra.mxu0 0.0
        %532 = vmatprep.subr.mxu0 0.0
        %533 = vmatpush1.msra.mxu0 0.0
        %534 = vmatprep.subr.mxu0 0.0
        %535 = vmatpush1.msra.mxu0 0.0
        %536 = vmatprep.subr.mxu0 0.0
        %537 = vmatpush1.msra.mxu0 0.0
        %538 = vmatprep.subr.mxu0 0.0
        %539 = vmatpush1.msra.mxu0 0.0
        %540 = vmatprep.subr.mxu0 0.0
        %541 = vmatpush1.msra.mxu0 0.0
        %542 = vmatprep.subr.mxu0 0.0
        %543 = vmatpush1.msra.mxu0 0.0
        %544 = vmatprep.subr.mxu0 0.0
        %545 = vmatpush1.msra.mxu0 0.0
        %546 = vmatprep.subr.mxu0 0.0
        %547 = vmatpush1.msra.mxu0 0.0
        %548 = vmatprep.subr.mxu0 0.0
        %549 = vmatpush1.msra.mxu0 0.0
        %550 = vmatprep.subr.mxu0 0.0
        %551 = vmatpush1.msra.mxu0 0.0
        %552 = vmatprep.subr.mxu0 0.0
        %553 = vmatpush1.msra.mxu0 0.0
        %554 = vmatprep.subr.mxu0 %v528
        %555 = vmatpush1.msra.mxu0 %v525
        %556 = vmatprep.subr.mxu0 %v507
        %557 = vmatpush1.msra.mxu0 %v506
        %558 = vmatprep.subr.mxu0 %v505
        %559 = vmatpush1.msra.mxu0 %v504
        %560 = vmatprep.subr.mxu0 %v503
        %561 = vmatpush1.msra.mxu0 %v502
        %562 = vmatprep.subr.mxu0 0.0
        %563 = vmatpush2.msra.mxu0 0.0
        %564 = vmatprep.subr.mxu0 0.0
        %565 = vmatpush2.msra.mxu0 0.0
        %566 = vmatprep.subr.mxu0 0.0
        %567 = vmatpush2.msra.mxu0 0.0
        %568 = vmatprep.subr.mxu0 0.0
        %569 = vmatpush2.msra.mxu0 0.0
        %570 = vmatprep.subr.mxu0 0.0
        %571 = vmatpush2.msra.mxu0 0.0
        %572 = vmatprep.subr.mxu0 0.0
        %573 = vmatpush2.msra.mxu0 0.0
        %574 = vmatprep.subr.mxu0 0.0
        %575 = vmatpush2.msra.mxu0 0.0
        %576 = vmatprep.subr.mxu0 0.0
        %577 = vmatpush2.msra.mxu0 0.0
        %578 = vmatprep.subr.mxu0 0.0
        %579 = vmatpush2.msra.mxu0 0.0
        %580 = vmatprep.subr.mxu0 0.0
        %581 = vmatpush2.msra.mxu0 0.0
        %582 = vmatprep.subr.mxu0 0.0
        %583 = vmatpush2.msra.mxu0 0.0
        %584 = vmatprep.subr.mxu0 0.0
        %585 = vmatpush2.msra.mxu0 0.0
        %586 = vmatprep.subr.mxu0 0.0
        %587 = vmatpush2.msra.mxu0 0.0
        %588 = vmatprep.subr.mxu0 0.0
        %589 = vmatpush2.msra.mxu0 0.0
        %590 = vmatprep.subr.mxu0 0.0
        %591 = vmatpush2.msra.mxu0 0.0
        %592 = vmatprep.subr.mxu0 0.0
        %593 = vmatpush2.msra.mxu0 0.0
        %594 = vmatprep.mubr.f32.mxu0 0.0
        %595 = vmatmul.mubr.f32.gmra.mxu0 %v512
        %v596 = vpop.f32.mrf.mxu0
        %v597 = vadd.f32 0.0, %v596
        %v598 = vpop.f32.mrf.mxu0
        %v599 = vadd.f32 0.0, %v598
        %600 = vmatprep.mubr.f32.mxu0 0.0
        %601 = vmatmul.mubr.f32.gmra.mxu0 %v515
        %v602 = vpop.f32.mrf.mxu0
        %v603 = vadd.f32 0.0, %v602
        %v604 = vpop.f32.mrf.mxu0
        %v605 = vadd.f32 0.0, %v604
        %606 = vmatprep.mubr.f32.mxu0 0.0
        %607 = vmatmul.mubr.f32.gmra.mxu0 %v518
        %v608 = vpop.f32.mrf.mxu0
        %v609 = vadd.f32 0.0, %v608
        %v610 = vpop.f32.mrf.mxu0
        %v611 = vadd.f32 0.0, %v610
        %612 = vmatprep.mubr.f32.mxu0 0.0
        %613 = vmatmul.mubr.f32.gmra.mxu0 %v521
        %v614 = vpop.f32.mrf.mxu0
        %v615 = vadd.f32 0.0, %v614
        %v616 = vpop.f32.mrf.mxu0
        %v617 = vadd.f32 0.0, %v616
        %618 = vdwg.mxu0
        %v619 = vadd.f32 %v490, %v597
        %v620 = vadd.f32 %v491, %v599
        %v621 = vadd.f32 %v492, %v603
        %v622 = vadd.f32 %v493, %v605
        %v623 = vadd.f32 %v494, %v609
        %v624 = vadd.f32 %v495, %v611
        %v625 = vadd.f32 %v496, %v615
        %v626 = vadd.f32 %v497, %v617
        %627 = vst [vmem:[#allocation4] sm:$0xff] %v619
        %628 = vst [vmem:[#allocation4 + $0x8] sm:$0xff] %v620
        %629 = vst [vmem:[#allocation4 + $0x10] sm:$0xff] %v621
        %630 = vst [vmem:[#allocation4 + $0x18] sm:$0xff] %v622
        %631 = vst [vmem:[#allocation4 + $0x20] sm:$0xff] %v623
        %632 = vst [vmem:[#allocation4 + $0x28] sm:$0xff] %v624
        %633 = vst [vmem:[#allocation4 + $0x30] sm:$0xf] %v625
        %634 = vst [vmem:[#allocation4 + $0x38] sm:$0xf] %v626
        %v635 = vld [vmem:[#allocation4] ss:$8 sm:$0x3]
        %v636 = vmul.f32 %v635, %v635
        %v638 = vlaneseq
        %v639 = vshrl.u32 %v638, 7
        %v640 = vsub.s32 0, %v639
        %v641 = vrot.slane %v636, %v640
        %v642 = vlaneseq
        %v643 = vshrl.u32 %v642, 7
        %v644 = vsub.s32 1, %v643
        %v645 = vrot.slane %v636, %v644
        %648 = vmatprep.subr.mxu0 0.0
        %649 = vmatpush1.msra.mxu0 %v465
        %650 = vmatprep.subr.mxu0 0.0
        %651 = vmatpush1.msra.mxu0 %v464
        %652 = vmatprep.subr.mxu0 0.0
        %653 = vmatpush1.msra.mxu0 %v463
        %654 = vmatprep.subr.mxu0 0.0
        %655 = vmatpush1.msra.mxu0 %v462
        %656 = vmatprep.subr.mxu0 0.0
        %657 = vmatpush1.msra.mxu0 %v461
        %658 = vmatprep.subr.mxu0 0.0
        %659 = vmatpush1.msra.mxu0 %v460
        %660 = vmatprep.subr.mxu0 0.0
        %661 = vmatpush1.msra.mxu0 %v459
        %662 = vmatprep.subr.mxu0 0.0
        %663 = vmatpush1.msra.mxu0 %v458
        %664 = vmatprep.subr.mxu0 0.0
        %665 = vmatpush1.msra.mxu0 %v457
        %666 = vmatprep.subr.mxu0 0.0
        %667 = vmatpush1.msra.mxu0 %v456
        %668 = vmatprep.subr.mxu0 0.0
        %669 = vmatpush1.msra.mxu0 %v455
        %670 = vmatprep.subr.mxu0 0.0
        %671 = vmatpush1.msra.mxu0 %v454
        %672 = vmatprep.subr.mxu0 0.0
        %673 = vmatpush1.msra.mxu0 %v453
        %674 = vmatprep.subr.mxu0 0.0
        %675 = vmatpush1.msra.mxu0 %v452
        %676 = vmatprep.subr.mxu0 0.0
        %677 = vmatpush1.msra.mxu0 %v451
        %678 = vmatprep.subr.mxu0 0.0
        %679 = vmatpush1.msra.mxu0 %v450
        %680 = vmatprep.subr.mxu0 0.0
        %681 = vmatpush2.msra.mxu0 %v481
        %682 = vmatprep.subr.mxu0 0.0
        %683 = vmatpush2.msra.mxu0 %v480
        %684 = vmatprep.subr.mxu0 0.0
        %685 = vmatpush2.msra.mxu0 %v479
        %686 = vmatprep.subr.mxu0 0.0
        %687 = vmatpush2.msra.mxu0 %v478
        %688 = vmatprep.subr.mxu0 0.0
        %689 = vmatpush2.msra.mxu0 %v477
        %690 = vmatprep.subr.mxu0 0.0
        %691 = vmatpush2.msra.mxu0 %v476
        %692 = vmatprep.subr.mxu0 0.0
        %693 = vmatpush2.msra.mxu0 %v475
        %694 = vmatprep.subr.mxu0 0.0
        %695 = vmatpush2.msra.mxu0 %v474
        %696 = vmatprep.subr.mxu0 0.0
        %697 = vmatpush2.msra.mxu0 %v473
        %698 = vmatprep.subr.mxu0 0.0
        %699 = vmatpush2.msra.mxu0 %v472
        %700 = vmatprep.subr.mxu0 0.0
        %701 = vmatpush2.msra.mxu0 %v471
        %702 = vmatprep.subr.mxu0 0.0
        %703 = vmatpush2.msra.mxu0 %v470
        %704 = vmatprep.subr.mxu0 0.0
        %705 = vmatpush2.msra.mxu0 %v469
        %706 = vmatprep.subr.mxu0 0.0
        %707 = vmatpush2.msra.mxu0 %v468
        %708 = vmatprep.subr.mxu0 0.0
        %709 = vmatpush2.msra.mxu0 %v467
        %710 = vmatprep.subr.mxu0 0.0
        %711 = vmatpush2.msra.mxu0 %v466
        %712 = vmatprep.mubr.f32.mxu0 %v645
        %713 = vmatmul.mubr.f32.gmra.mxu0 %v641
        %v714 = vpop.f32.mrf.mxu0
        %v715 = vadd.f32 1e-12, %v714
        %v716 = vpop.f32.mrf.mxu0
        %717 = vdwg.mxu0
        %v718 = vrsqrt.pop %v715
        %vm719 = vcmask 64512
        %v721 = vsel %vm719, %v718, 0
        %723 = vmatprep.subr.mxu0 0.0
        %724 = vmatpush1.msra.mxu0 0.0
        %725 = vmatprep.subr.mxu0 0.0
        %726 = vmatpush1.msra.mxu0 0.0
        %727 = vmatprep.subr.mxu0 0.0
        %728 = vmatpush1.msra.mxu0 0.0
        %729 = vmatprep.subr.mxu0 0.0
        %730 = vmatpush1.msra.mxu0 0.0
        %731 = vmatprep.subr.mxu0 0.0
        %732 = vmatpush1.msra.mxu0 0.0
        %733 = vmatprep.subr.mxu0 0.0
        %734 = vmatpush1.msra.mxu0 0.0
        %735 = vmatprep.subr.mxu0 0.0
        %736 = vmatpush1.msra.mxu0 0.0
        %737 = vmatprep.subr.mxu0 0.0
        %738 = vmatpush1.msra.mxu0 0.0
        %739 = vmatprep.subr.mxu0 0.0
        %740 = vmatpush1.msra.mxu0 0.0
        %741 = vmatprep.subr.mxu0 0.0
        %742 = vmatpush1.msra.mxu0 0.0
        %743 = vmatprep.subr.mxu0 0.0
        %744 = vmatpush1.msra.mxu0 0.0
        %745 = vmatprep.subr.mxu0 0.0
        %746 = vmatpush1.msra.mxu0 0.0
        %747 = vmatprep.subr.mxu0 0.0
        %748 = vmatpush1.msra.mxu0 0.0
        %749 = vmatprep.subr.mxu0 0.0
        %750 = vmatpush1.msra.mxu0 0.0
        %751 = vmatprep.subr.mxu0 0.0
        %752 = vmatpush1.msra.mxu0 0.0
        %753 = vmatprep.subr.mxu0 %v483
        %754 = vmatpush1.msra.mxu0 %v482
        %755 = vmatprep.subr.mxu0 0.0
        %756 = vmatpush2.msra.mxu0 0.0
        %757 = vmatprep.subr.mxu0 0.0
        %758 = vmatpush2.msra.mxu0 0.0
        %759 = vmatprep.subr.mxu0 0.0
        %760 = vmatpush2.msra.mxu0 0.0
        %761 = vmatprep.subr.mxu0 0.0
        %762 = vmatpush2.msra.mxu0 0.0
        %763 = vmatprep.subr.mxu0 0.0
        %764 = vmatpush2.msra.mxu0 0.0
        %765 = vmatprep.subr.mxu0 0.0
        %766 = vmatpush2.msra.mxu0 0.0
        %767 = vmatprep.subr.mxu0 0.0
        %768 = vmatpush2.msra.mxu0 0.0
        %769 = vmatprep.subr.mxu0 0.0
        %770 = vmatpush2.msra.mxu0 0.0
        %771 = vmatprep.subr.mxu0 0.0
        %772 = vmatpush2.msra.mxu0 0.0
        %773 = vmatprep.subr.mxu0 0.0
        %774 = vmatpush2.msra.mxu0 0.0
        %775 = vmatprep.subr.mxu0 0.0
        %776 = vmatpush2.msra.mxu0 0.0
        %777 = vmatprep.subr.mxu0 0.0
        %778 = vmatpush2.msra.mxu0 0.0
        %779 = vmatprep.subr.mxu0 0.0
        %780 = vmatpush2.msra.mxu0 0.0
        %781 = vmatprep.subr.mxu0 0.0
        %782 = vmatpush2.msra.mxu0 0.0
        %783 = vmatprep.subr.mxu0 0.0
        %784 = vmatpush2.msra.mxu0 0.0
        %785 = vmatprep.subr.mxu0 0.0
        %786 = vmatpush2.msra.mxu0 0.0
        %787 = vmatprep.mubr.f32.mxu0 0.0
        %788 = vmatmul.mubr.f32.gmra.mxu0 %v721
        %v789 = vpop.f32.mrf.mxu0
        %v790 = vadd.f32 0.0, %v789
        %v791 = vpop.f32.mrf.mxu0
        %v792 = vadd.f32 0.0, %v791
        %793 = vdwg.mxu0
        %v794 = vsub.f32 0.0, %v635
        %v797 = vcombine.low %v790, %v792
        %v799 = vunpack.c.l.s4 1966171168
        %v800 = vunpack.c.0.s8 %v799
        %v801 = vlaneseq
        %v802 = vshrl.u32 %v801, 7
        %v803 = vsub.s32 %v800, %v802
        %v804 = vrot.slane %v797, %v803
        %v806 = vunpack.c.l.s4 1966171168
        %v807 = vunpack.c.0.s8 %v806
        %v808 = vlaneseq
        %v809 = vshrl.u32 %v808, 7
        %v810 = vsub.s32 %v807, %v809
        %v811 = vrot.slane %v804, %v810
        %v813 = vmul.f32 %v794, %v811
        %v814 = vld [vmem:[#allocation3] ss:$8 sm:$0x3]
        %v815 = vsub.f32 %v813, %v814
        %v816 = vlaneseq
        %vm817 = vcmp.ge.s32.totalorder %v816, 0
        %vm818 = vcmp.lt.s32.totalorder %v816, 256
        %vm819 = vmand %vm817, %vm818
        %820 = vst.msk [vmem:[#allocation3] ss:$8 sm:$0x3] %vm819, %v813
        %821 = vst.msk [vmem:[#allocation3] ss:$8 sm:$0x0] %vm819, %v813
        %v822 = vld [vmem:[%s1 + $0x1] sm:$0xff]
        %v823 = vld [vmem:[%s1 + $0x9] sm:$0xff]
        %v824 = vld [vmem:[%s1 + $0x11] sm:$0xff]
        %v825 = vld [vmem:[%s1 + $0x19] sm:$0x7]
        %v826 = vld [vmem:[#allocation4] sm:$0xfe]
        %v827 = vld [vmem:[#allocation4 + $0x8] sm:$0xfe]
        %v828 = vld [vmem:[#allocation4 + $0x10] sm:$0xff]
        %v829 = vld [vmem:[#allocation4 + $0x18] sm:$0xff]
        %v830 = vld [vmem:[#allocation4 + $0x20] sm:$0xff]
        %v831 = vld [vmem:[#allocation4 + $0x28] sm:$0xff]
        %v832 = vld [vmem:[#allocation4 + $0x30] sm:$0xf]
        %v833 = vld [vmem:[#allocation4 + $0x38] sm:$0xf]
        %835 = vset.pattern.permute.xlu0 0
        %836 = vperm.xlu0 %835, %v822
        %v837 = vpop.permute.xlu0 %836
        %840 = vset.pattern.permute.xlu0 0
        %841 = vperm.xlu0 %840, %v823
        %v842 = vpop.permute.xlu0 %841
        %845 = vset.pattern.permute.xlu0 0
        %846 = vperm.xlu0 %845, %v824
        %v847 = vpop.permute.xlu0 %846
        %850 = vset.pattern.permute.xlu0 0
        %851 = vperm.xlu0 %850, %v825
        %v852 = vpop.permute.xlu0 %851
        %v855 = vlaneseq
        %v856 = vshrl.u32 %v855, 7
        %v857 = vsub.s32 0, %v856
        %v858 = vrot.slane %v815, %v857
        %v859 = vlaneseq
        %v860 = vshrl.u32 %v859, 7
        %v861 = vsub.s32 1, %v860
        %v862 = vrot.slane %v815, %v861
        %v865 = vmul.f32 %v837, %v858
        %v866 = vmul.f32 %v837, %v862
        %v867 = vmul.f32 %v842, %v858
        %v868 = vmul.f32 %v842, %v862
        %v869 = vmul.f32 %v847, %v858
        %v870 = vmul.f32 %v847, %v862
        %v871 = vmul.f32 %v852, %v858
        %v872 = vmul.f32 %v852, %v862
        %vm881 = vcmask 1040384
        %v882 = vrot.slane %v865, 7
        %v883 = vrot.slane %v866, 7
        %v884 = vrot.slane %v867, 7
        %v885 = vsel %vm881, %v882, %v884
        %v886 = vrot.slane %v868, 7
        %v887 = vsel %vm881, %v883, %v886
        %v888 = vrot.slane %v869, 7
        %v889 = vsel %vm881, %v884, %v888
        %v890 = vrot.slane %v870, 7
        %v891 = vsel %vm881, %v886, %v890
        %v892 = vrot.slane %v871, 7
        %v893 = vsel %vm881, %v888, %v892
        %v894 = vrot.slane %v872, 7
        %v895 = vsel %vm881, %v890, %v894
        %v904 = vadd.f32 %v826, %v882
        %v905 = vadd.f32 %v827, %v883
        %v906 = vadd.f32 %v828, %v885
        %v907 = vadd.f32 %v829, %v887
        %v908 = vadd.f32 %v830, %v889
        %v909 = vadd.f32 %v831, %v891
        %v910 = vadd.f32 %v832, %v893
        %v911 = vadd.f32 %v833, %v895
        %912 = vst [vmem:[#allocation4] sm:$0xfe] %v904
        %913 = vst [vmem:[#allocation4 + $0x8] sm:$0xfe] %v905
        %914 = vst [vmem:[#allocation4 + $0x10] sm:$0xff] %v906
        %915 = vst [vmem:[#allocation4 + $0x18] sm:$0xff] %v907
        %916 = vst [vmem:[#allocation4 + $0x20] sm:$0xff] %v908
        %917 = vst [vmem:[#allocation4 + $0x28] sm:$0xff] %v909
        %918 = vst [vmem:[#allocation4 + $0x30] sm:$0xf] %v910
        %919 = vst [vmem:[#allocation4 + $0x38] sm:$0xf] %v911
        %s920 = scalar_lea.vmem [#allocation4], 1
        %v921 = vld [vmem:[%s920] ss:$8 sm:$0x3]
        %v922 = vmul.f32 %v921, %v921
        %v924 = vlaneseq
        %v925 = vshrl.u32 %v924, 7
        %v926 = vsub.s32 0, %v925
        %v927 = vrot.slane %v922, %v926
        %v928 = vlaneseq
        %v929 = vshrl.u32 %v928, 7
        %v930 = vsub.s32 1, %v929
        %v931 = vrot.slane %v922, %v930
        %934 = vmatprep.subr.mxu0 0.0
        %935 = vmatpush1.msra.mxu0 %v465
        %936 = vmatprep.subr.mxu0 0.0
        %937 = vmatpush1.msra.mxu0 %v464
        %938 = vmatprep.subr.mxu0 0.0
        %939 = vmatpush1.msra.mxu0 %v463
        %940 = vmatprep.subr.mxu0 0.0
        %941 = vmatpush1.msra.mxu0 %v462
        %942 = vmatprep.subr.mxu0 0.0
        %943 = vmatpush1.msra.mxu0 %v461
        %944 = vmatprep.subr.mxu0 0.0
        %945 = vmatpush1.msra.mxu0 %v460
        %946 = vmatprep.subr.mxu0 0.0
        %947 = vmatpush1.msra.mxu0 %v459
        %948 = vmatprep.subr.mxu0 0.0
        %949 = vmatpush1.msra.mxu0 %v458
        %950 = vmatprep.subr.mxu0 0.0
        %951 = vmatpush1.msra.mxu0 %v457
        %952 = vmatprep.subr.mxu0 0.0
        %953 = vmatpush1.msra.mxu0 %v456
        %954 = vmatprep.subr.mxu0 0.0
        %955 = vmatpush1.msra.mxu0 %v455
        %956 = vmatprep.subr.mxu0 0.0
        %957 = vmatpush1.msra.mxu0 %v454
        %958 = vmatprep.subr.mxu0 0.0
        %959 = vmatpush1.msra.mxu0 %v453
        %960 = vmatprep.subr.mxu0 0.0
        %961 = vmatpush1.msra.mxu0 %v452
        %962 = vmatprep.subr.mxu0 0.0
        %963 = vmatpush1.msra.mxu0 %v451
        %964 = vmatprep.subr.mxu0 0.0
        %965 = vmatpush1.msra.mxu0 %v450
        %966 = vmatprep.subr.mxu0 0.0
        %967 = vmatpush2.msra.mxu0 %v481
        %968 = vmatprep.subr.mxu0 0.0
        %969 = vmatpush2.msra.mxu0 %v480
        %970 = vmatprep.subr.mxu0 0.0
        %971 = vmatpush2.msra.mxu0 %v479
        %972 = vmatprep.subr.mxu0 0.0
        %973 = vmatpush2.msra.mxu0 %v478
        %974 = vmatprep.subr.mxu0 0.0
        %975 = vmatpush2.msra.mxu0 %v477
        %976 = vmatprep.subr.mxu0 0.0
        %977 = vmatpush2.msra.mxu0 %v476
        %978 = vmatprep.subr.mxu0 0.0
        %979 = vmatpush2.msra.mxu0 %v475
        %980 = vmatprep.subr.mxu0 0.0
        %981 = vmatpush2.msra.mxu0 %v474
        %982 = vmatprep.subr.mxu0 0.0
        %983 = vmatpush2.msra.mxu0 %v473
        %984 = vmatprep.subr.mxu0 0.0
        %985 = vmatpush2.msra.mxu0 %v472
        %986 = vmatprep.subr.mxu0 0.0
        %987 = vmatpush2.msra.mxu0 %v471
        %988 = vmatprep.subr.mxu0 0.0
        %989 = vmatpush2.msra.mxu0 %v470
        %990 = vmatprep.subr.mxu0 0.0
        %991 = vmatpush2.msra.mxu0 %v469
        %992 = vmatprep.subr.mxu0 0.0
        %993 = vmatpush2.msra.mxu0 %v468
        %994 = vmatprep.subr.mxu0 0.0
        %995 = vmatpush2.msra.mxu0 %v467
        %996 = vmatprep.subr.mxu0 0.0
        %997 = vmatpush2.msra.mxu0 %v466
        %998 = vmatprep.mubr.f32.mxu0 %v931
        %999 = vmatmul.mubr.f32.gmra.mxu0 %v927
        %v1000 = vpop.f32.mrf.mxu0
        %v1001 = vadd.f32 1e-12, %v1000
        %v1002 = vpop.f32.mrf.mxu0
        %1003 = vdwg.mxu0
        %v1004 = vrsqrt.pop %v1001
        %v1006 = vsel %vm719, %v1004, 0
        %1008 = vmatprep.subr.mxu0 0.0
        %1009 = vmatpush1.msra.mxu0 0.0
        %1010 = vmatprep.subr.mxu0 0.0
        %1011 = vmatpush1.msra.mxu0 0.0
        %1012 = vmatprep.subr.mxu0 0.0
        %1013 = vmatpush1.msra.mxu0 0.0
        %1014 = vmatprep.subr.mxu0 0.0
        %1015 = vmatpush1.msra.mxu0 0.0
        %1016 = vmatprep.subr.mxu0 0.0
        %1017 = vmatpush1.msra.mxu0 0.0
        %1018 = vmatprep.subr.mxu0 0.0
        %1019 = vmatpush1.msra.mxu0 0.0
        %1020 = vmatprep.subr.mxu0 0.0
        %1021 = vmatpush1.msra.mxu0 0.0
        %1022 = vmatprep.subr.mxu0 0.0
        %1023 = vmatpush1.msra.mxu0 0.0
        %1024 = vmatprep.subr.mxu0 0.0
        %1025 = vmatpush1.msra.mxu0 0.0
        %1026 = vmatprep.subr.mxu0 0.0
        %1027 = vmatpush1.msra.mxu0 0.0
        %1028 = vmatprep.subr.mxu0 0.0
        %1029 = vmatpush1.msra.mxu0 0.0
        %1030 = vmatprep.subr.mxu0 0.0
        %1031 = vmatpush1.msra.mxu0 0.0
        %1032 = vmatprep.subr.mxu0 0.0
        %1033 = vmatpush1.msra.mxu0 0.0
        %1034 = vmatprep.subr.mxu0 0.0
        %1035 = vmatpush1.msra.mxu0 0.0
        %1036 = vmatprep.subr.mxu0 0.0
        %1037 = vmatpush1.msra.mxu0 0.0
        %1038 = vmatprep.subr.mxu0 %v483
        %1039 = vmatpush1.msra.mxu0 %v482
        %1040 = vmatprep.subr.mxu0 0.0
        %1041 = vmatpush2.msra.mxu0 0.0
        %1042 = vmatprep.subr.mxu0 0.0
        %1043 = vmatpush2.msra.mxu0 0.0
        %1044 = vmatprep.subr.mxu0 0.0
        %1045 = vmatpush2.msra.mxu0 0.0
        %1046 = vmatprep.subr.mxu0 0.0
        %1047 = vmatpush2.msra.mxu0 0.0
        %1048 = vmatprep.subr.mxu0 0.0
        %1049 = vmatpush2.msra.mxu0 0.0
        %1050 = vmatprep.subr.mxu0 0.0
        %1051 = vmatpush2.msra.mxu0 0.0
        %1052 = vmatprep.subr.mxu0 0.0
        %1053 = vmatpush2.msra.mxu0 0.0
        %1054 = vmatprep.subr.mxu0 0.0
        %1055 = vmatpush2.msra.mxu0 0.0
        %1056 = vmatprep.subr.mxu0 0.0
        %1057 = vmatpush2.msra.mxu0 0.0
        %1058 = vmatprep.subr.mxu0 0.0
        %1059 = vmatpush2.msra.mxu0 0.0
        %1060 = vmatprep.subr.mxu0 0.0
        %1061 = vmatpush2.msra.mxu0 0.0
        %1062 = vmatprep.subr.mxu0 0.0
        %1063 = vmatpush2.msra.mxu0 0.0
        %1064 = vmatprep.subr.mxu0 0.0
        %1065 = vmatpush2.msra.mxu0 0.0
        %1066 = vmatprep.subr.mxu0 0.0
        %1067 = vmatpush2.msra.mxu0 0.0
        %1068 = vmatprep.subr.mxu0 0.0
        %1069 = vmatpush2.msra.mxu0 0.0
        %1070 = vmatprep.subr.mxu0 0.0
        %1071 = vmatpush2.msra.mxu0 0.0
        %1072 = vmatprep.mubr.f32.mxu0 0.0
        %1073 = vmatmul.mubr.f32.gmra.mxu0 %v1006
        %v1074 = vpop.f32.mrf.mxu0
        %v1075 = vadd.f32 0.0, %v1074
        %v1076 = vpop.f32.mrf.mxu0
        %v1077 = vadd.f32 0.0, %v1076
        %1078 = vdwg.mxu0
        %v1079 = vsub.f32 0.0, %v921
        %v1082 = vcombine.low %v1075, %v1077
        %v1084 = vunpack.c.l.s4 1966171168
        %v1085 = vunpack.c.0.s8 %v1084
        %v1086 = vlaneseq
        %v1087 = vshrl.u32 %v1086, 7
        %v1088 = vsub.s32 %v1085, %v1087
        %v1089 = vrot.slane %v1082, %v1088
        %v1091 = vunpack.c.l.s4 1966171168
        %v1092 = vunpack.c.0.s8 %v1091
        %v1093 = vlaneseq
        %v1094 = vshrl.u32 %v1093, 7
        %v1095 = vsub.s32 %v1092, %v1094
        %v1096 = vrot.slane %v1089, %v1095
        %v1098 = vmul.f32 %v1079, %v1096
        %s1099 = scalar_lea.vmem [#allocation3], 1
        %v1100 = vld [vmem:[%s1099] ss:$8 sm:$0x3]
        %v1101 = vsub.f32 %v1098, %v1100
        %1102 = vst.msk [vmem:[%s1099] ss:$8 sm:$0x3] %vm819, %v1098
        %1103 = vst.msk [vmem:[%s1099] ss:$8 sm:$0x0] %vm819, %v1098
        %s1104 = scalar_lea.vmem %s1, 32
        %v1105 = vld [vmem:[%s1104 + $0x2] sm:$0xff]
        %v1106 = vld [vmem:[%s1104 + $0xa] sm:$0xff]
        %v1107 = vld [vmem:[%s1104 + $0x12] sm:$0xff]
        %v1108 = vld [vmem:[%s1104 + $0x1a] sm:$0x3]
        %v1109 = vld [vmem:[#allocation4] sm:$0xfc]
        %v1110 = vld [vmem:[#allocation4 + $0x8] sm:$0xfc]
        %v1111 = vld [vmem:[#allocation4 + $0x10] sm:$0xff]
        %v1112 = vld [vmem:[#allocation4 + $0x18] sm:$0xff]
        %v1113 = vld [vmem:[#allocation4 + $0x20] sm:$0xff]
        %v1114 = vld [vmem:[#allocation4 + $0x28] sm:$0xff]
        %v1115 = vld [vmem:[#allocation4 + $0x30] sm:$0xf]
        %v1116 = vld [vmem:[#allocation4 + $0x38] sm:$0xf]
        %1118 = vset.pattern.permute.xlu0 0
        %1119 = vperm.xlu0 %1118, %v1105
        %v1120 = vpop.permute.xlu0 %1119
        %1123 = vset.pattern.permute.xlu0 0
        %1124 = vperm.xlu0 %1123, %v1106
        %v1125 = vpop.permute.xlu0 %1124
        %1128 = vset.pattern.permute.xlu0 0
        %1129 = vperm.xlu0 %1128, %v1107
        %v1130 = vpop.permute.xlu0 %1129
        %1133 = vset.pattern.permute.xlu0 0
        %1134 = vperm.xlu0 %1133, %v1108
        %v1135 = vpop.permute.xlu0 %1134
        %v1138 = vlaneseq
        %v1139 = vshrl.u32 %v1138, 7
        %v1140 = vsub.s32 0, %v1139
        %v1141 = vrot.slane %v1101, %v1140
        %v1142 = vlaneseq
        %v1143 = vshrl.u32 %v1142, 7
        %v1144 = vsub.s32 1, %v1143
        %v1145 = vrot.slane %v1101, %v1144
        %v1148 = vmul.f32 %v1120, %v1141
        %v1149 = vmul.f32 %v1120, %v1145
        %v1150 = vmul.f32 %v1125, %v1141
        %v1151 = vmul.f32 %v1125, %v1145
        %v1152 = vmul.f32 %v1130, %v1141
        %v1153 = vmul.f32 %v1130, %v1145
        %v1154 = vmul.f32 %v1135, %v1141
        %v1155 = vmul.f32 %v1135, %v1145
        %v1164 = vrot.slane %v1148, 6
        %v1165 = vrot.slane %v1149, 6
        %v1166 = vrot.slane %v1150, 6
        %v1167 = vsel %vm330, %v1164, %v1166
        %v1168 = vrot.slane %v1151, 6
        %v1169 = vsel %vm330, %v1165, %v1168
        %v1170 = vrot.slane %v1152, 6
        %v1171 = vsel %vm330, %v1166, %v1170
        %v1172 = vrot.slane %v1153, 6
        %v1173 = vsel %vm330, %v1168, %v1172
        %v1174 = vrot.slane %v1154, 6
        %v1175 = vsel %vm330, %v1170, %v1174
        %v1176 = vrot.slane %v1155, 6
        %v1177 = vsel %vm330, %v1172, %v1176
        %v1186 = vadd.f32 %v1109, %v1164
        %v1187 = vadd.f32 %v1110, %v1165
        %v1188 = vadd.f32 %v1111, %v1167
        %v1189 = vadd.f32 %v1112, %v1169
        %v1190 = vadd.f32 %v1113, %v1171
        %v1191 = vadd.f32 %v1114, %v1173
        %v1192 = vadd.f32 %v1115, %v1175
        %v1193 = vadd.f32 %v1116, %v1177
        %1194 = vst [vmem:[#allocation4] sm:$0xfc] %v1186
        %1195 = vst [vmem:[#allocation4 + $0x8] sm:$0xfc] %v1187
        %1196 = vst [vmem:[#allocation4 + $0x10] sm:$0xff] %v1188
        %1197 = vst [vmem:[#allocation4 + $0x18] sm:$0xff] %v1189
        %1198 = vst [vmem:[#allocation4 + $0x20] sm:$0xff] %v1190
        %1199 = vst [vmem:[#allocation4 + $0x28] sm:$0xff] %v1191
        %1200 = vst [vmem:[#allocation4 + $0x30] sm:$0xf] %v1192
        %1201 = vst [vmem:[#allocation4 + $0x38] sm:$0xf] %v1193
        %s1202 = scalar_lea.vmem [#allocation4], 2
        %v1203 = vld [vmem:[%s1202] ss:$8 sm:$0x3]
        %v1204 = vmul.f32 %v1203, %v1203
        %v1206 = vlaneseq
        %v1207 = vshrl.u32 %v1206, 7
        %v1208 = vsub.s32 0, %v1207
        %v1209 = vrot.slane %v1204, %v1208
        %v1210 = vlaneseq
        %v1211 = vshrl.u32 %v1210, 7
        %v1212 = vsub.s32 1, %v1211
        %v1213 = vrot.slane %v1204, %v1212
        %1216 = vmatprep.subr.mxu0 0.0
        %1217 = vmatpush1.msra.mxu0 %v465
        %1218 = vmatprep.subr.mxu0 0.0
        %1219 = vmatpush1.msra.mxu0 %v464
        %1220 = vmatprep.subr.mxu0 0.0
        %1221 = vmatpush1.msra.mxu0 %v463
        %1222 = vmatprep.subr.mxu0 0.0
        %1223 = vmatpush1.msra.mxu0 %v462
        %1224 = vmatprep.subr.mxu0 0.0
        %1225 = vmatpush1.msra.mxu0 %v461
        %1226 = vmatprep.subr.mxu0 0.0
        %1227 = vmatpush1.msra.mxu0 %v460
        %1228 = vmatprep.subr.mxu0 0.0
        %1229 = vmatpush1.msra.mxu0 %v459
        %1230 = vmatprep.subr.mxu0 0.0
        %1231 = vmatpush1.msra.mxu0 %v458
        %1232 = vmatprep.subr.mxu0 0.0
        %1233 = vmatpush1.msra.mxu0 %v457
        %1234 = vmatprep.subr.mxu0 0.0
        %1235 = vmatpush1.msra.mxu0 %v456
        %1236 = vmatprep.subr.mxu0 0.0
        %1237 = vmatpush1.msra.mxu0 %v455
        %1238 = vmatprep.subr.mxu0 0.0
        %1239 = vmatpush1.msra.mxu0 %v454
        %1240 = vmatprep.subr.mxu0 0.0
        %1241 = vmatpush1.msra.mxu0 %v453
        %1242 = vmatprep.subr.mxu0 0.0
        %1243 = vmatpush1.msra.mxu0 %v452
        %1244 = vmatprep.subr.mxu0 0.0
        %1245 = vmatpush1.msra.mxu0 %v451
        %1246 = vmatprep.subr.mxu0 0.0
        %1247 = vmatpush1.msra.mxu0 %v450
        %1248 = vmatprep.subr.mxu0 0.0
        %1249 = vmatpush2.msra.mxu0 %v481
        %1250 = vmatprep.subr.mxu0 0.0
        %1251 = vmatpush2.msra.mxu0 %v480
        %1252 = vmatprep.subr.mxu0 0.0
        %1253 = vmatpush2.msra.mxu0 %v479
        %1254 = vmatprep.subr.mxu0 0.0
        %1255 = vmatpush2.msra.mxu0 %v478
        %1256 = vmatprep.subr.mxu0 0.0
        %1257 = vmatpush2.msra.mxu0 %v477
        %1258 = vmatprep.subr.mxu0 0.0
        %1259 = vmatpush2.msra.mxu0 %v476
        %1260 = vmatprep.subr.mxu0 0.0
        %1261 = vmatpush2.msra.mxu0 %v475
        %1262 = vmatprep.subr.mxu0 0.0
        %1263 = vmatpush2.msra.mxu0 %v474
        %1264 = vmatprep.subr.mxu0 0.0
        %1265 = vmatpush2.msra.mxu0 %v473
        %1266 = vmatprep.subr.mxu0 0.0
        %1267 = vmatpush2.msra.mxu0 %v472
        %1268 = vmatprep.subr.mxu0 0.0
        %1269 = vmatpush2.msra.mxu0 %v471
        %1270 = vmatprep.subr.mxu0 0.0
        %1271 = vmatpush2.msra.mxu0 %v470
        %1272 = vmatprep.subr.mxu0 0.0
        %1273 = vmatpush2.msra.mxu0 %v469
        %1274 = vmatprep.subr.mxu0 0.0
        %1275 = vmatpush2.msra.mxu0 %v468
        %1276 = vmatprep.subr.mxu0 0.0
        %1277 = vmatpush2.msra.mxu0 %v467
        %1278 = vmatprep.subr.mxu0 0.0
        %1279 = vmatpush2.msra.mxu0 %v466
        %1280 = vmatprep.mubr.f32.mxu0 %v1213
        %1281 = vmatmul.mubr.f32.gmra.mxu0 %v1209
        %v1282 = vpop.f32.mrf.mxu0
        %v1283 = vadd.f32 1e-12, %v1282
        %v1284 = vpop.f32.mrf.mxu0
        %1285 = vdwg.mxu0
        %v1286 = vrsqrt.pop %v1283
        %v1288 = vsel %vm719, %v1286, 0
        %1290 = vmatprep.subr.mxu0 0.0
        %1291 = vmatpush1.msra.mxu0 0.0
        %1292 = vmatprep.subr.mxu0 0.0
        %1293 = vmatpush1.msra.mxu0 0.0
        %1294 = vmatprep.subr.mxu0 0.0
        %1295 = vmatpush1.msra.mxu0 0.0
        %1296 = vmatprep.subr.mxu0 0.0
        %1297 = vmatpush1.msra.mxu0 0.0
        %1298 = vmatprep.subr.mxu0 0.0
        %1299 = vmatpush1.msra.mxu0 0.0
        %1300 = vmatprep.subr.mxu0 0.0
        %1301 = vmatpush1.msra.mxu0 0.0
        %1302 = vmatprep.subr.mxu0 0.0
        %1303 = vmatpush1.msra.mxu0 0.0
        %1304 = vmatprep.subr.mxu0 0.0
        %1305 = vmatpush1.msra.mxu0 0.0
        %1306 = vmatprep.subr.mxu0 0.0
        %1307 = vmatpush1.msra.mxu0 0.0
        %1308 = vmatprep.subr.mxu0 0.0
        %1309 = vmatpush1.msra.mxu0 0.0
        %1310 = vmatprep.subr.mxu0 0.0
        %1311 = vmatpush1.msra.mxu0 0.0
        %1312 = vmatprep.subr.mxu0 0.0
        %1313 = vmatpush1.msra.mxu0 0.0
        %1314 = vmatprep.subr.mxu0 0.0
        %1315 = vmatpush1.msra.mxu0 0.0
        %1316 = vmatprep.subr.mxu0 0.0
        %1317 = vmatpush1.msra.mxu0 0.0
        %1318 = vmatprep.subr.mxu0 0.0
        %1319 = vmatpush1.msra.mxu0 0.0
        %1320 = vmatprep.subr.mxu0 %v483
        %1321 = vmatpush1.msra.mxu0 %v482
        %1322 = vmatprep.subr.mxu0 0.0
        %1323 = vmatpush2.msra.mxu0 0.0
        %1324 = vmatprep.subr.mxu0 0.0
        %1325 = vmatpush2.msra.mxu0 0.0
        %1326 = vmatprep.subr.mxu0 0.0
        %1327 = vmatpush2.msra.mxu0 0.0
        %1328 = vmatprep.subr.mxu0 0.0
        %1329 = vmatpush2.msra.mxu0 0.0
        %1330 = vmatprep.subr.mxu0 0.0
        %1331 = vmatpush2.msra.mxu0 0.0
        %1332 = vmatprep.subr.mxu0 0.0
        %1333 = vmatpush2.msra.mxu0 0.0
        %1334 = vmatprep.subr.mxu0 0.0
        %1335 = vmatpush2.msra.mxu0 0.0
        %1336 = vmatprep.subr.mxu0 0.0
        %1337 = vmatpush2.msra.mxu0 0.0
        %1338 = vmatprep.subr.mxu0 0.0
        %1339 = vmatpush2.msra.mxu0 0.0
        %1340 = vmatprep.subr.mxu0 0.0
        %1341 = vmatpush2.msra.mxu0 0.0
        %1342 = vmatprep.subr.mxu0 0.0
        %1343 = vmatpush2.msra.mxu0 0.0
        %1344 = vmatprep.subr.mxu0 0.0
        %1345 = vmatpush2.msra.mxu0 0.0
        %1346 = vmatprep.subr.mxu0 0.0
        %1347 = vmatpush2.msra.mxu0 0.0
        %1348 = vmatprep.subr.mxu0 0.0
        %1349 = vmatpush2.msra.mxu0 0.0
        %1350 = vmatprep.subr.mxu0 0.0
        %1351 = vmatpush2.msra.mxu0 0.0
        %1352 = vmatprep.subr.mxu0 0.0
        %1353 = vmatpush2.msra.mxu0 0.0
        %1354 = vmatprep.mubr.f32.mxu0 0.0
        %1355 = vmatmul.mubr.f32.gmra.mxu0 %v1288
        %v1356 = vpop.f32.mrf.mxu0
        %v1357 = vadd.f32 0.0, %v1356
        %v1358 = vpop.f32.mrf.mxu0
        %v1359 = vadd.f32 0.0, %v1358
        %1360 = vdwg.mxu0
        %v1361 = vsub.f32 0.0, %v1203
        %v1364 = vcombine.low %v1357, %v1359
        %v1366 = vunpack.c.l.s4 1966171168
        %v1367 = vunpack.c.0.s8 %v1366
        %v1368 = vlaneseq
        %v1369 = vshrl.u32 %v1368, 7
        %v1370 = vsub.s32 %v1367, %v1369
        %v1371 = vrot.slane %v1364, %v1370
        %v1373 = vunpack.c.l.s4 1966171168
        %v1374 = vunpack.c.0.s8 %v1373
        %v1375 = vlaneseq
        %v1376 = vshrl.u32 %v1375, 7
        %v1377 = vsub.s32 %v1374, %v1376
        %v1378 = vrot.slane %v1371, %v1377
        %v1380 = vmul.f32 %v1361, %v1378
        %s1381 = scalar_lea.vmem [#allocation3], 2
        %v1382 = vld [vmem:[%s1381] ss:$8 sm:$0x3]
        %v1383 = vsub.f32 %v1380, %v1382
        %1384 = vst.msk [vmem:[%s1381] ss:$8 sm:$0x3] %vm819, %v1380
        %1385 = vst.msk [vmem:[%s1381] ss:$8 sm:$0x0] %vm819, %v1380
        %s1386 = scalar_lea.vmem %s1, 64
        %v1387 = vld [vmem:[%s1386 + $0x3] sm:$0xff]
        %v1388 = vld [vmem:[%s1386 + $0xb] sm:$0xff]
        %v1389 = vld [vmem:[%s1386 + $0x13] sm:$0xff]
        %v1390 = vld [vmem:[%s1386 + $0x1b] sm:$0x1]
        %v1391 = vld [vmem:[#allocation4] sm:$0xf8]
        %v1392 = vld [vmem:[#allocation4 + $0x8] sm:$0xf8]
        %v1393 = vld [vmem:[#allocation4 + $0x10] sm:$0xff]
        %v1394 = vld [vmem:[#allocation4 + $0x18] sm:$0xff]
        %v1395 = vld [vmem:[#allocation4 + $0x20] sm:$0xff]
        %v1396 = vld [vmem:[#allocation4 + $0x28] sm:$0xff]
        %v1397 = vld [vmem:[#allocation4 + $0x30] sm:$0xf]
        %v1398 = vld [vmem:[#allocation4 + $0x38] sm:$0xf]
        %1400 = vset.pattern.permute.xlu0 0
        %1401 = vperm.xlu0 %1400, %v1387
        %v1402 = vpop.permute.xlu0 %1401
        %1405 = vset.pattern.permute.xlu0 0
        %1406 = vperm.xlu0 %1405, %v1388
        %v1407 = vpop.permute.xlu0 %1406
        %1410 = vset.pattern.permute.xlu0 0
        %1411 = vperm.xlu0 %1410, %v1389
        %v1412 = vpop.permute.xlu0 %1411
        %1415 = vset.pattern.permute.xlu0 0
        %1416 = vperm.xlu0 %1415, %v1390
        %v1417 = vpop.permute.xlu0 %1416
        %v1420 = vlaneseq
        %v1421 = vshrl.u32 %v1420, 7
        %v1422 = vsub.s32 0, %v1421
        %v1423 = vrot.slane %v1383, %v1422
        %v1424 = vlaneseq
        %v1425 = vshrl.u32 %v1424, 7
        %v1426 = vsub.s32 1, %v1425
        %v1427 = vrot.slane %v1383, %v1426
        %v1430 = vmul.f32 %v1402, %v1423
        %v1431 = vmul.f32 %v1402, %v1427
        %v1432 = vmul.f32 %v1407, %v1423
        %v1433 = vmul.f32 %v1407, %v1427
        %v1434 = vmul.f32 %v1412, %v1423
        %v1435 = vmul.f32 %v1412, %v1427
        %v1436 = vmul.f32 %v1417, %v1423
        %v1437 = vmul.f32 %v1417, %v1427
        %vm1446 = vcmask 1042432
        %v1447 = vrot.slane %v1430, 5
        %v1448 = vrot.slane %v1431, 5
        %v1449 = vrot.slane %v1432, 5
        %v1450 = vsel %vm1446, %v1447, %v1449
        %v1451 = vrot.slane %v1433, 5
        %v1452 = vsel %vm1446, %v1448, %v1451
        %v1453 = vrot.slane %v1434, 5
        %v1454 = vsel %vm1446, %v1449, %v1453
        %v1455 = vrot.slane %v1435, 5
        %v1456 = vsel %vm1446, %v1451, %v1455
        %v1457 = vrot.slane %v1436, 5
        %v1458 = vsel %vm1446, %v1453, %v1457
        %v1459 = vrot.slane %v1437, 5
        %v1460 = vsel %vm1446, %v1455, %v1459
        %v1469 = vadd.f32 %v1391, %v1447
        %v1470 = vadd.f32 %v1392, %v1448
        %v1471 = vadd.f32 %v1393, %v1450
        %v1472 = vadd.f32 %v1394, %v1452
        %v1473 = vadd.f32 %v1395, %v1454
        %v1474 = vadd.f32 %v1396, %v1456
        %v1475 = vadd.f32 %v1397, %v1458
        %v1476 = vadd.f32 %v1398, %v1460
        %1477 = vst [vmem:[#allocation4] sm:$0xf8] %v1469
        %1478 = vst [vmem:[#allocation4 + $0x8] sm:$0xf8] %v1470
        %1479 = vst [vmem:[#allocation4 + $0x10] sm:$0xff] %v1471
        %1480 = vst [vmem:[#allocation4 + $0x18] sm:$0xff] %v1472
        %1481 = vst [vmem:[#allocation4 + $0x20] sm:$0xff] %v1473
        %1482 = vst [vmem:[#allocation4 + $0x28] sm:$0xff] %v1474
        %1483 = vst [vmem:[#allocation4 + $0x30] sm:$0xf] %v1475
        %1484 = vst [vmem:[#allocation4 + $0x38] sm:$0xf] %v1476
        %s1485 = scalar_lea.vmem [#allocation4], 3
        %v1486 = vld [vmem:[%s1485] ss:$8 sm:$0x3]
        %v1487 = vmul.f32 %v1486, %v1486
        %v1489 = vlaneseq
        %v1490 = vshrl.u32 %v1489, 7
        %v1491 = vsub.s32 0, %v1490
        %v1492 = vrot.slane %v1487, %v1491
        %v1493 = vlaneseq
        %v1494 = vshrl.u32 %v1493, 7
        %v1495 = vsub.s32 1, %v1494
        %v1496 = vrot.slane %v1487, %v1495
        %1499 = vmatprep.subr.mxu0 0.0
        %1500 = vmatpush1.msra.mxu0 %v465
        %1501 = vmatprep.subr.mxu0 0.0
        %1502 = vmatpush1.msra.mxu0 %v464
        %1503 = vmatprep.subr.mxu0 0.0
        %1504 = vmatpush1.msra.mxu0 %v463
        %1505 = vmatprep.subr.mxu0 0.0
        %1506 = vmatpush1.msra.mxu0 %v462
        %1507 = vmatprep.subr.mxu0 0.0
        %1508 = vmatpush1.msra.mxu0 %v461
        %1509 = vmatprep.subr.mxu0 0.0
        %1510 = vmatpush1.msra.mxu0 %v460
        %1511 = vmatprep.subr.mxu0 0.0
        %1512 = vmatpush1.msra.mxu0 %v459
        %1513 = vmatprep.subr.mxu0 0.0
        %1514 = vmatpush1.msra.mxu0 %v458
        %1515 = vmatprep.subr.mxu0 0.0
        %1516 = vmatpush1.msra.mxu0 %v457
        %1517 = vmatprep.subr.mxu0 0.0
        %1518 = vmatpush1.msra.mxu0 %v456
        %1519 = vmatprep.subr.mxu0 0.0
        %1520 = vmatpush1.msra.mxu0 %v455
        %1521 = vmatprep.subr.mxu0 0.0
        %1522 = vmatpush1.msra.mxu0 %v454
        %1523 = vmatprep.subr.mxu0 0.0
        %1524 = vmatpush1.msra.mxu0 %v453
        %1525 = vmatprep.subr.mxu0 0.0
        %1526 = vmatpush1.msra.mxu0 %v452
        %1527 = vmatprep.subr.mxu0 0.0
        %1528 = vmatpush1.msra.mxu0 %v451
        %1529 = vmatprep.subr.mxu0 0.0
        %1530 = vmatpush1.msra.mxu0 %v450
        %1531 = vmatprep.subr.mxu0 0.0
        %1532 = vmatpush2.msra.mxu0 %v481
        %1533 = vmatprep.subr.mxu0 0.0
        %1534 = vmatpush2.msra.mxu0 %v480
        %1535 = vmatprep.subr.mxu0 0.0
        %1536 = vmatpush2.msra.mxu0 %v479
        %1537 = vmatprep.subr.mxu0 0.0
        %1538 = vmatpush2.msra.mxu0 %v478
        %1539 = vmatprep.subr.mxu0 0.0
        %1540 = vmatpush2.msra.mxu0 %v477
        %1541 = vmatprep.subr.mxu0 0.0
        %1542 = vmatpush2.msra.mxu0 %v476
        %1543 = vmatprep.subr.mxu0 0.0
        %1544 = vmatpush2.msra.mxu0 %v475
        %1545 = vmatprep.subr.mxu0 0.0
        %1546 = vmatpush2.msra.mxu0 %v474
        %1547 = vmatprep.subr.mxu0 0.0
        %1548 = vmatpush2.msra.mxu0 %v473
        %1549 = vmatprep.subr.mxu0 0.0
        %1550 = vmatpush2.msra.mxu0 %v472
        %1551 = vmatprep.subr.mxu0 0.0
        %1552 = vmatpush2.msra.mxu0 %v471
        %1553 = vmatprep.subr.mxu0 0.0
        %1554 = vmatpush2.msra.mxu0 %v470
        %1555 = vmatprep.subr.mxu0 0.0
        %1556 = vmatpush2.msra.mxu0 %v469
        %1557 = vmatprep.subr.mxu0 0.0
        %1558 = vmatpush2.msra.mxu0 %v468
        %1559 = vmatprep.subr.mxu0 0.0
        %1560 = vmatpush2.msra.mxu0 %v467
        %1561 = vmatprep.subr.mxu0 0.0
        %1562 = vmatpush2.msra.mxu0 %v466
        %1563 = vmatprep.mubr.f32.mxu0 %v1496
        %1564 = vmatmul.mubr.f32.gmra.mxu0 %v1492
        %v1565 = vpop.f32.mrf.mxu0
        %v1566 = vadd.f32 1e-12, %v1565
        %v1567 = vpop.f32.mrf.mxu0
        %1568 = vdwg.mxu0
        %v1569 = vrsqrt.pop %v1566
        %v1571 = vsel %vm719, %v1569, 0
        %1573 = vmatprep.subr.mxu0 0.0
        %1574 = vmatpush1.msra.mxu0 0.0
        %1575 = vmatprep.subr.mxu0 0.0
        %1576 = vmatpush1.msra.mxu0 0.0
        %1577 = vmatprep.subr.mxu0 0.0
        %1578 = vmatpush1.msra.mxu0 0.0
        %1579 = vmatprep.subr.mxu0 0.0
        %1580 = vmatpush1.msra.mxu0 0.0
        %1581 = vmatprep.subr.mxu0 0.0
        %1582 = vmatpush1.msra.mxu0 0.0
        %1583 = vmatprep.subr.mxu0 0.0
        %1584 = vmatpush1.msra.mxu0 0.0
        %1585 = vmatprep.subr.mxu0 0.0
        %1586 = vmatpush1.msra.mxu0 0.0
        %1587 = vmatprep.subr.mxu0 0.0
        %1588 = vmatpush1.msra.mxu0 0.0
        %1589 = vmatprep.subr.mxu0 0.0
        %1590 = vmatpush1.msra.mxu0 0.0
        %1591 = vmatprep.subr.mxu0 0.0
        %1592 = vmatpush1.msra.mxu0 0.0
        %1593 = vmatprep.subr.mxu0 0.0
        %1594 = vmatpush1.msra.mxu0 0.0
        %1595 = vmatprep.subr.mxu0 0.0
        %1596 = vmatpush1.msra.mxu0 0.0
        %1597 = vmatprep.subr.mxu0 0.0
        %1598 = vmatpush1.msra.mxu0 0.0
        %1599 = vmatprep.subr.mxu0 0.0
        %1600 = vmatpush1.msra.mxu0 0.0
        %1601 = vmatprep.subr.mxu0 0.0
        %1602 = vmatpush1.msra.mxu0 0.0
        %1603 = vmatprep.subr.mxu0 %v483
        %1604 = vmatpush1.msra.mxu0 %v482
        %1605 = vmatprep.subr.mxu0 0.0
        %1606 = vmatpush2.msra.mxu0 0.0
        %1607 = vmatprep.subr.mxu0 0.0
        %1608 = vmatpush2.msra.mxu0 0.0
        %1609 = vmatprep.subr.mxu0 0.0
        %1610 = vmatpush2.msra.mxu0 0.0
        %1611 = vmatprep.subr.mxu0 0.0
        %1612 = vmatpush2.msra.mxu0 0.0
        %1613 = vmatprep.subr.mxu0 0.0
        %1614 = vmatpush2.msra.mxu0 0.0
        %1615 = vmatprep.subr.mxu0 0.0
        %1616 = vmatpush2.msra.mxu0 0.0
        %1617 = vmatprep.subr.mxu0 0.0
        %1618 = vmatpush2.msra.mxu0 0.0
        %1619 = vmatprep.subr.mxu0 0.0
        %1620 = vmatpush2.msra.mxu0 0.0
        %1621 = vmatprep.subr.mxu0 0.0
        %1622 = vmatpush2.msra.mxu0 0.0
        %1623 = vmatprep.subr.mxu0 0.0
        %1624 = vmatpush2.msra.mxu0 0.0
        %1625 = vmatprep.subr.mxu0 0.0
        %1626 = vmatpush2.msra.mxu0 0.0
        %1627 = vmatprep.subr.mxu0 0.0
        %1628 = vmatpush2.msra.mxu0 0.0
        %1629 = vmatprep.subr.mxu0 0.0
        %1630 = vmatpush2.msra.mxu0 0.0
        %1631 = vmatprep.subr.mxu0 0.0
        %1632 = vmatpush2.msra.mxu0 0.0
        %1633 = vmatprep.subr.mxu0 0.0
        %1634 = vmatpush2.msra.mxu0 0.0
        %1635 = vmatprep.subr.mxu0 0.0
        %1636 = vmatpush2.msra.mxu0 0.0
        %1637 = vmatprep.mubr.f32.mxu0 0.0
        %1638 = vmatmul.mubr.f32.gmra.mxu0 %v1571
        %v1639 = vpop.f32.mrf.mxu0
        %v1640 = vadd.f32 0.0, %v1639
        %v1641 = vpop.f32.mrf.mxu0
        %v1642 = vadd.f32 0.0, %v1641
        %1643 = vdwg.mxu0
        %v1644 = vsub.f32 0.0, %v1486
        %v1647 = vcombine.low %v1640, %v1642
        %v1649 = vunpack.c.l.s4 1966171168
        %v1650 = vunpack.c.0.s8 %v1649
        %v1651 = vlaneseq
        %v1652 = vshrl.u32 %v1651, 7
        %v1653 = vsub.s32 %v1650, %v1652
        %v1654 = vrot.slane %v1647, %v1653
        %v1656 = vunpack.c.l.s4 1966171168
        %v1657 = vunpack.c.0.s8 %v1656
        %v1658 = vlaneseq
        %v1659 = vshrl.u32 %v1658, 7
        %v1660 = vsub.s32 %v1657, %v1659
        %v1661 = vrot.slane %v1654, %v1660
        %v1663 = vmul.f32 %v1644, %v1661
        %s1664 = scalar_lea.vmem [#allocation3], 3
        %v1665 = vld [vmem:[%s1664] ss:$8 sm:$0x3]
        %v1666 = vsub.f32 %v1663, %v1665
        %1667 = vst.msk [vmem:[%s1664] ss:$8 sm:$0x3] %vm819, %v1663
        %1668 = vst.msk [vmem:[%s1664] ss:$8 sm:$0x0] %vm819, %v1663
        %s1669 = scalar_lea.vmem %s1, 96
        %v1670 = vld [vmem:[%s1669 + $0x4] sm:$0xff]
        %v1671 = vld [vmem:[%s1669 + $0xc] sm:$0xff]
        %v1672 = vld [vmem:[%s1669 + $0x14] sm:$0xff]
        %v1673 = vld [vmem:[#allocation4] sm:$0xf0]
        %v1674 = vld [vmem:[#allocation4 + $0x8] sm:$0xf0]
        %v1675 = vld [vmem:[#allocation4 + $0x10] sm:$0xff]
        %v1676 = vld [vmem:[#allocation4 + $0x18] sm:$0xff]
        %v1677 = vld [vmem:[#allocation4 + $0x20] sm:$0xff]
        %v1678 = vld [vmem:[#allocation4 + $0x28] sm:$0xff]
        %v1679 = vld [vmem:[#allocation4 + $0x30] sm:$0xf]
        %v1680 = vld [vmem:[#allocation4 + $0x38] sm:$0xf]
        %1682 = vset.pattern.permute.xlu0 0
        %1683 = vperm.xlu0 %1682, %v1670
        %v1684 = vpop.permute.xlu0 %1683
        %1687 = vset.pattern.permute.xlu0 0
        %1688 = vperm.xlu0 %1687, %v1671
        %v1689 = vpop.permute.xlu0 %1688
        %1692 = vset.pattern.permute.xlu0 0
        %1693 = vperm.xlu0 %1692, %v1672
        %v1694 = vpop.permute.xlu0 %1693
        %v1697 = vlaneseq
        %v1698 = vshrl.u32 %v1697, 7
        %v1699 = vsub.s32 0, %v1698
        %v1700 = vrot.slane %v1666, %v1699
        %v1701 = vlaneseq
        %v1702 = vshrl.u32 %v1701, 7
        %v1703 = vsub.s32 1, %v1702
        %v1704 = vrot.slane %v1666, %v1703
        %v1707 = vmul.f32 %v1684, %v1700
        %v1708 = vmul.f32 %v1684, %v1704
        %v1709 = vmul.f32 %v1689, %v1700
        %v1710 = vmul.f32 %v1689, %v1704
        %v1711 = vmul.f32 %v1694, %v1700
        %v1712 = vmul.f32 %v1694, %v1704
        %v1719 = vrot.slane %v1707, 4
        %v1720 = vrot.slane %v1708, 4
        %v1721 = vrot.slane %v1709, 4
        %v1722 = vsel %vm523, %v1719, %v1721
        %v1723 = vrot.slane %v1710, 4
        %v1724 = vsel %vm523, %v1720, %v1723
        %v1725 = vrot.slane %v1711, 4
        %v1726 = vsel %vm523, %v1721, %v1725
        %v1727 = vrot.slane %v1712, 4
        %v1728 = vsel %vm523, %v1723, %v1727
        %v1737 = vadd.f32 %v1673, %v1719
        %v1738 = vadd.f32 %v1674, %v1720
        %v1739 = vadd.f32 %v1675, %v1722
        %v1740 = vadd.f32 %v1676, %v1724
        %v1741 = vadd.f32 %v1677, %v1726
        %v1742 = vadd.f32 %v1678, %v1728
        %v1743 = vadd.f32 %v1679, %v1725
        %v1744 = vadd.f32 %v1680, %v1727
        %1745 = vst [vmem:[#allocation4] sm:$0xf0] %v1737
        %1746 = vst [vmem:[#allocation4 + $0x8] sm:$0xf0] %v1738
        %1747 = vst [vmem:[#allocation4 + $0x10] sm:$0xff] %v1739
        %1748 = vst [vmem:[#allocation4 + $0x18] sm:$0xff] %v1740
        %1749 = vst [vmem:[#allocation4 + $0x20] sm:$0xff] %v1741
        %1750 = vst [vmem:[#allocation4 + $0x28] sm:$0xff] %v1742
        %1751 = vst [vmem:[#allocation4 + $0x30] sm:$0xf] %v1743
        %1752 = vst [vmem:[#allocation4 + $0x38] sm:$0xf] %v1744
        %s1753 = scalar_lea.vmem [#allocation4], 4
        %v1754 = vld [vmem:[%s1753] ss:$8 sm:$0x3]
        %v1755 = vmul.f32 %v1754, %v1754
        %v1757 = vlaneseq
        %v1758 = vshrl.u32 %v1757, 7
        %v1759 = vsub.s32 0, %v1758
        %v1760 = vrot.slane %v1755, %v1759
        %v1761 = vlaneseq
        %v1762 = vshrl.u32 %v1761, 7
        %v1763 = vsub.s32 1, %v1762
        %v1764 = vrot.slane %v1755, %v1763
        %1767 = vmatprep.subr.mxu0 0.0
        %1768 = vmatpush1.msra.mxu0 %v465
        %1769 = vmatprep.subr.mxu0 0.0
        %1770 = vmatpush1.msra.mxu0 %v464
        %1771 = vmatprep.subr.mxu0 0.0
        %1772 = vmatpush1.msra.mxu0 %v463
        %1773 = vmatprep.subr.mxu0 0.0
        %1774 = vmatpush1.msra.mxu0 %v462
        %1775 = vmatprep.subr.mxu0 0.0
        %1776 = vmatpush1.msra.mxu0 %v461
        %1777 = vmatprep.subr.mxu0 0.0
        %1778 = vmatpush1.msra.mxu0 %v460
        %1779 = vmatprep.subr.mxu0 0.0
        %1780 = vmatpush1.msra.mxu0 %v459
        %1781 = vmatprep.subr.mxu0 0.0
        %1782 = vmatpush1.msra.mxu0 %v458
        %1783 = vmatprep.subr.mxu0 0.0
        %1784 = vmatpush1.msra.mxu0 %v457
        %1785 = vmatprep.subr.mxu0 0.0
        %1786 = vmatpush1.msra.mxu0 %v456
        %1787 = vmatprep.subr.mxu0 0.0
        %1788 = vmatpush1.msra.mxu0 %v455
        %1789 = vmatprep.subr.mxu0 0.0
        %1790 = vmatpush1.msra.mxu0 %v454
        %1791 = vmatprep.subr.mxu0 0.0
        %1792 = vmatpush1.msra.mxu0 %v453
        %1793 = vmatprep.subr.mxu0 0.0
        %1794 = vmatpush1.msra.mxu0 %v452
        %1795 = vmatprep.subr.mxu0 0.0
        %1796 = vmatpush1.msra.mxu0 %v451
        %1797 = vmatprep.subr.mxu0 0.0
        %1798 = vmatpush1.msra.mxu0 %v450
        %1799 = vmatprep.subr.mxu0 0.0
        %1800 = vmatpush2.msra.mxu0 %v481
        %1801 = vmatprep.subr.mxu0 0.0
        %1802 = vmatpush2.msra.mxu0 %v480
        %1803 = vmatprep.subr.mxu0 0.0
        %1804 = vmatpush2.msra.mxu0 %v479
        %1805 = vmatprep.subr.mxu0 0.0
        %1806 = vmatpush2.msra.mxu0 %v478
        %1807 = vmatprep.subr.mxu0 0.0
        %1808 = vmatpush2.msra.mxu0 %v477
        %1809 = vmatprep.subr.mxu0 0.0
        %1810 = vmatpush2.msra.mxu0 %v476
        %1811 = vmatprep.subr.mxu0 0.0
        %1812 = vmatpush2.msra.mxu0 %v475
        %1813 = vmatprep.subr.mxu0 0.0
        %1814 = vmatpush2.msra.mxu0 %v474
        %1815 = vmatprep.subr.mxu0 0.0
        %1816 = vmatpush2.msra.mxu0 %v473
        %1817 = vmatprep.subr.mxu0 0.0
        %1818 = vmatpush2.msra.mxu0 %v472
        %1819 = vmatprep.subr.mxu0 0.0
        %1820 = vmatpush2.msra.mxu0 %v471
        %1821 = vmatprep.subr.mxu0 0.0
        %1822 = vmatpush2.msra.mxu0 %v470
        %1823 = vmatprep.subr.mxu0 0.0
        %1824 = vmatpush2.msra.mxu0 %v469
        %1825 = vmatprep.subr.mxu0 0.0
        %1826 = vmatpush2.msra.mxu0 %v468
        %1827 = vmatprep.subr.mxu0 0.0
        %1828 = vmatpush2.msra.mxu0 %v467
        %1829 = vmatprep.subr.mxu0 0.0
        %1830 = vmatpush2.msra.mxu0 %v466
        %1831 = vmatprep.mubr.f32.mxu0 %v1764
        %1832 = vmatmul.mubr.f32.gmra.mxu0 %v1760
        %v1833 = vpop.f32.mrf.mxu0
        %v1834 = vadd.f32 1e-12, %v1833
        %v1835 = vpop.f32.mrf.mxu0
        %1836 = vdwg.mxu0
        %v1837 = vrsqrt.pop %v1834
        %v1839 = vsel %vm719, %v1837, 0
        %1841 = vmatprep.subr.mxu0 0.0
        %1842 = vmatpush1.msra.mxu0 0.0
        %1843 = vmatprep.subr.mxu0 0.0
        %1844 = vmatpush1.msra.mxu0 0.0
        %1845 = vmatprep.subr.mxu0 0.0
        %1846 = vmatpush1.msra.mxu0 0.0
        %1847 = vmatprep.subr.mxu0 0.0
        %1848 = vmatpush1.msra.mxu0 0.0
        %1849 = vmatprep.subr.mxu0 0.0
        %1850 = vmatpush1.msra.mxu0 0.0
        %1851 = vmatprep.subr.mxu0 0.0
        %1852 = vmatpush1.msra.mxu0 0.0
        %1853 = vmatprep.subr.mxu0 0.0
        %1854 = vmatpush1.msra.mxu0 0.0
        %1855 = vmatprep.subr.mxu0 0.0
        %1856 = vmatpush1.msra.mxu0 0.0
        %1857 = vmatprep.subr.mxu0 0.0
        %1858 = vmatpush1.msra.mxu0 0.0
        %1859 = vmatprep.subr.mxu0 0.0
        %1860 = vmatpush1.msra.mxu0 0.0
        %1861 = vmatprep.subr.mxu0 0.0
        %1862 = vmatpush1.msra.mxu0 0.0
        %1863 = vmatprep.subr.mxu0 0.0
        %1864 = vmatpush1.msra.mxu0 0.0
        %1865 = vmatprep.subr.mxu0 0.0
        %1866 = vmatpush1.msra.mxu0 0.0
        %1867 = vmatprep.subr.mxu0 0.0
        %1868 = vmatpush1.msra.mxu0 0.0
        %1869 = vmatprep.subr.mxu0 0.0
        %1870 = vmatpush1.msra.mxu0 0.0
        %1871 = vmatprep.subr.mxu0 %v483
        %1872 = vmatpush1.msra.mxu0 %v482
        %1873 = vmatprep.subr.mxu0 0.0
        %1874 = vmatpush2.msra.mxu0 0.0
        %1875 = vmatprep.subr.mxu0 0.0
        %1876 = vmatpush2.msra.mxu0 0.0
        %1877 = vmatprep.subr.mxu0 0.0
        %1878 = vmatpush2.msra.mxu0 0.0
        %1879 = vmatprep.subr.mxu0 0.0
        %1880 = vmatpush2.msra.mxu0 0.0
        %1881 = vmatprep.subr.mxu0 0.0
        %1882 = vmatpush2.msra.mxu0 0.0
        %1883 = vmatprep.subr.mxu0 0.0
        %1884 = vmatpush2.msra.mxu0 0.0
        %1885 = vmatprep.subr.mxu0 0.0
        %1886 = vmatpush2.msra.mxu0 0.0
        %1887 = vmatprep.subr.mxu0 0.0
        %1888 = vmatpush2.msra.mxu0 0.0
        %1889 = vmatprep.subr.mxu0 0.0
        %1890 = vmatpush2.msra.mxu0 0.0
        %1891 = vmatprep.subr.mxu0 0.0
        %1892 = vmatpush2.msra.mxu0 0.0
        %1893 = vmatprep.subr.mxu0 0.0
        %1894 = vmatpush2.msra.mxu0 0.0
        %1895 = vmatprep.subr.mxu0 0.0
        %1896 = vmatpush2.msra.mxu0 0.0
        %1897 = vmatprep.subr.mxu0 0.0
        %1898 = vmatpush2.msra.mxu0 0.0
        %1899 = vmatprep.subr.mxu0 0.0
        %1900 = vmatpush2.msra.mxu0 0.0
        %1901 = vmatprep.subr.mxu0 0.0
        %1902 = vmatpush2.msra.mxu0 0.0
        %1903 = vmatprep.subr.mxu0 0.0
        %1904 = vmatpush2.msra.mxu0 0.0
        %1905 = vmatprep.mubr.f32.mxu0 0.0
        %1906 = vmatmul.mubr.f32.gmra.mxu0 %v1839
        %v1907 = vpop.f32.mrf.mxu0
        %v1908 = vadd.f32 0.0, %v1907
        %v1909 = vpop.f32.mrf.mxu0
        %v1910 = vadd.f32 0.0, %v1909
        %1911 = vdwg.mxu0
        %v1912 = vsub.f32 0.0, %v1754
        %v1915 = vcombine.low %v1908, %v1910
        %v1917 = vunpack.c.l.s4 1966171168
        %v1918 = vunpack.c.0.s8 %v1917
        %v1919 = vlaneseq
        %v1920 = vshrl.u32 %v1919, 7
        %v1921 = vsub.s32 %v1918, %v1920
        %v1922 = vrot.slane %v1915, %v1921
        %v1924 = vunpack.c.l.s4 1966171168
        %v1925 = vunpack.c.0.s8 %v1924
        %v1926 = vlaneseq
        %v1927 = vshrl.u32 %v1926, 7
        %v1928 = vsub.s32 %v1925, %v1927
        %v1929 = vrot.slane %v1922, %v1928
        %v1931 = vmul.f32 %v1912, %v1929
        %s1932 = scalar_lea.vmem [#allocation3], 4
        %v1933 = vld [vmem:[%s1932] ss:$8 sm:$0x3]
        %v1934 = vsub.f32 %v1931, %v1933
        %1935 = vst.msk [vmem:[%s1932] ss:$8 sm:$0x3] %vm819, %v1931
        %1936 = vst.msk [vmem:[%s1932] ss:$8 sm:$0x0] %vm819, %v1931
        %s1937 = scalar_lea.vmem %s1, 128
        %v1938 = vld [vmem:[%s1937 + $0x5] sm:$0xff]
        %v1939 = vld [vmem:[%s1937 + $0xd] sm:$0xff]
        %v1940 = vld [vmem:[%s1937 + $0x15] sm:$0x7f]
        %v1941 = vld [vmem:[#allocation4] sm:$0xe0]
        %v1942 = vld [vmem:[#allocation4 + $0x8] sm:$0xe0]
        %v1943 = vld [vmem:[#allocation4 + $0x10] sm:$0xff]
        %v1944 = vld [vmem:[#allocation4 + $0x18] sm:$0xff]
        %v1945 = vld [vmem:[#allocation4 + $0x20] sm:$0xff]
        %v1946 = vld [vmem:[#allocation4 + $0x28] sm:$0xff]
        %v1947 = vld [vmem:[#allocation4 + $0x30] sm:$0xf]
        %v1948 = vld [vmem:[#allocation4 + $0x38] sm:$0xf]
        %1950 = vset.pattern.permute.xlu0 0
        %1951 = vperm.xlu0 %1950, %v1938
        %v1952 = vpop.permute.xlu0 %1951
        %1955 = vset.pattern.permute.xlu0 0
        %1956 = vperm.xlu0 %1955, %v1939
        %v1957 = vpop.permute.xlu0 %1956
        %1960 = vset.pattern.permute.xlu0 0
        %1961 = vperm.xlu0 %1960, %v1940
        %v1962 = vpop.permute.xlu0 %1961
        %v1965 = vlaneseq
        %v1966 = vshrl.u32 %v1965, 7
        %v1967 = vsub.s32 0, %v1966
        %v1968 = vrot.slane %v1934, %v1967
        %v1969 = vlaneseq
        %v1970 = vshrl.u32 %v1969, 7
        %v1971 = vsub.s32 1, %v1970
        %v1972 = vrot.slane %v1934, %v1971
        %v1975 = vmul.f32 %v1952, %v1968
        %v1976 = vmul.f32 %v1952, %v1972
        %v1977 = vmul.f32 %v1957, %v1968
        %v1978 = vmul.f32 %v1957, %v1972
        %v1979 = vmul.f32 %v1962, %v1968
        %v1980 = vmul.f32 %v1962, %v1972
        %vm1987 = vcmask 1044480
        %v1988 = vrot.slane %v1975, 3
        %v1989 = vrot.slane %v1976, 3
        %v1990 = vrot.slane %v1977, 3
        %v1991 = vsel %vm1987, %v1988, %v1990
        %v1992 = vrot.slane %v1978, 3
        %v1993 = vsel %vm1987, %v1989, %v1992
        %v1994 = vrot.slane %v1979, 3
        %v1995 = vsel %vm1987, %v1990, %v1994
        %v1996 = vrot.slane %v1980, 3
        %v1997 = vsel %vm1987, %v1992, %v1996
        %v2006 = vadd.f32 %v1941, %v1988
        %v2007 = vadd.f32 %v1942, %v1989
        %v2008 = vadd.f32 %v1943, %v1991
        %v2009 = vadd.f32 %v1944, %v1993
        %v2010 = vadd.f32 %v1945, %v1995
        %v2011 = vadd.f32 %v1946, %v1997
        %v2012 = vadd.f32 %v1947, %v1994
        %v2013 = vadd.f32 %v1948, %v1996
        %2014 = vst [vmem:[#allocation4] sm:$0xe0] %v2006
        %2015 = vst [vmem:[#allocation4 + $0x8] sm:$0xe0] %v2007
        %2016 = vst [vmem:[#allocation4 + $0x10] sm:$0xff] %v2008
        %2017 = vst [vmem:[#allocation4 + $0x18] sm:$0xff] %v2009
        %2018 = vst [vmem:[#allocation4 + $0x20] sm:$0xff] %v2010
        %2019 = vst [vmem:[#allocation4 + $0x28] sm:$0xff] %v2011
        %2020 = vst [vmem:[#allocation4 + $0x30] sm:$0xf] %v2012
        %2021 = vst [vmem:[#allocation4 + $0x38] sm:$0xf] %v2013
        %s2022 = scalar_lea.vmem [#allocation4], 5
        %v2023 = vld [vmem:[%s2022] ss:$8 sm:$0x3]
        %v2024 = vmul.f32 %v2023, %v2023
        %v2026 = vlaneseq
        %v2027 = vshrl.u32 %v2026, 7
        %v2028 = vsub.s32 0, %v2027
        %v2029 = vrot.slane %v2024, %v2028
        %v2030 = vlaneseq
        %v2031 = vshrl.u32 %v2030, 7
        %v2032 = vsub.s32 1, %v2031
        %v2033 = vrot.slane %v2024, %v2032
        %2036 = vmatprep.subr.mxu0 0.0
        %2037 = vmatpush1.msra.mxu0 %v465
        %2038 = vmatprep.subr.mxu0 0.0
        %2039 = vmatpush1.msra.mxu0 %v464
        %2040 = vmatprep.subr.mxu0 0.0
        %2041 = vmatpush1.msra.mxu0 %v463
        %2042 = vmatprep.subr.mxu0 0.0
        %2043 = vmatpush1.msra.mxu0 %v462
        %2044 = vmatprep.subr.mxu0 0.0
        %2045 = vmatpush1.msra.mxu0 %v461
        %2046 = vmatprep.subr.mxu0 0.0
        %2047 = vmatpush1.msra.mxu0 %v460
        %2048 = vmatprep.subr.mxu0 0.0
        %2049 = vmatpush1.msra.mxu0 %v459
        %2050 = vmatprep.subr.mxu0 0.0
        %2051 = vmatpush1.msra.mxu0 %v458
        %2052 = vmatprep.subr.mxu0 0.0
        %2053 = vmatpush1.msra.mxu0 %v457
        %2054 = vmatprep.subr.mxu0 0.0
        %2055 = vmatpush1.msra.mxu0 %v456
        %2056 = vmatprep.subr.mxu0 0.0
        %2057 = vmatpush1.msra.mxu0 %v455
        %2058 = vmatprep.subr.mxu0 0.0
        %2059 = vmatpush1.msra.mxu0 %v454
        %2060 = vmatprep.subr.mxu0 0.0
        %2061 = vmatpush1.msra.mxu0 %v453
        %2062 = vmatprep.subr.mxu0 0.0
        %2063 = vmatpush1.msra.mxu0 %v452
        %2064 = vmatprep.subr.mxu0 0.0
        %2065 = vmatpush1.msra.mxu0 %v451
        %2066 = vmatprep.subr.mxu0 0.0
        %2067 = vmatpush1.msra.mxu0 %v450
        %2068 = vmatprep.subr.mxu0 0.0
        %2069 = vmatpush2.msra.mxu0 %v481
        %2070 = vmatprep.subr.mxu0 0.0
        %2071 = vmatpush2.msra.mxu0 %v480
        %2072 = vmatprep.subr.mxu0 0.0
        %2073 = vmatpush2.msra.mxu0 %v479
        %2074 = vmatprep.subr.mxu0 0.0
        %2075 = vmatpush2.msra.mxu0 %v478
        %2076 = vmatprep.subr.mxu0 0.0
        %2077 = vmatpush2.msra.mxu0 %v477
        %2078 = vmatprep.subr.mxu0 0.0
        %2079 = vmatpush2.msra.mxu0 %v476
        %2080 = vmatprep.subr.mxu0 0.0
        %2081 = vmatpush2.msra.mxu0 %v475
        %2082 = vmatprep.subr.mxu0 0.0
        %2083 = vmatpush2.msra.mxu0 %v474
        %2084 = vmatprep.subr.mxu0 0.0
        %2085 = vmatpush2.msra.mxu0 %v473
        %2086 = vmatprep.subr.mxu0 0.0
        %2087 = vmatpush2.msra.mxu0 %v472
        %2088 = vmatprep.subr.mxu0 0.0
        %2089 = vmatpush2.msra.mxu0 %v471
        %2090 = vmatprep.subr.mxu0 0.0
        %2091 = vmatpush2.msra.mxu0 %v470
        %2092 = vmatprep.subr.mxu0 0.0
        %2093 = vmatpush2.msra.mxu0 %v469
        %2094 = vmatprep.subr.mxu0 0.0
        %2095 = vmatpush2.msra.mxu0 %v468
        %2096 = vmatprep.subr.mxu0 0.0
        %2097 = vmatpush2.msra.mxu0 %v467
        %2098 = vmatprep.subr.mxu0 0.0
        %2099 = vmatpush2.msra.mxu0 %v466
        %2100 = vmatprep.mubr.f32.mxu0 %v2033
        %2101 = vmatmul.mubr.f32.gmra.mxu0 %v2029
        %v2102 = vpop.f32.mrf.mxu0
        %v2103 = vadd.f32 1e-12, %v2102
        %v2104 = vpop.f32.mrf.mxu0
        %2105 = vdwg.mxu0
        %v2106 = vrsqrt.pop %v2103
        %v2108 = vsel %vm719, %v2106, 0
        %2110 = vmatprep.subr.mxu0 0.0
        %2111 = vmatpush1.msra.mxu0 0.0
        %2112 = vmatprep.subr.mxu0 0.0
        %2113 = vmatpush1.msra.mxu0 0.0
        %2114 = vmatprep.subr.mxu0 0.0
        %2115 = vmatpush1.msra.mxu0 0.0
        %2116 = vmatprep.subr.mxu0 0.0
        %2117 = vmatpush1.msra.mxu0 0.0
        %2118 = vmatprep.subr.mxu0 0.0
        %2119 = vmatpush1.msra.mxu0 0.0
        %2120 = vmatprep.subr.mxu0 0.0
        %2121 = vmatpush1.msra.mxu0 0.0
        %2122 = vmatprep.subr.mxu0 0.0
        %2123 = vmatpush1.msra.mxu0 0.0
        %2124 = vmatprep.subr.mxu0 0.0
        %2125 = vmatpush1.msra.mxu0 0.0
        %2126 = vmatprep.subr.mxu0 0.0
        %2127 = vmatpush1.msra.mxu0 0.0
        %2128 = vmatprep.subr.mxu0 0.0
        %2129 = vmatpush1.msra.mxu0 0.0
        %2130 = vmatprep.subr.mxu0 0.0
        %2131 = vmatpush1.msra.mxu0 0.0
        %2132 = vmatprep.subr.mxu0 0.0
        %2133 = vmatpush1.msra.mxu0 0.0
        %2134 = vmatprep.subr.mxu0 0.0
        %2135 = vmatpush1.msra.mxu0 0.0
        %2136 = vmatprep.subr.mxu0 0.0
        %2137 = vmatpush1.msra.mxu0 0.0
        %2138 = vmatprep.subr.mxu0 0.0
        %2139 = vmatpush1.msra.mxu0 0.0
        %2140 = vmatprep.subr.mxu0 %v483
        %2141 = vmatpush1.msra.mxu0 %v482
        %2142 = vmatprep.subr.mxu0 0.0
        %2143 = vmatpush2.msra.mxu0 0.0
        %2144 = vmatprep.subr.mxu0 0.0
        %2145 = vmatpush2.msra.mxu0 0.0
        %2146 = vmatprep.subr.mxu0 0.0
        %2147 = vmatpush2.msra.mxu0 0.0
        %2148 = vmatprep.subr.mxu0 0.0
        %2149 = vmatpush2.msra.mxu0 0.0
        %2150 = vmatprep.subr.mxu0 0.0
        %2151 = vmatpush2.msra.mxu0 0.0
        %2152 = vmatprep.subr.mxu0 0.0
        %2153 = vmatpush2.msra.mxu0 0.0
        %2154 = vmatprep.subr.mxu0 0.0
        %2155 = vmatpush2.msra.mxu0 0.0
        %2156 = vmatprep.subr.mxu0 0.0
        %2157 = vmatpush2.msra.mxu0 0.0
        %2158 = vmatprep.subr.mxu0 0.0
        %2159 = vmatpush2.msra.mxu0 0.0
        %2160 = vmatprep.subr.mxu0 0.0
        %2161 = vmatpush2.msra.mxu0 0.0
        %2162 = vmatprep.subr.mxu0 0.0
        %2163 = vmatpush2.msra.mxu0 0.0
        %2164 = vmatprep.subr.mxu0 0.0
        %2165 = vmatpush2.msra.mxu0 0.0
        %2166 = vmatprep.subr.mxu0 0.0
        %2167 = vmatpush2.msra.mxu0 0.0
        %2168 = vmatprep.subr.mxu0 0.0
        %2169 = vmatpush2.msra.mxu0 0.0
        %2170 = vmatprep.subr.mxu0 0.0
        %2171 = vmatpush2.msra.mxu0 0.0
        %2172 = vmatprep.subr.mxu0 0.0
        %2173 = vmatpush2.msra.mxu0 0.0
        %2174 = vmatprep.mubr.f32.mxu0 0.0
        %2175 = vmatmul.mubr.f32.gmra.mxu0 %v2108
        %v2176 = vpop.f32.mrf.mxu0
        %v2177 = vadd.f32 0.0, %v2176
        %v2178 = vpop.f32.mrf.mxu0
        %v2179 = vadd.f32 0.0, %v2178
        %2180 = vdwg.mxu0
        %v2181 = vsub.f32 0.0, %v2023
        %v2184 = vcombine.low %v2177, %v2179
        %v2186 = vunpack.c.l.s4 1966171168
        %v2187 = vunpack.c.0.s8 %v2186
        %v2188 = vlaneseq
        %v2189 = vshrl.u32 %v2188, 7
        %v2190 = vsub.s32 %v2187, %v2189
        %v2191 = vrot.slane %v2184, %v2190
        %v2193 = vunpack.c.l.s4 1966171168
        %v2194 = vunpack.c.0.s8 %v2193
        %v2195 = vlaneseq
        %v2196 = vshrl.u32 %v2195, 7
        %v2197 = vsub.s32 %v2194, %v2196
        %v2198 = vrot.slane %v2191, %v2197
        %v2200 = vmul.f32 %v2181, %v2198
        %s2201 = scalar_lea.vmem [#allocation3], 5
        %v2202 = vld [vmem:[%s2201] ss:$8 sm:$0x3]
        %v2203 = vsub.f32 %v2200, %v2202
        %2204 = vst.msk [vmem:[%s2201] ss:$8 sm:$0x3] %vm819, %v2200
        %2205 = vst.msk [vmem:[%s2201] ss:$8 sm:$0x0] %vm819, %v2200
        %s2206 = scalar_lea.vmem %s1, 160
        %v2207 = vld [vmem:[%s2206 + $0x6] sm:$0xff]
        %v2208 = vld [vmem:[%s2206 + $0xe] sm:$0xff]
        %v2209 = vld [vmem:[%s2206 + $0x16] sm:$0x3f]
        %v2210 = vld [vmem:[#allocation4] sm:$0xc0]
        %v2211 = vld [vmem:[#allocation4 + $0x8] sm:$0xc0]
        %v2212 = vld [vmem:[#allocation4 + $0x10] sm:$0xff]
        %v2213 = vld [vmem:[#allocation4 + $0x18] sm:$0xff]
        %v2214 = vld [vmem:[#allocation4 + $0x20] sm:$0xff]
        %v2215 = vld [vmem:[#allocation4 + $0x28] sm:$0xff]
        %v2216 = vld [vmem:[#allocation4 + $0x30] sm:$0xf]
        %v2217 = vld [vmem:[#allocation4 + $0x38] sm:$0xf]
        %2219 = vset.pattern.permute.xlu0 0
        %2220 = vperm.xlu0 %2219, %v2207
        %v2221 = vpop.permute.xlu0 %2220
        %2224 = vset.pattern.permute.xlu0 0
        %2225 = vperm.xlu0 %2224, %v2208
        %v2226 = vpop.permute.xlu0 %2225
        %2229 = vset.pattern.permute.xlu0 0
        %2230 = vperm.xlu0 %2229, %v2209
        %v2231 = vpop.permute.xlu0 %2230
        %v2234 = vlaneseq
        %v2235 = vshrl.u32 %v2234, 7
        %v2236 = vsub.s32 0, %v2235
        %v2237 = vrot.slane %v2203, %v2236
        %v2238 = vlaneseq
        %v2239 = vshrl.u32 %v2238, 7
        %v2240 = vsub.s32 1, %v2239
        %v2241 = vrot.slane %v2203, %v2240
        %v2244 = vmul.f32 %v2221, %v2237
        %v2245 = vmul.f32 %v2221, %v2241
        %v2246 = vmul.f32 %v2226, %v2237
        %v2247 = vmul.f32 %v2226, %v2241
        %v2248 = vmul.f32 %v2231, %v2237
        %v2249 = vmul.f32 %v2231, %v2241
        %vm2256 = vcmask 1045504
        %v2257 = vrot.slane %v2244, 2
        %v2258 = vrot.slane %v2245, 2
        %v2259 = vrot.slane %v2246, 2
        %v2260 = vsel %vm2256, %v2257, %v2259
        %v2261 = vrot.slane %v2247, 2
        %v2262 = vsel %vm2256, %v2258, %v2261
        %v2263 = vrot.slane %v2248, 2
        %v2264 = vsel %vm2256, %v2259, %v2263
        %v2265 = vrot.slane %v2249, 2
        %v2266 = vsel %vm2256, %v2261, %v2265
        %v2275 = vadd.f32 %v2210, %v2257
        %v2276 = vadd.f32 %v2211, %v2258
        %v2277 = vadd.f32 %v2212, %v2260
        %v2278 = vadd.f32 %v2213, %v2262
        %v2279 = vadd.f32 %v2214, %v2264
        %v2280 = vadd.f32 %v2215, %v2266
        %v2281 = vadd.f32 %v2216, %v2263
        %v2282 = vadd.f32 %v2217, %v2265
        %2283 = vst [vmem:[#allocation4] sm:$0xc0] %v2275
        %2284 = vst [vmem:[#allocation4 + $0x8] sm:$0xc0] %v2276
        %2285 = vst [vmem:[#allocation4 + $0x10] sm:$0xff] %v2277
        %2286 = vst [vmem:[#allocation4 + $0x18] sm:$0xff] %v2278
        %2287 = vst [vmem:[#allocation4 + $0x20] sm:$0xff] %v2279
        %2288 = vst [vmem:[#allocation4 + $0x28] sm:$0xff] %v2280
        %2289 = vst [vmem:[#allocation4 + $0x30] sm:$0xf] %v2281
        %2290 = vst [vmem:[#allocation4 + $0x38] sm:$0xf] %v2282
        %s2291 = scalar_lea.vmem [#allocation4], 6
        %v2292 = vld [vmem:[%s2291] ss:$8 sm:$0x3]
        %v2293 = vmul.f32 %v2292, %v2292
        %v2295 = vlaneseq
        %v2296 = vshrl.u32 %v2295, 7
        %v2297 = vsub.s32 0, %v2296
        %v2298 = vrot.slane %v2293, %v2297
        %v2299 = vlaneseq
        %v2300 = vshrl.u32 %v2299, 7
        %v2301 = vsub.s32 1, %v2300
        %v2302 = vrot.slane %v2293, %v2301
        %2305 = vmatprep.subr.mxu0 0.0
        %2306 = vmatpush1.msra.mxu0 %v465
        %2307 = vmatprep.subr.mxu0 0.0
        %2308 = vmatpush1.msra.mxu0 %v464
        %2309 = vmatprep.subr.mxu0 0.0
        %2310 = vmatpush1.msra.mxu0 %v463
        %2311 = vmatprep.subr.mxu0 0.0
        %2312 = vmatpush1.msra.mxu0 %v462
        %2313 = vmatprep.subr.mxu0 0.0
        %2314 = vmatpush1.msra.mxu0 %v461
        %2315 = vmatprep.subr.mxu0 0.0
        %2316 = vmatpush1.msra.mxu0 %v460
        %2317 = vmatprep.subr.mxu0 0.0
        %2318 = vmatpush1.msra.mxu0 %v459
        %2319 = vmatprep.subr.mxu0 0.0
        %2320 = vmatpush1.msra.mxu0 %v458
        %2321 = vmatprep.subr.mxu0 0.0
        %2322 = vmatpush1.msra.mxu0 %v457
        %2323 = vmatprep.subr.mxu0 0.0
        %2324 = vmatpush1.msra.mxu0 %v456
        %2325 = vmatprep.subr.mxu0 0.0
        %2326 = vmatpush1.msra.mxu0 %v455
        %2327 = vmatprep.subr.mxu0 0.0
        %2328 = vmatpush1.msra.mxu0 %v454
        %2329 = vmatprep.subr.mxu0 0.0
        %2330 = vmatpush1.msra.mxu0 %v453
        %2331 = vmatprep.subr.mxu0 0.0
        %2332 = vmatpush1.msra.mxu0 %v452
        %2333 = vmatprep.subr.mxu0 0.0
        %2334 = vmatpush1.msra.mxu0 %v451
        %2335 = vmatprep.subr.mxu0 0.0
        %2336 = vmatpush1.msra.mxu0 %v450
        %2337 = vmatprep.subr.mxu0 0.0
        %2338 = vmatpush2.msra.mxu0 %v481
        %2339 = vmatprep.subr.mxu0 0.0
        %2340 = vmatpush2.msra.mxu0 %v480
        %2341 = vmatprep.subr.mxu0 0.0
        %2342 = vmatpush2.msra.mxu0 %v479
        %2343 = vmatprep.subr.mxu0 0.0
        %2344 = vmatpush2.msra.mxu0 %v478
        %2345 = vmatprep.subr.mxu0 0.0
        %2346 = vmatpush2.msra.mxu0 %v477
        %2347 = vmatprep.subr.mxu0 0.0
        %2348 = vmatpush2.msra.mxu0 %v476
        %2349 = vmatprep.subr.mxu0 0.0
        %2350 = vmatpush2.msra.mxu0 %v475
        %2351 = vmatprep.subr.mxu0 0.0
        %2352 = vmatpush2.msra.mxu0 %v474
        %2353 = vmatprep.subr.mxu0 0.0
        %2354 = vmatpush2.msra.mxu0 %v473
        %2355 = vmatprep.subr.mxu0 0.0
        %2356 = vmatpush2.msra.mxu0 %v472
        %2357 = vmatprep.subr.mxu0 0.0
        %2358 = vmatpush2.msra.mxu0 %v471
        %2359 = vmatprep.subr.mxu0 0.0
        %2360 = vmatpush2.msra.mxu0 %v470
        %2361 = vmatprep.subr.mxu0 0.0
        %2362 = vmatpush2.msra.mxu0 %v469
        %2363 = vmatprep.subr.mxu0 0.0
        %2364 = vmatpush2.msra.mxu0 %v468
        %2365 = vmatprep.subr.mxu0 0.0
        %2366 = vmatpush2.msra.mxu0 %v467
        %2367 = vmatprep.subr.mxu0 0.0
        %2368 = vmatpush2.msra.mxu0 %v466
        %2369 = vmatprep.mubr.f32.mxu0 %v2302
        %2370 = vmatmul.mubr.f32.gmra.mxu0 %v2298
        %v2371 = vpop.f32.mrf.mxu0
        %v2372 = vadd.f32 1e-12, %v2371
        %v2373 = vpop.f32.mrf.mxu0
        %2374 = vdwg.mxu0
        %v2375 = vrsqrt.pop %v2372
        %v2377 = vsel %vm719, %v2375, 0
        %2379 = vmatprep.subr.mxu0 0.0
        %2380 = vmatpush1.msra.mxu0 0.0
        %2381 = vmatprep.subr.mxu0 0.0
        %2382 = vmatpush1.msra.mxu0 0.0
        %2383 = vmatprep.subr.mxu0 0.0
        %2384 = vmatpush1.msra.mxu0 0.0
        %2385 = vmatprep.subr.mxu0 0.0
        %2386 = vmatpush1.msra.mxu0 0.0
        %2387 = vmatprep.subr.mxu0 0.0
        %2388 = vmatpush1.msra.mxu0 0.0
        %2389 = vmatprep.subr.mxu0 0.0
        %2390 = vmatpush1.msra.mxu0 0.0
        %2391 = vmatprep.subr.mxu0 0.0
        %2392 = vmatpush1.msra.mxu0 0.0
        %2393 = vmatprep.subr.mxu0 0.0
        %2394 = vmatpush1.msra.mxu0 0.0
        %2395 = vmatprep.subr.mxu0 0.0
        %2396 = vmatpush1.msra.mxu0 0.0
        %2397 = vmatprep.subr.mxu0 0.0
        %2398 = vmatpush1.msra.mxu0 0.0
        %2399 = vmatprep.subr.mxu0 0.0
        %2400 = vmatpush1.msra.mxu0 0.0
        %2401 = vmatprep.subr.mxu0 0.0
        %2402 = vmatpush1.msra.mxu0 0.0
        %2403 = vmatprep.subr.mxu0 0.0
        %2404 = vmatpush1.msra.mxu0 0.0
        %2405 = vmatprep.subr.mxu0 0.0
        %2406 = vmatpush1.msra.mxu0 0.0
        %2407 = vmatprep.subr.mxu0 0.0
        %2408 = vmatpush1.msra.mxu0 0.0
        %2409 = vmatprep.subr.mxu0 %v483
        %2410 = vmatpush1.msra.mxu0 %v482
        %2411 = vmatprep.subr.mxu0 0.0
        %2412 = vmatpush2.msra.mxu0 0.0
        %2413 = vmatprep.subr.mxu0 0.0
        %2414 = vmatpush2.msra.mxu0 0.0
        %2415 = vmatprep.subr.mxu0 0.0
        %2416 = vmatpush2.msra.mxu0 0.0
        %2417 = vmatprep.subr.mxu0 0.0
        %2418 = vmatpush2.msra.mxu0 0.0
        %2419 = vmatprep.subr.mxu0 0.0
        %2420 = vmatpush2.msra.mxu0 0.0
        %2421 = vmatprep.subr.mxu0 0.0
        %2422 = vmatpush2.msra.mxu0 0.0
        %2423 = vmatprep.subr.mxu0 0.0
        %2424 = vmatpush2.msra.mxu0 0.0
        %2425 = vmatprep.subr.mxu0 0.0
        %2426 = vmatpush2.msra.mxu0 0.0
        %2427 = vmatprep.subr.mxu0 0.0
        %2428 = vmatpush2.msra.mxu0 0.0
        %2429 = vmatprep.subr.mxu0 0.0
        %2430 = vmatpush2.msra.mxu0 0.0
        %2431 = vmatprep.subr.mxu0 0.0
        %2432 = vmatpush2.msra.mxu0 0.0
        %2433 = vmatprep.subr.mxu0 0.0
        %2434 = vmatpush2.msra.mxu0 0.0
        %2435 = vmatprep.subr.mxu0 0.0
        %2436 = vmatpush2.msra.mxu0 0.0
        %2437 = vmatprep.subr.mxu0 0.0
        %2438 = vmatpush2.msra.mxu0 0.0
        %2439 = vmatprep.subr.mxu0 0.0
        %2440 = vmatpush2.msra.mxu0 0.0
        %2441 = vmatprep.subr.mxu0 0.0
        %2442 = vmatpush2.msra.mxu0 0.0
        %2443 = vmatprep.mubr.f32.mxu0 0.0
        %2444 = vmatmul.mubr.f32.gmra.mxu0 %v2377
        %v2445 = vpop.f32.mrf.mxu0
        %v2446 = vadd.f32 0.0, %v2445
        %v2447 = vpop.f32.mrf.mxu0
        %v2448 = vadd.f32 0.0, %v2447
        %2449 = vdwg.mxu0
        %v2450 = vsub.f32 0.0, %v2292
        %v2453 = vcombine.low %v2446, %v2448
        %v2455 = vunpack.c.l.s4 1966171168
        %v2456 = vunpack.c.0.s8 %v2455
        %v2457 = vlaneseq
        %v2458 = vshrl.u32 %v2457, 7
        %v2459 = vsub.s32 %v2456, %v2458
        %v2460 = vrot.slane %v2453, %v2459
        %v2462 = vunpack.c.l.s4 1966171168
        %v2463 = vunpack.c.0.s8 %v2462
        %v2464 = vlaneseq
        %v2465 = vshrl.u32 %v2464, 7
        %v2466 = vsub.s32 %v2463, %v2465
        %v2467 = vrot.slane %v2460, %v2466
        %v2469 = vmul.f32 %v2450, %v2467
        %s2470 = scalar_lea.vmem [#allocation3], 6
        %v2471 = vld [vmem:[%s2470] ss:$8 sm:$0x3]
        %v2472 = vsub.f32 %v2469, %v2471
        %2473 = vst.msk [vmem:[%s2470] ss:$8 sm:$0x3] %vm819, %v2469
        %2474 = vst.msk [vmem:[%s2470] ss:$8 sm:$0x0] %vm819, %v2469
        %s2475 = scalar_lea.vmem %s1, 192
        %v2476 = vld [vmem:[%s2475 + $0x7] sm:$0xff]
        %v2477 = vld [vmem:[%s2475 + $0xf] sm:$0xff]
        %v2478 = vld [vmem:[%s2475 + $0x17] sm:$0x1f]
        %v2479 = vld [vmem:[#allocation4] sm:$0x80]
        %v2480 = vld [vmem:[#allocation4 + $0x8] sm:$0x80]
        %v2481 = vld [vmem:[#allocation4 + $0x10] sm:$0xff]
        %v2482 = vld [vmem:[#allocation4 + $0x18] sm:$0xff]
        %v2483 = vld [vmem:[#allocation4 + $0x20] sm:$0xff]
        %v2484 = vld [vmem:[#allocation4 + $0x28] sm:$0xff]
        %v2485 = vld [vmem:[#allocation4 + $0x30] sm:$0xf]
        %v2486 = vld [vmem:[#allocation4 + $0x38] sm:$0xf]
        %2488 = vset.pattern.permute.xlu0 0
        %2489 = vperm.xlu0 %2488, %v2476
        %v2490 = vpop.permute.xlu0 %2489
        %2493 = vset.pattern.permute.xlu0 0
        %2494 = vperm.xlu0 %2493, %v2477
        %v2495 = vpop.permute.xlu0 %2494
        %2498 = vset.pattern.permute.xlu0 0
        %2499 = vperm.xlu0 %2498, %v2478
        %v2500 = vpop.permute.xlu0 %2499
        %v2503 = vlaneseq
        %v2504 = vshrl.u32 %v2503, 7
        %v2505 = vsub.s32 0, %v2504
        %v2506 = vrot.slane %v2472, %v2505
        %v2507 = vlaneseq
        %v2508 = vshrl.u32 %v2507, 7
        %v2509 = vsub.s32 1, %v2508
        %v2510 = vrot.slane %v2472, %v2509
        %v2513 = vmul.f32 %v2490, %v2506
        %v2514 = vmul.f32 %v2490, %v2510
        %v2515 = vmul.f32 %v2495, %v2506
        %v2516 = vmul.f32 %v2495, %v2510
        %v2517 = vmul.f32 %v2500, %v2506
        %v2518 = vmul.f32 %v2500, %v2510
        %vm2525 = vcmask 1046528
        %v2526 = vrot.slane %v2513, 1
        %v2527 = vrot.slane %v2514, 1
        %v2528 = vrot.slane %v2515, 1
        %v2529 = vsel %vm2525, %v2526, %v2528
        %v2530 = vrot.slane %v2516, 1
        %v2531 = vsel %vm2525, %v2527, %v2530
        %v2532 = vrot.slane %v2517, 1
        %v2533 = vsel %vm2525, %v2528, %v2532
        %v2534 = vrot.slane %v2518, 1
        %v2535 = vsel %vm2525, %v2530, %v2534
        %v2544 = vadd.f32 %v2479, %v2526
        %v2545 = vadd.f32 %v2480, %v2527
        %v2546 = vadd.f32 %v2481, %v2529
        %v2547 = vadd.f32 %v2482, %v2531
        %v2548 = vadd.f32 %v2483, %v2533
        %v2549 = vadd.f32 %v2484, %v2535
        %v2550 = vadd.f32 %v2485, %v2532
        %v2551 = vadd.f32 %v2486, %v2534
        %2552 = vst [vmem:[#allocation4] sm:$0x80] %v2544
        %2553 = vst [vmem:[#allocation4 + $0x8] sm:$0x80] %v2545
        %2554 = vst [vmem:[#allocation4 + $0x10] sm:$0xff] %v2546
        %2555 = vst [vmem:[#allocation4 + $0x18] sm:$0xff] %v2547
        %2556 = vst [vmem:[#allocation4 + $0x20] sm:$0xff] %v2548
        %2557 = vst [vmem:[#allocation4 + $0x28] sm:$0xff] %v2549
        %2558 = vst [vmem:[#allocation4 + $0x30] sm:$0xf] %v2550
        %2559 = vst [vmem:[#allocation4 + $0x38] sm:$0xf] %v2551
        %s2560 = scalar_lea.vmem [#allocation4], 7
        %v2561 = vld [vmem:[%s2560] ss:$8 sm:$0x3]
        %v2562 = vmul.f32 %v2561, %v2561
        %v2564 = vlaneseq
        %v2565 = vshrl.u32 %v2564, 7
        %v2566 = vsub.s32 0, %v2565
        %v2567 = vrot.slane %v2562, %v2566
        %v2568 = vlaneseq
        %v2569 = vshrl.u32 %v2568, 7
        %v2570 = vsub.s32 1, %v2569
        %v2571 = vrot.slane %v2562, %v2570
        %2574 = vmatprep.subr.mxu0 0.0
        %2575 = vmatpush1.msra.mxu0 %v465
        %2576 = vmatprep.subr.mxu0 0.0
        %2577 = vmatpush1.msra.mxu0 %v464
        %2578 = vmatprep.subr.mxu0 0.0
        %2579 = vmatpush1.msra.mxu0 %v463
        %2580 = vmatprep.subr.mxu0 0.0
        %2581 = vmatpush1.msra.mxu0 %v462
        %2582 = vmatprep.subr.mxu0 0.0
        %2583 = vmatpush1.msra.mxu0 %v461
        %2584 = vmatprep.subr.mxu0 0.0
        %2585 = vmatpush1.msra.mxu0 %v460
        %2586 = vmatprep.subr.mxu0 0.0
        %2587 = vmatpush1.msra.mxu0 %v459
        %2588 = vmatprep.subr.mxu0 0.0
        %2589 = vmatpush1.msra.mxu0 %v458
        %2590 = vmatprep.subr.mxu0 0.0
        %2591 = vmatpush1.msra.mxu0 %v457
        %2592 = vmatprep.subr.mxu0 0.0
        %2593 = vmatpush1.msra.mxu0 %v456
        %2594 = vmatprep.subr.mxu0 0.0
        %2595 = vmatpush1.msra.mxu0 %v455
        %2596 = vmatprep.subr.mxu0 0.0
        %2597 = vmatpush1.msra.mxu0 %v454
        %2598 = vmatprep.subr.mxu0 0.0
        %2599 = vmatpush1.msra.mxu0 %v453
        %2600 = vmatprep.subr.mxu0 0.0
        %2601 = vmatpush1.msra.mxu0 %v452
        %2602 = vmatprep.subr.mxu0 0.0
        %2603 = vmatpush1.msra.mxu0 %v451
        %2604 = vmatprep.subr.mxu0 0.0
        %2605 = vmatpush1.msra.mxu0 %v450
        %2606 = vmatprep.subr.mxu0 0.0
        %2607 = vmatpush2.msra.mxu0 %v481
        %2608 = vmatprep.subr.mxu0 0.0
        %2609 = vmatpush2.msra.mxu0 %v480
        %2610 = vmatprep.subr.mxu0 0.0
        %2611 = vmatpush2.msra.mxu0 %v479
        %2612 = vmatprep.subr.mxu0 0.0
        %2613 = vmatpush2.msra.mxu0 %v478
        %2614 = vmatprep.subr.mxu0 0.0
        %2615 = vmatpush2.msra.mxu0 %v477
        %2616 = vmatprep.subr.mxu0 0.0
        %2617 = vmatpush2.msra.mxu0 %v476
        %2618 = vmatprep.subr.mxu0 0.0
        %2619 = vmatpush2.msra.mxu0 %v475
        %2620 = vmatprep.subr.mxu0 0.0
        %2621 = vmatpush2.msra.mxu0 %v474
        %2622 = vmatprep.subr.mxu0 0.0
        %2623 = vmatpush2.msra.mxu0 %v473
        %2624 = vmatprep.subr.mxu0 0.0
        %2625 = vmatpush2.msra.mxu0 %v472
        %2626 = vmatprep.subr.mxu0 0.0
        %2627 = vmatpush2.msra.mxu0 %v471
        %2628 = vmatprep.subr.mxu0 0.0
        %2629 = vmatpush2.msra.mxu0 %v470
        %2630 = vmatprep.subr.mxu0 0.0
        %2631 = vmatpush2.msra.mxu0 %v469
        %2632 = vmatprep.subr.mxu0 0.0
        %2633 = vmatpush2.msra.mxu0 %v468
        %2634 = vmatprep.subr.mxu0 0.0
        %2635 = vmatpush2.msra.mxu0 %v467
        %2636 = vmatprep.subr.mxu0 0.0
        %2637 = vmatpush2.msra.mxu0 %v466
        %2638 = vmatprep.mubr.f32.mxu0 %v2571
        %2639 = vmatmul.mubr.f32.gmra.mxu0 %v2567
        %v2640 = vpop.f32.mrf.mxu0
        %v2641 = vadd.f32 1e-12, %v2640
        %v2642 = vpop.f32.mrf.mxu0
        %2643 = vdwg.mxu0
        %v2644 = vrsqrt.pop %v2641
        %v2646 = vsel %vm719, %v2644, 0
        %2648 = vmatprep.subr.mxu0 0.0
        %2649 = vmatpush1.msra.mxu0 0.0
        %2650 = vmatprep.subr.mxu0 0.0
        %2651 = vmatpush1.msra.mxu0 0.0
        %2652 = vmatprep.subr.mxu0 0.0
        %2653 = vmatpush1.msra.mxu0 0.0
        %2654 = vmatprep.subr.mxu0 0.0
        %2655 = vmatpush1.msra.mxu0 0.0
        %2656 = vmatprep.subr.mxu0 0.0
        %2657 = vmatpush1.msra.mxu0 0.0
        %2658 = vmatprep.subr.mxu0 0.0
        %2659 = vmatpush1.msra.mxu0 0.0
        %2660 = vmatprep.subr.mxu0 0.0
        %2661 = vmatpush1.msra.mxu0 0.0
        %2662 = vmatprep.subr.mxu0 0.0
        %2663 = vmatpush1.msra.mxu0 0.0
        %2664 = vmatprep.subr.mxu0 0.0
        %2665 = vmatpush1.msra.mxu0 0.0
        %2666 = vmatprep.subr.mxu0 0.0
        %2667 = vmatpush1.msra.mxu0 0.0
        %2668 = vmatprep.subr.mxu0 0.0
        %2669 = vmatpush1.msra.mxu0 0.0
        %2670 = vmatprep.subr.mxu0 0.0
        %2671 = vmatpush1.msra.mxu0 0.0
        %2672 = vmatprep.subr.mxu0 0.0
        %2673 = vmatpush1.msra.mxu0 0.0
        %2674 = vmatprep.subr.mxu0 0.0
        %2675 = vmatpush1.msra.mxu0 0.0
        %2676 = vmatprep.subr.mxu0 0.0
        %2677 = vmatpush1.msra.mxu0 0.0
        %2678 = vmatprep.subr.mxu0 %v483
        %2679 = vmatpush1.msra.mxu0 %v482
        %2680 = vmatprep.subr.mxu0 0.0
        %2681 = vmatpush2.msra.mxu0 0.0
        %2682 = vmatprep.subr.mxu0 0.0
        %2683 = vmatpush2.msra.mxu0 0.0
        %2684 = vmatprep.subr.mxu0 0.0
        %2685 = vmatpush2.msra.mxu0 0.0
        %2686 = vmatprep.subr.mxu0 0.0
        %2687 = vmatpush2.msra.mxu0 0.0
        %2688 = vmatprep.subr.mxu0 0.0
        %2689 = vmatpush2.msra.mxu0 0.0
        %2690 = vmatprep.subr.mxu0 0.0
        %2691 = vmatpush2.msra.mxu0 0.0
        %2692 = vmatprep.subr.mxu0 0.0
        %2693 = vmatpush2.msra.mxu0 0.0
        %2694 = vmatprep.subr.mxu0 0.0
        %2695 = vmatpush2.msra.mxu0 0.0
        %2696 = vmatprep.subr.mxu0 0.0
        %2697 = vmatpush2.msra.mxu0 0.0
        %2698 = vmatprep.subr.mxu0 0.0
        %2699 = vmatpush2.msra.mxu0 0.0
        %2700 = vmatprep.subr.mxu0 0.0
        %2701 = vmatpush2.msra.mxu0 0.0
        %2702 = vmatprep.subr.mxu0 0.0
        %2703 = vmatpush2.msra.mxu0 0.0
        %2704 = vmatprep.subr.mxu0 0.0
        %2705 = vmatpush2.msra.mxu0 0.0
        %2706 = vmatprep.subr.mxu0 0.0
        %2707 = vmatpush2.msra.mxu0 0.0
        %2708 = vmatprep.subr.mxu0 0.0
        %2709 = vmatpush2.msra.mxu0 0.0
        %2710 = vmatprep.subr.mxu0 0.0
        %2711 = vmatpush2.msra.mxu0 0.0
        %2712 = vmatprep.mubr.f32.mxu0 0.0
        %2713 = vmatmul.mubr.f32.gmra.mxu0 %v2646
        %v2714 = vpop.f32.mrf.mxu0
        %v2715 = vadd.f32 0.0, %v2714
        %v2716 = vpop.f32.mrf.mxu0
        %v2717 = vadd.f32 0.0, %v2716
        %2718 = vdwg.mxu0
        %v2719 = vsub.f32 0.0, %v2561
        %v2722 = vcombine.low %v2715, %v2717
        %v2724 = vunpack.c.l.s4 1966171168
        %v2725 = vunpack.c.0.s8 %v2724
        %v2726 = vlaneseq
        %v2727 = vshrl.u32 %v2726, 7
        %v2728 = vsub.s32 %v2725, %v2727
        %v2729 = vrot.slane %v2722, %v2728
        %v2731 = vunpack.c.l.s4 1966171168
        %v2732 = vunpack.c.0.s8 %v2731
        %v2733 = vlaneseq
        %v2734 = vshrl.u32 %v2733, 7
        %v2735 = vsub.s32 %v2732, %v2734
        %v2736 = vrot.slane %v2729, %v2735
        %v2738 = vmul.f32 %v2719, %v2736
        %s2739 = scalar_lea.vmem [#allocation3], 7
        %v2740 = vld [vmem:[%s2739] ss:$8 sm:$0x3]
        %v2741 = vsub.f32 %v2738, %v2740
        %2742 = vst.msk [vmem:[%s2739] ss:$8 sm:$0x3] %vm819, %v2738
        %2743 = vst.msk [vmem:[%s2739] ss:$8 sm:$0x0] %vm819, %v2738
        %s2744 = scalar_lea.vmem %s1, 224
        %v2745 = vld [vmem:[%s2744 + $0x8] sm:$0xff]
        %v2746 = vld [vmem:[%s2744 + $0x10] sm:$0xff]
        %v2747 = vld [vmem:[%s2744 + $0x18] sm:$0xf]
        %v2748 = vld [vmem:[#allocation4 + $0x10] sm:$0xff]
        %v2749 = vld [vmem:[#allocation4 + $0x18] sm:$0xff]
        %v2750 = vld [vmem:[#allocation4 + $0x20] sm:$0xff]
        %v2751 = vld [vmem:[#allocation4 + $0x28] sm:$0xff]
        %v2752 = vld [vmem:[#allocation4 + $0x30] sm:$0xf]
        %v2753 = vld [vmem:[#allocation4 + $0x38] sm:$0xf]
        %2755 = vset.pattern.permute.xlu0 0
        %2756 = vperm.xlu0 %2755, %v2745
        %v2757 = vpop.permute.xlu0 %2756
        %2760 = vset.pattern.permute.xlu0 0
        %2761 = vperm.xlu0 %2760, %v2746
        %v2762 = vpop.permute.xlu0 %2761
        %2765 = vset.pattern.permute.xlu0 0
        %2766 = vperm.xlu0 %2765, %v2747
        %v2767 = vpop.permute.xlu0 %2766
        %v2770 = vlaneseq
        %v2771 = vshrl.u32 %v2770, 7
        %v2772 = vsub.s32 0, %v2771
        %v2773 = vrot.slane %v2741, %v2772
        %v2774 = vlaneseq
        %v2775 = vshrl.u32 %v2774, 7
        %v2776 = vsub.s32 1, %v2775
        %v2777 = vrot.slane %v2741, %v2776
        %v2780 = vmul.f32 %v2757, %v2773
        %v2781 = vmul.f32 %v2757, %v2777
        %v2782 = vmul.f32 %v2762, %v2773
        %v2783 = vmul.f32 %v2762, %v2777
        %v2784 = vmul.f32 %v2767, %v2773
        %v2785 = vmul.f32 %v2767, %v2777
        %v2786 = vadd.f32 %v2748, %v2780
        %v2787 = vadd.f32 %v2749, %v2781
        %v2788 = vadd.f32 %v2750, %v2782
        %v2789 = vadd.f32 %v2751, %v2783
        %v2790 = vadd.f32 %v2752, %v2784
        %v2791 = vadd.f32 %v2753, %v2785
        %2792 = vst [vmem:[#allocation4 + $0x10] sm:$0xff] %v2786
        %2793 = vst [vmem:[#allocation4 + $0x18] sm:$0xff] %v2787
        %2794 = vst [vmem:[#allocation4 + $0x20] sm:$0xff] %v2788
        %2795 = vst [vmem:[#allocation4 + $0x28] sm:$0xff] %v2789
        %2796 = vst [vmem:[#allocation4 + $0x30] sm:$0xf] %v2790
        %2797 = vst [vmem:[#allocation4 + $0x38] sm:$0xf] %v2791
        %s2798 = scalar_lea.vmem [#allocation4], 16
        %v2799 = vld [vmem:[%s2798] ss:$8 sm:$0x3]
        %v2800 = vmul.f32 %v2799, %v2799
        %v2802 = vlaneseq
        %v2803 = vshrl.u32 %v2802, 7
        %v2804 = vsub.s32 0, %v2803
        %v2805 = vrot.slane %v2800, %v2804
        %v2806 = vlaneseq
        %v2807 = vshrl.u32 %v2806, 7
        %v2808 = vsub.s32 1, %v2807
        %v2809 = vrot.slane %v2800, %v2808
        %2812 = vmatprep.subr.mxu0 0.0
        %2813 = vmatpush1.msra.mxu0 %v465
        %2814 = vmatprep.subr.mxu0 0.0
        %2815 = vmatpush1.msra.mxu0 %v464
        %2816 = vmatprep.subr.mxu0 0.0
        %2817 = vmatpush1.msra.mxu0 %v463
        %2818 = vmatprep.subr.mxu0 0.0
        %2819 = vmatpush1.msra.mxu0 %v462
        %2820 = vmatprep.subr.mxu0 0.0
        %2821 = vmatpush1.msra.mxu0 %v461
        %2822 = vmatprep.subr.mxu0 0.0
        %2823 = vmatpush1.msra.mxu0 %v460
        %2824 = vmatprep.subr.mxu0 0.0
        %2825 = vmatpush1.msra.mxu0 %v459
        %2826 = vmatprep.subr.mxu0 0.0
        %2827 = vmatpush1.msra.mxu0 %v458
        %2828 = vmatprep.subr.mxu0 0.0
        %2829 = vmatpush1.msra.mxu0 %v457
        %2830 = vmatprep.subr.mxu0 0.0
        %2831 = vmatpush1.msra.mxu0 %v456
        %2832 = vmatprep.subr.mxu0 0.0
        %2833 = vmatpush1.msra.mxu0 %v455
        %2834 = vmatprep.subr.mxu0 0.0
        %2835 = vmatpush1.msra.mxu0 %v454
        %2836 = vmatprep.subr.mxu0 0.0
        %2837 = vmatpush1.msra.mxu0 %v453
        %2838 = vmatprep.subr.mxu0 0.0
        %2839 = vmatpush1.msra.mxu0 %v452
        %2840 = vmatprep.subr.mxu0 0.0
        %2841 = vmatpush1.msra.mxu0 %v451
        %2842 = vmatprep.subr.mxu0 0.0
        %2843 = vmatpush1.msra.mxu0 %v450
        %2844 = vmatprep.subr.mxu0 0.0
        %2845 = vmatpush2.msra.mxu0 %v481
        %2846 = vmatprep.subr.mxu0 0.0
        %2847 = vmatpush2.msra.mxu0 %v480
        %2848 = vmatprep.subr.mxu0 0.0
        %2849 = vmatpush2.msra.mxu0 %v479
        %2850 = vmatprep.subr.mxu0 0.0
        %2851 = vmatpush2.msra.mxu0 %v478
        %2852 = vmatprep.subr.mxu0 0.0
        %2853 = vmatpush2.msra.mxu0 %v477
        %2854 = vmatprep.subr.mxu0 0.0
        %2855 = vmatpush2.msra.mxu0 %v476
        %2856 = vmatprep.subr.mxu0 0.0
        %2857 = vmatpush2.msra.mxu0 %v475
        %2858 = vmatprep.subr.mxu0 0.0
        %2859 = vmatpush2.msra.mxu0 %v474
        %2860 = vmatprep.subr.mxu0 0.0
        %2861 = vmatpush2.msra.mxu0 %v473
        %2862 = vmatprep.subr.mxu0 0.0
        %2863 = vmatpush2.msra.mxu0 %v472
        %2864 = vmatprep.subr.mxu0 0.0
        %2865 = vmatpush2.msra.mxu0 %v471
        %2866 = vmatprep.subr.mxu0 0.0
        %2867 = vmatpush2.msra.mxu0 %v470
        %2868 = vmatprep.subr.mxu0 0.0
        %2869 = vmatpush2.msra.mxu0 %v469
        %2870 = vmatprep.subr.mxu0 0.0
        %2871 = vmatpush2.msra.mxu0 %v468
        %2872 = vmatprep.subr.mxu0 0.0
        %2873 = vmatpush2.msra.mxu0 %v467
        %2874 = vmatprep.subr.mxu0 0.0
        %2875 = vmatpush2.msra.mxu0 %v466
        %2876 = vmatprep.mubr.f32.mxu0 %v2809
        %2877 = vmatmul.mubr.f32.gmra.mxu0 %v2805
        %v2878 = vpop.f32.mrf.mxu0
        %v2879 = vadd.f32 1e-12, %v2878
        %v2880 = vpop.f32.mrf.mxu0
        %2881 = vdwg.mxu0
        %v2882 = vrsqrt.pop %v2879
        %v2884 = vsel %vm719, %v2882, 0
        %2886 = vmatprep.subr.mxu0 0.0
        %2887 = vmatpush1.msra.mxu0 0.0
        %2888 = vmatprep.subr.mxu0 0.0
        %2889 = vmatpush1.msra.mxu0 0.0
        %2890 = vmatprep.subr.mxu0 0.0
        %2891 = vmatpush1.msra.mxu0 0.0
        %2892 = vmatprep.subr.mxu0 0.0
        %2893 = vmatpush1.msra.mxu0 0.0
        %2894 = vmatprep.subr.mxu0 0.0
        %2895 = vmatpush1.msra.mxu0 0.0
        %2896 = vmatprep.subr.mxu0 0.0
        %2897 = vmatpush1.msra.mxu0 0.0
        %2898 = vmatprep.subr.mxu0 0.0
        %2899 = vmatpush1.msra.mxu0 0.0
        %2900 = vmatprep.subr.mxu0 0.0
        %2901 = vmatpush1.msra.mxu0 0.0
        %2902 = vmatprep.subr.mxu0 0.0
        %2903 = vmatpush1.msra.mxu0 0.0
        %2904 = vmatprep.subr.mxu0 0.0
        %2905 = vmatpush1.msra.mxu0 0.0
        %2906 = vmatprep.subr.mxu0 0.0
        %2907 = vmatpush1.msra.mxu0 0.0
        %2908 = vmatprep.subr.mxu0 0.0
        %2909 = vmatpush1.msra.mxu0 0.0
        %2910 = vmatprep.subr.mxu0 0.0
        %2911 = vmatpush1.msra.mxu0 0.0
        %2912 = vmatprep.subr.mxu0 0.0
        %2913 = vmatpush1.msra.mxu0 0.0
        %2914 = vmatprep.subr.mxu0 0.0
        %2915 = vmatpush1.msra.mxu0 0.0
        %2916 = vmatprep.subr.mxu0 %v483
        %2917 = vmatpush1.msra.mxu0 %v482
        %2918 = vmatprep.subr.mxu0 0.0
        %2919 = vmatpush2.msra.mxu0 0.0
        %2920 = vmatprep.subr.mxu0 0.0
        %2921 = vmatpush2.msra.mxu0 0.0
        %2922 = vmatprep.subr.mxu0 0.0
        %2923 = vmatpush2.msra.mxu0 0.0
        %2924 = vmatprep.subr.mxu0 0.0
        %2925 = vmatpush2.msra.mxu0 0.0
        %2926 = vmatprep.subr.mxu0 0.0
        %2927 = vmatpush2.msra.mxu0 0.0
        %2928 = vmatprep.subr.mxu0 0.0
        %2929 = vmatpush2.msra.mxu0 0.0
        %2930 = vmatprep.subr.mxu0 0.0
        %2931 = vmatpush2.msra.mxu0 0.0
        %2932 = vmatprep.subr.mxu0 0.0
        %2933 = vmatpush2.msra.mxu0 0.0
        %2934 = vmatprep.subr.mxu0 0.0
        %2935 = vmatpush2.msra.mxu0 0.0
        %2936 = vmatprep.subr.mxu0 0.0
        %2937 = vmatpush2.msra.mxu0 0.0
        %2938 = vmatprep.subr.mxu0 0.0
        %2939 = vmatpush2.msra.mxu0 0.0
        %2940 = vmatprep.subr.mxu0 0.0
        %2941 = vmatpush2.msra.mxu0 0.0
        %2942 = vmatprep.subr.mxu0 0.0
        %2943 = vmatpush2.msra.mxu0 0.0
        %2944 = vmatprep.subr.mxu0 0.0
        %2945 = vmatpush2.msra.mxu0 0.0
        %2946 = vmatprep.subr.mxu0 0.0
        %2947 = vmatpush2.msra.mxu0 0.0
        %2948 = vmatprep.subr.mxu0 0.0
        %2949 = vmatpush2.msra.mxu0 0.0
        %2950 = vmatprep.mubr.f32.mxu0 0.0
        %2951 = vmatmul.mubr.f32.gmra.mxu0 %v2884
        %v2952 = vpop.f32.mrf.mxu0
        %v2953 = vadd.f32 0.0, %v2952
        %v2954 = vpop.f32.mrf.mxu0
        %v2955 = vadd.f32 0.0, %v2954
        %2956 = vdwg.mxu0
        %v2957 = vsub.f32 0.0, %v2799
        %v2960 = vcombine.low %v2953, %v2955
        %v2962 = vunpack.c.l.s4 1966171168
        %v2963 = vunpack.c.0.s8 %v2962
        %v2964 = vlaneseq
        %v2965 = vshrl.u32 %v2964, 7
        %v2966 = vsub.s32 %v2963, %v2965
        %v2967 = vrot.slane %v2960, %v2966
        %v2969 = vunpack.c.l.s4 1966171168
        %v2970 = vunpack.c.0.s8 %v2969
        %v2971 = vlaneseq
        %v2972 = vshrl.u32 %v2971, 7
        %v2973 = vsub.s32 %v2970, %v2972
        %v2974 = vrot.slane %v2967, %v2973
        %v2976 = vmul.f32 %v2957, %v2974
        %s2977 = scalar_lea.vmem [#allocation3], 16
        %v2978 = vld [vmem:[%s2977] ss:$8 sm:$0x3]
        %v2979 = vsub.f32 %v2976, %v2978
        %2980 = vst.msk [vmem:[%s2977] ss:$8 sm:$0x3] %vm819, %v2976
        %2981 = vst.msk [vmem:[%s2977] ss:$8 sm:$0x0] %vm819, %v2976
        %s2982 = scalar_lea.vmem %s1, 256
        %v2983 = vld [vmem:[%s2982 + $0x9] sm:$0xff]
        %v2984 = vld [vmem:[%s2982 + $0x11] sm:$0xff]
        %v2985 = vld [vmem:[%s2982 + $0x19] sm:$0x7]
        %v2986 = vld [vmem:[#allocation4 + $0x10] sm:$0xfe]
        %v2987 = vld [vmem:[#allocation4 + $0x18] sm:$0xfe]
        %v2988 = vld [vmem:[#allocation4 + $0x20] sm:$0xff]
        %v2989 = vld [vmem:[#allocation4 + $0x28] sm:$0xff]
        %v2990 = vld [vmem:[#allocation4 + $0x30] sm:$0xf]
        %v2991 = vld [vmem:[#allocation4 + $0x38] sm:$0xf]
        %2993 = vset.pattern.permute.xlu0 0
        %2994 = vperm.xlu0 %2993, %v2983
        %v2995 = vpop.permute.xlu0 %2994
        %2998 = vset.pattern.permute.xlu0 0
        %2999 = vperm.xlu0 %2998, %v2984
        %v3000 = vpop.permute.xlu0 %2999
        %3003 = vset.pattern.permute.xlu0 0
        %3004 = vperm.xlu0 %3003, %v2985
        %v3005 = vpop.permute.xlu0 %3004
        %v3008 = vlaneseq
        %v3009 = vshrl.u32 %v3008, 7
        %v3010 = vsub.s32 0, %v3009
        %v3011 = vrot.slane %v2979, %v3010
        %v3012 = vlaneseq
        %v3013 = vshrl.u32 %v3012, 7
        %v3014 = vsub.s32 1, %v3013
        %v3015 = vrot.slane %v2979, %v3014
        %v3018 = vmul.f32 %v2995, %v3011
        %v3019 = vmul.f32 %v2995, %v3015
        %v3020 = vmul.f32 %v3000, %v3011
        %v3021 = vmul.f32 %v3000, %v3015
        %v3022 = vmul.f32 %v3005, %v3011
        %v3023 = vmul.f32 %v3005, %v3015
        %v3030 = vrot.slane %v3018, 7
        %v3031 = vrot.slane %v3019, 7
        %v3032 = vrot.slane %v3020, 7
        %v3033 = vsel %vm881, %v3030, %v3032
        %v3034 = vrot.slane %v3021, 7
        %v3035 = vsel %vm881, %v3031, %v3034
        %v3036 = vrot.slane %v3022, 7
        %v3037 = vsel %vm881, %v3032, %v3036
        %v3038 = vrot.slane %v3023, 7
        %v3039 = vsel %vm881, %v3034, %v3038
        %v3046 = vadd.f32 %v2986, %v3030
        %v3047 = vadd.f32 %v2987, %v3031
        %v3048 = vadd.f32 %v2988, %v3033
        %v3049 = vadd.f32 %v2989, %v3035
        %v3050 = vadd.f32 %v2990, %v3037
        %v3051 = vadd.f32 %v2991, %v3039
        %3052 = vst [vmem:[#allocation4 + $0x10] sm:$0xfe] %v3046
        %3053 = vst [vmem:[#allocation4 + $0x18] sm:$0xfe] %v3047
        %3054 = vst [vmem:[#allocation4 + $0x20] sm:$0xff] %v3048
        %3055 = vst [vmem:[#allocation4 + $0x28] sm:$0xff] %v3049
        %3056 = vst [vmem:[#allocation4 + $0x30] sm:$0xf] %v3050
        %3057 = vst [vmem:[#allocation4 + $0x38] sm:$0xf] %v3051
        %s3058 = scalar_lea.vmem [#allocation4], 17
        %v3059 = vld [vmem:[%s3058] ss:$8 sm:$0x3]
        %v3060 = vmul.f32 %v3059, %v3059
        %v3062 = vlaneseq
        %v3063 = vshrl.u32 %v3062, 7
        %v3064 = vsub.s32 0, %v3063
        %v3065 = vrot.slane %v3060, %v3064
        %v3066 = vlaneseq
        %v3067 = vshrl.u32 %v3066, 7
        %v3068 = vsub.s32 1, %v3067
        %v3069 = vrot.slane %v3060, %v3068
        %3072 = vmatprep.subr.mxu0 0.0
        %3073 = vmatpush1.msra.mxu0 %v465
        %3074 = vmatprep.subr.mxu0 0.0
        %3075 = vmatpush1.msra.mxu0 %v464
        %3076 = vmatprep.subr.mxu0 0.0
        %3077 = vmatpush1.msra.mxu0 %v463
        %3078 = vmatprep.subr.mxu0 0.0
        %3079 = vmatpush1.msra.mxu0 %v462
        %3080 = vmatprep.subr.mxu0 0.0
        %3081 = vmatpush1.msra.mxu0 %v461
        %3082 = vmatprep.subr.mxu0 0.0
        %3083 = vmatpush1.msra.mxu0 %v460
        %3084 = vmatprep.subr.mxu0 0.0
        %3085 = vmatpush1.msra.mxu0 %v459
        %3086 = vmatprep.subr.mxu0 0.0
        %3087 = vmatpush1.msra.mxu0 %v458
        %3088 = vmatprep.subr.mxu0 0.0
        %3089 = vmatpush1.msra.mxu0 %v457
        %3090 = vmatprep.subr.mxu0 0.0
        %3091 = vmatpush1.msra.mxu0 %v456
        %3092 = vmatprep.subr.mxu0 0.0
        %3093 = vmatpush1.msra.mxu0 %v455
        %3094 = vmatprep.subr.mxu0 0.0
        %3095 = vmatpush1.msra.mxu0 %v454
        %3096 = vmatprep.subr.mxu0 0.0
        %3097 = vmatpush1.msra.mxu0 %v453
        %3098 = vmatprep.subr.mxu0 0.0
        %3099 = vmatpush1.msra.mxu0 %v452
        %3100 = vmatprep.subr.mxu0 0.0
        %3101 = vmatpush1.msra.mxu0 %v451
        %3102 = vmatprep.subr.mxu0 0.0
        %3103 = vmatpush1.msra.mxu0 %v450
        %3104 = vmatprep.subr.mxu0 0.0
        %3105 = vmatpush2.msra.mxu0 %v481
        %3106 = vmatprep.subr.mxu0 0.0
        %3107 = vmatpush2.msra.mxu0 %v480
        %3108 = vmatprep.subr.mxu0 0.0
        %3109 = vmatpush2.msra.mxu0 %v479
        %3110 = vmatprep.subr.mxu0 0.0
        %3111 = vmatpush2.msra.mxu0 %v478
        %3112 = vmatprep.subr.mxu0 0.0
        %3113 = vmatpush2.msra.mxu0 %v477
        %3114 = vmatprep.subr.mxu0 0.0
        %3115 = vmatpush2.msra.mxu0 %v476
        %3116 = vmatprep.subr.mxu0 0.0
        %3117 = vmatpush2.msra.mxu0 %v475
        %3118 = vmatprep.subr.mxu0 0.0
        %3119 = vmatpush2.msra.mxu0 %v474
        %3120 = vmatprep.subr.mxu0 0.0
        %3121 = vmatpush2.msra.mxu0 %v473
        %3122 = vmatprep.subr.mxu0 0.0
        %3123 = vmatpush2.msra.mxu0 %v472
        %3124 = vmatprep.subr.mxu0 0.0
        %3125 = vmatpush2.msra.mxu0 %v471
        %3126 = vmatprep.subr.mxu0 0.0
        %3127 = vmatpush2.msra.mxu0 %v470
        %3128 = vmatprep.subr.mxu0 0.0
        %3129 = vmatpush2.msra.mxu0 %v469
        %3130 = vmatprep.subr.mxu0 0.0
        %3131 = vmatpush2.msra.mxu0 %v468
        %3132 = vmatprep.subr.mxu0 0.0
        %3133 = vmatpush2.msra.mxu0 %v467
        %3134 = vmatprep.subr.mxu0 0.0
        %3135 = vmatpush2.msra.mxu0 %v466
        %3136 = vmatprep.mubr.f32.mxu0 %v3069
        %3137 = vmatmul.mubr.f32.gmra.mxu0 %v3065
        %v3138 = vpop.f32.mrf.mxu0
        %v3139 = vadd.f32 1e-12, %v3138
        %v3140 = vpop.f32.mrf.mxu0
        %3141 = vdwg.mxu0
        %v3142 = vrsqrt.pop %v3139
        %v3144 = vsel %vm719, %v3142, 0
        %3146 = vmatprep.subr.mxu0 0.0
        %3147 = vmatpush1.msra.mxu0 0.0
        %3148 = vmatprep.subr.mxu0 0.0
        %3149 = vmatpush1.msra.mxu0 0.0
        %3150 = vmatprep.subr.mxu0 0.0
        %3151 = vmatpush1.msra.mxu0 0.0
        %3152 = vmatprep.subr.mxu0 0.0
        %3153 = vmatpush1.msra.mxu0 0.0
        %3154 = vmatprep.subr.mxu0 0.0
        %3155 = vmatpush1.msra.mxu0 0.0
        %3156 = vmatprep.subr.mxu0 0.0
        %3157 = vmatpush1.msra.mxu0 0.0
        %3158 = vmatprep.subr.mxu0 0.0
        %3159 = vmatpush1.msra.mxu0 0.0
        %3160 = vmatprep.subr.mxu0 0.0
        %3161 = vmatpush1.msra.mxu0 0.0
        %3162 = vmatprep.subr.mxu0 0.0
        %3163 = vmatpush1.msra.mxu0 0.0
        %3164 = vmatprep.subr.mxu0 0.0
        %3165 = vmatpush1.msra.mxu0 0.0
        %3166 = vmatprep.subr.mxu0 0.0
        %3167 = vmatpush1.msra.mxu0 0.0
        %3168 = vmatprep.subr.mxu0 0.0
        %3169 = vmatpush1.msra.mxu0 0.0
        %3170 = vmatprep.subr.mxu0 0.0
        %3171 = vmatpush1.msra.mxu0 0.0
        %3172 = vmatprep.subr.mxu0 0.0
        %3173 = vmatpush1.msra.mxu0 0.0
        %3174 = vmatprep.subr.mxu0 0.0
        %3175 = vmatpush1.msra.mxu0 0.0
        %3176 = vmatprep.subr.mxu0 %v483
        %3177 = vmatpush1.msra.mxu0 %v482
        %3178 = vmatprep.subr.mxu0 0.0
        %3179 = vmatpush2.msra.mxu0 0.0
        %3180 = vmatprep.subr.mxu0 0.0
        %3181 = vmatpush2.msra.mxu0 0.0
        %3182 = vmatprep.subr.mxu0 0.0
        %3183 = vmatpush2.msra.mxu0 0.0
        %3184 = vmatprep.subr.mxu0 0.0
        %3185 = vmatpush2.msra.mxu0 0.0
        %3186 = vmatprep.subr.mxu0 0.0
        %3187 = vmatpush2.msra.mxu0 0.0
        %3188 = vmatprep.subr.mxu0 0.0
        %3189 = vmatpush2.msra.mxu0 0.0
        %3190 = vmatprep.subr.mxu0 0.0
        %3191 = vmatpush2.msra.mxu0 0.0
        %3192 = vmatprep.subr.mxu0 0.0
        %3193 = vmatpush2.msra.mxu0 0.0
        %3194 = vmatprep.subr.mxu0 0.0
        %3195 = vmatpush2.msra.mxu0 0.0
        %3196 = vmatprep.subr.mxu0 0.0
        %3197 = vmatpush2.msra.mxu0 0.0
        %3198 = vmatprep.subr.mxu0 0.0
        %3199 = vmatpush2.msra.mxu0 0.0
        %3200 = vmatprep.subr.mxu0 0.0
        %3201 = vmatpush2.msra.mxu0 0.0
        %3202 = vmatprep.subr.mxu0 0.0
        %3203 = vmatpush2.msra.mxu0 0.0
        %3204 = vmatprep.subr.mxu0 0.0
        %3205 = vmatpush2.msra.mxu0 0.0
        %3206 = vmatprep.subr.mxu0 0.0
        %3207 = vmatpush2.msra.mxu0 0.0
        %3208 = vmatprep.subr.mxu0 0.0
        %3209 = vmatpush2.msra.mxu0 0.0
        %3210 = vmatprep.mubr.f32.mxu0 0.0
        %3211 = vmatmul.mubr.f32.gmra.mxu0 %v3144
        %v3212 = vpop.f32.mrf.mxu0
        %v3213 = vadd.f32 0.0, %v3212
        %v3214 = vpop.f32.mrf.mxu0
        %v3215 = vadd.f32 0.0, %v3214
        %3216 = vdwg.mxu0
        %v3217 = vsub.f32 0.0, %v3059
        %v3220 = vcombine.low %v3213, %v3215
        %v3222 = vunpack.c.l.s4 1966171168
        %v3223 = vunpack.c.0.s8 %v3222
        %v3224 = vlaneseq
        %v3225 = vshrl.u32 %v3224, 7
        %v3226 = vsub.s32 %v3223, %v3225
        %v3227 = vrot.slane %v3220, %v3226
        %v3229 = vunpack.c.l.s4 1966171168
        %v3230 = vunpack.c.0.s8 %v3229
        %v3231 = vlaneseq
        %v3232 = vshrl.u32 %v3231, 7
        %v3233 = vsub.s32 %v3230, %v3232
        %v3234 = vrot.slane %v3227, %v3233
        %v3236 = vmul.f32 %v3217, %v3234
        %s3237 = scalar_lea.vmem [#allocation3], 17
        %v3238 = vld [vmem:[%s3237] ss:$8 sm:$0x3]
        %v3239 = vsub.f32 %v3236, %v3238
        %3240 = vst.msk [vmem:[%s3237] ss:$8 sm:$0x3] %vm819, %v3236
        %3241 = vst.msk [vmem:[%s3237] ss:$8 sm:$0x0] %vm819, %v3236
        %s3242 = scalar_lea.vmem %s1, 288
        %v3243 = vld [vmem:[%s3242 + $0xa] sm:$0xff]
        %v3244 = vld [vmem:[%s3242 + $0x12] sm:$0xff]
        %v3245 = vld [vmem:[%s3242 + $0x1a] sm:$0x3]
        %v3246 = vld [vmem:[#allocation4 + $0x10] sm:$0xfc]
        %v3247 = vld [vmem:[#allocation4 + $0x18] sm:$0xfc]
        %v3248 = vld [vmem:[#allocation4 + $0x20] sm:$0xff]
        %v3249 = vld [vmem:[#allocation4 + $0x28] sm:$0xff]
        %v3250 = vld [vmem:[#allocation4 + $0x30] sm:$0xf]
        %v3251 = vld [vmem:[#allocation4 + $0x38] sm:$0xf]
        %3253 = vset.pattern.permute.xlu0 0
        %3254 = vperm.xlu0 %3253, %v3243
        %v3255 = vpop.permute.xlu0 %3254
        %3258 = vset.pattern.permute.xlu0 0
        %3259 = vperm.xlu0 %3258, %v3244
        %v3260 = vpop.permute.xlu0 %3259
        %3263 = vset.pattern.permute.xlu0 0
        %3264 = vperm.xlu0 %3263, %v3245
        %v3265 = vpop.permute.xlu0 %3264
        %v3268 = vlaneseq
        %v3269 = vshrl.u32 %v3268, 7
        %v3270 = vsub.s32 0, %v3269
        %v3271 = vrot.slane %v3239, %v3270
        %v3272 = vlaneseq
        %v3273 = vshrl.u32 %v3272, 7
        %v3274 = vsub.s32 1, %v3273
        %v3275 = vrot.slane %v3239, %v3274
        %v3278 = vmul.f32 %v3255, %v3271
        %v3279 = vmul.f32 %v3255, %v3275
        %v3280 = vmul.f32 %v3260, %v3271
        %v3281 = vmul.f32 %v3260, %v3275
        %v3282 = vmul.f32 %v3265, %v3271
        %v3283 = vmul.f32 %v3265, %v3275
        %v3290 = vrot.slane %v3278, 6
        %v3291 = vrot.slane %v3279, 6
        %v3292 = vrot.slane %v3280, 6
        %v3293 = vsel %vm330, %v3290, %v3292
        %v3294 = vrot.slane %v3281, 6
        %v3295 = vsel %vm330, %v3291, %v3294
        %v3296 = vrot.slane %v3282, 6
        %v3297 = vsel %vm330, %v3292, %v3296
        %v3298 = vrot.slane %v3283, 6
        %v3299 = vsel %vm330, %v3294, %v3298
        %v3306 = vadd.f32 %v3246, %v3290
        %v3307 = vadd.f32 %v3247, %v3291
        %v3308 = vadd.f32 %v3248, %v3293
        %v3309 = vadd.f32 %v3249, %v3295
        %v3310 = vadd.f32 %v3250, %v3297
        %v3311 = vadd.f32 %v3251, %v3299
        %3312 = vst [vmem:[#allocation4 + $0x10] sm:$0xfc] %v3306
        %3313 = vst [vmem:[#allocation4 + $0x18] sm:$0xfc] %v3307
        %3314 = vst [vmem:[#allocation4 + $0x20] sm:$0xff] %v3308
        %3315 = vst [vmem:[#allocation4 + $0x28] sm:$0xff] %v3309
        %3316 = vst [vmem:[#allocation4 + $0x30] sm:$0xf] %v3310
        %3317 = vst [vmem:[#allocation4 + $0x38] sm:$0xf] %v3311
        %s3318 = scalar_lea.vmem [#allocation4], 18
        %v3319 = vld [vmem:[%s3318] ss:$8 sm:$0x3]
        %v3320 = vmul.f32 %v3319, %v3319
        %v3322 = vlaneseq
        %v3323 = vshrl.u32 %v3322, 7
        %v3324 = vsub.s32 0, %v3323
        %v3325 = vrot.slane %v3320, %v3324
        %v3326 = vlaneseq
        %v3327 = vshrl.u32 %v3326, 7
        %v3328 = vsub.s32 1, %v3327
        %v3329 = vrot.slane %v3320, %v3328
        %3332 = vmatprep.subr.mxu0 0.0
        %3333 = vmatpush1.msra.mxu0 %v465
        %3334 = vmatprep.subr.mxu0 0.0
        %3335 = vmatpush1.msra.mxu0 %v464
        %3336 = vmatprep.subr.mxu0 0.0
        %3337 = vmatpush1.msra.mxu0 %v463
        %3338 = vmatprep.subr.mxu0 0.0
        %3339 = vmatpush1.msra.mxu0 %v462
        %3340 = vmatprep.subr.mxu0 0.0
        %3341 = vmatpush1.msra.mxu0 %v461
        %3342 = vmatprep.subr.mxu0 0.0
        %3343 = vmatpush1.msra.mxu0 %v460
        %3344 = vmatprep.subr.mxu0 0.0
        %3345 = vmatpush1.msra.mxu0 %v459
        %3346 = vmatprep.subr.mxu0 0.0
        %3347 = vmatpush1.msra.mxu0 %v458
        %3348 = vmatprep.subr.mxu0 0.0
        %3349 = vmatpush1.msra.mxu0 %v457
        %3350 = vmatprep.subr.mxu0 0.0
        %3351 = vmatpush1.msra.mxu0 %v456
        %3352 = vmatprep.subr.mxu0 0.0
        %3353 = vmatpush1.msra.mxu0 %v455
        %3354 = vmatprep.subr.mxu0 0.0
        %3355 = vmatpush1.msra.mxu0 %v454
        %3356 = vmatprep.subr.mxu0 0.0
        %3357 = vmatpush1.msra.mxu0 %v453
        %3358 = vmatprep.subr.mxu0 0.0
        %3359 = vmatpush1.msra.mxu0 %v452
        %3360 = vmatprep.subr.mxu0 0.0
        %3361 = vmatpush1.msra.mxu0 %v451
        %3362 = vmatprep.subr.mxu0 0.0
        %3363 = vmatpush1.msra.mxu0 %v450
        %3364 = vmatprep.subr.mxu0 0.0
        %3365 = vmatpush2.msra.mxu0 %v481
        %3366 = vmatprep.subr.mxu0 0.0
        %3367 = vmatpush2.msra.mxu0 %v480
        %3368 = vmatprep.subr.mxu0 0.0
        %3369 = vmatpush2.msra.mxu0 %v479
        %3370 = vmatprep.subr.mxu0 0.0
        %3371 = vmatpush2.msra.mxu0 %v478
        %3372 = vmatprep.subr.mxu0 0.0
        %3373 = vmatpush2.msra.mxu0 %v477
        %3374 = vmatprep.subr.mxu0 0.0
        %3375 = vmatpush2.msra.mxu0 %v476
        %3376 = vmatprep.subr.mxu0 0.0
        %3377 = vmatpush2.msra.mxu0 %v475
        %3378 = vmatprep.subr.mxu0 0.0
        %3379 = vmatpush2.msra.mxu0 %v474
        %3380 = vmatprep.subr.mxu0 0.0
        %3381 = vmatpush2.msra.mxu0 %v473
        %3382 = vmatprep.subr.mxu0 0.0
        %3383 = vmatpush2.msra.mxu0 %v472
        %3384 = vmatprep.subr.mxu0 0.0
        %3385 = vmatpush2.msra.mxu0 %v471
        %3386 = vmatprep.subr.mxu0 0.0
        %3387 = vmatpush2.msra.mxu0 %v470
        %3388 = vmatprep.subr.mxu0 0.0
        %3389 = vmatpush2.msra.mxu0 %v469
        %3390 = vmatprep.subr.mxu0 0.0
        %3391 = vmatpush2.msra.mxu0 %v468
        %3392 = vmatprep.subr.mxu0 0.0
        %3393 = vmatpush2.msra.mxu0 %v467
        %3394 = vmatprep.subr.mxu0 0.0
        %3395 = vmatpush2.msra.mxu0 %v466
        %3396 = vmatprep.mubr.f32.mxu0 %v3329
        %3397 = vmatmul.mubr.f32.gmra.mxu0 %v3325
        %v3398 = vpop.f32.mrf.mxu0
        %v3399 = vadd.f32 1e-12, %v3398
        %v3400 = vpop.f32.mrf.mxu0
        %3401 = vdwg.mxu0
        %v3402 = vrsqrt.pop %v3399
        %v3404 = vsel %vm719, %v3402, 0
        %3406 = vmatprep.subr.mxu0 0.0
        %3407 = vmatpush1.msra.mxu0 0.0
        %3408 = vmatprep.subr.mxu0 0.0
        %3409 = vmatpush1.msra.mxu0 0.0
        %3410 = vmatprep.subr.mxu0 0.0
        %3411 = vmatpush1.msra.mxu0 0.0
        %3412 = vmatprep.subr.mxu0 0.0
        %3413 = vmatpush1.msra.mxu0 0.0
        %3414 = vmatprep.subr.mxu0 0.0
        %3415 = vmatpush1.msra.mxu0 0.0
        %3416 = vmatprep.subr.mxu0 0.0
        %3417 = vmatpush1.msra.mxu0 0.0
        %3418 = vmatprep.subr.mxu0 0.0
        %3419 = vmatpush1.msra.mxu0 0.0
        %3420 = vmatprep.subr.mxu0 0.0
        %3421 = vmatpush1.msra.mxu0 0.0
        %3422 = vmatprep.subr.mxu0 0.0
        %3423 = vmatpush1.msra.mxu0 0.0
        %3424 = vmatprep.subr.mxu0 0.0
        %3425 = vmatpush1.msra.mxu0 0.0
        %3426 = vmatprep.subr.mxu0 0.0
        %3427 = vmatpush1.msra.mxu0 0.0
        %3428 = vmatprep.subr.mxu0 0.0
        %3429 = vmatpush1.msra.mxu0 0.0
        %3430 = vmatprep.subr.mxu0 0.0
        %3431 = vmatpush1.msra.mxu0 0.0
        %3432 = vmatprep.subr.mxu0 0.0
        %3433 = vmatpush1.msra.mxu0 0.0
        %3434 = vmatprep.subr.mxu0 0.0
        %3435 = vmatpush1.msra.mxu0 0.0
        %3436 = vmatprep.subr.mxu0 %v483
        %3437 = vmatpush1.msra.mxu0 %v482
        %3438 = vmatprep.subr.mxu0 0.0
        %3439 = vmatpush2.msra.mxu0 0.0
        %3440 = vmatprep.subr.mxu0 0.0
        %3441 = vmatpush2.msra.mxu0 0.0
        %3442 = vmatprep.subr.mxu0 0.0
        %3443 = vmatpush2.msra.mxu0 0.0
        %3444 = vmatprep.subr.mxu0 0.0
        %3445 = vmatpush2.msra.mxu0 0.0
        %3446 = vmatprep.subr.mxu0 0.0
        %3447 = vmatpush2.msra.mxu0 0.0
        %3448 = vmatprep.subr.mxu0 0.0
        %3449 = vmatpush2.msra.mxu0 0.0
        %3450 = vmatprep.subr.mxu0 0.0
        %3451 = vmatpush2.msra.mxu0 0.0
        %3452 = vmatprep.subr.mxu0 0.0
        %3453 = vmatpush2.msra.mxu0 0.0
        %3454 = vmatprep.subr.mxu0 0.0
        %3455 = vmatpush2.msra.mxu0 0.0
        %3456 = vmatprep.subr.mxu0 0.0
        %3457 = vmatpush2.msra.mxu0 0.0
        %3458 = vmatprep.subr.mxu0 0.0
        %3459 = vmatpush2.msra.mxu0 0.0
        %3460 = vmatprep.subr.mxu0 0.0
        %3461 = vmatpush2.msra.mxu0 0.0
        %3462 = vmatprep.subr.mxu0 0.0
        %3463 = vmatpush2.msra.mxu0 0.0
        %3464 = vmatprep.subr.mxu0 0.0
        %3465 = vmatpush2.msra.mxu0 0.0
        %3466 = vmatprep.subr.mxu0 0.0
        %3467 = vmatpush2.msra.mxu0 0.0
        %3468 = vmatprep.subr.mxu0 0.0
        %3469 = vmatpush2.msra.mxu0 0.0
        %3470 = vmatprep.mubr.f32.mxu0 0.0
        %3471 = vmatmul.mubr.f32.gmra.mxu0 %v3404
        %v3472 = vpop.f32.mrf.mxu0
        %v3473 = vadd.f32 0.0, %v3472
        %v3474 = vpop.f32.mrf.mxu0
        %v3475 = vadd.f32 0.0, %v3474
        %3476 = vdwg.mxu0
        %v3477 = vsub.f32 0.0, %v3319
        %v3480 = vcombine.low %v3473, %v3475
        %v3482 = vunpack.c.l.s4 1966171168
        %v3483 = vunpack.c.0.s8 %v3482
        %v3484 = vlaneseq
        %v3485 = vshrl.u32 %v3484, 7
        %v3486 = vsub.s32 %v3483, %v3485
        %v3487 = vrot.slane %v3480, %v3486
        %v3489 = vunpack.c.l.s4 1966171168
        %v3490 = vunpack.c.0.s8 %v3489
        %v3491 = vlaneseq
        %v3492 = vshrl.u32 %v3491, 7
        %v3493 = vsub.s32 %v3490, %v3492
        %v3494 = vrot.slane %v3487, %v3493
        %v3496 = vmul.f32 %v3477, %v3494
        %s3497 = scalar_lea.vmem [#allocation3], 18
        %v3498 = vld [vmem:[%s3497] ss:$8 sm:$0x3]
        %v3499 = vsub.f32 %v3496, %v3498
        %3500 = vst.msk [vmem:[%s3497] ss:$8 sm:$0x3] %vm819, %v3496
        %3501 = vst.msk [vmem:[%s3497] ss:$8 sm:$0x0] %vm819, %v3496
        %s3502 = scalar_lea.vmem %s1, 320
        %v3503 = vld [vmem:[%s3502 + $0xb] sm:$0xff]
        %v3504 = vld [vmem:[%s3502 + $0x13] sm:$0xff]
        %v3505 = vld [vmem:[%s3502 + $0x1b] sm:$0x1]
        %v3506 = vld [vmem:[#allocation4 + $0x10] sm:$0xf8]
        %v3507 = vld [vmem:[#allocation4 + $0x18] sm:$0xf8]
        %v3508 = vld [vmem:[#allocation4 + $0x20] sm:$0xff]
        %v3509 = vld [vmem:[#allocation4 + $0x28] sm:$0xff]
        %v3510 = vld [vmem:[#allocation4 + $0x30] sm:$0xf]
        %v3511 = vld [vmem:[#allocation4 + $0x38] sm:$0xf]
        %3513 = vset.pattern.permute.xlu0 0
        %3514 = vperm.xlu0 %3513, %v3503
        %v3515 = vpop.permute.xlu0 %3514
        %3518 = vset.pattern.permute.xlu0 0
        %3519 = vperm.xlu0 %3518, %v3504
        %v3520 = vpop.permute.xlu0 %3519
        %3523 = vset.pattern.permute.xlu0 0
        %3524 = vperm.xlu0 %3523, %v3505
        %v3525 = vpop.permute.xlu0 %3524
        %v3528 = vlaneseq
        %v3529 = vshrl.u32 %v3528, 7
        %v3530 = vsub.s32 0, %v3529
        %v3531 = vrot.slane %v3499, %v3530
        %v3532 = vlaneseq
        %v3533 = vshrl.u32 %v3532, 7
        %v3534 = vsub.s32 1, %v3533
        %v3535 = vrot.slane %v3499, %v3534
        %v3538 = vmul.f32 %v3515, %v3531
        %v3539 = vmul.f32 %v3515, %v3535
        %v3540 = vmul.f32 %v3520, %v3531
        %v3541 = vmul.f32 %v3520, %v3535
        %v3542 = vmul.f32 %v3525, %v3531
        %v3543 = vmul.f32 %v3525, %v3535
        %v3550 = vrot.slane %v3538, 5
        %v3551 = vrot.slane %v3539, 5
        %v3552 = vrot.slane %v3540, 5
        %v3553 = vsel %vm1446, %v3550, %v3552
        %v3554 = vrot.slane %v3541, 5
        %v3555 = vsel %vm1446, %v3551, %v3554
        %v3556 = vrot.slane %v3542, 5
        %v3557 = vsel %vm1446, %v3552, %v3556
        %v3558 = vrot.slane %v3543, 5
        %v3559 = vsel %vm1446, %v3554, %v3558
        %v3566 = vadd.f32 %v3506, %v3550
        %v3567 = vadd.f32 %v3507, %v3551
        %v3568 = vadd.f32 %v3508, %v3553
        %v3569 = vadd.f32 %v3509, %v3555
        %v3570 = vadd.f32 %v3510, %v3557
        %v3571 = vadd.f32 %v3511, %v3559
        %3572 = vst [vmem:[#allocation4 + $0x10] sm:$0xf8] %v3566
        %3573 = vst [vmem:[#allocation4 + $0x18] sm:$0xf8] %v3567
        %3574 = vst [vmem:[#allocation4 + $0x20] sm:$0xff] %v3568
        %3575 = vst [vmem:[#allocation4 + $0x28] sm:$0xff] %v3569
        %3576 = vst [vmem:[#allocation4 + $0x30] sm:$0xf] %v3570
        %3577 = vst [vmem:[#allocation4 + $0x38] sm:$0xf] %v3571
        %s3578 = scalar_lea.vmem [#allocation4], 19
        %v3579 = vld [vmem:[%s3578] ss:$8 sm:$0x3]
        %v3580 = vmul.f32 %v3579, %v3579
        %v3582 = vlaneseq
        %v3583 = vshrl.u32 %v3582, 7
        %v3584 = vsub.s32 0, %v3583
        %v3585 = vrot.slane %v3580, %v3584
        %v3586 = vlaneseq
        %v3587 = vshrl.u32 %v3586, 7
        %v3588 = vsub.s32 1, %v3587
        %v3589 = vrot.slane %v3580, %v3588
        %3592 = vmatprep.subr.mxu0 0.0
        %3593 = vmatpush1.msra.mxu0 %v465
        %3594 = vmatprep.subr.mxu0 0.0
        %3595 = vmatpush1.msra.mxu0 %v464
        %3596 = vmatprep.subr.mxu0 0.0
        %3597 = vmatpush1.msra.mxu0 %v463
        %3598 = vmatprep.subr.mxu0 0.0
        %3599 = vmatpush1.msra.mxu0 %v462
        %3600 = vmatprep.subr.mxu0 0.0
        %3601 = vmatpush1.msra.mxu0 %v461
        %3602 = vmatprep.subr.mxu0 0.0
        %3603 = vmatpush1.msra.mxu0 %v460
        %3604 = vmatprep.subr.mxu0 0.0
        %3605 = vmatpush1.msra.mxu0 %v459
        %3606 = vmatprep.subr.mxu0 0.0
        %3607 = vmatpush1.msra.mxu0 %v458
        %3608 = vmatprep.subr.mxu0 0.0
        %3609 = vmatpush1.msra.mxu0 %v457
        %3610 = vmatprep.subr.mxu0 0.0
        %3611 = vmatpush1.msra.mxu0 %v456
        %3612 = vmatprep.subr.mxu0 0.0
        %3613 = vmatpush1.msra.mxu0 %v455
        %3614 = vmatprep.subr.mxu0 0.0
        %3615 = vmatpush1.msra.mxu0 %v454
        %3616 = vmatprep.subr.mxu0 0.0
        %3617 = vmatpush1.msra.mxu0 %v453
        %3618 = vmatprep.subr.mxu0 0.0
        %3619 = vmatpush1.msra.mxu0 %v452
        %3620 = vmatprep.subr.mxu0 0.0
        %3621 = vmatpush1.msra.mxu0 %v451
        %3622 = vmatprep.subr.mxu0 0.0
        %3623 = vmatpush1.msra.mxu0 %v450
        %3624 = vmatprep.subr.mxu0 0.0
        %3625 = vmatpush2.msra.mxu0 %v481
        %3626 = vmatprep.subr.mxu0 0.0
        %3627 = vmatpush2.msra.mxu0 %v480
        %3628 = vmatprep.subr.mxu0 0.0
        %3629 = vmatpush2.msra.mxu0 %v479
        %3630 = vmatprep.subr.mxu0 0.0
        %3631 = vmatpush2.msra.mxu0 %v478
        %3632 = vmatprep.subr.mxu0 0.0
        %3633 = vmatpush2.msra.mxu0 %v477
        %3634 = vmatprep.subr.mxu0 0.0
        %3635 = vmatpush2.msra.mxu0 %v476
        %3636 = vmatprep.subr.mxu0 0.0
        %3637 = vmatpush2.msra.mxu0 %v475
        %3638 = vmatprep.subr.mxu0 0.0
        %3639 = vmatpush2.msra.mxu0 %v474
        %3640 = vmatprep.subr.mxu0 0.0
        %3641 = vmatpush2.msra.mxu0 %v473
        %3642 = vmatprep.subr.mxu0 0.0
        %3643 = vmatpush2.msra.mxu0 %v472
        %3644 = vmatprep.subr.mxu0 0.0
        %3645 = vmatpush2.msra.mxu0 %v471
        %3646 = vmatprep.subr.mxu0 0.0
        %3647 = vmatpush2.msra.mxu0 %v470
        %3648 = vmatprep.subr.mxu0 0.0
        %3649 = vmatpush2.msra.mxu0 %v469
        %3650 = vmatprep.subr.mxu0 0.0
        %3651 = vmatpush2.msra.mxu0 %v468
        %3652 = vmatprep.subr.mxu0 0.0
        %3653 = vmatpush2.msra.mxu0 %v467
        %3654 = vmatprep.subr.mxu0 0.0
        %3655 = vmatpush2.msra.mxu0 %v466
        %3656 = vmatprep.mubr.f32.mxu0 %v3589
        %3657 = vmatmul.mubr.f32.gmra.mxu0 %v3585
        %v3658 = vpop.f32.mrf.mxu0
        %v3659 = vadd.f32 1e-12, %v3658
        %v3660 = vpop.f32.mrf.mxu0
        %3661 = vdwg.mxu0
        %v3662 = vrsqrt.pop %v3659
        %v3664 = vsel %vm719, %v3662, 0
        %3666 = vmatprep.subr.mxu0 0.0
        %3667 = vmatpush1.msra.mxu0 0.0
        %3668 = vmatprep.subr.mxu0 0.0
        %3669 = vmatpush1.msra.mxu0 0.0
        %3670 = vmatprep.subr.mxu0 0.0
        %3671 = vmatpush1.msra.mxu0 0.0
        %3672 = vmatprep.subr.mxu0 0.0
        %3673 = vmatpush1.msra.mxu0 0.0
        %3674 = vmatprep.subr.mxu0 0.0
        %3675 = vmatpush1.msra.mxu0 0.0
        %3676 = vmatprep.subr.mxu0 0.0
        %3677 = vmatpush1.msra.mxu0 0.0
        %3678 = vmatprep.subr.mxu0 0.0
        %3679 = vmatpush1.msra.mxu0 0.0
        %3680 = vmatprep.subr.mxu0 0.0
        %3681 = vmatpush1.msra.mxu0 0.0
        %3682 = vmatprep.subr.mxu0 0.0
        %3683 = vmatpush1.msra.mxu0 0.0
        %3684 = vmatprep.subr.mxu0 0.0
        %3685 = vmatpush1.msra.mxu0 0.0
        %3686 = vmatprep.subr.mxu0 0.0
        %3687 = vmatpush1.msra.mxu0 0.0
        %3688 = vmatprep.subr.mxu0 0.0
        %3689 = vmatpush1.msra.mxu0 0.0
        %3690 = vmatprep.subr.mxu0 0.0
        %3691 = vmatpush1.msra.mxu0 0.0
        %3692 = vmatprep.subr.mxu0 0.0
        %3693 = vmatpush1.msra.mxu0 0.0
        %3694 = vmatprep.subr.mxu0 0.0
        %3695 = vmatpush1.msra.mxu0 0.0
        %3696 = vmatprep.subr.mxu0 %v483
        %3697 = vmatpush1.msra.mxu0 %v482
        %3698 = vmatprep.subr.mxu0 0.0
        %3699 = vmatpush2.msra.mxu0 0.0
        %3700 = vmatprep.subr.mxu0 0.0
        %3701 = vmatpush2.msra.mxu0 0.0
        %3702 = vmatprep.subr.mxu0 0.0
        %3703 = vmatpush2.msra.mxu0 0.0
        %3704 = vmatprep.subr.mxu0 0.0
        %3705 = vmatpush2.msra.mxu0 0.0
        %3706 = vmatprep.subr.mxu0 0.0
        %3707 = vmatpush2.msra.mxu0 0.0
        %3708 = vmatprep.subr.mxu0 0.0
        %3709 = vmatpush2.msra.mxu0 0.0
        %3710 = vmatprep.subr.mxu0 0.0
        %3711 = vmatpush2.msra.mxu0 0.0
        %3712 = vmatprep.subr.mxu0 0.0
        %3713 = vmatpush2.msra.mxu0 0.0
        %3714 = vmatprep.subr.mxu0 0.0
        %3715 = vmatpush2.msra.mxu0 0.0
        %3716 = vmatprep.subr.mxu0 0.0
        %3717 = vmatpush2.msra.mxu0 0.0
        %3718 = vmatprep.subr.mxu0 0.0
        %3719 = vmatpush2.msra.mxu0 0.0
        %3720 = vmatprep.subr.mxu0 0.0
        %3721 = vmatpush2.msra.mxu0 0.0
        %3722 = vmatprep.subr.mxu0 0.0
        %3723 = vmatpush2.msra.mxu0 0.0
        %3724 = vmatprep.subr.mxu0 0.0
        %3725 = vmatpush2.msra.mxu0 0.0
        %3726 = vmatprep.subr.mxu0 0.0
        %3727 = vmatpush2.msra.mxu0 0.0
        %3728 = vmatprep.subr.mxu0 0.0
        %3729 = vmatpush2.msra.mxu0 0.0
        %3730 = vmatprep.mubr.f32.mxu0 0.0
        %3731 = vmatmul.mubr.f32.gmra.mxu0 %v3664
        %v3732 = vpop.f32.mrf.mxu0
        %v3733 = vadd.f32 0.0, %v3732
        %v3734 = vpop.f32.mrf.mxu0
        %v3735 = vadd.f32 0.0, %v3734
        %3736 = vdwg.mxu0
        %v3737 = vsub.f32 0.0, %v3579
        %v3740 = vcombine.low %v3733, %v3735
        %v3742 = vunpack.c.l.s4 1966171168
        %v3743 = vunpack.c.0.s8 %v3742
        %v3744 = vlaneseq
        %v3745 = vshrl.u32 %v3744, 7
        %v3746 = vsub.s32 %v3743, %v3745
        %v3747 = vrot.slane %v3740, %v3746
        %v3749 = vunpack.c.l.s4 1966171168
        %v3750 = vunpack.c.0.s8 %v3749
        %v3751 = vlaneseq
        %v3752 = vshrl.u32 %v3751, 7
        %v3753 = vsub.s32 %v3750, %v3752
        %v3754 = vrot.slane %v3747, %v3753
        %v3756 = vmul.f32 %v3737, %v3754
        %s3757 = scalar_lea.vmem [#allocation3], 19
        %v3758 = vld [vmem:[%s3757] ss:$8 sm:$0x3]
        %v3759 = vsub.f32 %v3756, %v3758
        %3760 = vst.msk [vmem:[%s3757] ss:$8 sm:$0x3] %vm819, %v3756
        %3761 = vst.msk [vmem:[%s3757] ss:$8 sm:$0x0] %vm819, %v3756
        %s3762 = scalar_lea.vmem %s1, 352
        %v3763 = vld [vmem:[%s3762 + $0xc] sm:$0xff]
        %v3764 = vld [vmem:[%s3762 + $0x14] sm:$0xff]
        %v3765 = vld [vmem:[#allocation4 + $0x10] sm:$0xf0]
        %v3766 = vld [vmem:[#allocation4 + $0x18] sm:$0xf0]
        %v3767 = vld [vmem:[#allocation4 + $0x20] sm:$0xff]
        %v3768 = vld [vmem:[#allocation4 + $0x28] sm:$0xff]
        %v3769 = vld [vmem:[#allocation4 + $0x30] sm:$0xf]
        %v3770 = vld [vmem:[#allocation4 + $0x38] sm:$0xf]
        %3772 = vset.pattern.permute.xlu0 0
        %3773 = vperm.xlu0 %3772, %v3763
        %v3774 = vpop.permute.xlu0 %3773
        %3777 = vset.pattern.permute.xlu0 0
        %3778 = vperm.xlu0 %3777, %v3764
        %v3779 = vpop.permute.xlu0 %3778
        %v3782 = vlaneseq
        %v3783 = vshrl.u32 %v3782, 7
        %v3784 = vsub.s32 0, %v3783
        %v3785 = vrot.slane %v3759, %v3784
        %v3786 = vlaneseq
        %v3787 = vshrl.u32 %v3786, 7
        %v3788 = vsub.s32 1, %v3787
        %v3789 = vrot.slane %v3759, %v3788
        %v3792 = vmul.f32 %v3774, %v3785
        %v3793 = vmul.f32 %v3774, %v3789
        %v3794 = vmul.f32 %v3779, %v3785
        %v3795 = vmul.f32 %v3779, %v3789
        %v3800 = vrot.slane %v3792, 4
        %v3801 = vrot.slane %v3793, 4
        %v3802 = vrot.slane %v3794, 4
        %v3803 = vsel %vm523, %v3800, %v3802
        %v3804 = vrot.slane %v3795, 4
        %v3805 = vsel %vm523, %v3801, %v3804
        %v3812 = vadd.f32 %v3765, %v3800
        %v3813 = vadd.f32 %v3766, %v3801
        %v3814 = vadd.f32 %v3767, %v3803
        %v3815 = vadd.f32 %v3768, %v3805
        %v3816 = vadd.f32 %v3769, %v3802
        %v3817 = vadd.f32 %v3770, %v3804
        %3818 = vst [vmem:[#allocation4 + $0x10] sm:$0xf0] %v3812
        %3819 = vst [vmem:[#allocation4 + $0x18] sm:$0xf0] %v3813
        %3820 = vst [vmem:[#allocation4 + $0x20] sm:$0xff] %v3814
        %3821 = vst [vmem:[#allocation4 + $0x28] sm:$0xff] %v3815
        %3822 = vst [vmem:[#allocation4 + $0x30] sm:$0xf] %v3816
        %3823 = vst [vmem:[#allocation4 + $0x38] sm:$0xf] %v3817
        %s3824 = scalar_lea.vmem [#allocation4], 20
        %v3825 = vld [vmem:[%s3824] ss:$8 sm:$0x3]
        %v3826 = vmul.f32 %v3825, %v3825
        %v3828 = vlaneseq
        %v3829 = vshrl.u32 %v3828, 7
        %v3830 = vsub.s32 0, %v3829
        %v3831 = vrot.slane %v3826, %v3830
        %v3832 = vlaneseq
        %v3833 = vshrl.u32 %v3832, 7
        %v3834 = vsub.s32 1, %v3833
        %v3835 = vrot.slane %v3826, %v3834
        %3838 = vmatprep.subr.mxu0 0.0
        %3839 = vmatpush1.msra.mxu0 %v465
        %3840 = vmatprep.subr.mxu0 0.0
        %3841 = vmatpush1.msra.mxu0 %v464
        %3842 = vmatprep.subr.mxu0 0.0
        %3843 = vmatpush1.msra.mxu0 %v463
        %3844 = vmatprep.subr.mxu0 0.0
        %3845 = vmatpush1.msra.mxu0 %v462
        %3846 = vmatprep.subr.mxu0 0.0
        %3847 = vmatpush1.msra.mxu0 %v461
        %3848 = vmatprep.subr.mxu0 0.0
        %3849 = vmatpush1.msra.mxu0 %v460
        %3850 = vmatprep.subr.mxu0 0.0
        %3851 = vmatpush1.msra.mxu0 %v459
        %3852 = vmatprep.subr.mxu0 0.0
        %3853 = vmatpush1.msra.mxu0 %v458
        %3854 = vmatprep.subr.mxu0 0.0
        %3855 = vmatpush1.msra.mxu0 %v457
        %3856 = vmatprep.subr.mxu0 0.0
        %3857 = vmatpush1.msra.mxu0 %v456
        %3858 = vmatprep.subr.mxu0 0.0
        %3859 = vmatpush1.msra.mxu0 %v455
        %3860 = vmatprep.subr.mxu0 0.0
        %3861 = vmatpush1.msra.mxu0 %v454
        %3862 = vmatprep.subr.mxu0 0.0
        %3863 = vmatpush1.msra.mxu0 %v453
        %3864 = vmatprep.subr.mxu0 0.0
        %3865 = vmatpush1.msra.mxu0 %v452
        %3866 = vmatprep.subr.mxu0 0.0
        %3867 = vmatpush1.msra.mxu0 %v451
        %3868 = vmatprep.subr.mxu0 0.0
        %3869 = vmatpush1.msra.mxu0 %v450
        %3870 = vmatprep.subr.mxu0 0.0
        %3871 = vmatpush2.msra.mxu0 %v481
        %3872 = vmatprep.subr.mxu0 0.0
        %3873 = vmatpush2.msra.mxu0 %v480
        %3874 = vmatprep.subr.mxu0 0.0
        %3875 = vmatpush2.msra.mxu0 %v479
        %3876 = vmatprep.subr.mxu0 0.0
        %3877 = vmatpush2.msra.mxu0 %v478
        %3878 = vmatprep.subr.mxu0 0.0
        %3879 = vmatpush2.msra.mxu0 %v477
        %3880 = vmatprep.subr.mxu0 0.0
        %3881 = vmatpush2.msra.mxu0 %v476
        %3882 = vmatprep.subr.mxu0 0.0
        %3883 = vmatpush2.msra.mxu0 %v475
        %3884 = vmatprep.subr.mxu0 0.0
        %3885 = vmatpush2.msra.mxu0 %v474
        %3886 = vmatprep.subr.mxu0 0.0
        %3887 = vmatpush2.msra.mxu0 %v473
        %3888 = vmatprep.subr.mxu0 0.0
        %3889 = vmatpush2.msra.mxu0 %v472
        %3890 = vmatprep.subr.mxu0 0.0
        %3891 = vmatpush2.msra.mxu0 %v471
        %3892 = vmatprep.subr.mxu0 0.0
        %3893 = vmatpush2.msra.mxu0 %v470
        %3894 = vmatprep.subr.mxu0 0.0
        %3895 = vmatpush2.msra.mxu0 %v469
        %3896 = vmatprep.subr.mxu0 0.0
        %3897 = vmatpush2.msra.mxu0 %v468
        %3898 = vmatprep.subr.mxu0 0.0
        %3899 = vmatpush2.msra.mxu0 %v467
        %3900 = vmatprep.subr.mxu0 0.0
        %3901 = vmatpush2.msra.mxu0 %v466
        %3902 = vmatprep.mubr.f32.mxu0 %v3835
        %3903 = vmatmul.mubr.f32.gmra.mxu0 %v3831
        %v3904 = vpop.f32.mrf.mxu0
        %v3905 = vadd.f32 1e-12, %v3904
        %v3906 = vpop.f32.mrf.mxu0
        %3907 = vdwg.mxu0
        %v3908 = vrsqrt.pop %v3905
        %v3910 = vsel %vm719, %v3908, 0
        %3912 = vmatprep.subr.mxu0 0.0
        %3913 = vmatpush1.msra.mxu0 0.0
        %3914 = vmatprep.subr.mxu0 0.0
        %3915 = vmatpush1.msra.mxu0 0.0
        %3916 = vmatprep.subr.mxu0 0.0
        %3917 = vmatpush1.msra.mxu0 0.0
        %3918 = vmatprep.subr.mxu0 0.0
        %3919 = vmatpush1.msra.mxu0 0.0
        %3920 = vmatprep.subr.mxu0 0.0
        %3921 = vmatpush1.msra.mxu0 0.0
        %3922 = vmatprep.subr.mxu0 0.0
        %3923 = vmatpush1.msra.mxu0 0.0
        %3924 = vmatprep.subr.mxu0 0.0
        %3925 = vmatpush1.msra.mxu0 0.0
        %3926 = vmatprep.subr.mxu0 0.0
        %3927 = vmatpush1.msra.mxu0 0.0
        %3928 = vmatprep.subr.mxu0 0.0
        %3929 = vmatpush1.msra.mxu0 0.0
        %3930 = vmatprep.subr.mxu0 0.0
        %3931 = vmatpush1.msra.mxu0 0.0
        %3932 = vmatprep.subr.mxu0 0.0
        %3933 = vmatpush1.msra.mxu0 0.0
        %3934 = vmatprep.subr.mxu0 0.0
        %3935 = vmatpush1.msra.mxu0 0.0
        %3936 = vmatprep.subr.mxu0 0.0
        %3937 = vmatpush1.msra.mxu0 0.0
        %3938 = vmatprep.subr.mxu0 0.0
        %3939 = vmatpush1.msra.mxu0 0.0
        %3940 = vmatprep.subr.mxu0 0.0
        %3941 = vmatpush1.msra.mxu0 0.0
        %3942 = vmatprep.subr.mxu0 %v483
        %3943 = vmatpush1.msra.mxu0 %v482
        %3944 = vmatprep.subr.mxu0 0.0
        %3945 = vmatpush2.msra.mxu0 0.0
        %3946 = vmatprep.subr.mxu0 0.0
        %3947 = vmatpush2.msra.mxu0 0.0
        %3948 = vmatprep.subr.mxu0 0.0
        %3949 = vmatpush2.msra.mxu0 0.0
        %3950 = vmatprep.subr.mxu0 0.0
        %3951 = vmatpush2.msra.mxu0 0.0
        %3952 = vmatprep.subr.mxu0 0.0
        %3953 = vmatpush2.msra.mxu0 0.0
        %3954 = vmatprep.subr.mxu0 0.0
        %3955 = vmatpush2.msra.mxu0 0.0
        %3956 = vmatprep.subr.mxu0 0.0
        %3957 = vmatpush2.msra.mxu0 0.0
        %3958 = vmatprep.subr.mxu0 0.0
        %3959 = vmatpush2.msra.mxu0 0.0
        %3960 = vmatprep.subr.mxu0 0.0
        %3961 = vmatpush2.msra.mxu0 0.0
        %3962 = vmatprep.subr.mxu0 0.0
        %3963 = vmatpush2.msra.mxu0 0.0
        %3964 = vmatprep.subr.mxu0 0.0
        %3965 = vmatpush2.msra.mxu0 0.0
        %3966 = vmatprep.subr.mxu0 0.0
        %3967 = vmatpush2.msra.mxu0 0.0
        %3968 = vmatprep.subr.mxu0 0.0
        %3969 = vmatpush2.msra.mxu0 0.0
        %3970 = vmatprep.subr.mxu0 0.0
        %3971 = vmatpush2.msra.mxu0 0.0
        %3972 = vmatprep.subr.mxu0 0.0
        %3973 = vmatpush2.msra.mxu0 0.0
        %3974 = vmatprep.subr.mxu0 0.0
        %3975 = vmatpush2.msra.mxu0 0.0
        %3976 = vmatprep.mubr.f32.mxu0 0.0
        %3977 = vmatmul.mubr.f32.gmra.mxu0 %v3910
        %v3978 = vpop.f32.mrf.mxu0
        %v3979 = vadd.f32 0.0, %v3978
        %v3980 = vpop.f32.mrf.mxu0
        %v3981 = vadd.f32 0.0, %v3980
        %3982 = vdwg.mxu0
        %v3983 = vsub.f32 0.0, %v3825
        %v3986 = vcombine.low %v3979, %v3981
        %v3988 = vunpack.c.l.s4 1966171168
        %v3989 = vunpack.c.0.s8 %v3988
        %v3990 = vlaneseq
        %v3991 = vshrl.u32 %v3990, 7
        %v3992 = vsub.s32 %v3989, %v3991
        %v3993 = vrot.slane %v3986, %v3992
        %v3995 = vunpack.c.l.s4 1966171168
        %v3996 = vunpack.c.0.s8 %v3995
        %v3997 = vlaneseq
        %v3998 = vshrl.u32 %v3997, 7
        %v3999 = vsub.s32 %v3996, %v3998
        %v4000 = vrot.slane %v3993, %v3999
        %v4002 = vmul.f32 %v3983, %v4000
        %s4003 = scalar_lea.vmem [#allocation3], 20
        %v4004 = vld [vmem:[%s4003] ss:$8 sm:$0x3]
        %v4005 = vsub.f32 %v4002, %v4004
        %4006 = vst.msk [vmem:[%s4003] ss:$8 sm:$0x3] %vm819, %v4002
        %4007 = vst.msk [vmem:[%s4003] ss:$8 sm:$0x0] %vm819, %v4002
        %s4008 = scalar_lea.vmem %s1, 384
        %v4009 = vld [vmem:[%s4008 + $0xd] sm:$0xff]
        %v4010 = vld [vmem:[%s4008 + $0x15] sm:$0x7f]
        %v4011 = vld [vmem:[#allocation4 + $0x10] sm:$0xe0]
        %v4012 = vld [vmem:[#allocation4 + $0x18] sm:$0xe0]
        %v4013 = vld [vmem:[#allocation4 + $0x20] sm:$0xff]
        %v4014 = vld [vmem:[#allocation4 + $0x28] sm:$0xff]
        %v4015 = vld [vmem:[#allocation4 + $0x30] sm:$0xf]
        %v4016 = vld [vmem:[#allocation4 + $0x38] sm:$0xf]
        %4018 = vset.pattern.permute.xlu0 0
        %4019 = vperm.xlu0 %4018, %v4009
        %v4020 = vpop.permute.xlu0 %4019
        %4023 = vset.pattern.permute.xlu0 0
        %4024 = vperm.xlu0 %4023, %v4010
        %v4025 = vpop.permute.xlu0 %4024
        %v4028 = vlaneseq
        %v4029 = vshrl.u32 %v4028, 7
        %v4030 = vsub.s32 0, %v4029
        %v4031 = vrot.slane %v4005, %v4030
        %v4032 = vlaneseq
        %v4033 = vshrl.u32 %v4032, 7
        %v4034 = vsub.s32 1, %v4033
        %v4035 = vrot.slane %v4005, %v4034
        %v4038 = vmul.f32 %v4020, %v4031
        %v4039 = vmul.f32 %v4020, %v4035
        %v4040 = vmul.f32 %v4025, %v4031
        %v4041 = vmul.f32 %v4025, %v4035
        %v4046 = vrot.slane %v4038, 3
        %v4047 = vrot.slane %v4039, 3
        %v4048 = vrot.slane %v4040, 3
        %v4049 = vsel %vm1987, %v4046, %v4048
        %v4050 = vrot.slane %v4041, 3
        %v4051 = vsel %vm1987, %v4047, %v4050
        %v4058 = vadd.f32 %v4011, %v4046
        %v4059 = vadd.f32 %v4012, %v4047
        %v4060 = vadd.f32 %v4013, %v4049
        %v4061 = vadd.f32 %v4014, %v4051
        %v4062 = vadd.f32 %v4015, %v4048
        %v4063 = vadd.f32 %v4016, %v4050
        %4064 = vst [vmem:[#allocation4 + $0x10] sm:$0xe0] %v4058
        %4065 = vst [vmem:[#allocation4 + $0x18] sm:$0xe0] %v4059
        %4066 = vst [vmem:[#allocation4 + $0x20] sm:$0xff] %v4060
        %4067 = vst [vmem:[#allocation4 + $0x28] sm:$0xff] %v4061
        %4068 = vst [vmem:[#allocation4 + $0x30] sm:$0xf] %v4062
        %4069 = vst [vmem:[#allocation4 + $0x38] sm:$0xf] %v4063
        %s4070 = scalar_lea.vmem [#allocation4], 21
        %v4071 = vld [vmem:[%s4070] ss:$8 sm:$0x3]
        %v4072 = vmul.f32 %v4071, %v4071
        %v4074 = vlaneseq
        %v4075 = vshrl.u32 %v4074, 7
        %v4076 = vsub.s32 0, %v4075
        %v4077 = vrot.slane %v4072, %v4076
        %v4078 = vlaneseq
        %v4079 = vshrl.u32 %v4078, 7
        %v4080 = vsub.s32 1, %v4079
        %v4081 = vrot.slane %v4072, %v4080
        %4084 = vmatprep.subr.mxu0 0.0
        %4085 = vmatpush1.msra.mxu0 %v465
        %4086 = vmatprep.subr.mxu0 0.0
        %4087 = vmatpush1.msra.mxu0 %v464
        %4088 = vmatprep.subr.mxu0 0.0
        %4089 = vmatpush1.msra.mxu0 %v463
        %4090 = vmatprep.subr.mxu0 0.0
        %4091 = vmatpush1.msra.mxu0 %v462
        %4092 = vmatprep.subr.mxu0 0.0
        %4093 = vmatpush1.msra.mxu0 %v461
        %4094 = vmatprep.subr.mxu0 0.0
        %4095 = vmatpush1.msra.mxu0 %v460
        %4096 = vmatprep.subr.mxu0 0.0
        %4097 = vmatpush1.msra.mxu0 %v459
        %4098 = vmatprep.subr.mxu0 0.0
        %4099 = vmatpush1.msra.mxu0 %v458
        %4100 = vmatprep.subr.mxu0 0.0
        %4101 = vmatpush1.msra.mxu0 %v457
        %4102 = vmatprep.subr.mxu0 0.0
        %4103 = vmatpush1.msra.mxu0 %v456
        %4104 = vmatprep.subr.mxu0 0.0
        %4105 = vmatpush1.msra.mxu0 %v455
        %4106 = vmatprep.subr.mxu0 0.0
        %4107 = vmatpush1.msra.mxu0 %v454
        %4108 = vmatprep.subr.mxu0 0.0
        %4109 = vmatpush1.msra.mxu0 %v453
        %4110 = vmatprep.subr.mxu0 0.0
        %4111 = vmatpush1.msra.mxu0 %v452
        %4112 = vmatprep.subr.mxu0 0.0
        %4113 = vmatpush1.msra.mxu0 %v451
        %4114 = vmatprep.subr.mxu0 0.0
        %4115 = vmatpush1.msra.mxu0 %v450
        %4116 = vmatprep.subr.mxu0 0.0
        %4117 = vmatpush2.msra.mxu0 %v481
        %4118 = vmatprep.subr.mxu0 0.0
        %4119 = vmatpush2.msra.mxu0 %v480
        %4120 = vmatprep.subr.mxu0 0.0
        %4121 = vmatpush2.msra.mxu0 %v479
        %4122 = vmatprep.subr.mxu0 0.0
        %4123 = vmatpush2.msra.mxu0 %v478
        %4124 = vmatprep.subr.mxu0 0.0
        %4125 = vmatpush2.msra.mxu0 %v477
        %4126 = vmatprep.subr.mxu0 0.0
        %4127 = vmatpush2.msra.mxu0 %v476
        %4128 = vmatprep.subr.mxu0 0.0
        %4129 = vmatpush2.msra.mxu0 %v475
        %4130 = vmatprep.subr.mxu0 0.0
        %4131 = vmatpush2.msra.mxu0 %v474
        %4132 = vmatprep.subr.mxu0 0.0
        %4133 = vmatpush2.msra.mxu0 %v473
        %4134 = vmatprep.subr.mxu0 0.0
        %4135 = vmatpush2.msra.mxu0 %v472
        %4136 = vmatprep.subr.mxu0 0.0
        %4137 = vmatpush2.msra.mxu0 %v471
        %4138 = vmatprep.subr.mxu0 0.0
        %4139 = vmatpush2.msra.mxu0 %v470
        %4140 = vmatprep.subr.mxu0 0.0
        %4141 = vmatpush2.msra.mxu0 %v469
        %4142 = vmatprep.subr.mxu0 0.0
        %4143 = vmatpush2.msra.mxu0 %v468
        %4144 = vmatprep.subr.mxu0 0.0
        %4145 = vmatpush2.msra.mxu0 %v467
        %4146 = vmatprep.subr.mxu0 0.0
        %4147 = vmatpush2.msra.mxu0 %v466
        %4148 = vmatprep.mubr.f32.mxu0 %v4081
        %4149 = vmatmul.mubr.f32.gmra.mxu0 %v4077
        %v4150 = vpop.f32.mrf.mxu0
        %v4151 = vadd.f32 1e-12, %v4150
        %v4152 = vpop.f32.mrf.mxu0
        %4153 = vdwg.mxu0
        %v4154 = vrsqrt.pop %v4151
        %v4156 = vsel %vm719, %v4154, 0
        %4158 = vmatprep.subr.mxu0 0.0
        %4159 = vmatpush1.msra.mxu0 0.0
        %4160 = vmatprep.subr.mxu0 0.0
        %4161 = vmatpush1.msra.mxu0 0.0
        %4162 = vmatprep.subr.mxu0 0.0
        %4163 = vmatpush1.msra.mxu0 0.0
        %4164 = vmatprep.subr.mxu0 0.0
        %4165 = vmatpush1.msra.mxu0 0.0
        %4166 = vmatprep.subr.mxu0 0.0
        %4167 = vmatpush1.msra.mxu0 0.0
        %4168 = vmatprep.subr.mxu0 0.0
        %4169 = vmatpush1.msra.mxu0 0.0
        %4170 = vmatprep.subr.mxu0 0.0
        %4171 = vmatpush1.msra.mxu0 0.0
        %4172 = vmatprep.subr.mxu0 0.0
        %4173 = vmatpush1.msra.mxu0 0.0
        %4174 = vmatprep.subr.mxu0 0.0
        %4175 = vmatpush1.msra.mxu0 0.0
        %4176 = vmatprep.subr.mxu0 0.0
        %4177 = vmatpush1.msra.mxu0 0.0
        %4178 = vmatprep.subr.mxu0 0.0
        %4179 = vmatpush1.msra.mxu0 0.0
        %4180 = vmatprep.subr.mxu0 0.0
        %4181 = vmatpush1.msra.mxu0 0.0
        %4182 = vmatprep.subr.mxu0 0.0
        %4183 = vmatpush1.msra.mxu0 0.0
        %4184 = vmatprep.subr.mxu0 0.0
        %4185 = vmatpush1.msra.mxu0 0.0
        %4186 = vmatprep.subr.mxu0 0.0
        %4187 = vmatpush1.msra.mxu0 0.0
        %4188 = vmatprep.subr.mxu0 %v483
        %4189 = vmatpush1.msra.mxu0 %v482
        %4190 = vmatprep.subr.mxu0 0.0
        %4191 = vmatpush2.msra.mxu0 0.0
        %4192 = vmatprep.subr.mxu0 0.0
        %4193 = vmatpush2.msra.mxu0 0.0
        %4194 = vmatprep.subr.mxu0 0.0
        %4195 = vmatpush2.msra.mxu0 0.0
        %4196 = vmatprep.subr.mxu0 0.0
        %4197 = vmatpush2.msra.mxu0 0.0
        %4198 = vmatprep.subr.mxu0 0.0
        %4199 = vmatpush2.msra.mxu0 0.0
        %4200 = vmatprep.subr.mxu0 0.0
        %4201 = vmatpush2.msra.mxu0 0.0
        %4202 = vmatprep.subr.mxu0 0.0
        %4203 = vmatpush2.msra.mxu0 0.0
        %4204 = vmatprep.subr.mxu0 0.0
        %4205 = vmatpush2.msra.mxu0 0.0
        %4206 = vmatprep.subr.mxu0 0.0
        %4207 = vmatpush2.msra.mxu0 0.0
        %4208 = vmatprep.subr.mxu0 0.0
        %4209 = vmatpush2.msra.mxu0 0.0
        %4210 = vmatprep.subr.mxu0 0.0
        %4211 = vmatpush2.msra.mxu0 0.0
        %4212 = vmatprep.subr.mxu0 0.0
        %4213 = vmatpush2.msra.mxu0 0.0
        %4214 = vmatprep.subr.mxu0 0.0
        %4215 = vmatpush2.msra.mxu0 0.0
        %4216 = vmatprep.subr.mxu0 0.0
        %4217 = vmatpush2.msra.mxu0 0.0
        %4218 = vmatprep.subr.mxu0 0.0
        %4219 = vmatpush2.msra.mxu0 0.0
        %4220 = vmatprep.subr.mxu0 0.0
        %4221 = vmatpush2.msra.mxu0 0.0
        %4222 = vmatprep.mubr.f32.mxu0 0.0
        %4223 = vmatmul.mubr.f32.gmra.mxu0 %v4156
        %v4224 = vpop.f32.mrf.mxu0
        %v4225 = vadd.f32 0.0, %v4224
        %v4226 = vpop.f32.mrf.mxu0
        %v4227 = vadd.f32 0.0, %v4226
        %4228 = vdwg.mxu0
        %v4229 = vsub.f32 0.0, %v4071
        %v4232 = vcombine.low %v4225, %v4227
        %v4234 = vunpack.c.l.s4 1966171168
        %v4235 = vunpack.c.0.s8 %v4234
        %v4236 = vlaneseq
        %v4237 = vshrl.u32 %v4236, 7
        %v4238 = vsub.s32 %v4235, %v4237
        %v4239 = vrot.slane %v4232, %v4238
        %v4241 = vunpack.c.l.s4 1966171168
        %v4242 = vunpack.c.0.s8 %v4241
        %v4243 = vlaneseq
        %v4244 = vshrl.u32 %v4243, 7
        %v4245 = vsub.s32 %v4242, %v4244
        %v4246 = vrot.slane %v4239, %v4245
        %v4248 = vmul.f32 %v4229, %v4246
        %s4249 = scalar_lea.vmem [#allocation3], 21
        %v4250 = vld [vmem:[%s4249] ss:$8 sm:$0x3]
        %v4251 = vsub.f32 %v4248, %v4250
        %4252 = vst.msk [vmem:[%s4249] ss:$8 sm:$0x3] %vm819, %v4248
        %4253 = vst.msk [vmem:[%s4249] ss:$8 sm:$0x0] %vm819, %v4248
        %s4254 = scalar_lea.vmem %s1, 416
        %v4255 = vld [vmem:[%s4254 + $0xe] sm:$0xff]
        %v4256 = vld [vmem:[%s4254 + $0x16] sm:$0x3f]
        %v4257 = vld [vmem:[#allocation4 + $0x10] sm:$0xc0]
        %v4258 = vld [vmem:[#allocation4 + $0x18] sm:$0xc0]
        %v4259 = vld [vmem:[#allocation4 + $0x20] sm:$0xff]
        %v4260 = vld [vmem:[#allocation4 + $0x28] sm:$0xff]
        %v4261 = vld [vmem:[#allocation4 + $0x30] sm:$0xf]
        %v4262 = vld [vmem:[#allocation4 + $0x38] sm:$0xf]
        %4264 = vset.pattern.permute.xlu0 0
        %4265 = vperm.xlu0 %4264, %v4255
        %v4266 = vpop.permute.xlu0 %4265
        %4269 = vset.pattern.permute.xlu0 0
        %4270 = vperm.xlu0 %4269, %v4256
        %v4271 = vpop.permute.xlu0 %4270
        %v4274 = vlaneseq
        %v4275 = vshrl.u32 %v4274, 7
        %v4276 = vsub.s32 0, %v4275
        %v4277 = vrot.slane %v4251, %v4276
        %v4278 = vlaneseq
        %v4279 = vshrl.u32 %v4278, 7
        %v4280 = vsub.s32 1, %v4279
        %v4281 = vrot.slane %v4251, %v4280
        %v4284 = vmul.f32 %v4266, %v4277
        %v4285 = vmul.f32 %v4266, %v4281
        %v4286 = vmul.f32 %v4271, %v4277
        %v4287 = vmul.f32 %v4271, %v4281
        %v4292 = vrot.slane %v4284, 2
        %v4293 = vrot.slane %v4285, 2
        %v4294 = vrot.slane %v4286, 2
        %v4295 = vsel %vm2256, %v4292, %v4294
        %v4296 = vrot.slane %v4287, 2
        %v4297 = vsel %vm2256, %v4293, %v4296
        %v4304 = vadd.f32 %v4257, %v4292
        %v4305 = vadd.f32 %v4258, %v4293
        %v4306 = vadd.f32 %v4259, %v4295
        %v4307 = vadd.f32 %v4260, %v4297
        %v4308 = vadd.f32 %v4261, %v4294
        %v4309 = vadd.f32 %v4262, %v4296
        %4310 = vst [vmem:[#allocation4 + $0x10] sm:$0xc0] %v4304
        %4311 = vst [vmem:[#allocation4 + $0x18] sm:$0xc0] %v4305
        %4312 = vst [vmem:[#allocation4 + $0x20] sm:$0xff] %v4306
        %4313 = vst [vmem:[#allocation4 + $0x28] sm:$0xff] %v4307
        %4314 = vst [vmem:[#allocation4 + $0x30] sm:$0xf] %v4308
        %4315 = vst [vmem:[#allocation4 + $0x38] sm:$0xf] %v4309
        %s4316 = scalar_lea.vmem [#allocation4], 22
        %v4317 = vld [vmem:[%s4316] ss:$8 sm:$0x3]
        %v4318 = vmul.f32 %v4317, %v4317
        %v4320 = vlaneseq
        %v4321 = vshrl.u32 %v4320, 7
        %v4322 = vsub.s32 0, %v4321
        %v4323 = vrot.slane %v4318, %v4322
        %v4324 = vlaneseq
        %v4325 = vshrl.u32 %v4324, 7
        %v4326 = vsub.s32 1, %v4325
        %v4327 = vrot.slane %v4318, %v4326
        %4330 = vmatprep.subr.mxu0 0.0
        %4331 = vmatpush1.msra.mxu0 %v465
        %4332 = vmatprep.subr.mxu0 0.0
        %4333 = vmatpush1.msra.mxu0 %v464
        %4334 = vmatprep.subr.mxu0 0.0
        %4335 = vmatpush1.msra.mxu0 %v463
        %4336 = vmatprep.subr.mxu0 0.0
        %4337 = vmatpush1.msra.mxu0 %v462
        %4338 = vmatprep.subr.mxu0 0.0
        %4339 = vmatpush1.msra.mxu0 %v461
        %4340 = vmatprep.subr.mxu0 0.0
        %4341 = vmatpush1.msra.mxu0 %v460
        %4342 = vmatprep.subr.mxu0 0.0
        %4343 = vmatpush1.msra.mxu0 %v459
        %4344 = vmatprep.subr.mxu0 0.0
        %4345 = vmatpush1.msra.mxu0 %v458
        %4346 = vmatprep.subr.mxu0 0.0
        %4347 = vmatpush1.msra.mxu0 %v457
        %4348 = vmatprep.subr.mxu0 0.0
        %4349 = vmatpush1.msra.mxu0 %v456
        %4350 = vmatprep.subr.mxu0 0.0
        %4351 = vmatpush1.msra.mxu0 %v455
        %4352 = vmatprep.subr.mxu0 0.0
        %4353 = vmatpush1.msra.mxu0 %v454
        %4354 = vmatprep.subr.mxu0 0.0
        %4355 = vmatpush1.msra.mxu0 %v453
        %4356 = vmatprep.subr.mxu0 0.0
        %4357 = vmatpush1.msra.mxu0 %v452
        %4358 = vmatprep.subr.mxu0 0.0
        %4359 = vmatpush1.msra.mxu0 %v451
        %4360 = vmatprep.subr.mxu0 0.0
        %4361 = vmatpush1.msra.mxu0 %v450
        %4362 = vmatprep.subr.mxu0 0.0
        %4363 = vmatpush2.msra.mxu0 %v481
        %4364 = vmatprep.subr.mxu0 0.0
        %4365 = vmatpush2.msra.mxu0 %v480
        %4366 = vmatprep.subr.mxu0 0.0
        %4367 = vmatpush2.msra.mxu0 %v479
        %4368 = vmatprep.subr.mxu0 0.0
        %4369 = vmatpush2.msra.mxu0 %v478
        %4370 = vmatprep.subr.mxu0 0.0
        %4371 = vmatpush2.msra.mxu0 %v477
        %4372 = vmatprep.subr.mxu0 0.0
        %4373 = vmatpush2.msra.mxu0 %v476
        %4374 = vmatprep.subr.mxu0 0.0
        %4375 = vmatpush2.msra.mxu0 %v475
        %4376 = vmatprep.subr.mxu0 0.0
        %4377 = vmatpush2.msra.mxu0 %v474
        %4378 = vmatprep.subr.mxu0 0.0
        %4379 = vmatpush2.msra.mxu0 %v473
        %4380 = vmatprep.subr.mxu0 0.0
        %4381 = vmatpush2.msra.mxu0 %v472
        %4382 = vmatprep.subr.mxu0 0.0
        %4383 = vmatpush2.msra.mxu0 %v471
        %4384 = vmatprep.subr.mxu0 0.0
        %4385 = vmatpush2.msra.mxu0 %v470
        %4386 = vmatprep.subr.mxu0 0.0
        %4387 = vmatpush2.msra.mxu0 %v469
        %4388 = vmatprep.subr.mxu0 0.0
        %4389 = vmatpush2.msra.mxu0 %v468
        %4390 = vmatprep.subr.mxu0 0.0
        %4391 = vmatpush2.msra.mxu0 %v467
        %4392 = vmatprep.subr.mxu0 0.0
        %4393 = vmatpush2.msra.mxu0 %v466
        %4394 = vmatprep.mubr.f32.mxu0 %v4327
        %4395 = vmatmul.mubr.f32.gmra.mxu0 %v4323
        %v4396 = vpop.f32.mrf.mxu0
        %v4397 = vadd.f32 1e-12, %v4396
        %v4398 = vpop.f32.mrf.mxu0
        %4399 = vdwg.mxu0
        %v4400 = vrsqrt.pop %v4397
        %v4402 = vsel %vm719, %v4400, 0
        %4404 = vmatprep.subr.mxu0 0.0
        %4405 = vmatpush1.msra.mxu0 0.0
        %4406 = vmatprep.subr.mxu0 0.0
        %4407 = vmatpush1.msra.mxu0 0.0
        %4408 = vmatprep.subr.mxu0 0.0
        %4409 = vmatpush1.msra.mxu0 0.0
        %4410 = vmatprep.subr.mxu0 0.0
        %4411 = vmatpush1.msra.mxu0 0.0
        %4412 = vmatprep.subr.mxu0 0.0
        %4413 = vmatpush1.msra.mxu0 0.0
        %4414 = vmatprep.subr.mxu0 0.0
        %4415 = vmatpush1.msra.mxu0 0.0
        %4416 = vmatprep.subr.mxu0 0.0
        %4417 = vmatpush1.msra.mxu0 0.0
        %4418 = vmatprep.subr.mxu0 0.0
        %4419 = vmatpush1.msra.mxu0 0.0
        %4420 = vmatprep.subr.mxu0 0.0
        %4421 = vmatpush1.msra.mxu0 0.0
        %4422 = vmatprep.subr.mxu0 0.0
        %4423 = vmatpush1.msra.mxu0 0.0
        %4424 = vmatprep.subr.mxu0 0.0
        %4425 = vmatpush1.msra.mxu0 0.0
        %4426 = vmatprep.subr.mxu0 0.0
        %4427 = vmatpush1.msra.mxu0 0.0
        %4428 = vmatprep.subr.mxu0 0.0
        %4429 = vmatpush1.msra.mxu0 0.0
        %4430 = vmatprep.subr.mxu0 0.0
        %4431 = vmatpush1.msra.mxu0 0.0
        %4432 = vmatprep.subr.mxu0 0.0
        %4433 = vmatpush1.msra.mxu0 0.0
        %4434 = vmatprep.subr.mxu0 %v483
        %4435 = vmatpush1.msra.mxu0 %v482
        %4436 = vmatprep.subr.mxu0 0.0
        %4437 = vmatpush2.msra.mxu0 0.0
        %4438 = vmatprep.subr.mxu0 0.0
        %4439 = vmatpush2.msra.mxu0 0.0
        %4440 = vmatprep.subr.mxu0 0.0
        %4441 = vmatpush2.msra.mxu0 0.0
        %4442 = vmatprep.subr.mxu0 0.0
        %4443 = vmatpush2.msra.mxu0 0.0
        %4444 = vmatprep.subr.mxu0 0.0
        %4445 = vmatpush2.msra.mxu0 0.0
        %4446 = vmatprep.subr.mxu0 0.0
        %4447 = vmatpush2.msra.mxu0 0.0
        %4448 = vmatprep.subr.mxu0 0.0
        %4449 = vmatpush2.msra.mxu0 0.0
        %4450 = vmatprep.subr.mxu0 0.0
        %4451 = vmatpush2.msra.mxu0 0.0
        %4452 = vmatprep.subr.mxu0 0.0
        %4453 = vmatpush2.msra.mxu0 0.0
        %4454 = vmatprep.subr.mxu0 0.0
        %4455 = vmatpush2.msra.mxu0 0.0
        %4456 = vmatprep.subr.mxu0 0.0
        %4457 = vmatpush2.msra.mxu0 0.0
        %4458 = vmatprep.subr.mxu0 0.0
        %4459 = vmatpush2.msra.mxu0 0.0
        %4460 = vmatprep.subr.mxu0 0.0
        %4461 = vmatpush2.msra.mxu0 0.0
        %4462 = vmatprep.subr.mxu0 0.0
        %4463 = vmatpush2.msra.mxu0 0.0
        %4464 = vmatprep.subr.mxu0 0.0
        %4465 = vmatpush2.msra.mxu0 0.0
        %4466 = vmatprep.subr.mxu0 0.0
        %4467 = vmatpush2.msra.mxu0 0.0
        %4468 = vmatprep.mubr.f32.mxu0 0.0
        %4469 = vmatmul.mubr.f32.gmra.mxu0 %v4402
        %v4470 = vpop.f32.mrf.mxu0
        %v4471 = vadd.f32 0.0, %v4470
        %v4472 = vpop.f32.mrf.mxu0
        %v4473 = vadd.f32 0.0, %v4472
        %4474 = vdwg.mxu0
        %v4475 = vsub.f32 0.0, %v4317
        %v4478 = vcombine.low %v4471, %v4473
        %v4480 = vunpack.c.l.s4 1966171168
        %v4481 = vunpack.c.0.s8 %v4480
        %v4482 = vlaneseq
        %v4483 = vshrl.u32 %v4482, 7
        %v4484 = vsub.s32 %v4481, %v4483
        %v4485 = vrot.slane %v4478, %v4484
        %v4487 = vunpack.c.l.s4 1966171168
        %v4488 = vunpack.c.0.s8 %v4487
        %v4489 = vlaneseq
        %v4490 = vshrl.u32 %v4489, 7
        %v4491 = vsub.s32 %v4488, %v4490
        %v4492 = vrot.slane %v4485, %v4491
        %v4494 = vmul.f32 %v4475, %v4492
        %s4495 = scalar_lea.vmem [#allocation3], 22
        %v4496 = vld [vmem:[%s4495] ss:$8 sm:$0x3]
        %v4497 = vsub.f32 %v4494, %v4496
        %4498 = vst.msk [vmem:[%s4495] ss:$8 sm:$0x3] %vm819, %v4494
        %4499 = vst.msk [vmem:[%s4495] ss:$8 sm:$0x0] %vm819, %v4494
        %s4500 = scalar_lea.vmem %s1, 448
        %v4501 = vld [vmem:[%s4500 + $0xf] sm:$0xff]
        %v4502 = vld [vmem:[%s4500 + $0x17] sm:$0x1f]
        %v4503 = vld [vmem:[#allocation4 + $0x10] sm:$0x80]
        %v4504 = vld [vmem:[#allocation4 + $0x18] sm:$0x80]
        %v4505 = vld [vmem:[#allocation4 + $0x20] sm:$0xff]
        %v4506 = vld [vmem:[#allocation4 + $0x28] sm:$0xff]
        %v4507 = vld [vmem:[#allocation4 + $0x30] sm:$0xf]
        %v4508 = vld [vmem:[#allocation4 + $0x38] sm:$0xf]
        %4510 = vset.pattern.permute.xlu0 0
        %4511 = vperm.xlu0 %4510, %v4501
        %v4512 = vpop.permute.xlu0 %4511
        %4515 = vset.pattern.permute.xlu0 0
        %4516 = vperm.xlu0 %4515, %v4502
        %v4517 = vpop.permute.xlu0 %4516
        %v4520 = vlaneseq
        %v4521 = vshrl.u32 %v4520, 7
        %v4522 = vsub.s32 0, %v4521
        %v4523 = vrot.slane %v4497, %v4522
        %v4524 = vlaneseq
        %v4525 = vshrl.u32 %v4524, 7
        %v4526 = vsub.s32 1, %v4525
        %v4527 = vrot.slane %v4497, %v4526
        %v4530 = vmul.f32 %v4512, %v4523
        %v4531 = vmul.f32 %v4512, %v4527
        %v4532 = vmul.f32 %v4517, %v4523
        %v4533 = vmul.f32 %v4517, %v4527
        %v4538 = vrot.slane %v4530, 1
        %v4539 = vrot.slane %v4531, 1
        %v4540 = vrot.slane %v4532, 1
        %v4541 = vsel %vm2525, %v4538, %v4540
        %v4542 = vrot.slane %v4533, 1
        %v4543 = vsel %vm2525, %v4539, %v4542
        %v4550 = vadd.f32 %v4503, %v4538
        %v4551 = vadd.f32 %v4504, %v4539
        %v4552 = vadd.f32 %v4505, %v4541
        %v4553 = vadd.f32 %v4506, %v4543
        %v4554 = vadd.f32 %v4507, %v4540
        %v4555 = vadd.f32 %v4508, %v4542
        %4556 = vst [vmem:[#allocation4 + $0x10] sm:$0x80] %v4550
        %4557 = vst [vmem:[#allocation4 + $0x18] sm:$0x80] %v4551
        %4558 = vst [vmem:[#allocation4 + $0x20] sm:$0xff] %v4552
        %4559 = vst [vmem:[#allocation4 + $0x28] sm:$0xff] %v4553
        %4560 = vst [vmem:[#allocation4 + $0x30] sm:$0xf] %v4554
        %4561 = vst [vmem:[#allocation4 + $0x38] sm:$0xf] %v4555
        %s4562 = scalar_lea.vmem [#allocation4], 23
        %v4563 = vld [vmem:[%s4562] ss:$8 sm:$0x3]
        %v4564 = vmul.f32 %v4563, %v4563
        %v4566 = vlaneseq
        %v4567 = vshrl.u32 %v4566, 7
        %v4568 = vsub.s32 0, %v4567
        %v4569 = vrot.slane %v4564, %v4568
        %v4570 = vlaneseq
        %v4571 = vshrl.u32 %v4570, 7
        %v4572 = vsub.s32 1, %v4571
        %v4573 = vrot.slane %v4564, %v4572
        %4576 = vmatprep.subr.mxu0 0.0
        %4577 = vmatpush1.msra.mxu0 %v465
        %4578 = vmatprep.subr.mxu0 0.0
        %4579 = vmatpush1.msra.mxu0 %v464
        %4580 = vmatprep.subr.mxu0 0.0
        %4581 = vmatpush1.msra.mxu0 %v463
        %4582 = vmatprep.subr.mxu0 0.0
        %4583 = vmatpush1.msra.mxu0 %v462
        %4584 = vmatprep.subr.mxu0 0.0
        %4585 = vmatpush1.msra.mxu0 %v461
        %4586 = vmatprep.subr.mxu0 0.0
        %4587 = vmatpush1.msra.mxu0 %v460
        %4588 = vmatprep.subr.mxu0 0.0
        %4589 = vmatpush1.msra.mxu0 %v459
        %4590 = vmatprep.subr.mxu0 0.0
        %4591 = vmatpush1.msra.mxu0 %v458
        %4592 = vmatprep.subr.mxu0 0.0
        %4593 = vmatpush1.msra.mxu0 %v457
        %4594 = vmatprep.subr.mxu0 0.0
        %4595 = vmatpush1.msra.mxu0 %v456
        %4596 = vmatprep.subr.mxu0 0.0
        %4597 = vmatpush1.msra.mxu0 %v455
        %4598 = vmatprep.subr.mxu0 0.0
        %4599 = vmatpush1.msra.mxu0 %v454
        %4600 = vmatprep.subr.mxu0 0.0
        %4601 = vmatpush1.msra.mxu0 %v453
        %4602 = vmatprep.subr.mxu0 0.0
        %4603 = vmatpush1.msra.mxu0 %v452
        %4604 = vmatprep.subr.mxu0 0.0
        %4605 = vmatpush1.msra.mxu0 %v451
        %4606 = vmatprep.subr.mxu0 0.0
        %4607 = vmatpush1.msra.mxu0 %v450
        %4608 = vmatprep.subr.mxu0 0.0
        %4609 = vmatpush2.msra.mxu0 %v481
        %4610 = vmatprep.subr.mxu0 0.0
        %4611 = vmatpush2.msra.mxu0 %v480
        %4612 = vmatprep.subr.mxu0 0.0
        %4613 = vmatpush2.msra.mxu0 %v479
        %4614 = vmatprep.subr.mxu0 0.0
        %4615 = vmatpush2.msra.mxu0 %v478
        %4616 = vmatprep.subr.mxu0 0.0
        %4617 = vmatpush2.msra.mxu0 %v477
        %4618 = vmatprep.subr.mxu0 0.0
        %4619 = vmatpush2.msra.mxu0 %v476
        %4620 = vmatprep.subr.mxu0 0.0
        %4621 = vmatpush2.msra.mxu0 %v475
        %4622 = vmatprep.subr.mxu0 0.0
        %4623 = vmatpush2.msra.mxu0 %v474
        %4624 = vmatprep.subr.mxu0 0.0
        %4625 = vmatpush2.msra.mxu0 %v473
        %4626 = vmatprep.subr.mxu0 0.0
        %4627 = vmatpush2.msra.mxu0 %v472
        %4628 = vmatprep.subr.mxu0 0.0
        %4629 = vmatpush2.msra.mxu0 %v471
        %4630 = vmatprep.subr.mxu0 0.0
        %4631 = vmatpush2.msra.mxu0 %v470
        %4632 = vmatprep.subr.mxu0 0.0
        %4633 = vmatpush2.msra.mxu0 %v469
        %4634 = vmatprep.subr.mxu0 0.0
        %4635 = vmatpush2.msra.mxu0 %v468
        %4636 = vmatprep.subr.mxu0 0.0
        %4637 = vmatpush2.msra.mxu0 %v467
        %4638 = vmatprep.subr.mxu0 0.0
        %4639 = vmatpush2.msra.mxu0 %v466
        %4640 = vmatprep.mubr.f32.mxu0 %v4573
        %4641 = vmatmul.mubr.f32.gmra.mxu0 %v4569
        %v4642 = vpop.f32.mrf.mxu0
        %v4643 = vadd.f32 1e-12, %v4642
        %v4644 = vpop.f32.mrf.mxu0
        %4645 = vdwg.mxu0
        %v4646 = vrsqrt.pop %v4643
        %v4648 = vsel %vm719, %v4646, 0
        %4650 = vmatprep.subr.mxu0 0.0
        %4651 = vmatpush1.msra.mxu0 0.0
        %4652 = vmatprep.subr.mxu0 0.0
        %4653 = vmatpush1.msra.mxu0 0.0
        %4654 = vmatprep.subr.mxu0 0.0
        %4655 = vmatpush1.msra.mxu0 0.0
        %4656 = vmatprep.subr.mxu0 0.0
        %4657 = vmatpush1.msra.mxu0 0.0
        %4658 = vmatprep.subr.mxu0 0.0
        %4659 = vmatpush1.msra.mxu0 0.0
        %4660 = vmatprep.subr.mxu0 0.0
        %4661 = vmatpush1.msra.mxu0 0.0
        %4662 = vmatprep.subr.mxu0 0.0
        %4663 = vmatpush1.msra.mxu0 0.0
        %4664 = vmatprep.subr.mxu0 0.0
        %4665 = vmatpush1.msra.mxu0 0.0
        %4666 = vmatprep.subr.mxu0 0.0
        %4667 = vmatpush1.msra.mxu0 0.0
        %4668 = vmatprep.subr.mxu0 0.0
        %4669 = vmatpush1.msra.mxu0 0.0
        %4670 = vmatprep.subr.mxu0 0.0
        %4671 = vmatpush1.msra.mxu0 0.0
        %4672 = vmatprep.subr.mxu0 0.0
        %4673 = vmatpush1.msra.mxu0 0.0
        %4674 = vmatprep.subr.mxu0 0.0
        %4675 = vmatpush1.msra.mxu0 0.0
        %4676 = vmatprep.subr.mxu0 0.0
        %4677 = vmatpush1.msra.mxu0 0.0
        %4678 = vmatprep.subr.mxu0 0.0
        %4679 = vmatpush1.msra.mxu0 0.0
        %4680 = vmatprep.subr.mxu0 %v483
        %4681 = vmatpush1.msra.mxu0 %v482
        %4682 = vmatprep.subr.mxu0 0.0
        %4683 = vmatpush2.msra.mxu0 0.0
        %4684 = vmatprep.subr.mxu0 0.0
        %4685 = vmatpush2.msra.mxu0 0.0
        %4686 = vmatprep.subr.mxu0 0.0
        %4687 = vmatpush2.msra.mxu0 0.0
        %4688 = vmatprep.subr.mxu0 0.0
        %4689 = vmatpush2.msra.mxu0 0.0
        %4690 = vmatprep.subr.mxu0 0.0
        %4691 = vmatpush2.msra.mxu0 0.0
        %4692 = vmatprep.subr.mxu0 0.0
        %4693 = vmatpush2.msra.mxu0 0.0
        %4694 = vmatprep.subr.mxu0 0.0
        %4695 = vmatpush2.msra.mxu0 0.0
        %4696 = vmatprep.subr.mxu0 0.0
        %4697 = vmatpush2.msra.mxu0 0.0
        %4698 = vmatprep.subr.mxu0 0.0
        %4699 = vmatpush2.msra.mxu0 0.0
        %4700 = vmatprep.subr.mxu0 0.0
        %4701 = vmatpush2.msra.mxu0 0.0
        %4702 = vmatprep.subr.mxu0 0.0
        %4703 = vmatpush2.msra.mxu0 0.0
        %4704 = vmatprep.subr.mxu0 0.0
        %4705 = vmatpush2.msra.mxu0 0.0
        %4706 = vmatprep.subr.mxu0 0.0
        %4707 = vmatpush2.msra.mxu0 0.0
        %4708 = vmatprep.subr.mxu0 0.0
        %4709 = vmatpush2.msra.mxu0 0.0
        %4710 = vmatprep.subr.mxu0 0.0
        %4711 = vmatpush2.msra.mxu0 0.0
        %4712 = vmatprep.subr.mxu0 0.0
        %4713 = vmatpush2.msra.mxu0 0.0
        %4714 = vmatprep.mubr.f32.mxu0 0.0
        %4715 = vmatmul.mubr.f32.gmra.mxu0 %v4648
        %v4716 = vpop.f32.mrf.mxu0
        %v4717 = vadd.f32 0.0, %v4716
        %v4718 = vpop.f32.mrf.mxu0
        %v4719 = vadd.f32 0.0, %v4718
        %4720 = vdwg.mxu0
        %v4721 = vsub.f32 0.0, %v4563
        %v4724 = vcombine.low %v4717, %v4719
        %v4726 = vunpack.c.l.s4 1966171168
        %v4727 = vunpack.c.0.s8 %v4726
        %v4728 = vlaneseq
        %v4729 = vshrl.u32 %v4728, 7
        %v4730 = vsub.s32 %v4727, %v4729
        %v4731 = vrot.slane %v4724, %v4730
        %v4733 = vunpack.c.l.s4 1966171168
        %v4734 = vunpack.c.0.s8 %v4733
        %v4735 = vlaneseq
        %v4736 = vshrl.u32 %v4735, 7
        %v4737 = vsub.s32 %v4734, %v4736
        %v4738 = vrot.slane %v4731, %v4737
        %v4740 = vmul.f32 %v4721, %v4738
        %s4741 = scalar_lea.vmem [#allocation3], 23
        %v4742 = vld [vmem:[%s4741] ss:$8 sm:$0x3]
        %v4743 = vsub.f32 %v4740, %v4742
        %4744 = vst.msk [vmem:[%s4741] ss:$8 sm:$0x3] %vm819, %v4740
        %4745 = vst.msk [vmem:[%s4741] ss:$8 sm:$0x0] %vm819, %v4740
        %s4746 = scalar_lea.vmem %s1, 480
        %v4747 = vld [vmem:[%s4746 + $0x10] sm:$0xff]
        %v4748 = vld [vmem:[%s4746 + $0x18] sm:$0xf]
        %v4749 = vld [vmem:[#allocation4 + $0x20] sm:$0xff]
        %v4750 = vld [vmem:[#allocation4 + $0x28] sm:$0xff]
        %v4751 = vld [vmem:[#allocation4 + $0x30] sm:$0xf]
        %v4752 = vld [vmem:[#allocation4 + $0x38] sm:$0xf]
        %4754 = vset.pattern.permute.xlu0 0
        %4755 = vperm.xlu0 %4754, %v4747
        %v4756 = vpop.permute.xlu0 %4755
        %4759 = vset.pattern.permute.xlu0 0
        %4760 = vperm.xlu0 %4759, %v4748
        %v4761 = vpop.permute.xlu0 %4760
        %v4764 = vlaneseq
        %v4765 = vshrl.u32 %v4764, 7
        %v4766 = vsub.s32 0, %v4765
        %v4767 = vrot.slane %v4743, %v4766
        %v4768 = vlaneseq
        %v4769 = vshrl.u32 %v4768, 7
        %v4770 = vsub.s32 1, %v4769
        %v4771 = vrot.slane %v4743, %v4770
        %v4774 = vmul.f32 %v4756, %v4767
        %v4775 = vmul.f32 %v4756, %v4771
        %v4776 = vmul.f32 %v4761, %v4767
        %v4777 = vmul.f32 %v4761, %v4771
        %v4778 = vadd.f32 %v4749, %v4774
        %v4779 = vadd.f32 %v4750, %v4775
        %v4780 = vadd.f32 %v4751, %v4776
        %v4781 = vadd.f32 %v4752, %v4777
        %4782 = vst [vmem:[#allocation4 + $0x20] sm:$0xff] %v4778
        %4783 = vst [vmem:[#allocation4 + $0x28] sm:$0xff] %v4779
        %4784 = vst [vmem:[#allocation4 + $0x30] sm:$0xf] %v4780
        %4785 = vst [vmem:[#allocation4 + $0x38] sm:$0xf] %v4781
        %s4786 = scalar_lea.vmem [#allocation4], 32
        %v4787 = vld [vmem:[%s4786] ss:$8 sm:$0x3]
        %v4788 = vmul.f32 %v4787, %v4787
        %v4790 = vlaneseq
        %v4791 = vshrl.u32 %v4790, 7
        %v4792 = vsub.s32 0, %v4791
        %v4793 = vrot.slane %v4788, %v4792
        %v4794 = vlaneseq
        %v4795 = vshrl.u32 %v4794, 7
        %v4796 = vsub.s32 1, %v4795
        %v4797 = vrot.slane %v4788, %v4796
        %4800 = vmatprep.subr.mxu0 0.0
        %4801 = vmatpush1.msra.mxu0 %v465
        %4802 = vmatprep.subr.mxu0 0.0
        %4803 = vmatpush1.msra.mxu0 %v464
        %4804 = vmatprep.subr.mxu0 0.0
        %4805 = vmatpush1.msra.mxu0 %v463
        %4806 = vmatprep.subr.mxu0 0.0
        %4807 = vmatpush1.msra.mxu0 %v462
        %4808 = vmatprep.subr.mxu0 0.0
        %4809 = vmatpush1.msra.mxu0 %v461
        %4810 = vmatprep.subr.mxu0 0.0
        %4811 = vmatpush1.msra.mxu0 %v460
        %4812 = vmatprep.subr.mxu0 0.0
        %4813 = vmatpush1.msra.mxu0 %v459
        %4814 = vmatprep.subr.mxu0 0.0
        %4815 = vmatpush1.msra.mxu0 %v458
        %4816 = vmatprep.subr.mxu0 0.0
        %4817 = vmatpush1.msra.mxu0 %v457
        %4818 = vmatprep.subr.mxu0 0.0
        %4819 = vmatpush1.msra.mxu0 %v456
        %4820 = vmatprep.subr.mxu0 0.0
        %4821 = vmatpush1.msra.mxu0 %v455
        %4822 = vmatprep.subr.mxu0 0.0
        %4823 = vmatpush1.msra.mxu0 %v454
        %4824 = vmatprep.subr.mxu0 0.0
        %4825 = vmatpush1.msra.mxu0 %v453
        %4826 = vmatprep.subr.mxu0 0.0
        %4827 = vmatpush1.msra.mxu0 %v452
        %4828 = vmatprep.subr.mxu0 0.0
        %4829 = vmatpush1.msra.mxu0 %v451
        %4830 = vmatprep.subr.mxu0 0.0
        %4831 = vmatpush1.msra.mxu0 %v450
        %4832 = vmatprep.subr.mxu0 0.0
        %4833 = vmatpush2.msra.mxu0 %v481
        %4834 = vmatprep.subr.mxu0 0.0
        %4835 = vmatpush2.msra.mxu0 %v480
        %4836 = vmatprep.subr.mxu0 0.0
        %4837 = vmatpush2.msra.mxu0 %v479
        %4838 = vmatprep.subr.mxu0 0.0
        %4839 = vmatpush2.msra.mxu0 %v478
        %4840 = vmatprep.subr.mxu0 0.0
        %4841 = vmatpush2.msra.mxu0 %v477
        %4842 = vmatprep.subr.mxu0 0.0
        %4843 = vmatpush2.msra.mxu0 %v476
        %4844 = vmatprep.subr.mxu0 0.0
        %4845 = vmatpush2.msra.mxu0 %v475
        %4846 = vmatprep.subr.mxu0 0.0
        %4847 = vmatpush2.msra.mxu0 %v474
        %4848 = vmatprep.subr.mxu0 0.0
        %4849 = vmatpush2.msra.mxu0 %v473
        %4850 = vmatprep.subr.mxu0 0.0
        %4851 = vmatpush2.msra.mxu0 %v472
        %4852 = vmatprep.subr.mxu0 0.0
        %4853 = vmatpush2.msra.mxu0 %v471
        %4854 = vmatprep.subr.mxu0 0.0
        %4855 = vmatpush2.msra.mxu0 %v470
        %4856 = vmatprep.subr.mxu0 0.0
        %4857 = vmatpush2.msra.mxu0 %v469
        %4858 = vmatprep.subr.mxu0 0.0
        %4859 = vmatpush2.msra.mxu0 %v468
        %4860 = vmatprep.subr.mxu0 0.0
        %4861 = vmatpush2.msra.mxu0 %v467
        %4862 = vmatprep.subr.mxu0 0.0
        %4863 = vmatpush2.msra.mxu0 %v466
        %4864 = vmatprep.mubr.f32.mxu0 %v4797
        %4865 = vmatmul.mubr.f32.gmra.mxu0 %v4793
        %v4866 = vpop.f32.mrf.mxu0
        %v4867 = vadd.f32 1e-12, %v4866
        %v4868 = vpop.f32.mrf.mxu0
        %4869 = vdwg.mxu0
        %v4870 = vrsqrt.pop %v4867
        %v4872 = vsel %vm719, %v4870, 0
        %4874 = vmatprep.subr.mxu0 0.0
        %4875 = vmatpush1.msra.mxu0 0.0
        %4876 = vmatprep.subr.mxu0 0.0
        %4877 = vmatpush1.msra.mxu0 0.0
        %4878 = vmatprep.subr.mxu0 0.0
        %4879 = vmatpush1.msra.mxu0 0.0
        %4880 = vmatprep.subr.mxu0 0.0
        %4881 = vmatpush1.msra.mxu0 0.0
        %4882 = vmatprep.subr.mxu0 0.0
        %4883 = vmatpush1.msra.mxu0 0.0
        %4884 = vmatprep.subr.mxu0 0.0
        %4885 = vmatpush1.msra.mxu0 0.0
        %4886 = vmatprep.subr.mxu0 0.0
        %4887 = vmatpush1.msra.mxu0 0.0
        %4888 = vmatprep.subr.mxu0 0.0
        %4889 = vmatpush1.msra.mxu0 0.0
        %4890 = vmatprep.subr.mxu0 0.0
        %4891 = vmatpush1.msra.mxu0 0.0
        %4892 = vmatprep.subr.mxu0 0.0
        %4893 = vmatpush1.msra.mxu0 0.0
        %4894 = vmatprep.subr.mxu0 0.0
        %4895 = vmatpush1.msra.mxu0 0.0
        %4896 = vmatprep.subr.mxu0 0.0
        %4897 = vmatpush1.msra.mxu0 0.0
        %4898 = vmatprep.subr.mxu0 0.0
        %4899 = vmatpush1.msra.mxu0 0.0
        %4900 = vmatprep.subr.mxu0 0.0
        %4901 = vmatpush1.msra.mxu0 0.0
        %4902 = vmatprep.subr.mxu0 0.0
        %4903 = vmatpush1.msra.mxu0 0.0
        %4904 = vmatprep.subr.mxu0 %v483
        %4905 = vmatpush1.msra.mxu0 %v482
        %4906 = vmatprep.subr.mxu0 0.0
        %4907 = vmatpush2.msra.mxu0 0.0
        %4908 = vmatprep.subr.mxu0 0.0
        %4909 = vmatpush2.msra.mxu0 0.0
        %4910 = vmatprep.subr.mxu0 0.0
        %4911 = vmatpush2.msra.mxu0 0.0
        %4912 = vmatprep.subr.mxu0 0.0
        %4913 = vmatpush2.msra.mxu0 0.0
        %4914 = vmatprep.subr.mxu0 0.0
        %4915 = vmatpush2.msra.mxu0 0.0
        %4916 = vmatprep.subr.mxu0 0.0
        %4917 = vmatpush2.msra.mxu0 0.0
        %4918 = vmatprep.subr.mxu0 0.0
        %4919 = vmatpush2.msra.mxu0 0.0
        %4920 = vmatprep.subr.mxu0 0.0
        %4921 = vmatpush2.msra.mxu0 0.0
        %4922 = vmatprep.subr.mxu0 0.0
        %4923 = vmatpush2.msra.mxu0 0.0
        %4924 = vmatprep.subr.mxu0 0.0
        %4925 = vmatpush2.msra.mxu0 0.0
        %4926 = vmatprep.subr.mxu0 0.0
        %4927 = vmatpush2.msra.mxu0 0.0
        %4928 = vmatprep.subr.mxu0 0.0
        %4929 = vmatpush2.msra.mxu0 0.0
        %4930 = vmatprep.subr.mxu0 0.0
        %4931 = vmatpush2.msra.mxu0 0.0
        %4932 = vmatprep.subr.mxu0 0.0
        %4933 = vmatpush2.msra.mxu0 0.0
        %4934 = vmatprep.subr.mxu0 0.0
        %4935 = vmatpush2.msra.mxu0 0.0
        %4936 = vmatprep.subr.mxu0 0.0
        %4937 = vmatpush2.msra.mxu0 0.0
        %4938 = vmatprep.mubr.f32.mxu0 0.0
        %4939 = vmatmul.mubr.f32.gmra.mxu0 %v4872
        %v4940 = vpop.f32.mrf.mxu0
        %v4941 = vadd.f32 0.0, %v4940
        %v4942 = vpop.f32.mrf.mxu0
        %v4943 = vadd.f32 0.0, %v4942
        %4944 = vdwg.mxu0
        %v4945 = vsub.f32 0.0, %v4787
        %v4948 = vcombine.low %v4941, %v4943
        %v4950 = vunpack.c.l.s4 1966171168
        %v4951 = vunpack.c.0.s8 %v4950
        %v4952 = vlaneseq
        %v4953 = vshrl.u32 %v4952, 7
        %v4954 = vsub.s32 %v4951, %v4953
        %v4955 = vrot.slane %v4948, %v4954
        %v4957 = vunpack.c.l.s4 1966171168
        %v4958 = vunpack.c.0.s8 %v4957
        %v4959 = vlaneseq
        %v4960 = vshrl.u32 %v4959, 7
        %v4961 = vsub.s32 %v4958, %v4960
        %v4962 = vrot.slane %v4955, %v4961
        %v4964 = vmul.f32 %v4945, %v4962
        %s4965 = scalar_lea.vmem [#allocation3], 32
        %v4966 = vld [vmem:[%s4965] ss:$8 sm:$0x3]
        %v4967 = vsub.f32 %v4964, %v4966
        %4968 = vst.msk [vmem:[%s4965] ss:$8 sm:$0x3] %vm819, %v4964
        %4969 = vst.msk [vmem:[%s4965] ss:$8 sm:$0x0] %vm819, %v4964
        %s4970 = scalar_lea.vmem %s1, 512
        %v4971 = vld [vmem:[%s4970 + $0x11] sm:$0xff]
        %v4972 = vld [vmem:[%s4970 + $0x19] sm:$0x7]
        %v4973 = vld [vmem:[#allocation4 + $0x20] sm:$0xfe]
        %v4974 = vld [vmem:[#allocation4 + $0x28] sm:$0xfe]
        %v4975 = vld [vmem:[#allocation4 + $0x30] sm:$0xf]
        %v4976 = vld [vmem:[#allocation4 + $0x38] sm:$0xf]
        %4978 = vset.pattern.permute.xlu0 0
        %4979 = vperm.xlu0 %4978, %v4971
        %v4980 = vpop.permute.xlu0 %4979
        %4983 = vset.pattern.permute.xlu0 0
        %4984 = vperm.xlu0 %4983, %v4972
        %v4985 = vpop.permute.xlu0 %4984
        %v4988 = vlaneseq
        %v4989 = vshrl.u32 %v4988, 7
        %v4990 = vsub.s32 0, %v4989
        %v4991 = vrot.slane %v4967, %v4990
        %v4992 = vlaneseq
        %v4993 = vshrl.u32 %v4992, 7
        %v4994 = vsub.s32 1, %v4993
        %v4995 = vrot.slane %v4967, %v4994
        %v4998 = vmul.f32 %v4980, %v4991
        %v4999 = vmul.f32 %v4980, %v4995
        %v5000 = vmul.f32 %v4985, %v4991
        %v5001 = vmul.f32 %v4985, %v4995
        %v5006 = vrot.slane %v4998, 7
        %v5007 = vrot.slane %v4999, 7
        %v5008 = vrot.slane %v5000, 7
        %v5009 = vsel %vm881, %v5006, %v5008
        %v5010 = vrot.slane %v5001, 7
        %v5011 = vsel %vm881, %v5007, %v5010
        %v5016 = vadd.f32 %v4973, %v5006
        %v5017 = vadd.f32 %v4974, %v5007
        %v5018 = vadd.f32 %v4975, %v5009
        %v5019 = vadd.f32 %v4976, %v5011
        %5020 = vst [vmem:[#allocation4 + $0x20] sm:$0xfe] %v5016
        %5021 = vst [vmem:[#allocation4 + $0x28] sm:$0xfe] %v5017
        %5022 = vst [vmem:[#allocation4 + $0x30] sm:$0xf] %v5018
        %5023 = vst [vmem:[#allocation4 + $0x38] sm:$0xf] %v5019
        %s5024 = scalar_lea.vmem [#allocation4], 33
        %v5025 = vld [vmem:[%s5024] ss:$8 sm:$0x3]
        %v5026 = vmul.f32 %v5025, %v5025
        %v5028 = vlaneseq
        %v5029 = vshrl.u32 %v5028, 7
        %v5030 = vsub.s32 0, %v5029
        %v5031 = vrot.slane %v5026, %v5030
        %v5032 = vlaneseq
        %v5033 = vshrl.u32 %v5032, 7
        %v5034 = vsub.s32 1, %v5033
        %v5035 = vrot.slane %v5026, %v5034
        %5038 = vmatprep.subr.mxu0 0.0
        %5039 = vmatpush1.msra.mxu0 %v465
        %5040 = vmatprep.subr.mxu0 0.0
        %5041 = vmatpush1.msra.mxu0 %v464
        %5042 = vmatprep.subr.mxu0 0.0
        %5043 = vmatpush1.msra.mxu0 %v463
        %5044 = vmatprep.subr.mxu0 0.0
        %5045 = vmatpush1.msra.mxu0 %v462
        %5046 = vmatprep.subr.mxu0 0.0
        %5047 = vmatpush1.msra.mxu0 %v461
        %5048 = vmatprep.subr.mxu0 0.0
        %5049 = vmatpush1.msra.mxu0 %v460
        %5050 = vmatprep.subr.mxu0 0.0
        %5051 = vmatpush1.msra.mxu0 %v459
        %5052 = vmatprep.subr.mxu0 0.0
        %5053 = vmatpush1.msra.mxu0 %v458
        %5054 = vmatprep.subr.mxu0 0.0
        %5055 = vmatpush1.msra.mxu0 %v457
        %5056 = vmatprep.subr.mxu0 0.0
        %5057 = vmatpush1.msra.mxu0 %v456
        %5058 = vmatprep.subr.mxu0 0.0
        %5059 = vmatpush1.msra.mxu0 %v455
        %5060 = vmatprep.subr.mxu0 0.0
        %5061 = vmatpush1.msra.mxu0 %v454
        %5062 = vmatprep.subr.mxu0 0.0
        %5063 = vmatpush1.msra.mxu0 %v453
        %5064 = vmatprep.subr.mxu0 0.0
        %5065 = vmatpush1.msra.mxu0 %v452
        %5066 = vmatprep.subr.mxu0 0.0
        %5067 = vmatpush1.msra.mxu0 %v451
        %5068 = vmatprep.subr.mxu0 0.0
        %5069 = vmatpush1.msra.mxu0 %v450
        %5070 = vmatprep.subr.mxu0 0.0
        %5071 = vmatpush2.msra.mxu0 %v481
        %5072 = vmatprep.subr.mxu0 0.0
        %5073 = vmatpush2.msra.mxu0 %v480
        %5074 = vmatprep.subr.mxu0 0.0
        %5075 = vmatpush2.msra.mxu0 %v479
        %5076 = vmatprep.subr.mxu0 0.0
        %5077 = vmatpush2.msra.mxu0 %v478
        %5078 = vmatprep.subr.mxu0 0.0
        %5079 = vmatpush2.msra.mxu0 %v477
        %5080 = vmatprep.subr.mxu0 0.0
        %5081 = vmatpush2.msra.mxu0 %v476
        %5082 = vmatprep.subr.mxu0 0.0
        %5083 = vmatpush2.msra.mxu0 %v475
        %5084 = vmatprep.subr.mxu0 0.0
        %5085 = vmatpush2.msra.mxu0 %v474
        %5086 = vmatprep.subr.mxu0 0.0
        %5087 = vmatpush2.msra.mxu0 %v473
        %5088 = vmatprep.subr.mxu0 0.0
        %5089 = vmatpush2.msra.mxu0 %v472
        %5090 = vmatprep.subr.mxu0 0.0
        %5091 = vmatpush2.msra.mxu0 %v471
        %5092 = vmatprep.subr.mxu0 0.0
        %5093 = vmatpush2.msra.mxu0 %v470
        %5094 = vmatprep.subr.mxu0 0.0
        %5095 = vmatpush2.msra.mxu0 %v469
        %5096 = vmatprep.subr.mxu0 0.0
        %5097 = vmatpush2.msra.mxu0 %v468
        %5098 = vmatprep.subr.mxu0 0.0
        %5099 = vmatpush2.msra.mxu0 %v467
        %5100 = vmatprep.subr.mxu0 0.0
        %5101 = vmatpush2.msra.mxu0 %v466
        %5102 = vmatprep.mubr.f32.mxu0 %v5035
        %5103 = vmatmul.mubr.f32.gmra.mxu0 %v5031
        %v5104 = vpop.f32.mrf.mxu0
        %v5105 = vadd.f32 1e-12, %v5104
        %v5106 = vpop.f32.mrf.mxu0
        %5107 = vdwg.mxu0
        %v5108 = vrsqrt.pop %v5105
        %v5110 = vsel %vm719, %v5108, 0
        %5112 = vmatprep.subr.mxu0 0.0
        %5113 = vmatpush1.msra.mxu0 0.0
        %5114 = vmatprep.subr.mxu0 0.0
        %5115 = vmatpush1.msra.mxu0 0.0
        %5116 = vmatprep.subr.mxu0 0.0
        %5117 = vmatpush1.msra.mxu0 0.0
        %5118 = vmatprep.subr.mxu0 0.0
        %5119 = vmatpush1.msra.mxu0 0.0
        %5120 = vmatprep.subr.mxu0 0.0
        %5121 = vmatpush1.msra.mxu0 0.0
        %5122 = vmatprep.subr.mxu0 0.0
        %5123 = vmatpush1.msra.mxu0 0.0
        %5124 = vmatprep.subr.mxu0 0.0
        %5125 = vmatpush1.msra.mxu0 0.0
        %5126 = vmatprep.subr.mxu0 0.0
        %5127 = vmatpush1.msra.mxu0 0.0
        %5128 = vmatprep.subr.mxu0 0.0
        %5129 = vmatpush1.msra.mxu0 0.0
        %5130 = vmatprep.subr.mxu0 0.0
        %5131 = vmatpush1.msra.mxu0 0.0
        %5132 = vmatprep.subr.mxu0 0.0
        %5133 = vmatpush1.msra.mxu0 0.0
        %5134 = vmatprep.subr.mxu0 0.0
        %5135 = vmatpush1.msra.mxu0 0.0
        %5136 = vmatprep.subr.mxu0 0.0
        %5137 = vmatpush1.msra.mxu0 0.0
        %5138 = vmatprep.subr.mxu0 0.0
        %5139 = vmatpush1.msra.mxu0 0.0
        %5140 = vmatprep.subr.mxu0 0.0
        %5141 = vmatpush1.msra.mxu0 0.0
        %5142 = vmatprep.subr.mxu0 %v483
        %5143 = vmatpush1.msra.mxu0 %v482
        %5144 = vmatprep.subr.mxu0 0.0
        %5145 = vmatpush2.msra.mxu0 0.0
        %5146 = vmatprep.subr.mxu0 0.0
        %5147 = vmatpush2.msra.mxu0 0.0
        %5148 = vmatprep.subr.mxu0 0.0
        %5149 = vmatpush2.msra.mxu0 0.0
        %5150 = vmatprep.subr.mxu0 0.0
        %5151 = vmatpush2.msra.mxu0 0.0
        %5152 = vmatprep.subr.mxu0 0.0
        %5153 = vmatpush2.msra.mxu0 0.0
        %5154 = vmatprep.subr.mxu0 0.0
        %5155 = vmatpush2.msra.mxu0 0.0
        %5156 = vmatprep.subr.mxu0 0.0
        %5157 = vmatpush2.msra.mxu0 0.0
        %5158 = vmatprep.subr.mxu0 0.0
        %5159 = vmatpush2.msra.mxu0 0.0
        %5160 = vmatprep.subr.mxu0 0.0
        %5161 = vmatpush2.msra.mxu0 0.0
        %5162 = vmatprep.subr.mxu0 0.0
        %5163 = vmatpush2.msra.mxu0 0.0
        %5164 = vmatprep.subr.mxu0 0.0
        %5165 = vmatpush2.msra.mxu0 0.0
        %5166 = vmatprep.subr.mxu0 0.0
        %5167 = vmatpush2.msra.mxu0 0.0
        %5168 = vmatprep.subr.mxu0 0.0
        %5169 = vmatpush2.msra.mxu0 0.0
        %5170 = vmatprep.subr.mxu0 0.0
        %5171 = vmatpush2.msra.mxu0 0.0
        %5172 = vmatprep.subr.mxu0 0.0
        %5173 = vmatpush2.msra.mxu0 0.0
        %5174 = vmatprep.subr.mxu0 0.0
        %5175 = vmatpush2.msra.mxu0 0.0
        %5176 = vmatprep.mubr.f32.mxu0 0.0
        %5177 = vmatmul.mubr.f32.gmra.mxu0 %v5110
        %v5178 = vpop.f32.mrf.mxu0
        %v5179 = vadd.f32 0.0, %v5178
        %v5180 = vpop.f32.mrf.mxu0
        %v5181 = vadd.f32 0.0, %v5180
        %5182 = vdwg.mxu0
        %v5183 = vsub.f32 0.0, %v5025
        %v5186 = vcombine.low %v5179, %v5181
        %v5188 = vunpack.c.l.s4 1966171168
        %v5189 = vunpack.c.0.s8 %v5188
        %v5190 = vlaneseq
        %v5191 = vshrl.u32 %v5190, 7
        %v5192 = vsub.s32 %v5189, %v5191
        %v5193 = vrot.slane %v5186, %v5192
        %v5195 = vunpack.c.l.s4 1966171168
        %v5196 = vunpack.c.0.s8 %v5195
        %v5197 = vlaneseq
        %v5198 = vshrl.u32 %v5197, 7
        %v5199 = vsub.s32 %v5196, %v5198
        %v5200 = vrot.slane %v5193, %v5199
        %v5202 = vmul.f32 %v5183, %v5200
        %s5203 = scalar_lea.vmem [#allocation3], 33
        %v5204 = vld [vmem:[%s5203] ss:$8 sm:$0x3]
        %v5205 = vsub.f32 %v5202, %v5204
        %5206 = vst.msk [vmem:[%s5203] ss:$8 sm:$0x3] %vm819, %v5202
        %5207 = vst.msk [vmem:[%s5203] ss:$8 sm:$0x0] %vm819, %v5202
        %s5208 = scalar_lea.vmem %s1, 544
        %v5209 = vld [vmem:[%s5208 + $0x12] sm:$0xff]
        %v5210 = vld [vmem:[%s5208 + $0x1a] sm:$0x3]
        %v5211 = vld [vmem:[#allocation4 + $0x20] sm:$0xfc]
        %v5212 = vld [vmem:[#allocation4 + $0x28] sm:$0xfc]
        %v5213 = vld [vmem:[#allocation4 + $0x30] sm:$0xf]
        %v5214 = vld [vmem:[#allocation4 + $0x38] sm:$0xf]
        %5216 = vset.pattern.permute.xlu0 0
        %5217 = vperm.xlu0 %5216, %v5209
        %v5218 = vpop.permute.xlu0 %5217
        %5221 = vset.pattern.permute.xlu0 0
        %5222 = vperm.xlu0 %5221, %v5210
        %v5223 = vpop.permute.xlu0 %5222
        %v5226 = vlaneseq
        %v5227 = vshrl.u32 %v5226, 7
        %v5228 = vsub.s32 0, %v5227
        %v5229 = vrot.slane %v5205, %v5228
        %v5230 = vlaneseq
        %v5231 = vshrl.u32 %v5230, 7
        %v5232 = vsub.s32 1, %v5231
        %v5233 = vrot.slane %v5205, %v5232
        %v5236 = vmul.f32 %v5218, %v5229
        %v5237 = vmul.f32 %v5218, %v5233
        %v5238 = vmul.f32 %v5223, %v5229
        %v5239 = vmul.f32 %v5223, %v5233
        %v5244 = vrot.slane %v5236, 6
        %v5245 = vrot.slane %v5237, 6
        %v5246 = vrot.slane %v5238, 6
        %v5247 = vsel %vm330, %v5244, %v5246
        %v5248 = vrot.slane %v5239, 6
        %v5249 = vsel %vm330, %v5245, %v5248
        %v5254 = vadd.f32 %v5211, %v5244
        %v5255 = vadd.f32 %v5212, %v5245
        %v5256 = vadd.f32 %v5213, %v5247
        %v5257 = vadd.f32 %v5214, %v5249
        %5258 = vst [vmem:[#allocation4 + $0x20] sm:$0xfc] %v5254
        %5259 = vst [vmem:[#allocation4 + $0x28] sm:$0xfc] %v5255
        %5260 = vst [vmem:[#allocation4 + $0x30] sm:$0xf] %v5256
        %5261 = vst [vmem:[#allocation4 + $0x38] sm:$0xf] %v5257
        %s5262 = scalar_lea.vmem [#allocation4], 34
        %v5263 = vld [vmem:[%s5262] ss:$8 sm:$0x3]
        %v5264 = vmul.f32 %v5263, %v5263
        %v5266 = vlaneseq
        %v5267 = vshrl.u32 %v5266, 7
        %v5268 = vsub.s32 0, %v5267
        %v5269 = vrot.slane %v5264, %v5268
        %v5270 = vlaneseq
        %v5271 = vshrl.u32 %v5270, 7
        %v5272 = vsub.s32 1, %v5271
        %v5273 = vrot.slane %v5264, %v5272
        %5276 = vmatprep.subr.mxu0 0.0
        %5277 = vmatpush1.msra.mxu0 %v465
        %5278 = vmatprep.subr.mxu0 0.0
        %5279 = vmatpush1.msra.mxu0 %v464
        %5280 = vmatprep.subr.mxu0 0.0
        %5281 = vmatpush1.msra.mxu0 %v463
        %5282 = vmatprep.subr.mxu0 0.0
        %5283 = vmatpush1.msra.mxu0 %v462
        %5284 = vmatprep.subr.mxu0 0.0
        %5285 = vmatpush1.msra.mxu0 %v461
        %5286 = vmatprep.subr.mxu0 0.0
        %5287 = vmatpush1.msra.mxu0 %v460
        %5288 = vmatprep.subr.mxu0 0.0
        %5289 = vmatpush1.msra.mxu0 %v459
        %5290 = vmatprep.subr.mxu0 0.0
        %5291 = vmatpush1.msra.mxu0 %v458
        %5292 = vmatprep.subr.mxu0 0.0
        %5293 = vmatpush1.msra.mxu0 %v457
        %5294 = vmatprep.subr.mxu0 0.0
        %5295 = vmatpush1.msra.mxu0 %v456
        %5296 = vmatprep.subr.mxu0 0.0
        %5297 = vmatpush1.msra.mxu0 %v455
        %5298 = vmatprep.subr.mxu0 0.0
        %5299 = vmatpush1.msra.mxu0 %v454
        %5300 = vmatprep.subr.mxu0 0.0
        %5301 = vmatpush1.msra.mxu0 %v453
        %5302 = vmatprep.subr.mxu0 0.0
        %5303 = vmatpush1.msra.mxu0 %v452
        %5304 = vmatprep.subr.mxu0 0.0
        %5305 = vmatpush1.msra.mxu0 %v451
        %5306 = vmatprep.subr.mxu0 0.0
        %5307 = vmatpush1.msra.mxu0 %v450
        %5308 = vmatprep.subr.mxu0 0.0
        %5309 = vmatpush2.msra.mxu0 %v481
        %5310 = vmatprep.subr.mxu0 0.0
        %5311 = vmatpush2.msra.mxu0 %v480
        %5312 = vmatprep.subr.mxu0 0.0
        %5313 = vmatpush2.msra.mxu0 %v479
        %5314 = vmatprep.subr.mxu0 0.0
        %5315 = vmatpush2.msra.mxu0 %v478
        %5316 = vmatprep.subr.mxu0 0.0
        %5317 = vmatpush2.msra.mxu0 %v477
        %5318 = vmatprep.subr.mxu0 0.0
        %5319 = vmatpush2.msra.mxu0 %v476
        %5320 = vmatprep.subr.mxu0 0.0
        %5321 = vmatpush2.msra.mxu0 %v475
        %5322 = vmatprep.subr.mxu0 0.0
        %5323 = vmatpush2.msra.mxu0 %v474
        %5324 = vmatprep.subr.mxu0 0.0
        %5325 = vmatpush2.msra.mxu0 %v473
        %5326 = vmatprep.subr.mxu0 0.0
        %5327 = vmatpush2.msra.mxu0 %v472
        %5328 = vmatprep.subr.mxu0 0.0
        %5329 = vmatpush2.msra.mxu0 %v471
        %5330 = vmatprep.subr.mxu0 0.0
        %5331 = vmatpush2.msra.mxu0 %v470
        %5332 = vmatprep.subr.mxu0 0.0
        %5333 = vmatpush2.msra.mxu0 %v469
        %5334 = vmatprep.subr.mxu0 0.0
        %5335 = vmatpush2.msra.mxu0 %v468
        %5336 = vmatprep.subr.mxu0 0.0
        %5337 = vmatpush2.msra.mxu0 %v467
        %5338 = vmatprep.subr.mxu0 0.0
        %5339 = vmatpush2.msra.mxu0 %v466
        %5340 = vmatprep.mubr.f32.mxu0 %v5273
        %5341 = vmatmul.mubr.f32.gmra.mxu0 %v5269
        %v5342 = vpop.f32.mrf.mxu0
        %v5343 = vadd.f32 1e-12, %v5342
        %v5344 = vpop.f32.mrf.mxu0
        %5345 = vdwg.mxu0
        %v5346 = vrsqrt.pop %v5343
        %v5348 = vsel %vm719, %v5346, 0
        %5350 = vmatprep.subr.mxu0 0.0
        %5351 = vmatpush1.msra.mxu0 0.0
        %5352 = vmatprep.subr.mxu0 0.0
        %5353 = vmatpush1.msra.mxu0 0.0
        %5354 = vmatprep.subr.mxu0 0.0
        %5355 = vmatpush1.msra.mxu0 0.0
        %5356 = vmatprep.subr.mxu0 0.0
        %5357 = vmatpush1.msra.mxu0 0.0
        %5358 = vmatprep.subr.mxu0 0.0
        %5359 = vmatpush1.msra.mxu0 0.0
        %5360 = vmatprep.subr.mxu0 0.0
        %5361 = vmatpush1.msra.mxu0 0.0
        %5362 = vmatprep.subr.mxu0 0.0
        %5363 = vmatpush1.msra.mxu0 0.0
        %5364 = vmatprep.subr.mxu0 0.0
        %5365 = vmatpush1.msra.mxu0 0.0
        %5366 = vmatprep.subr.mxu0 0.0
        %5367 = vmatpush1.msra.mxu0 0.0
        %5368 = vmatprep.subr.mxu0 0.0
        %5369 = vmatpush1.msra.mxu0 0.0
        %5370 = vmatprep.subr.mxu0 0.0
        %5371 = vmatpush1.msra.mxu0 0.0
        %5372 = vmatprep.subr.mxu0 0.0
        %5373 = vmatpush1.msra.mxu0 0.0
        %5374 = vmatprep.subr.mxu0 0.0
        %5375 = vmatpush1.msra.mxu0 0.0
        %5376 = vmatprep.subr.mxu0 0.0
        %5377 = vmatpush1.msra.mxu0 0.0
        %5378 = vmatprep.subr.mxu0 0.0
        %5379 = vmatpush1.msra.mxu0 0.0
        %5380 = vmatprep.subr.mxu0 %v483
        %5381 = vmatpush1.msra.mxu0 %v482
        %5382 = vmatprep.subr.mxu0 0.0
        %5383 = vmatpush2.msra.mxu0 0.0
        %5384 = vmatprep.subr.mxu0 0.0
        %5385 = vmatpush2.msra.mxu0 0.0
        %5386 = vmatprep.subr.mxu0 0.0
        %5387 = vmatpush2.msra.mxu0 0.0
        %5388 = vmatprep.subr.mxu0 0.0
        %5389 = vmatpush2.msra.mxu0 0.0
        %5390 = vmatprep.subr.mxu0 0.0
        %5391 = vmatpush2.msra.mxu0 0.0
        %5392 = vmatprep.subr.mxu0 0.0
        %5393 = vmatpush2.msra.mxu0 0.0
        %5394 = vmatprep.subr.mxu0 0.0
        %5395 = vmatpush2.msra.mxu0 0.0
        %5396 = vmatprep.subr.mxu0 0.0
        %5397 = vmatpush2.msra.mxu0 0.0
        %5398 = vmatprep.subr.mxu0 0.0
        %5399 = vmatpush2.msra.mxu0 0.0
        %5400 = vmatprep.subr.mxu0 0.0
        %5401 = vmatpush2.msra.mxu0 0.0
        %5402 = vmatprep.subr.mxu0 0.0
        %5403 = vmatpush2.msra.mxu0 0.0
        %5404 = vmatprep.subr.mxu0 0.0
        %5405 = vmatpush2.msra.mxu0 0.0
        %5406 = vmatprep.subr.mxu0 0.0
        %5407 = vmatpush2.msra.mxu0 0.0
        %5408 = vmatprep.subr.mxu0 0.0
        %5409 = vmatpush2.msra.mxu0 0.0
        %5410 = vmatprep.subr.mxu0 0.0
        %5411 = vmatpush2.msra.mxu0 0.0
        %5412 = vmatprep.subr.mxu0 0.0
        %5413 = vmatpush2.msra.mxu0 0.0
        %5414 = vmatprep.mubr.f32.mxu0 0.0
        %5415 = vmatmul.mubr.f32.gmra.mxu0 %v5348
        %v5416 = vpop.f32.mrf.mxu0
        %v5417 = vadd.f32 0.0, %v5416
        %v5418 = vpop.f32.mrf.mxu0
        %v5419 = vadd.f32 0.0, %v5418
        %5420 = vdwg.mxu0
        %v5421 = vsub.f32 0.0, %v5263
        %v5424 = vcombine.low %v5417, %v5419
        %v5426 = vunpack.c.l.s4 1966171168
        %v5427 = vunpack.c.0.s8 %v5426
        %v5428 = vlaneseq
        %v5429 = vshrl.u32 %v5428, 7
        %v5430 = vsub.s32 %v5427, %v5429
        %v5431 = vrot.slane %v5424, %v5430
        %v5433 = vunpack.c.l.s4 1966171168
        %v5434 = vunpack.c.0.s8 %v5433
        %v5435 = vlaneseq
        %v5436 = vshrl.u32 %v5435, 7
        %v5437 = vsub.s32 %v5434, %v5436
        %v5438 = vrot.slane %v5431, %v5437
        %v5440 = vmul.f32 %v5421, %v5438
        %s5441 = scalar_lea.vmem [#allocation3], 34
        %v5442 = vld [vmem:[%s5441] ss:$8 sm:$0x3]
        %v5443 = vsub.f32 %v5440, %v5442
        %5444 = vst.msk [vmem:[%s5441] ss:$8 sm:$0x3] %vm819, %v5440
        %5445 = vst.msk [vmem:[%s5441] ss:$8 sm:$0x0] %vm819, %v5440
        %s5446 = scalar_lea.vmem %s1, 576
        %v5447 = vld [vmem:[%s5446 + $0x13] sm:$0xff]
        %v5448 = vld [vmem:[%s5446 + $0x1b] sm:$0x1]
        %v5449 = vld [vmem:[#allocation4 + $0x20] sm:$0xf8]
        %v5450 = vld [vmem:[#allocation4 + $0x28] sm:$0xf8]
        %v5451 = vld [vmem:[#allocation4 + $0x30] sm:$0xf]
        %v5452 = vld [vmem:[#allocation4 + $0x38] sm:$0xf]
        %5454 = vset.pattern.permute.xlu0 0
        %5455 = vperm.xlu0 %5454, %v5447
        %v5456 = vpop.permute.xlu0 %5455
        %5459 = vset.pattern.permute.xlu0 0
        %5460 = vperm.xlu0 %5459, %v5448
        %v5461 = vpop.permute.xlu0 %5460
        %v5464 = vlaneseq
        %v5465 = vshrl.u32 %v5464, 7
        %v5466 = vsub.s32 0, %v5465
        %v5467 = vrot.slane %v5443, %v5466
        %v5468 = vlaneseq
        %v5469 = vshrl.u32 %v5468, 7
        %v5470 = vsub.s32 1, %v5469
        %v5471 = vrot.slane %v5443, %v5470
        %v5474 = vmul.f32 %v5456, %v5467
        %v5475 = vmul.f32 %v5456, %v5471
        %v5476 = vmul.f32 %v5461, %v5467
        %v5477 = vmul.f32 %v5461, %v5471
        %v5482 = vrot.slane %v5474, 5
        %v5483 = vrot.slane %v5475, 5
        %v5484 = vrot.slane %v5476, 5
        %v5485 = vsel %vm1446, %v5482, %v5484
        %v5486 = vrot.slane %v5477, 5
        %v5487 = vsel %vm1446, %v5483, %v5486
        %v5492 = vadd.f32 %v5449, %v5482
        %v5493 = vadd.f32 %v5450, %v5483
        %v5494 = vadd.f32 %v5451, %v5485
        %v5495 = vadd.f32 %v5452, %v5487
        %5496 = vst [vmem:[#allocation4 + $0x20] sm:$0xf8] %v5492
        %5497 = vst [vmem:[#allocation4 + $0x28] sm:$0xf8] %v5493
        %5498 = vst [vmem:[#allocation4 + $0x30] sm:$0xf] %v5494
        %5499 = vst [vmem:[#allocation4 + $0x38] sm:$0xf] %v5495
        %s5500 = scalar_lea.vmem [#allocation4], 35
        %v5501 = vld [vmem:[%s5500] ss:$8 sm:$0x3]
        %v5502 = vmul.f32 %v5501, %v5501
        %v5504 = vlaneseq
        %v5505 = vshrl.u32 %v5504, 7
        %v5506 = vsub.s32 0, %v5505
        %v5507 = vrot.slane %v5502, %v5506
        %v5508 = vlaneseq
        %v5509 = vshrl.u32 %v5508, 7
        %v5510 = vsub.s32 1, %v5509
        %v5511 = vrot.slane %v5502, %v5510
        %5514 = vmatprep.subr.mxu0 0.0
        %5515 = vmatpush1.msra.mxu0 %v465
        %5516 = vmatprep.subr.mxu0 0.0
        %5517 = vmatpush1.msra.mxu0 %v464
        %5518 = vmatprep.subr.mxu0 0.0
        %5519 = vmatpush1.msra.mxu0 %v463
        %5520 = vmatprep.subr.mxu0 0.0
        %5521 = vmatpush1.msra.mxu0 %v462
        %5522 = vmatprep.subr.mxu0 0.0
        %5523 = vmatpush1.msra.mxu0 %v461
        %5524 = vmatprep.subr.mxu0 0.0
        %5525 = vmatpush1.msra.mxu0 %v460
        %5526 = vmatprep.subr.mxu0 0.0
        %5527 = vmatpush1.msra.mxu0 %v459
        %5528 = vmatprep.subr.mxu0 0.0
        %5529 = vmatpush1.msra.mxu0 %v458
        %5530 = vmatprep.subr.mxu0 0.0
        %5531 = vmatpush1.msra.mxu0 %v457
        %5532 = vmatprep.subr.mxu0 0.0
        %5533 = vmatpush1.msra.mxu0 %v456
        %5534 = vmatprep.subr.mxu0 0.0
        %5535 = vmatpush1.msra.mxu0 %v455
        %5536 = vmatprep.subr.mxu0 0.0
        %5537 = vmatpush1.msra.mxu0 %v454
        %5538 = vmatprep.subr.mxu0 0.0
        %5539 = vmatpush1.msra.mxu0 %v453
        %5540 = vmatprep.subr.mxu0 0.0
        %5541 = vmatpush1.msra.mxu0 %v452
        %5542 = vmatprep.subr.mxu0 0.0
        %5543 = vmatpush1.msra.mxu0 %v451
        %5544 = vmatprep.subr.mxu0 0.0
        %5545 = vmatpush1.msra.mxu0 %v450
        %5546 = vmatprep.subr.mxu0 0.0
        %5547 = vmatpush2.msra.mxu0 %v481
        %5548 = vmatprep.subr.mxu0 0.0
        %5549 = vmatpush2.msra.mxu0 %v480
        %5550 = vmatprep.subr.mxu0 0.0
        %5551 = vmatpush2.msra.mxu0 %v479
        %5552 = vmatprep.subr.mxu0 0.0
        %5553 = vmatpush2.msra.mxu0 %v478
        %5554 = vmatprep.subr.mxu0 0.0
        %5555 = vmatpush2.msra.mxu0 %v477
        %5556 = vmatprep.subr.mxu0 0.0
        %5557 = vmatpush2.msra.mxu0 %v476
        %5558 = vmatprep.subr.mxu0 0.0
        %5559 = vmatpush2.msra.mxu0 %v475
        %5560 = vmatprep.subr.mxu0 0.0
        %5561 = vmatpush2.msra.mxu0 %v474
        %5562 = vmatprep.subr.mxu0 0.0
        %5563 = vmatpush2.msra.mxu0 %v473
        %5564 = vmatprep.subr.mxu0 0.0
        %5565 = vmatpush2.msra.mxu0 %v472
        %5566 = vmatprep.subr.mxu0 0.0
        %5567 = vmatpush2.msra.mxu0 %v471
        %5568 = vmatprep.subr.mxu0 0.0
        %5569 = vmatpush2.msra.mxu0 %v470
        %5570 = vmatprep.subr.mxu0 0.0
        %5571 = vmatpush2.msra.mxu0 %v469
        %5572 = vmatprep.subr.mxu0 0.0
        %5573 = vmatpush2.msra.mxu0 %v468
        %5574 = vmatprep.subr.mxu0 0.0
        %5575 = vmatpush2.msra.mxu0 %v467
        %5576 = vmatprep.subr.mxu0 0.0
        %5577 = vmatpush2.msra.mxu0 %v466
        %5578 = vmatprep.mubr.f32.mxu0 %v5511
        %5579 = vmatmul.mubr.f32.gmra.mxu0 %v5507
        %v5580 = vpop.f32.mrf.mxu0
        %v5581 = vadd.f32 1e-12, %v5580
        %v5582 = vpop.f32.mrf.mxu0
        %5583 = vdwg.mxu0
        %v5584 = vrsqrt.pop %v5581
        %v5586 = vsel %vm719, %v5584, 0
        %5588 = vmatprep.subr.mxu0 0.0
        %5589 = vmatpush1.msra.mxu0 0.0
        %5590 = vmatprep.subr.mxu0 0.0
        %5591 = vmatpush1.msra.mxu0 0.0
        %5592 = vmatprep.subr.mxu0 0.0
        %5593 = vmatpush1.msra.mxu0 0.0
        %5594 = vmatprep.subr.mxu0 0.0
        %5595 = vmatpush1.msra.mxu0 0.0
        %5596 = vmatprep.subr.mxu0 0.0
        %5597 = vmatpush1.msra.mxu0 0.0
        %5598 = vmatprep.subr.mxu0 0.0
        %5599 = vmatpush1.msra.mxu0 0.0
        %5600 = vmatprep.subr.mxu0 0.0
        %5601 = vmatpush1.msra.mxu0 0.0
        %5602 = vmatprep.subr.mxu0 0.0
        %5603 = vmatpush1.msra.mxu0 0.0
        %5604 = vmatprep.subr.mxu0 0.0
        %5605 = vmatpush1.msra.mxu0 0.0
        %5606 = vmatprep.subr.mxu0 0.0
        %5607 = vmatpush1.msra.mxu0 0.0
        %5608 = vmatprep.subr.mxu0 0.0
        %5609 = vmatpush1.msra.mxu0 0.0
        %5610 = vmatprep.subr.mxu0 0.0
        %5611 = vmatpush1.msra.mxu0 0.0
        %5612 = vmatprep.subr.mxu0 0.0
        %5613 = vmatpush1.msra.mxu0 0.0
        %5614 = vmatprep.subr.mxu0 0.0
        %5615 = vmatpush1.msra.mxu0 0.0
        %5616 = vmatprep.subr.mxu0 0.0
        %5617 = vmatpush1.msra.mxu0 0.0
        %5618 = vmatprep.subr.mxu0 %v483
        %5619 = vmatpush1.msra.mxu0 %v482
        %5620 = vmatprep.subr.mxu0 0.0
        %5621 = vmatpush2.msra.mxu0 0.0
        %5622 = vmatprep.subr.mxu0 0.0
        %5623 = vmatpush2.msra.mxu0 0.0
        %5624 = vmatprep.subr.mxu0 0.0
        %5625 = vmatpush2.msra.mxu0 0.0
        %5626 = vmatprep.subr.mxu0 0.0
        %5627 = vmatpush2.msra.mxu0 0.0
        %5628 = vmatprep.subr.mxu0 0.0
        %5629 = vmatpush2.msra.mxu0 0.0
        %5630 = vmatprep.subr.mxu0 0.0
        %5631 = vmatpush2.msra.mxu0 0.0
        %5632 = vmatprep.subr.mxu0 0.0
        %5633 = vmatpush2.msra.mxu0 0.0
        %5634 = vmatprep.subr.mxu0 0.0
        %5635 = vmatpush2.msra.mxu0 0.0
        %5636 = vmatprep.subr.mxu0 0.0
        %5637 = vmatpush2.msra.mxu0 0.0
        %5638 = vmatprep.subr.mxu0 0.0
        %5639 = vmatpush2.msra.mxu0 0.0
        %5640 = vmatprep.subr.mxu0 0.0
        %5641 = vmatpush2.msra.mxu0 0.0
        %5642 = vmatprep.subr.mxu0 0.0
        %5643 = vmatpush2.msra.mxu0 0.0
        %5644 = vmatprep.subr.mxu0 0.0
        %5645 = vmatpush2.msra.mxu0 0.0
        %5646 = vmatprep.subr.mxu0 0.0
        %5647 = vmatpush2.msra.mxu0 0.0
        %5648 = vmatprep.subr.mxu0 0.0
        %5649 = vmatpush2.msra.mxu0 0.0
        %5650 = vmatprep.subr.mxu0 0.0
        %5651 = vmatpush2.msra.mxu0 0.0
        %5652 = vmatprep.mubr.f32.mxu0 0.0
        %5653 = vmatmul.mubr.f32.gmra.mxu0 %v5586
        %v5654 = vpop.f32.mrf.mxu0
        %v5655 = vadd.f32 0.0, %v5654
        %v5656 = vpop.f32.mrf.mxu0
        %v5657 = vadd.f32 0.0, %v5656
        %5658 = vdwg.mxu0
        %v5659 = vsub.f32 0.0, %v5501
        %v5662 = vcombine.low %v5655, %v5657
        %v5664 = vunpack.c.l.s4 1966171168
        %v5665 = vunpack.c.0.s8 %v5664
        %v5666 = vlaneseq
        %v5667 = vshrl.u32 %v5666, 7
        %v5668 = vsub.s32 %v5665, %v5667
        %v5669 = vrot.slane %v5662, %v5668
        %v5671 = vunpack.c.l.s4 1966171168
        %v5672 = vunpack.c.0.s8 %v5671
        %v5673 = vlaneseq
        %v5674 = vshrl.u32 %v5673, 7
        %v5675 = vsub.s32 %v5672, %v5674
        %v5676 = vrot.slane %v5669, %v5675
        %v5678 = vmul.f32 %v5659, %v5676
        %s5679 = scalar_lea.vmem [#allocation3], 35
        %v5680 = vld [vmem:[%s5679] ss:$8 sm:$0x3]
        %v5681 = vsub.f32 %v5678, %v5680
        %5682 = vst.msk [vmem:[%s5679] ss:$8 sm:$0x3] %vm819, %v5678
        %5683 = vst.msk [vmem:[%s5679] ss:$8 sm:$0x0] %vm819, %v5678
        %s5684 = scalar_lea.vmem %s1, 608
        %v5685 = vld [vmem:[%s5684 + $0x14] sm:$0xff]
        %v5686 = vld [vmem:[#allocation4 + $0x20] sm:$0xf0]
        %v5687 = vld [vmem:[#allocation4 + $0x28] sm:$0xf0]
        %v5688 = vld [vmem:[#allocation4 + $0x30] sm:$0xf]
        %v5689 = vld [vmem:[#allocation4 + $0x38] sm:$0xf]
        %5691 = vset.pattern.permute.xlu0 0
        %5692 = vperm.xlu0 %5691, %v5685
        %v5693 = vpop.permute.xlu0 %5692
        %v5696 = vlaneseq
        %v5697 = vshrl.u32 %v5696, 7
        %v5698 = vsub.s32 0, %v5697
        %v5699 = vrot.slane %v5681, %v5698
        %v5700 = vlaneseq
        %v5701 = vshrl.u32 %v5700, 7
        %v5702 = vsub.s32 1, %v5701
        %v5703 = vrot.slane %v5681, %v5702
        %v5706 = vmul.f32 %v5693, %v5699
        %v5707 = vmul.f32 %v5693, %v5703
        %v5710 = vrot.slane %v5706, 4
        %v5711 = vrot.slane %v5707, 4
        %v5714 = vadd.f32 %v5686, %v5710
        %v5715 = vadd.f32 %v5687, %v5711
        %v5716 = vadd.f32 %v5688, %v5710
        %v5717 = vadd.f32 %v5689, %v5711
        %5718 = vst [vmem:[#allocation4 + $0x20] sm:$0xf0] %v5714
        %5719 = vst [vmem:[#allocation4 + $0x28] sm:$0xf0] %v5715
        %5720 = vst [vmem:[#allocation4 + $0x30] sm:$0xf] %v5716
        %5721 = vst [vmem:[#allocation4 + $0x38] sm:$0xf] %v5717
        %s5722 = scalar_lea.vmem [#allocation4], 36
        %v5723 = vld [vmem:[%s5722] ss:$8 sm:$0x3]
        %v5724 = vmul.f32 %v5723, %v5723
        %v5726 = vlaneseq
        %v5727 = vshrl.u32 %v5726, 7
        %v5728 = vsub.s32 0, %v5727
        %v5729 = vrot.slane %v5724, %v5728
        %v5730 = vlaneseq
        %v5731 = vshrl.u32 %v5730, 7
        %v5732 = vsub.s32 1, %v5731
        %v5733 = vrot.slane %v5724, %v5732
        %5736 = vmatprep.subr.mxu0 0.0
        %5737 = vmatpush1.msra.mxu0 %v465
        %5738 = vmatprep.subr.mxu0 0.0
        %5739 = vmatpush1.msra.mxu0 %v464
        %5740 = vmatprep.subr.mxu0 0.0
        %5741 = vmatpush1.msra.mxu0 %v463
        %5742 = vmatprep.subr.mxu0 0.0
        %5743 = vmatpush1.msra.mxu0 %v462
        %5744 = vmatprep.subr.mxu0 0.0
        %5745 = vmatpush1.msra.mxu0 %v461
        %5746 = vmatprep.subr.mxu0 0.0
        %5747 = vmatpush1.msra.mxu0 %v460
        %5748 = vmatprep.subr.mxu0 0.0
        %5749 = vmatpush1.msra.mxu0 %v459
        %5750 = vmatprep.subr.mxu0 0.0
        %5751 = vmatpush1.msra.mxu0 %v458
        %5752 = vmatprep.subr.mxu0 0.0
        %5753 = vmatpush1.msra.mxu0 %v457
        %5754 = vmatprep.subr.mxu0 0.0
        %5755 = vmatpush1.msra.mxu0 %v456
        %5756 = vmatprep.subr.mxu0 0.0
        %5757 = vmatpush1.msra.mxu0 %v455
        %5758 = vmatprep.subr.mxu0 0.0
        %5759 = vmatpush1.msra.mxu0 %v454
        %5760 = vmatprep.subr.mxu0 0.0
        %5761 = vmatpush1.msra.mxu0 %v453
        %5762 = vmatprep.subr.mxu0 0.0
        %5763 = vmatpush1.msra.mxu0 %v452
        %5764 = vmatprep.subr.mxu0 0.0
        %5765 = vmatpush1.msra.mxu0 %v451
        %5766 = vmatprep.subr.mxu0 0.0
        %5767 = vmatpush1.msra.mxu0 %v450
        %5768 = vmatprep.subr.mxu0 0.0
        %5769 = vmatpush2.msra.mxu0 %v481
        %5770 = vmatprep.subr.mxu0 0.0
        %5771 = vmatpush2.msra.mxu0 %v480
        %5772 = vmatprep.subr.mxu0 0.0
        %5773 = vmatpush2.msra.mxu0 %v479
        %5774 = vmatprep.subr.mxu0 0.0
        %5775 = vmatpush2.msra.mxu0 %v478
        %5776 = vmatprep.subr.mxu0 0.0
        %5777 = vmatpush2.msra.mxu0 %v477
        %5778 = vmatprep.subr.mxu0 0.0
        %5779 = vmatpush2.msra.mxu0 %v476
        %5780 = vmatprep.subr.mxu0 0.0
        %5781 = vmatpush2.msra.mxu0 %v475
        %5782 = vmatprep.subr.mxu0 0.0
        %5783 = vmatpush2.msra.mxu0 %v474
        %5784 = vmatprep.subr.mxu0 0.0
        %5785 = vmatpush2.msra.mxu0 %v473
        %5786 = vmatprep.subr.mxu0 0.0
        %5787 = vmatpush2.msra.mxu0 %v472
        %5788 = vmatprep.subr.mxu0 0.0
        %5789 = vmatpush2.msra.mxu0 %v471
        %5790 = vmatprep.subr.mxu0 0.0
        %5791 = vmatpush2.msra.mxu0 %v470
        %5792 = vmatprep.subr.mxu0 0.0
        %5793 = vmatpush2.msra.mxu0 %v469
        %5794 = vmatprep.subr.mxu0 0.0
        %5795 = vmatpush2.msra.mxu0 %v468
        %5796 = vmatprep.subr.mxu0 0.0
        %5797 = vmatpush2.msra.mxu0 %v467
        %5798 = vmatprep.subr.mxu0 0.0
        %5799 = vmatpush2.msra.mxu0 %v466
        %5800 = vmatprep.mubr.f32.mxu0 %v5733
        %5801 = vmatmul.mubr.f32.gmra.mxu0 %v5729
        %v5802 = vpop.f32.mrf.mxu0
        %v5803 = vadd.f32 1e-12, %v5802
        %v5804 = vpop.f32.mrf.mxu0
        %5805 = vdwg.mxu0
        %v5806 = vrsqrt.pop %v5803
        %v5808 = vsel %vm719, %v5806, 0
        %5810 = vmatprep.subr.mxu0 0.0
        %5811 = vmatpush1.msra.mxu0 0.0
        %5812 = vmatprep.subr.mxu0 0.0
        %5813 = vmatpush1.msra.mxu0 0.0
        %5814 = vmatprep.subr.mxu0 0.0
        %5815 = vmatpush1.msra.mxu0 0.0
        %5816 = vmatprep.subr.mxu0 0.0
        %5817 = vmatpush1.msra.mxu0 0.0
        %5818 = vmatprep.subr.mxu0 0.0
        %5819 = vmatpush1.msra.mxu0 0.0
        %5820 = vmatprep.subr.mxu0 0.0
        %5821 = vmatpush1.msra.mxu0 0.0
        %5822 = vmatprep.subr.mxu0 0.0
        %5823 = vmatpush1.msra.mxu0 0.0
        %5824 = vmatprep.subr.mxu0 0.0
        %5825 = vmatpush1.msra.mxu0 0.0
        %5826 = vmatprep.subr.mxu0 0.0
        %5827 = vmatpush1.msra.mxu0 0.0
        %5828 = vmatprep.subr.mxu0 0.0
        %5829 = vmatpush1.msra.mxu0 0.0
        %5830 = vmatprep.subr.mxu0 0.0
        %5831 = vmatpush1.msra.mxu0 0.0
        %5832 = vmatprep.subr.mxu0 0.0
        %5833 = vmatpush1.msra.mxu0 0.0
        %5834 = vmatprep.subr.mxu0 0.0
        %5835 = vmatpush1.msra.mxu0 0.0
        %5836 = vmatprep.subr.mxu0 0.0
        %5837 = vmatpush1.msra.mxu0 0.0
        %5838 = vmatprep.subr.mxu0 0.0
        %5839 = vmatpush1.msra.mxu0 0.0
        %5840 = vmatprep.subr.mxu0 %v483
        %5841 = vmatpush1.msra.mxu0 %v482
        %5842 = vmatprep.subr.mxu0 0.0
        %5843 = vmatpush2.msra.mxu0 0.0
        %5844 = vmatprep.subr.mxu0 0.0
        %5845 = vmatpush2.msra.mxu0 0.0
        %5846 = vmatprep.subr.mxu0 0.0
        %5847 = vmatpush2.msra.mxu0 0.0
        %5848 = vmatprep.subr.mxu0 0.0
        %5849 = vmatpush2.msra.mxu0 0.0
        %5850 = vmatprep.subr.mxu0 0.0
        %5851 = vmatpush2.msra.mxu0 0.0
        %5852 = vmatprep.subr.mxu0 0.0
        %5853 = vmatpush2.msra.mxu0 0.0
        %5854 = vmatprep.subr.mxu0 0.0
        %5855 = vmatpush2.msra.mxu0 0.0
        %5856 = vmatprep.subr.mxu0 0.0
        %5857 = vmatpush2.msra.mxu0 0.0
        %5858 = vmatprep.subr.mxu0 0.0
        %5859 = vmatpush2.msra.mxu0 0.0
        %5860 = vmatprep.subr.mxu0 0.0
        %5861 = vmatpush2.msra.mxu0 0.0
        %5862 = vmatprep.subr.mxu0 0.0
        %5863 = vmatpush2.msra.mxu0 0.0
        %5864 = vmatprep.subr.mxu0 0.0
        %5865 = vmatpush2.msra.mxu0 0.0
        %5866 = vmatprep.subr.mxu0 0.0
        %5867 = vmatpush2.msra.mxu0 0.0
        %5868 = vmatprep.subr.mxu0 0.0
        %5869 = vmatpush2.msra.mxu0 0.0
        %5870 = vmatprep.subr.mxu0 0.0
        %5871 = vmatpush2.msra.mxu0 0.0
        %5872 = vmatprep.subr.mxu0 0.0
        %5873 = vmatpush2.msra.mxu0 0.0
        %5874 = vmatprep.mubr.f32.mxu0 0.0
        %5875 = vmatmul.mubr.f32.gmra.mxu0 %v5808
        %v5876 = vpop.f32.mrf.mxu0
        %v5877 = vadd.f32 0.0, %v5876
        %v5878 = vpop.f32.mrf.mxu0
        %v5879 = vadd.f32 0.0, %v5878
        %5880 = vdwg.mxu0
        %v5881 = vsub.f32 0.0, %v5723
        %v5884 = vcombine.low %v5877, %v5879
        %v5886 = vunpack.c.l.s4 1966171168
        %v5887 = vunpack.c.0.s8 %v5886
        %v5888 = vlaneseq
        %v5889 = vshrl.u32 %v5888, 7
        %v5890 = vsub.s32 %v5887, %v5889
        %v5891 = vrot.slane %v5884, %v5890
        %v5893 = vunpack.c.l.s4 1966171168
        %v5894 = vunpack.c.0.s8 %v5893
        %v5895 = vlaneseq
        %v5896 = vshrl.u32 %v5895, 7
        %v5897 = vsub.s32 %v5894, %v5896
        %v5898 = vrot.slane %v5891, %v5897
        %v5900 = vmul.f32 %v5881, %v5898
        %s5901 = scalar_lea.vmem [#allocation3], 36
        %v5902 = vld [vmem:[%s5901] ss:$8 sm:$0x3]
        %v5903 = vsub.f32 %v5900, %v5902
        %5904 = vst.msk [vmem:[%s5901] ss:$8 sm:$0x3] %vm819, %v5900
        %5905 = vst.msk [vmem:[%s5901] ss:$8 sm:$0x0] %vm819, %v5900
        %s5906 = scalar_lea.vmem %s1, 640
        %v5907 = vld [vmem:[%s5906 + $0x15] sm:$0x7f]
        %v5908 = vld [vmem:[#allocation4 + $0x20] sm:$0xe0]
        %v5909 = vld [vmem:[#allocation4 + $0x28] sm:$0xe0]
        %v5910 = vld [vmem:[#allocation4 + $0x30] sm:$0xf]
        %v5911 = vld [vmem:[#allocation4 + $0x38] sm:$0xf]
        %5913 = vset.pattern.permute.xlu0 0
        %5914 = vperm.xlu0 %5913, %v5907
        %v5915 = vpop.permute.xlu0 %5914
        %v5918 = vlaneseq
        %v5919 = vshrl.u32 %v5918, 7
        %v5920 = vsub.s32 0, %v5919
        %v5921 = vrot.slane %v5903, %v5920
        %v5922 = vlaneseq
        %v5923 = vshrl.u32 %v5922, 7
        %v5924 = vsub.s32 1, %v5923
        %v5925 = vrot.slane %v5903, %v5924
        %v5928 = vmul.f32 %v5915, %v5921
        %v5929 = vmul.f32 %v5915, %v5925
        %v5932 = vrot.slane %v5928, 3
        %v5933 = vrot.slane %v5929, 3
        %v5936 = vadd.f32 %v5908, %v5932
        %v5937 = vadd.f32 %v5909, %v5933
        %v5938 = vadd.f32 %v5910, %v5932
        %v5939 = vadd.f32 %v5911, %v5933
        %5940 = vst [vmem:[#allocation4 + $0x20] sm:$0xe0] %v5936
        %5941 = vst [vmem:[#allocation4 + $0x28] sm:$0xe0] %v5937
        %5942 = vst [vmem:[#allocation4 + $0x30] sm:$0xf] %v5938
        %5943 = vst [vmem:[#allocation4 + $0x38] sm:$0xf] %v5939
        %s5944 = scalar_lea.vmem [#allocation4], 37
        %v5945 = vld [vmem:[%s5944] ss:$8 sm:$0x3]
        %v5946 = vmul.f32 %v5945, %v5945
        %v5948 = vlaneseq
        %v5949 = vshrl.u32 %v5948, 7
        %v5950 = vsub.s32 0, %v5949
        %v5951 = vrot.slane %v5946, %v5950
        %v5952 = vlaneseq
        %v5953 = vshrl.u32 %v5952, 7
        %v5954 = vsub.s32 1, %v5953
        %v5955 = vrot.slane %v5946, %v5954
        %5958 = vmatprep.subr.mxu0 0.0
        %5959 = vmatpush1.msra.mxu0 %v465
        %5960 = vmatprep.subr.mxu0 0.0
        %5961 = vmatpush1.msra.mxu0 %v464
        %5962 = vmatprep.subr.mxu0 0.0
        %5963 = vmatpush1.msra.mxu0 %v463
        %5964 = vmatprep.subr.mxu0 0.0
        %5965 = vmatpush1.msra.mxu0 %v462
        %5966 = vmatprep.subr.mxu0 0.0
        %5967 = vmatpush1.msra.mxu0 %v461
        %5968 = vmatprep.subr.mxu0 0.0
        %5969 = vmatpush1.msra.mxu0 %v460
        %5970 = vmatprep.subr.mxu0 0.0
        %5971 = vmatpush1.msra.mxu0 %v459
        %5972 = vmatprep.subr.mxu0 0.0
        %5973 = vmatpush1.msra.mxu0 %v458
        %5974 = vmatprep.subr.mxu0 0.0
        %5975 = vmatpush1.msra.mxu0 %v457
        %5976 = vmatprep.subr.mxu0 0.0
        %5977 = vmatpush1.msra.mxu0 %v456
        %5978 = vmatprep.subr.mxu0 0.0
        %5979 = vmatpush1.msra.mxu0 %v455
        %5980 = vmatprep.subr.mxu0 0.0
        %5981 = vmatpush1.msra.mxu0 %v454
        %5982 = vmatprep.subr.mxu0 0.0
        %5983 = vmatpush1.msra.mxu0 %v453
        %5984 = vmatprep.subr.mxu0 0.0
        %5985 = vmatpush1.msra.mxu0 %v452
        %5986 = vmatprep.subr.mxu0 0.0
        %5987 = vmatpush1.msra.mxu0 %v451
        %5988 = vmatprep.subr.mxu0 0.0
        %5989 = vmatpush1.msra.mxu0 %v450
        %5990 = vmatprep.subr.mxu0 0.0
        %5991 = vmatpush2.msra.mxu0 %v481
        %5992 = vmatprep.subr.mxu0 0.0
        %5993 = vmatpush2.msra.mxu0 %v480
        %5994 = vmatprep.subr.mxu0 0.0
        %5995 = vmatpush2.msra.mxu0 %v479
        %5996 = vmatprep.subr.mxu0 0.0
        %5997 = vmatpush2.msra.mxu0 %v478
        %5998 = vmatprep.subr.mxu0 0.0
        %5999 = vmatpush2.msra.mxu0 %v477
        %6000 = vmatprep.subr.mxu0 0.0
        %6001 = vmatpush2.msra.mxu0 %v476
        %6002 = vmatprep.subr.mxu0 0.0
        %6003 = vmatpush2.msra.mxu0 %v475
        %6004 = vmatprep.subr.mxu0 0.0
        %6005 = vmatpush2.msra.mxu0 %v474
        %6006 = vmatprep.subr.mxu0 0.0
        %6007 = vmatpush2.msra.mxu0 %v473
        %6008 = vmatprep.subr.mxu0 0.0
        %6009 = vmatpush2.msra.mxu0 %v472
        %6010 = vmatprep.subr.mxu0 0.0
        %6011 = vmatpush2.msra.mxu0 %v471
        %6012 = vmatprep.subr.mxu0 0.0
        %6013 = vmatpush2.msra.mxu0 %v470
        %6014 = vmatprep.subr.mxu0 0.0
        %6015 = vmatpush2.msra.mxu0 %v469
        %6016 = vmatprep.subr.mxu0 0.0
        %6017 = vmatpush2.msra.mxu0 %v468
        %6018 = vmatprep.subr.mxu0 0.0
        %6019 = vmatpush2.msra.mxu0 %v467
        %6020 = vmatprep.subr.mxu0 0.0
        %6021 = vmatpush2.msra.mxu0 %v466
        %6022 = vmatprep.mubr.f32.mxu0 %v5955
        %6023 = vmatmul.mubr.f32.gmra.mxu0 %v5951
        %v6024 = vpop.f32.mrf.mxu0
        %v6025 = vadd.f32 1e-12, %v6024
        %v6026 = vpop.f32.mrf.mxu0
        %6027 = vdwg.mxu0
        %v6028 = vrsqrt.pop %v6025
        %v6030 = vsel %vm719, %v6028, 0
        %6032 = vmatprep.subr.mxu0 0.0
        %6033 = vmatpush1.msra.mxu0 0.0
        %6034 = vmatprep.subr.mxu0 0.0
        %6035 = vmatpush1.msra.mxu0 0.0
        %6036 = vmatprep.subr.mxu0 0.0
        %6037 = vmatpush1.msra.mxu0 0.0
        %6038 = vmatprep.subr.mxu0 0.0
        %6039 = vmatpush1.msra.mxu0 0.0
        %6040 = vmatprep.subr.mxu0 0.0
        %6041 = vmatpush1.msra.mxu0 0.0
        %6042 = vmatprep.subr.mxu0 0.0
        %6043 = vmatpush1.msra.mxu0 0.0
        %6044 = vmatprep.subr.mxu0 0.0
        %6045 = vmatpush1.msra.mxu0 0.0
        %6046 = vmatprep.subr.mxu0 0.0
        %6047 = vmatpush1.msra.mxu0 0.0
        %6048 = vmatprep.subr.mxu0 0.0
        %6049 = vmatpush1.msra.mxu0 0.0
        %6050 = vmatprep.subr.mxu0 0.0
        %6051 = vmatpush1.msra.mxu0 0.0
        %6052 = vmatprep.subr.mxu0 0.0
        %6053 = vmatpush1.msra.mxu0 0.0
        %6054 = vmatprep.subr.mxu0 0.0
        %6055 = vmatpush1.msra.mxu0 0.0
        %6056 = vmatprep.subr.mxu0 0.0
        %6057 = vmatpush1.msra.mxu0 0.0
        %6058 = vmatprep.subr.mxu0 0.0
        %6059 = vmatpush1.msra.mxu0 0.0
        %6060 = vmatprep.subr.mxu0 0.0
        %6061 = vmatpush1.msra.mxu0 0.0
        %6062 = vmatprep.subr.mxu0 %v483
        %6063 = vmatpush1.msra.mxu0 %v482
        %6064 = vmatprep.subr.mxu0 0.0
        %6065 = vmatpush2.msra.mxu0 0.0
        %6066 = vmatprep.subr.mxu0 0.0
        %6067 = vmatpush2.msra.mxu0 0.0
        %6068 = vmatprep.subr.mxu0 0.0
        %6069 = vmatpush2.msra.mxu0 0.0
        %6070 = vmatprep.subr.mxu0 0.0
        %6071 = vmatpush2.msra.mxu0 0.0
        %6072 = vmatprep.subr.mxu0 0.0
        %6073 = vmatpush2.msra.mxu0 0.0
        %6074 = vmatprep.subr.mxu0 0.0
        %6075 = vmatpush2.msra.mxu0 0.0
        %6076 = vmatprep.subr.mxu0 0.0
        %6077 = vmatpush2.msra.mxu0 0.0
        %6078 = vmatprep.subr.mxu0 0.0
        %6079 = vmatpush2.msra.mxu0 0.0
        %6080 = vmatprep.subr.mxu0 0.0
        %6081 = vmatpush2.msra.mxu0 0.0
        %6082 = vmatprep.subr.mxu0 0.0
        %6083 = vmatpush2.msra.mxu0 0.0
        %6084 = vmatprep.subr.mxu0 0.0
        %6085 = vmatpush2.msra.mxu0 0.0
        %6086 = vmatprep.subr.mxu0 0.0
        %6087 = vmatpush2.msra.mxu0 0.0
        %6088 = vmatprep.subr.mxu0 0.0
        %6089 = vmatpush2.msra.mxu0 0.0
        %6090 = vmatprep.subr.mxu0 0.0
        %6091 = vmatpush2.msra.mxu0 0.0
        %6092 = vmatprep.subr.mxu0 0.0
        %6093 = vmatpush2.msra.mxu0 0.0
        %6094 = vmatprep.subr.mxu0 0.0
        %6095 = vmatpush2.msra.mxu0 0.0
        %6096 = vmatprep.mubr.f32.mxu0 0.0
        %6097 = vmatmul.mubr.f32.gmra.mxu0 %v6030
        %v6098 = vpop.f32.mrf.mxu0
        %v6099 = vadd.f32 0.0, %v6098
        %v6100 = vpop.f32.mrf.mxu0
        %v6101 = vadd.f32 0.0, %v6100
        %6102 = vdwg.mxu0
        %v6103 = vsub.f32 0.0, %v5945
        %v6106 = vcombine.low %v6099, %v6101
        %v6108 = vunpack.c.l.s4 1966171168
        %v6109 = vunpack.c.0.s8 %v6108
        %v6110 = vlaneseq
        %v6111 = vshrl.u32 %v6110, 7
        %v6112 = vsub.s32 %v6109, %v6111
        %v6113 = vrot.slane %v6106, %v6112
        %v6115 = vunpack.c.l.s4 1966171168
        %v6116 = vunpack.c.0.s8 %v6115
        %v6117 = vlaneseq
        %v6118 = vshrl.u32 %v6117, 7
        %v6119 = vsub.s32 %v6116, %v6118
        %v6120 = vrot.slane %v6113, %v6119
        %v6122 = vmul.f32 %v6103, %v6120
        %s6123 = scalar_lea.vmem [#allocation3], 37
        %v6124 = vld [vmem:[%s6123] ss:$8 sm:$0x3]
        %v6125 = vsub.f32 %v6122, %v6124
        %6126 = vst.msk [vmem:[%s6123] ss:$8 sm:$0x3] %vm819, %v6122
        %6127 = vst.msk [vmem:[%s6123] ss:$8 sm:$0x0] %vm819, %v6122
        %s6128 = scalar_lea.vmem %s1, 672
        %v6129 = vld [vmem:[%s6128 + $0x16] sm:$0x3f]
        %v6130 = vld [vmem:[#allocation4 + $0x20] sm:$0xc0]
        %v6131 = vld [vmem:[#allocation4 + $0x28] sm:$0xc0]
        %v6132 = vld [vmem:[#allocation4 + $0x30] sm:$0xf]
        %v6133 = vld [vmem:[#allocation4 + $0x38] sm:$0xf]
        %6135 = vset.pattern.permute.xlu0 0
        %6136 = vperm.xlu0 %6135, %v6129
        %v6137 = vpop.permute.xlu0 %6136
        %v6140 = vlaneseq
        %v6141 = vshrl.u32 %v6140, 7
        %v6142 = vsub.s32 0, %v6141
        %v6143 = vrot.slane %v6125, %v6142
        %v6144 = vlaneseq
        %v6145 = vshrl.u32 %v6144, 7
        %v6146 = vsub.s32 1, %v6145
        %v6147 = vrot.slane %v6125, %v6146
        %v6150 = vmul.f32 %v6137, %v6143
        %v6151 = vmul.f32 %v6137, %v6147
        %v6154 = vrot.slane %v6150, 2
        %v6155 = vrot.slane %v6151, 2
        %v6158 = vadd.f32 %v6130, %v6154
        %v6159 = vadd.f32 %v6131, %v6155
        %v6160 = vadd.f32 %v6132, %v6154
        %v6161 = vadd.f32 %v6133, %v6155
        %6162 = vst [vmem:[#allocation4 + $0x20] sm:$0xc0] %v6158
        %6163 = vst [vmem:[#allocation4 + $0x28] sm:$0xc0] %v6159
        %6164 = vst [vmem:[#allocation4 + $0x30] sm:$0xf] %v6160
        %6165 = vst [vmem:[#allocation4 + $0x38] sm:$0xf] %v6161
        %s6166 = scalar_lea.vmem [#allocation4], 38
        %v6167 = vld [vmem:[%s6166] ss:$8 sm:$0x3]
        %v6168 = vmul.f32 %v6167, %v6167
        %v6170 = vlaneseq
        %v6171 = vshrl.u32 %v6170, 7
        %v6172 = vsub.s32 0, %v6171
        %v6173 = vrot.slane %v6168, %v6172
        %v6174 = vlaneseq
        %v6175 = vshrl.u32 %v6174, 7
        %v6176 = vsub.s32 1, %v6175
        %v6177 = vrot.slane %v6168, %v6176
        %6180 = vmatprep.subr.mxu0 0.0
        %6181 = vmatpush1.msra.mxu0 %v465
        %6182 = vmatprep.subr.mxu0 0.0
        %6183 = vmatpush1.msra.mxu0 %v464
        %6184 = vmatprep.subr.mxu0 0.0
        %6185 = vmatpush1.msra.mxu0 %v463
        %6186 = vmatprep.subr.mxu0 0.0
        %6187 = vmatpush1.msra.mxu0 %v462
        %6188 = vmatprep.subr.mxu0 0.0
        %6189 = vmatpush1.msra.mxu0 %v461
        %6190 = vmatprep.subr.mxu0 0.0
        %6191 = vmatpush1.msra.mxu0 %v460
        %6192 = vmatprep.subr.mxu0 0.0
        %6193 = vmatpush1.msra.mxu0 %v459
        %6194 = vmatprep.subr.mxu0 0.0
        %6195 = vmatpush1.msra.mxu0 %v458
        %6196 = vmatprep.subr.mxu0 0.0
        %6197 = vmatpush1.msra.mxu0 %v457
        %6198 = vmatprep.subr.mxu0 0.0
        %6199 = vmatpush1.msra.mxu0 %v456
        %6200 = vmatprep.subr.mxu0 0.0
        %6201 = vmatpush1.msra.mxu0 %v455
        %6202 = vmatprep.subr.mxu0 0.0
        %6203 = vmatpush1.msra.mxu0 %v454
        %6204 = vmatprep.subr.mxu0 0.0
        %6205 = vmatpush1.msra.mxu0 %v453
        %6206 = vmatprep.subr.mxu0 0.0
        %6207 = vmatpush1.msra.mxu0 %v452
        %6208 = vmatprep.subr.mxu0 0.0
        %6209 = vmatpush1.msra.mxu0 %v451
        %6210 = vmatprep.subr.mxu0 0.0
        %6211 = vmatpush1.msra.mxu0 %v450
        %6212 = vmatprep.subr.mxu0 0.0
        %6213 = vmatpush2.msra.mxu0 %v481
        %6214 = vmatprep.subr.mxu0 0.0
        %6215 = vmatpush2.msra.mxu0 %v480
        %6216 = vmatprep.subr.mxu0 0.0
        %6217 = vmatpush2.msra.mxu0 %v479
        %6218 = vmatprep.subr.mxu0 0.0
        %6219 = vmatpush2.msra.mxu0 %v478
        %6220 = vmatprep.subr.mxu0 0.0
        %6221 = vmatpush2.msra.mxu0 %v477
        %6222 = vmatprep.subr.mxu0 0.0
        %6223 = vmatpush2.msra.mxu0 %v476
        %6224 = vmatprep.subr.mxu0 0.0
        %6225 = vmatpush2.msra.mxu0 %v475
        %6226 = vmatprep.subr.mxu0 0.0
        %6227 = vmatpush2.msra.mxu0 %v474
        %6228 = vmatprep.subr.mxu0 0.0
        %6229 = vmatpush2.msra.mxu0 %v473
        %6230 = vmatprep.subr.mxu0 0.0
        %6231 = vmatpush2.msra.mxu0 %v472
        %6232 = vmatprep.subr.mxu0 0.0
        %6233 = vmatpush2.msra.mxu0 %v471
        %6234 = vmatprep.subr.mxu0 0.0
        %6235 = vmatpush2.msra.mxu0 %v470
        %6236 = vmatprep.subr.mxu0 0.0
        %6237 = vmatpush2.msra.mxu0 %v469
        %6238 = vmatprep.subr.mxu0 0.0
        %6239 = vmatpush2.msra.mxu0 %v468
        %6240 = vmatprep.subr.mxu0 0.0
        %6241 = vmatpush2.msra.mxu0 %v467
        %6242 = vmatprep.subr.mxu0 0.0
        %6243 = vmatpush2.msra.mxu0 %v466
        %6244 = vmatprep.mubr.f32.mxu0 %v6177
        %6245 = vmatmul.mubr.f32.gmra.mxu0 %v6173
        %v6246 = vpop.f32.mrf.mxu0
        %v6247 = vadd.f32 1e-12, %v6246
        %v6248 = vpop.f32.mrf.mxu0
        %6249 = vdwg.mxu0
        %v6250 = vrsqrt.pop %v6247
        %v6252 = vsel %vm719, %v6250, 0
        %6254 = vmatprep.subr.mxu0 0.0
        %6255 = vmatpush1.msra.mxu0 0.0
        %6256 = vmatprep.subr.mxu0 0.0
        %6257 = vmatpush1.msra.mxu0 0.0
        %6258 = vmatprep.subr.mxu0 0.0
        %6259 = vmatpush1.msra.mxu0 0.0
        %6260 = vmatprep.subr.mxu0 0.0
        %6261 = vmatpush1.msra.mxu0 0.0
        %6262 = vmatprep.subr.mxu0 0.0
        %6263 = vmatpush1.msra.mxu0 0.0
        %6264 = vmatprep.subr.mxu0 0.0
        %6265 = vmatpush1.msra.mxu0 0.0
        %6266 = vmatprep.subr.mxu0 0.0
        %6267 = vmatpush1.msra.mxu0 0.0
        %6268 = vmatprep.subr.mxu0 0.0
        %6269 = vmatpush1.msra.mxu0 0.0
        %6270 = vmatprep.subr.mxu0 0.0
        %6271 = vmatpush1.msra.mxu0 0.0
        %6272 = vmatprep.subr.mxu0 0.0
        %6273 = vmatpush1.msra.mxu0 0.0
        %6274 = vmatprep.subr.mxu0 0.0
        %6275 = vmatpush1.msra.mxu0 0.0
        %6276 = vmatprep.subr.mxu0 0.0
        %6277 = vmatpush1.msra.mxu0 0.0
        %6278 = vmatprep.subr.mxu0 0.0
        %6279 = vmatpush1.msra.mxu0 0.0
        %6280 = vmatprep.subr.mxu0 0.0
        %6281 = vmatpush1.msra.mxu0 0.0
        %6282 = vmatprep.subr.mxu0 0.0
        %6283 = vmatpush1.msra.mxu0 0.0
        %6284 = vmatprep.subr.mxu0 %v483
        %6285 = vmatpush1.msra.mxu0 %v482
        %6286 = vmatprep.subr.mxu0 0.0
        %6287 = vmatpush2.msra.mxu0 0.0
        %6288 = vmatprep.subr.mxu0 0.0
        %6289 = vmatpush2.msra.mxu0 0.0
        %6290 = vmatprep.subr.mxu0 0.0
        %6291 = vmatpush2.msra.mxu0 0.0
        %6292 = vmatprep.subr.mxu0 0.0
        %6293 = vmatpush2.msra.mxu0 0.0
        %6294 = vmatprep.subr.mxu0 0.0
        %6295 = vmatpush2.msra.mxu0 0.0
        %6296 = vmatprep.subr.mxu0 0.0
        %6297 = vmatpush2.msra.mxu0 0.0
        %6298 = vmatprep.subr.mxu0 0.0
        %6299 = vmatpush2.msra.mxu0 0.0
        %6300 = vmatprep.subr.mxu0 0.0
        %6301 = vmatpush2.msra.mxu0 0.0
        %6302 = vmatprep.subr.mxu0 0.0
        %6303 = vmatpush2.msra.mxu0 0.0
        %6304 = vmatprep.subr.mxu0 0.0
        %6305 = vmatpush2.msra.mxu0 0.0
        %6306 = vmatprep.subr.mxu0 0.0
        %6307 = vmatpush2.msra.mxu0 0.0
        %6308 = vmatprep.subr.mxu0 0.0
        %6309 = vmatpush2.msra.mxu0 0.0
        %6310 = vmatprep.subr.mxu0 0.0
        %6311 = vmatpush2.msra.mxu0 0.0
        %6312 = vmatprep.subr.mxu0 0.0
        %6313 = vmatpush2.msra.mxu0 0.0
        %6314 = vmatprep.subr.mxu0 0.0
        %6315 = vmatpush2.msra.mxu0 0.0
        %6316 = vmatprep.subr.mxu0 0.0
        %6317 = vmatpush2.msra.mxu0 0.0
        %6318 = vmatprep.mubr.f32.mxu0 0.0
        %6319 = vmatmul.mubr.f32.gmra.mxu0 %v6252
        %v6320 = vpop.f32.mrf.mxu0
        %v6321 = vadd.f32 0.0, %v6320
        %v6322 = vpop.f32.mrf.mxu0
        %v6323 = vadd.f32 0.0, %v6322
        %6324 = vdwg.mxu0
        %v6325 = vsub.f32 0.0, %v6167
        %v6328 = vcombine.low %v6321, %v6323
        %v6330 = vunpack.c.l.s4 1966171168
        %v6331 = vunpack.c.0.s8 %v6330
        %v6332 = vlaneseq
        %v6333 = vshrl.u32 %v6332, 7
        %v6334 = vsub.s32 %v6331, %v6333
        %v6335 = vrot.slane %v6328, %v6334
        %v6337 = vunpack.c.l.s4 1966171168
        %v6338 = vunpack.c.0.s8 %v6337
        %v6339 = vlaneseq
        %v6340 = vshrl.u32 %v6339, 7
        %v6341 = vsub.s32 %v6338, %v6340
        %v6342 = vrot.slane %v6335, %v6341
        %v6344 = vmul.f32 %v6325, %v6342
        %s6345 = scalar_lea.vmem [#allocation3], 38
        %v6346 = vld [vmem:[%s6345] ss:$8 sm:$0x3]
        %v6347 = vsub.f32 %v6344, %v6346
        %6348 = vst.msk [vmem:[%s6345] ss:$8 sm:$0x3] %vm819, %v6344
        %6349 = vst.msk [vmem:[%s6345] ss:$8 sm:$0x0] %vm819, %v6344
        %s6350 = scalar_lea.vmem %s1, 704
        %v6351 = vld [vmem:[%s6350 + $0x17] sm:$0x1f]
        %v6352 = vld [vmem:[#allocation4 + $0x20] sm:$0x80]
        %v6353 = vld [vmem:[#allocation4 + $0x28] sm:$0x80]
        %v6354 = vld [vmem:[#allocation4 + $0x30] sm:$0xf]
        %v6355 = vld [vmem:[#allocation4 + $0x38] sm:$0xf]
        %6357 = vset.pattern.permute.xlu0 0
        %6358 = vperm.xlu0 %6357, %v6351
        %v6359 = vpop.permute.xlu0 %6358
        %v6362 = vlaneseq
        %v6363 = vshrl.u32 %v6362, 7
        %v6364 = vsub.s32 0, %v6363
        %v6365 = vrot.slane %v6347, %v6364
        %v6366 = vlaneseq
        %v6367 = vshrl.u32 %v6366, 7
        %v6368 = vsub.s32 1, %v6367
        %v6369 = vrot.slane %v6347, %v6368
        %v6372 = vmul.f32 %v6359, %v6365
        %v6373 = vmul.f32 %v6359, %v6369
        %v6376 = vrot.slane %v6372, 1
        %v6377 = vrot.slane %v6373, 1
        %v6380 = vadd.f32 %v6352, %v6376
        %v6381 = vadd.f32 %v6353, %v6377
        %v6382 = vadd.f32 %v6354, %v6376
        %v6383 = vadd.f32 %v6355, %v6377
        %6384 = vst [vmem:[#allocation4 + $0x20] sm:$0x80] %v6380
        %6385 = vst [vmem:[#allocation4 + $0x28] sm:$0x80] %v6381
        %6386 = vst [vmem:[#allocation4 + $0x30] sm:$0xf] %v6382
        %6387 = vst [vmem:[#allocation4 + $0x38] sm:$0xf] %v6383
        %s6388 = scalar_lea.vmem [#allocation4], 39
        %v6389 = vld [vmem:[%s6388] ss:$8 sm:$0x3]
        %v6390 = vmul.f32 %v6389, %v6389
        %v6392 = vlaneseq
        %v6393 = vshrl.u32 %v6392, 7
        %v6394 = vsub.s32 0, %v6393
        %v6395 = vrot.slane %v6390, %v6394
        %v6396 = vlaneseq
        %v6397 = vshrl.u32 %v6396, 7
        %v6398 = vsub.s32 1, %v6397
        %v6399 = vrot.slane %v6390, %v6398
        %6402 = vmatprep.subr.mxu0 0.0
        %6403 = vmatpush1.msra.mxu0 %v465
        %6404 = vmatprep.subr.mxu0 0.0
        %6405 = vmatpush1.msra.mxu0 %v464
        %6406 = vmatprep.subr.mxu0 0.0
        %6407 = vmatpush1.msra.mxu0 %v463
        %6408 = vmatprep.subr.mxu0 0.0
        %6409 = vmatpush1.msra.mxu0 %v462
        %6410 = vmatprep.subr.mxu0 0.0
        %6411 = vmatpush1.msra.mxu0 %v461
        %6412 = vmatprep.subr.mxu0 0.0
        %6413 = vmatpush1.msra.mxu0 %v460
        %6414 = vmatprep.subr.mxu0 0.0
        %6415 = vmatpush1.msra.mxu0 %v459
        %6416 = vmatprep.subr.mxu0 0.0
        %6417 = vmatpush1.msra.mxu0 %v458
        %6418 = vmatprep.subr.mxu0 0.0
        %6419 = vmatpush1.msra.mxu0 %v457
        %6420 = vmatprep.subr.mxu0 0.0
        %6421 = vmatpush1.msra.mxu0 %v456
        %6422 = vmatprep.subr.mxu0 0.0
        %6423 = vmatpush1.msra.mxu0 %v455
        %6424 = vmatprep.subr.mxu0 0.0
        %6425 = vmatpush1.msra.mxu0 %v454
        %6426 = vmatprep.subr.mxu0 0.0
        %6427 = vmatpush1.msra.mxu0 %v453
        %6428 = vmatprep.subr.mxu0 0.0
        %6429 = vmatpush1.msra.mxu0 %v452
        %6430 = vmatprep.subr.mxu0 0.0
        %6431 = vmatpush1.msra.mxu0 %v451
        %6432 = vmatprep.subr.mxu0 0.0
        %6433 = vmatpush1.msra.mxu0 %v450
        %6434 = vmatprep.subr.mxu0 0.0
        %6435 = vmatpush2.msra.mxu0 %v481
        %6436 = vmatprep.subr.mxu0 0.0
        %6437 = vmatpush2.msra.mxu0 %v480
        %6438 = vmatprep.subr.mxu0 0.0
        %6439 = vmatpush2.msra.mxu0 %v479
        %6440 = vmatprep.subr.mxu0 0.0
        %6441 = vmatpush2.msra.mxu0 %v478
        %6442 = vmatprep.subr.mxu0 0.0
        %6443 = vmatpush2.msra.mxu0 %v477
        %6444 = vmatprep.subr.mxu0 0.0
        %6445 = vmatpush2.msra.mxu0 %v476
        %6446 = vmatprep.subr.mxu0 0.0
        %6447 = vmatpush2.msra.mxu0 %v475
        %6448 = vmatprep.subr.mxu0 0.0
        %6449 = vmatpush2.msra.mxu0 %v474
        %6450 = vmatprep.subr.mxu0 0.0
        %6451 = vmatpush2.msra.mxu0 %v473
        %6452 = vmatprep.subr.mxu0 0.0
        %6453 = vmatpush2.msra.mxu0 %v472
        %6454 = vmatprep.subr.mxu0 0.0
        %6455 = vmatpush2.msra.mxu0 %v471
        %6456 = vmatprep.subr.mxu0 0.0
        %6457 = vmatpush2.msra.mxu0 %v470
        %6458 = vmatprep.subr.mxu0 0.0
        %6459 = vmatpush2.msra.mxu0 %v469
        %6460 = vmatprep.subr.mxu0 0.0
        %6461 = vmatpush2.msra.mxu0 %v468
        %6462 = vmatprep.subr.mxu0 0.0
        %6463 = vmatpush2.msra.mxu0 %v467
        %6464 = vmatprep.subr.mxu0 0.0
        %6465 = vmatpush2.msra.mxu0 %v466
        %6466 = vmatprep.mubr.f32.mxu0 %v6399
        %6467 = vmatmul.mubr.f32.gmra.mxu0 %v6395
        %v6468 = vpop.f32.mrf.mxu0
        %v6469 = vadd.f32 1e-12, %v6468
        %v6470 = vpop.f32.mrf.mxu0
        %6471 = vdwg.mxu0
        %v6472 = vrsqrt.pop %v6469
        %v6474 = vsel %vm719, %v6472, 0
        %6476 = vmatprep.subr.mxu0 0.0
        %6477 = vmatpush1.msra.mxu0 0.0
        %6478 = vmatprep.subr.mxu0 0.0
        %6479 = vmatpush1.msra.mxu0 0.0
        %6480 = vmatprep.subr.mxu0 0.0
        %6481 = vmatpush1.msra.mxu0 0.0
        %6482 = vmatprep.subr.mxu0 0.0
        %6483 = vmatpush1.msra.mxu0 0.0
        %6484 = vmatprep.subr.mxu0 0.0
        %6485 = vmatpush1.msra.mxu0 0.0
        %6486 = vmatprep.subr.mxu0 0.0
        %6487 = vmatpush1.msra.mxu0 0.0
        %6488 = vmatprep.subr.mxu0 0.0
        %6489 = vmatpush1.msra.mxu0 0.0
        %6490 = vmatprep.subr.mxu0 0.0
        %6491 = vmatpush1.msra.mxu0 0.0
        %6492 = vmatprep.subr.mxu0 0.0
        %6493 = vmatpush1.msra.mxu0 0.0
        %6494 = vmatprep.subr.mxu0 0.0
        %6495 = vmatpush1.msra.mxu0 0.0
        %6496 = vmatprep.subr.mxu0 0.0
        %6497 = vmatpush1.msra.mxu0 0.0
        %6498 = vmatprep.subr.mxu0 0.0
        %6499 = vmatpush1.msra.mxu0 0.0
        %6500 = vmatprep.subr.mxu0 0.0
        %6501 = vmatpush1.msra.mxu0 0.0
        %6502 = vmatprep.subr.mxu0 0.0
        %6503 = vmatpush1.msra.mxu0 0.0
        %6504 = vmatprep.subr.mxu0 0.0
        %6505 = vmatpush1.msra.mxu0 0.0
        %6506 = vmatprep.subr.mxu0 %v483
        %6507 = vmatpush1.msra.mxu0 %v482
        %6508 = vmatprep.subr.mxu0 0.0
        %6509 = vmatpush2.msra.mxu0 0.0
        %6510 = vmatprep.subr.mxu0 0.0
        %6511 = vmatpush2.msra.mxu0 0.0
        %6512 = vmatprep.subr.mxu0 0.0
        %6513 = vmatpush2.msra.mxu0 0.0
        %6514 = vmatprep.subr.mxu0 0.0
        %6515 = vmatpush2.msra.mxu0 0.0
        %6516 = vmatprep.subr.mxu0 0.0
        %6517 = vmatpush2.msra.mxu0 0.0
        %6518 = vmatprep.subr.mxu0 0.0
        %6519 = vmatpush2.msra.mxu0 0.0
        %6520 = vmatprep.subr.mxu0 0.0
        %6521 = vmatpush2.msra.mxu0 0.0
        %6522 = vmatprep.subr.mxu0 0.0
        %6523 = vmatpush2.msra.mxu0 0.0
        %6524 = vmatprep.subr.mxu0 0.0
        %6525 = vmatpush2.msra.mxu0 0.0
        %6526 = vmatprep.subr.mxu0 0.0
        %6527 = vmatpush2.msra.mxu0 0.0
        %6528 = vmatprep.subr.mxu0 0.0
        %6529 = vmatpush2.msra.mxu0 0.0
        %6530 = vmatprep.subr.mxu0 0.0
        %6531 = vmatpush2.msra.mxu0 0.0
        %6532 = vmatprep.subr.mxu0 0.0
        %6533 = vmatpush2.msra.mxu0 0.0
        %6534 = vmatprep.subr.mxu0 0.0
        %6535 = vmatpush2.msra.mxu0 0.0
        %6536 = vmatprep.subr.mxu0 0.0
        %6537 = vmatpush2.msra.mxu0 0.0
        %6538 = vmatprep.subr.mxu0 0.0
        %6539 = vmatpush2.msra.mxu0 0.0
        %6540 = vmatprep.mubr.f32.mxu0 0.0
        %6541 = vmatmul.mubr.f32.gmra.mxu0 %v6474
        %v6542 = vpop.f32.mrf.mxu0
        %v6543 = vadd.f32 0.0, %v6542
        %v6544 = vpop.f32.mrf.mxu0
        %v6545 = vadd.f32 0.0, %v6544
        %6546 = vdwg.mxu0
        %v6547 = vsub.f32 0.0, %v6389
        %v6550 = vcombine.low %v6543, %v6545
        %v6552 = vunpack.c.l.s4 1966171168
        %v6553 = vunpack.c.0.s8 %v6552
        %v6554 = vlaneseq
        %v6555 = vshrl.u32 %v6554, 7
        %v6556 = vsub.s32 %v6553, %v6555
        %v6557 = vrot.slane %v6550, %v6556
        %v6559 = vunpack.c.l.s4 1966171168
        %v6560 = vunpack.c.0.s8 %v6559
        %v6561 = vlaneseq
        %v6562 = vshrl.u32 %v6561, 7
        %v6563 = vsub.s32 %v6560, %v6562
        %v6564 = vrot.slane %v6557, %v6563
        %v6566 = vmul.f32 %v6547, %v6564
        %s6567 = scalar_lea.vmem [#allocation3], 39
        %v6568 = vld [vmem:[%s6567] ss:$8 sm:$0x3]
        %v6569 = vsub.f32 %v6566, %v6568
        %6570 = vst.msk [vmem:[%s6567] ss:$8 sm:$0x3] %vm819, %v6566
        %6571 = vst.msk [vmem:[%s6567] ss:$8 sm:$0x0] %vm819, %v6566
        %s6572 = scalar_lea.vmem %s1, 736
        %v6573 = vld [vmem:[%s6572 + $0x18] sm:$0xf]
        %v6574 = vld [vmem:[#allocation4 + $0x30] sm:$0xf]
        %v6575 = vld [vmem:[#allocation4 + $0x38] sm:$0xf]
        %6577 = vset.pattern.permute.xlu0 0
        %6578 = vperm.xlu0 %6577, %v6573
        %v6579 = vpop.permute.xlu0 %6578
        %v6582 = vlaneseq
        %v6583 = vshrl.u32 %v6582, 7
        %v6584 = vsub.s32 0, %v6583
        %v6585 = vrot.slane %v6569, %v6584
        %v6586 = vlaneseq
        %v6587 = vshrl.u32 %v6586, 7
        %v6588 = vsub.s32 1, %v6587
        %v6589 = vrot.slane %v6569, %v6588
        %v6592 = vmul.f32 %v6579, %v6585
        %v6593 = vmul.f32 %v6579, %v6589
        %v6594 = vadd.f32 %v6574, %v6592
        %v6595 = vadd.f32 %v6575, %v6593
        %6596 = vst [vmem:[#allocation4 + $0x30] sm:$0xf] %v6594
        %6597 = vst [vmem:[#allocation4 + $0x38] sm:$0xf] %v6595
        %s6598 = scalar_lea.vmem [#allocation4], 48
        %v6599 = vld [vmem:[%s6598] ss:$8 sm:$0x3]
        %v6600 = vmul.f32 %v6599, %v6599
        %v6602 = vlaneseq
        %v6603 = vshrl.u32 %v6602, 7
        %v6604 = vsub.s32 0, %v6603
        %v6605 = vrot.slane %v6600, %v6604
        %v6606 = vlaneseq
        %v6607 = vshrl.u32 %v6606, 7
        %v6608 = vsub.s32 1, %v6607
        %v6609 = vrot.slane %v6600, %v6608
        %6612 = vmatprep.subr.mxu0 0.0
        %6613 = vmatpush1.msra.mxu0 %v465
        %6614 = vmatprep.subr.mxu0 0.0
        %6615 = vmatpush1.msra.mxu0 %v464
        %6616 = vmatprep.subr.mxu0 0.0
        %6617 = vmatpush1.msra.mxu0 %v463
        %6618 = vmatprep.subr.mxu0 0.0
        %6619 = vmatpush1.msra.mxu0 %v462
        %6620 = vmatprep.subr.mxu0 0.0
        %6621 = vmatpush1.msra.mxu0 %v461
        %6622 = vmatprep.subr.mxu0 0.0
        %6623 = vmatpush1.msra.mxu0 %v460
        %6624 = vmatprep.subr.mxu0 0.0
        %6625 = vmatpush1.msra.mxu0 %v459
        %6626 = vmatprep.subr.mxu0 0.0
        %6627 = vmatpush1.msra.mxu0 %v458
        %6628 = vmatprep.subr.mxu0 0.0
        %6629 = vmatpush1.msra.mxu0 %v457
        %6630 = vmatprep.subr.mxu0 0.0
        %6631 = vmatpush1.msra.mxu0 %v456
        %6632 = vmatprep.subr.mxu0 0.0
        %6633 = vmatpush1.msra.mxu0 %v455
        %6634 = vmatprep.subr.mxu0 0.0
        %6635 = vmatpush1.msra.mxu0 %v454
        %6636 = vmatprep.subr.mxu0 0.0
        %6637 = vmatpush1.msra.mxu0 %v453
        %6638 = vmatprep.subr.mxu0 0.0
        %6639 = vmatpush1.msra.mxu0 %v452
        %6640 = vmatprep.subr.mxu0 0.0
        %6641 = vmatpush1.msra.mxu0 %v451
        %6642 = vmatprep.subr.mxu0 0.0
        %6643 = vmatpush1.msra.mxu0 %v450
        %6644 = vmatprep.subr.mxu0 0.0
        %6645 = vmatpush2.msra.mxu0 %v481
        %6646 = vmatprep.subr.mxu0 0.0
        %6647 = vmatpush2.msra.mxu0 %v480
        %6648 = vmatprep.subr.mxu0 0.0
        %6649 = vmatpush2.msra.mxu0 %v479
        %6650 = vmatprep.subr.mxu0 0.0
        %6651 = vmatpush2.msra.mxu0 %v478
        %6652 = vmatprep.subr.mxu0 0.0
        %6653 = vmatpush2.msra.mxu0 %v477
        %6654 = vmatprep.subr.mxu0 0.0
        %6655 = vmatpush2.msra.mxu0 %v476
        %6656 = vmatprep.subr.mxu0 0.0
        %6657 = vmatpush2.msra.mxu0 %v475
        %6658 = vmatprep.subr.mxu0 0.0
        %6659 = vmatpush2.msra.mxu0 %v474
        %6660 = vmatprep.subr.mxu0 0.0
        %6661 = vmatpush2.msra.mxu0 %v473
        %6662 = vmatprep.subr.mxu0 0.0
        %6663 = vmatpush2.msra.mxu0 %v472
        %6664 = vmatprep.subr.mxu0 0.0
        %6665 = vmatpush2.msra.mxu0 %v471
        %6666 = vmatprep.subr.mxu0 0.0
        %6667 = vmatpush2.msra.mxu0 %v470
        %6668 = vmatprep.subr.mxu0 0.0
        %6669 = vmatpush2.msra.mxu0 %v469
        %6670 = vmatprep.subr.mxu0 0.0
        %6671 = vmatpush2.msra.mxu0 %v468
        %6672 = vmatprep.subr.mxu0 0.0
        %6673 = vmatpush2.msra.mxu0 %v467
        %6674 = vmatprep.subr.mxu0 0.0
        %6675 = vmatpush2.msra.mxu0 %v466
        %6676 = vmatprep.mubr.f32.mxu0 %v6609
        %6677 = vmatmul.mubr.f32.gmra.mxu0 %v6605
        %v6678 = vpop.f32.mrf.mxu0
        %v6679 = vadd.f32 1e-12, %v6678
        %v6680 = vpop.f32.mrf.mxu0
        %6681 = vdwg.mxu0
        %v6682 = vrsqrt.pop %v6679
        %v6684 = vsel %vm719, %v6682, 0
        %6686 = vmatprep.subr.mxu0 0.0
        %6687 = vmatpush1.msra.mxu0 0.0
        %6688 = vmatprep.subr.mxu0 0.0
        %6689 = vmatpush1.msra.mxu0 0.0
        %6690 = vmatprep.subr.mxu0 0.0
        %6691 = vmatpush1.msra.mxu0 0.0
        %6692 = vmatprep.subr.mxu0 0.0
        %6693 = vmatpush1.msra.mxu0 0.0
        %6694 = vmatprep.subr.mxu0 0.0
        %6695 = vmatpush1.msra.mxu0 0.0
        %6696 = vmatprep.subr.mxu0 0.0
        %6697 = vmatpush1.msra.mxu0 0.0
        %6698 = vmatprep.subr.mxu0 0.0
        %6699 = vmatpush1.msra.mxu0 0.0
        %6700 = vmatprep.subr.mxu0 0.0
        %6701 = vmatpush1.msra.mxu0 0.0
        %6702 = vmatprep.subr.mxu0 0.0
        %6703 = vmatpush1.msra.mxu0 0.0
        %6704 = vmatprep.subr.mxu0 0.0
        %6705 = vmatpush1.msra.mxu0 0.0
        %6706 = vmatprep.subr.mxu0 0.0
        %6707 = vmatpush1.msra.mxu0 0.0
        %6708 = vmatprep.subr.mxu0 0.0
        %6709 = vmatpush1.msra.mxu0 0.0
        %6710 = vmatprep.subr.mxu0 0.0
        %6711 = vmatpush1.msra.mxu0 0.0
        %6712 = vmatprep.subr.mxu0 0.0
        %6713 = vmatpush1.msra.mxu0 0.0
        %6714 = vmatprep.subr.mxu0 0.0
        %6715 = vmatpush1.msra.mxu0 0.0
        %6716 = vmatprep.subr.mxu0 %v483
        %6717 = vmatpush1.msra.mxu0 %v482
        %6718 = vmatprep.subr.mxu0 0.0
        %6719 = vmatpush2.msra.mxu0 0.0
        %6720 = vmatprep.subr.mxu0 0.0
        %6721 = vmatpush2.msra.mxu0 0.0
        %6722 = vmatprep.subr.mxu0 0.0
        %6723 = vmatpush2.msra.mxu0 0.0
        %6724 = vmatprep.subr.mxu0 0.0
        %6725 = vmatpush2.msra.mxu0 0.0
        %6726 = vmatprep.subr.mxu0 0.0
        %6727 = vmatpush2.msra.mxu0 0.0
        %6728 = vmatprep.subr.mxu0 0.0
        %6729 = vmatpush2.msra.mxu0 0.0
        %6730 = vmatprep.subr.mxu0 0.0
        %6731 = vmatpush2.msra.mxu0 0.0
        %6732 = vmatprep.subr.mxu0 0.0
        %6733 = vmatpush2.msra.mxu0 0.0
        %6734 = vmatprep.subr.mxu0 0.0
        %6735 = vmatpush2.msra.mxu0 0.0
        %6736 = vmatprep.subr.mxu0 0.0
        %6737 = vmatpush2.msra.mxu0 0.0
        %6738 = vmatprep.subr.mxu0 0.0
        %6739 = vmatpush2.msra.mxu0 0.0
        %6740 = vmatprep.subr.mxu0 0.0
        %6741 = vmatpush2.msra.mxu0 0.0
        %6742 = vmatprep.subr.mxu0 0.0
        %6743 = vmatpush2.msra.mxu0 0.0
        %6744 = vmatprep.subr.mxu0 0.0
        %6745 = vmatpush2.msra.mxu0 0.0
        %6746 = vmatprep.subr.mxu0 0.0
        %6747 = vmatpush2.msra.mxu0 0.0
        %6748 = vmatprep.subr.mxu0 0.0
        %6749 = vmatpush2.msra.mxu0 0.0
        %6750 = vmatprep.mubr.f32.mxu0 0.0
        %6751 = vmatmul.mubr.f32.gmra.mxu0 %v6684
        %v6752 = vpop.f32.mrf.mxu0
        %v6753 = vadd.f32 0.0, %v6752
        %v6754 = vpop.f32.mrf.mxu0
        %v6755 = vadd.f32 0.0, %v6754
        %6756 = vdwg.mxu0
        %v6757 = vsub.f32 0.0, %v6599
        %v6760 = vcombine.low %v6753, %v6755
        %v6762 = vunpack.c.l.s4 1966171168
        %v6763 = vunpack.c.0.s8 %v6762
        %v6764 = vlaneseq
        %v6765 = vshrl.u32 %v6764, 7
        %v6766 = vsub.s32 %v6763, %v6765
        %v6767 = vrot.slane %v6760, %v6766
        %v6769 = vunpack.c.l.s4 1966171168
        %v6770 = vunpack.c.0.s8 %v6769
        %v6771 = vlaneseq
        %v6772 = vshrl.u32 %v6771, 7
        %v6773 = vsub.s32 %v6770, %v6772
        %v6774 = vrot.slane %v6767, %v6773
        %v6776 = vmul.f32 %v6757, %v6774
        %s6777 = scalar_lea.vmem [#allocation3], 48
        %v6778 = vld [vmem:[%s6777] ss:$8 sm:$0x3]
        %v6779 = vsub.f32 %v6776, %v6778
        %6780 = vst.msk [vmem:[%s6777] ss:$8 sm:$0x3] %vm819, %v6776
        %6781 = vst.msk [vmem:[%s6777] ss:$8 sm:$0x0] %vm819, %v6776
        %s6782 = scalar_lea.vmem %s1, 768
        %v6783 = vld [vmem:[%s6782 + $0x19] sm:$0x7]
        %v6784 = vld [vmem:[#allocation4 + $0x30] sm:$0xe]
        %v6785 = vld [vmem:[#allocation4 + $0x38] sm:$0xe]
        %6787 = vset.pattern.permute.xlu0 0
        %6788 = vperm.xlu0 %6787, %v6783
        %v6789 = vpop.permute.xlu0 %6788
        %v6792 = vlaneseq
        %v6793 = vshrl.u32 %v6792, 7
        %v6794 = vsub.s32 0, %v6793
        %v6795 = vrot.slane %v6779, %v6794
        %v6796 = vlaneseq
        %v6797 = vshrl.u32 %v6796, 7
        %v6798 = vsub.s32 1, %v6797
        %v6799 = vrot.slane %v6779, %v6798
        %v6802 = vmul.f32 %v6789, %v6795
        %v6803 = vmul.f32 %v6789, %v6799
        %v6806 = vrot.slane %v6802, 7
        %v6807 = vrot.slane %v6803, 7
        %v6810 = vadd.f32 %v6784, %v6806
        %v6811 = vadd.f32 %v6785, %v6807
        %6812 = vst [vmem:[#allocation4 + $0x30] sm:$0xe] %v6810
        %6813 = vst [vmem:[#allocation4 + $0x38] sm:$0xe] %v6811
        %s6814 = scalar_lea.vmem [#allocation4], 49
        %v6815 = vld [vmem:[%s6814] ss:$8 sm:$0x3]
        %v6816 = vmul.f32 %v6815, %v6815
        %v6818 = vlaneseq
        %v6819 = vshrl.u32 %v6818, 7
        %v6820 = vsub.s32 0, %v6819
        %v6821 = vrot.slane %v6816, %v6820
        %v6822 = vlaneseq
        %v6823 = vshrl.u32 %v6822, 7
        %v6824 = vsub.s32 1, %v6823
        %v6825 = vrot.slane %v6816, %v6824
        %6828 = vmatprep.subr.mxu0 0.0
        %6829 = vmatpush1.msra.mxu0 %v465
        %6830 = vmatprep.subr.mxu0 0.0
        %6831 = vmatpush1.msra.mxu0 %v464
        %6832 = vmatprep.subr.mxu0 0.0
        %6833 = vmatpush1.msra.mxu0 %v463
        %6834 = vmatprep.subr.mxu0 0.0
        %6835 = vmatpush1.msra.mxu0 %v462
        %6836 = vmatprep.subr.mxu0 0.0
        %6837 = vmatpush1.msra.mxu0 %v461
        %6838 = vmatprep.subr.mxu0 0.0
        %6839 = vmatpush1.msra.mxu0 %v460
        %6840 = vmatprep.subr.mxu0 0.0
        %6841 = vmatpush1.msra.mxu0 %v459
        %6842 = vmatprep.subr.mxu0 0.0
        %6843 = vmatpush1.msra.mxu0 %v458
        %6844 = vmatprep.subr.mxu0 0.0
        %6845 = vmatpush1.msra.mxu0 %v457
        %6846 = vmatprep.subr.mxu0 0.0
        %6847 = vmatpush1.msra.mxu0 %v456
        %6848 = vmatprep.subr.mxu0 0.0
        %6849 = vmatpush1.msra.mxu0 %v455
        %6850 = vmatprep.subr.mxu0 0.0
        %6851 = vmatpush1.msra.mxu0 %v454
        %6852 = vmatprep.subr.mxu0 0.0
        %6853 = vmatpush1.msra.mxu0 %v453
        %6854 = vmatprep.subr.mxu0 0.0
        %6855 = vmatpush1.msra.mxu0 %v452
        %6856 = vmatprep.subr.mxu0 0.0
        %6857 = vmatpush1.msra.mxu0 %v451
        %6858 = vmatprep.subr.mxu0 0.0
        %6859 = vmatpush1.msra.mxu0 %v450
        %6860 = vmatprep.subr.mxu0 0.0
        %6861 = vmatpush2.msra.mxu0 %v481
        %6862 = vmatprep.subr.mxu0 0.0
        %6863 = vmatpush2.msra.mxu0 %v480
        %6864 = vmatprep.subr.mxu0 0.0
        %6865 = vmatpush2.msra.mxu0 %v479
        %6866 = vmatprep.subr.mxu0 0.0
        %6867 = vmatpush2.msra.mxu0 %v478
        %6868 = vmatprep.subr.mxu0 0.0
        %6869 = vmatpush2.msra.mxu0 %v477
        %6870 = vmatprep.subr.mxu0 0.0
        %6871 = vmatpush2.msra.mxu0 %v476
        %6872 = vmatprep.subr.mxu0 0.0
        %6873 = vmatpush2.msra.mxu0 %v475
        %6874 = vmatprep.subr.mxu0 0.0
        %6875 = vmatpush2.msra.mxu0 %v474
        %6876 = vmatprep.subr.mxu0 0.0
        %6877 = vmatpush2.msra.mxu0 %v473
        %6878 = vmatprep.subr.mxu0 0.0
        %6879 = vmatpush2.msra.mxu0 %v472
        %6880 = vmatprep.subr.mxu0 0.0
        %6881 = vmatpush2.msra.mxu0 %v471
        %6882 = vmatprep.subr.mxu0 0.0
        %6883 = vmatpush2.msra.mxu0 %v470
        %6884 = vmatprep.subr.mxu0 0.0
        %6885 = vmatpush2.msra.mxu0 %v469
        %6886 = vmatprep.subr.mxu0 0.0
        %6887 = vmatpush2.msra.mxu0 %v468
        %6888 = vmatprep.subr.mxu0 0.0
        %6889 = vmatpush2.msra.mxu0 %v467
        %6890 = vmatprep.subr.mxu0 0.0
        %6891 = vmatpush2.msra.mxu0 %v466
        %6892 = vmatprep.mubr.f32.mxu0 %v6825
        %6893 = vmatmul.mubr.f32.gmra.mxu0 %v6821
        %v6894 = vpop.f32.mrf.mxu0
        %v6895 = vadd.f32 1e-12, %v6894
        %v6896 = vpop.f32.mrf.mxu0
        %6897 = vdwg.mxu0
        %v6898 = vrsqrt.pop %v6895
        %v6900 = vsel %vm719, %v6898, 0
        %6902 = vmatprep.subr.mxu0 0.0
        %6903 = vmatpush1.msra.mxu0 0.0
        %6904 = vmatprep.subr.mxu0 0.0
        %6905 = vmatpush1.msra.mxu0 0.0
        %6906 = vmatprep.subr.mxu0 0.0
        %6907 = vmatpush1.msra.mxu0 0.0
        %6908 = vmatprep.subr.mxu0 0.0
        %6909 = vmatpush1.msra.mxu0 0.0
        %6910 = vmatprep.subr.mxu0 0.0
        %6911 = vmatpush1.msra.mxu0 0.0
        %6912 = vmatprep.subr.mxu0 0.0
        %6913 = vmatpush1.msra.mxu0 0.0
        %6914 = vmatprep.subr.mxu0 0.0
        %6915 = vmatpush1.msra.mxu0 0.0
        %6916 = vmatprep.subr.mxu0 0.0
        %6917 = vmatpush1.msra.mxu0 0.0
        %6918 = vmatprep.subr.mxu0 0.0
        %6919 = vmatpush1.msra.mxu0 0.0
        %6920 = vmatprep.subr.mxu0 0.0
        %6921 = vmatpush1.msra.mxu0 0.0
        %6922 = vmatprep.subr.mxu0 0.0
        %6923 = vmatpush1.msra.mxu0 0.0
        %6924 = vmatprep.subr.mxu0 0.0
        %6925 = vmatpush1.msra.mxu0 0.0
        %6926 = vmatprep.subr.mxu0 0.0
        %6927 = vmatpush1.msra.mxu0 0.0
        %6928 = vmatprep.subr.mxu0 0.0
        %6929 = vmatpush1.msra.mxu0 0.0
        %6930 = vmatprep.subr.mxu0 0.0
        %6931 = vmatpush1.msra.mxu0 0.0
        %6932 = vmatprep.subr.mxu0 %v483
        %6933 = vmatpush1.msra.mxu0 %v482
        %6934 = vmatprep.subr.mxu0 0.0
        %6935 = vmatpush2.msra.mxu0 0.0
        %6936 = vmatprep.subr.mxu0 0.0
        %6937 = vmatpush2.msra.mxu0 0.0
        %6938 = vmatprep.subr.mxu0 0.0
        %6939 = vmatpush2.msra.mxu0 0.0
        %6940 = vmatprep.subr.mxu0 0.0
        %6941 = vmatpush2.msra.mxu0 0.0
        %6942 = vmatprep.subr.mxu0 0.0
        %6943 = vmatpush2.msra.mxu0 0.0
        %6944 = vmatprep.subr.mxu0 0.0
        %6945 = vmatpush2.msra.mxu0 0.0
        %6946 = vmatprep.subr.mxu0 0.0
        %6947 = vmatpush2.msra.mxu0 0.0
        %6948 = vmatprep.subr.mxu0 0.0
        %6949 = vmatpush2.msra.mxu0 0.0
        %6950 = vmatprep.subr.mxu0 0.0
        %6951 = vmatpush2.msra.mxu0 0.0
        %6952 = vmatprep.subr.mxu0 0.0
        %6953 = vmatpush2.msra.mxu0 0.0
        %6954 = vmatprep.subr.mxu0 0.0
        %6955 = vmatpush2.msra.mxu0 0.0
        %6956 = vmatprep.subr.mxu0 0.0
        %6957 = vmatpush2.msra.mxu0 0.0
        %6958 = vmatprep.subr.mxu0 0.0
        %6959 = vmatpush2.msra.mxu0 0.0
        %6960 = vmatprep.subr.mxu0 0.0
        %6961 = vmatpush2.msra.mxu0 0.0
        %6962 = vmatprep.subr.mxu0 0.0
        %6963 = vmatpush2.msra.mxu0 0.0
        %6964 = vmatprep.subr.mxu0 0.0
        %6965 = vmatpush2.msra.mxu0 0.0
        %6966 = vmatprep.mubr.f32.mxu0 0.0
        %6967 = vmatmul.mubr.f32.gmra.mxu0 %v6900
        %v6968 = vpop.f32.mrf.mxu0
        %v6969 = vadd.f32 0.0, %v6968
        %v6970 = vpop.f32.mrf.mxu0
        %v6971 = vadd.f32 0.0, %v6970
        %6972 = vdwg.mxu0
        %v6973 = vsub.f32 0.0, %v6815
        %v6976 = vcombine.low %v6969, %v6971
        %v6978 = vunpack.c.l.s4 1966171168
        %v6979 = vunpack.c.0.s8 %v6978
        %v6980 = vlaneseq
        %v6981 = vshrl.u32 %v6980, 7
        %v6982 = vsub.s32 %v6979, %v6981
        %v6983 = vrot.slane %v6976, %v6982
        %v6985 = vunpack.c.l.s4 1966171168
        %v6986 = vunpack.c.0.s8 %v6985
        %v6987 = vlaneseq
        %v6988 = vshrl.u32 %v6987, 7
        %v6989 = vsub.s32 %v6986, %v6988
        %v6990 = vrot.slane %v6983, %v6989
        %v6992 = vmul.f32 %v6973, %v6990
        %s6993 = scalar_lea.vmem [#allocation3], 49
        %v6994 = vld [vmem:[%s6993] ss:$8 sm:$0x3]
        %v6995 = vsub.f32 %v6992, %v6994
        %6996 = vst.msk [vmem:[%s6993] ss:$8 sm:$0x3] %vm819, %v6992
        %6997 = vst.msk [vmem:[%s6993] ss:$8 sm:$0x0] %vm819, %v6992
        %s6998 = scalar_lea.vmem %s1, 800
        %v6999 = vld [vmem:[%s6998 + $0x1a] sm:$0x3]
        %v7000 = vld [vmem:[#allocation4 + $0x30] sm:$0xc]
        %v7001 = vld [vmem:[#allocation4 + $0x38] sm:$0xc]
        %7003 = vset.pattern.permute.xlu0 0
        %7004 = vperm.xlu0 %7003, %v6999
        %v7005 = vpop.permute.xlu0 %7004
        %v7008 = vlaneseq
        %v7009 = vshrl.u32 %v7008, 7
        %v7010 = vsub.s32 0, %v7009
        %v7011 = vrot.slane %v6995, %v7010
        %v7012 = vlaneseq
        %v7013 = vshrl.u32 %v7012, 7
        %v7014 = vsub.s32 1, %v7013
        %v7015 = vrot.slane %v6995, %v7014
        %v7018 = vmul.f32 %v7005, %v7011
        %v7019 = vmul.f32 %v7005, %v7015
        %v7022 = vrot.slane %v7018, 6
        %v7023 = vrot.slane %v7019, 6
        %v7026 = vadd.f32 %v7000, %v7022
        %v7027 = vadd.f32 %v7001, %v7023
        %7028 = vst [vmem:[#allocation4 + $0x30] sm:$0xc] %v7026
        %7029 = vst [vmem:[#allocation4 + $0x38] sm:$0xc] %v7027
        %s7030 = scalar_lea.vmem [#allocation4], 50
        %v7031 = vld [vmem:[%s7030] ss:$8 sm:$0x3]
        %v7032 = vmul.f32 %v7031, %v7031
        %v7034 = vlaneseq
        %v7035 = vshrl.u32 %v7034, 7
        %v7036 = vsub.s32 0, %v7035
        %v7037 = vrot.slane %v7032, %v7036
        %v7038 = vlaneseq
        %v7039 = vshrl.u32 %v7038, 7
        %v7040 = vsub.s32 1, %v7039
        %v7041 = vrot.slane %v7032, %v7040
        %7044 = vmatprep.subr.mxu0 0.0
        %7045 = vmatpush1.msra.mxu0 %v465
        %7046 = vmatprep.subr.mxu0 0.0
        %7047 = vmatpush1.msra.mxu0 %v464
        %7048 = vmatprep.subr.mxu0 0.0
        %7049 = vmatpush1.msra.mxu0 %v463
        %7050 = vmatprep.subr.mxu0 0.0
        %7051 = vmatpush1.msra.mxu0 %v462
        %7052 = vmatprep.subr.mxu0 0.0
        %7053 = vmatpush1.msra.mxu0 %v461
        %7054 = vmatprep.subr.mxu0 0.0
        %7055 = vmatpush1.msra.mxu0 %v460
        %7056 = vmatprep.subr.mxu0 0.0
        %7057 = vmatpush1.msra.mxu0 %v459
        %7058 = vmatprep.subr.mxu0 0.0
        %7059 = vmatpush1.msra.mxu0 %v458
        %7060 = vmatprep.subr.mxu0 0.0
        %7061 = vmatpush1.msra.mxu0 %v457
        %7062 = vmatprep.subr.mxu0 0.0
        %7063 = vmatpush1.msra.mxu0 %v456
        %7064 = vmatprep.subr.mxu0 0.0
        %7065 = vmatpush1.msra.mxu0 %v455
        %7066 = vmatprep.subr.mxu0 0.0
        %7067 = vmatpush1.msra.mxu0 %v454
        %7068 = vmatprep.subr.mxu0 0.0
        %7069 = vmatpush1.msra.mxu0 %v453
        %7070 = vmatprep.subr.mxu0 0.0
        %7071 = vmatpush1.msra.mxu0 %v452
        %7072 = vmatprep.subr.mxu0 0.0
        %7073 = vmatpush1.msra.mxu0 %v451
        %7074 = vmatprep.subr.mxu0 0.0
        %7075 = vmatpush1.msra.mxu0 %v450
        %7076 = vmatprep.subr.mxu0 0.0
        %7077 = vmatpush2.msra.mxu0 %v481
        %7078 = vmatprep.subr.mxu0 0.0
        %7079 = vmatpush2.msra.mxu0 %v480
        %7080 = vmatprep.subr.mxu0 0.0
        %7081 = vmatpush2.msra.mxu0 %v479
        %7082 = vmatprep.subr.mxu0 0.0
        %7083 = vmatpush2.msra.mxu0 %v478
        %7084 = vmatprep.subr.mxu0 0.0
        %7085 = vmatpush2.msra.mxu0 %v477
        %7086 = vmatprep.subr.mxu0 0.0
        %7087 = vmatpush2.msra.mxu0 %v476
        %7088 = vmatprep.subr.mxu0 0.0
        %7089 = vmatpush2.msra.mxu0 %v475
        %7090 = vmatprep.subr.mxu0 0.0
        %7091 = vmatpush2.msra.mxu0 %v474
        %7092 = vmatprep.subr.mxu0 0.0
        %7093 = vmatpush2.msra.mxu0 %v473
        %7094 = vmatprep.subr.mxu0 0.0
        %7095 = vmatpush2.msra.mxu0 %v472
        %7096 = vmatprep.subr.mxu0 0.0
        %7097 = vmatpush2.msra.mxu0 %v471
        %7098 = vmatprep.subr.mxu0 0.0
        %7099 = vmatpush2.msra.mxu0 %v470
        %7100 = vmatprep.subr.mxu0 0.0
        %7101 = vmatpush2.msra.mxu0 %v469
        %7102 = vmatprep.subr.mxu0 0.0
        %7103 = vmatpush2.msra.mxu0 %v468
        %7104 = vmatprep.subr.mxu0 0.0
        %7105 = vmatpush2.msra.mxu0 %v467
        %7106 = vmatprep.subr.mxu0 0.0
        %7107 = vmatpush2.msra.mxu0 %v466
        %7108 = vmatprep.mubr.f32.mxu0 %v7041
        %7109 = vmatmul.mubr.f32.gmra.mxu0 %v7037
        %v7110 = vpop.f32.mrf.mxu0
        %v7111 = vadd.f32 1e-12, %v7110
        %v7112 = vpop.f32.mrf.mxu0
        %7113 = vdwg.mxu0
        %v7114 = vrsqrt.pop %v7111
        %v7116 = vsel %vm719, %v7114, 0
        %7118 = vmatprep.subr.mxu0 0.0
        %7119 = vmatpush1.msra.mxu0 0.0
        %7120 = vmatprep.subr.mxu0 0.0
        %7121 = vmatpush1.msra.mxu0 0.0
        %7122 = vmatprep.subr.mxu0 0.0
        %7123 = vmatpush1.msra.mxu0 0.0
        %7124 = vmatprep.subr.mxu0 0.0
        %7125 = vmatpush1.msra.mxu0 0.0
        %7126 = vmatprep.subr.mxu0 0.0
        %7127 = vmatpush1.msra.mxu0 0.0
        %7128 = vmatprep.subr.mxu0 0.0
        %7129 = vmatpush1.msra.mxu0 0.0
        %7130 = vmatprep.subr.mxu0 0.0
        %7131 = vmatpush1.msra.mxu0 0.0
        %7132 = vmatprep.subr.mxu0 0.0
        %7133 = vmatpush1.msra.mxu0 0.0
        %7134 = vmatprep.subr.mxu0 0.0
        %7135 = vmatpush1.msra.mxu0 0.0
        %7136 = vmatprep.subr.mxu0 0.0
        %7137 = vmatpush1.msra.mxu0 0.0
        %7138 = vmatprep.subr.mxu0 0.0
        %7139 = vmatpush1.msra.mxu0 0.0
        %7140 = vmatprep.subr.mxu0 0.0
        %7141 = vmatpush1.msra.mxu0 0.0
        %7142 = vmatprep.subr.mxu0 0.0
        %7143 = vmatpush1.msra.mxu0 0.0
        %7144 = vmatprep.subr.mxu0 0.0
        %7145 = vmatpush1.msra.mxu0 0.0
        %7146 = vmatprep.subr.mxu0 0.0
        %7147 = vmatpush1.msra.mxu0 0.0
        %7148 = vmatprep.subr.mxu0 %v483
        %7149 = vmatpush1.msra.mxu0 %v482
        %7150 = vmatprep.subr.mxu0 0.0
        %7151 = vmatpush2.msra.mxu0 0.0
        %7152 = vmatprep.subr.mxu0 0.0
        %7153 = vmatpush2.msra.mxu0 0.0
        %7154 = vmatprep.subr.mxu0 0.0
        %7155 = vmatpush2.msra.mxu0 0.0
        %7156 = vmatprep.subr.mxu0 0.0
        %7157 = vmatpush2.msra.mxu0 0.0
        %7158 = vmatprep.subr.mxu0 0.0
        %7159 = vmatpush2.msra.mxu0 0.0
        %7160 = vmatprep.subr.mxu0 0.0
        %7161 = vmatpush2.msra.mxu0 0.0
        %7162 = vmatprep.subr.mxu0 0.0
        %7163 = vmatpush2.msra.mxu0 0.0
        %7164 = vmatprep.subr.mxu0 0.0
        %7165 = vmatpush2.msra.mxu0 0.0
        %7166 = vmatprep.subr.mxu0 0.0
        %7167 = vmatpush2.msra.mxu0 0.0
        %7168 = vmatprep.subr.mxu0 0.0
        %7169 = vmatpush2.msra.mxu0 0.0
        %7170 = vmatprep.subr.mxu0 0.0
        %7171 = vmatpush2.msra.mxu0 0.0
        %7172 = vmatprep.subr.mxu0 0.0
        %7173 = vmatpush2.msra.mxu0 0.0
        %7174 = vmatprep.subr.mxu0 0.0
        %7175 = vmatpush2.msra.mxu0 0.0
        %7176 = vmatprep.subr.mxu0 0.0
        %7177 = vmatpush2.msra.mxu0 0.0
        %7178 = vmatprep.subr.mxu0 0.0
        %7179 = vmatpush2.msra.mxu0 0.0
        %7180 = vmatprep.subr.mxu0 0.0
        %7181 = vmatpush2.msra.mxu0 0.0
        %7182 = vmatprep.mubr.f32.mxu0 0.0
        %7183 = vmatmul.mubr.f32.gmra.mxu0 %v7116
        %v7184 = vpop.f32.mrf.mxu0
        %v7185 = vadd.f32 0.0, %v7184
        %v7186 = vpop.f32.mrf.mxu0
        %v7187 = vadd.f32 0.0, %v7186
        %7188 = vdwg.mxu0
        %v7189 = vsub.f32 0.0, %v7031
        %v7192 = vcombine.low %v7185, %v7187
        %v7194 = vunpack.c.l.s4 1966171168
        %v7195 = vunpack.c.0.s8 %v7194
        %v7196 = vlaneseq
        %v7197 = vshrl.u32 %v7196, 7
        %v7198 = vsub.s32 %v7195, %v7197
        %v7199 = vrot.slane %v7192, %v7198
        %v7201 = vunpack.c.l.s4 1966171168
        %v7202 = vunpack.c.0.s8 %v7201
        %v7203 = vlaneseq
        %v7204 = vshrl.u32 %v7203, 7
        %v7205 = vsub.s32 %v7202, %v7204
        %v7206 = vrot.slane %v7199, %v7205
        %v7208 = vmul.f32 %v7189, %v7206
        %s7209 = scalar_lea.vmem [#allocation3], 50
        %v7210 = vld [vmem:[%s7209] ss:$8 sm:$0x3]
        %v7211 = vsub.f32 %v7208, %v7210
        %7212 = vst.msk [vmem:[%s7209] ss:$8 sm:$0x3] %vm819, %v7208
        %7213 = vst.msk [vmem:[%s7209] ss:$8 sm:$0x0] %vm819, %v7208
        %s7214 = scalar_lea.vmem %s1, 832
        %v7215 = vld [vmem:[%s7214 + $0x1b] sm:$0x1]
        %s7216 = scalar_lea.vmem [#allocation4], 51
        %v7217 = vld [vmem:[%s7216] ss:$8 sm:$0x3]
        %7219 = vset.pattern.permute.xlu0 0
        %7220 = vperm.xlu0 %7219, %v7215
        %v7221 = vpop.permute.xlu0 %7220
        %v7224 = vlaneseq
        %v7225 = vshrl.u32 %v7224, 7
        %v7226 = vsub.s32 0, %v7225
        %v7227 = vrot.slane %v7211, %v7226
        %v7228 = vlaneseq
        %v7229 = vshrl.u32 %v7228, 7
        %v7230 = vsub.s32 1, %v7229
        %v7231 = vrot.slane %v7211, %v7230
        %v7234 = vmul.f32 %v7221, %v7227
        %v7235 = vmul.f32 %v7221, %v7231
        %v7238 = vcombine.low %v7234, %v7235
        %v7240 = vunpack.c.l.s4 1966171168
        %v7241 = vunpack.c.0.s8 %v7240
        %v7242 = vlaneseq
        %v7243 = vshrl.u32 %v7242, 7
        %v7244 = vsub.s32 %v7241, %v7243
        %v7245 = vrot.slane %v7238, %v7244
        %v7247 = vunpack.c.l.s4 1966171168
        %v7248 = vunpack.c.0.s8 %v7247
        %v7249 = vlaneseq
        %v7250 = vshrl.u32 %v7249, 7
        %v7251 = vsub.s32 %v7248, %v7250
        %v7252 = vrot.slane %v7245, %v7251
        %v7254 = vadd.f32 %v7217, %v7252
        %7255 = vst.msk [vmem:[%s7216] ss:$8 sm:$0x3] %vm819, %v7254
        %7256 = vst.msk [vmem:[%s7216] ss:$8 sm:$0x0] %vm819, %v7254
        %v7257 = vld [vmem:[%s7216] ss:$8 sm:$0x3]
        %v7258 = vmul.f32 %v7257, %v7257
        %v7260 = vlaneseq
        %v7261 = vshrl.u32 %v7260, 7
        %v7262 = vsub.s32 0, %v7261
        %v7263 = vrot.slane %v7258, %v7262
        %v7264 = vlaneseq
        %v7265 = vshrl.u32 %v7264, 7
        %v7266 = vsub.s32 1, %v7265
        %v7267 = vrot.slane %v7258, %v7266
        %7270 = vmatprep.subr.mxu0 0.0
        %7271 = vmatpush1.msra.mxu0 %v465
        %7272 = vmatprep.subr.mxu0 0.0
        %7273 = vmatpush1.msra.mxu0 %v464
        %7274 = vmatprep.subr.mxu0 0.0
        %7275 = vmatpush1.msra.mxu0 %v463
        %7276 = vmatprep.subr.mxu0 0.0
        %7277 = vmatpush1.msra.mxu0 %v462
        %7278 = vmatprep.subr.mxu0 0.0
        %7279 = vmatpush1.msra.mxu0 %v461
        %7280 = vmatprep.subr.mxu0 0.0
        %7281 = vmatpush1.msra.mxu0 %v460
        %7282 = vmatprep.subr.mxu0 0.0
        %7283 = vmatpush1.msra.mxu0 %v459
        %7284 = vmatprep.subr.mxu0 0.0
        %7285 = vmatpush1.msra.mxu0 %v458
        %7286 = vmatprep.subr.mxu0 0.0
        %7287 = vmatpush1.msra.mxu0 %v457
        %7288 = vmatprep.subr.mxu0 0.0
        %7289 = vmatpush1.msra.mxu0 %v456
        %7290 = vmatprep.subr.mxu0 0.0
        %7291 = vmatpush1.msra.mxu0 %v455
        %7292 = vmatprep.subr.mxu0 0.0
        %7293 = vmatpush1.msra.mxu0 %v454
        %7294 = vmatprep.subr.mxu0 0.0
        %7295 = vmatpush1.msra.mxu0 %v453
        %7296 = vmatprep.subr.mxu0 0.0
        %7297 = vmatpush1.msra.mxu0 %v452
        %7298 = vmatprep.subr.mxu0 0.0
        %7299 = vmatpush1.msra.mxu0 %v451
        %7300 = vmatprep.subr.mxu0 0.0
        %7301 = vmatpush1.msra.mxu0 %v450
        %7302 = vmatprep.subr.mxu0 0.0
        %7303 = vmatpush2.msra.mxu0 %v481
        %7304 = vmatprep.subr.mxu0 0.0
        %7305 = vmatpush2.msra.mxu0 %v480
        %7306 = vmatprep.subr.mxu0 0.0
        %7307 = vmatpush2.msra.mxu0 %v479
        %7308 = vmatprep.subr.mxu0 0.0
        %7309 = vmatpush2.msra.mxu0 %v478
        %7310 = vmatprep.subr.mxu0 0.0
        %7311 = vmatpush2.msra.mxu0 %v477
        %7312 = vmatprep.subr.mxu0 0.0
        %7313 = vmatpush2.msra.mxu0 %v476
        %7314 = vmatprep.subr.mxu0 0.0
        %7315 = vmatpush2.msra.mxu0 %v475
        %7316 = vmatprep.subr.mxu0 0.0
        %7317 = vmatpush2.msra.mxu0 %v474
        %7318 = vmatprep.subr.mxu0 0.0
        %7319 = vmatpush2.msra.mxu0 %v473
        %7320 = vmatprep.subr.mxu0 0.0
        %7321 = vmatpush2.msra.mxu0 %v472
        %7322 = vmatprep.subr.mxu0 0.0
        %7323 = vmatpush2.msra.mxu0 %v471
        %7324 = vmatprep.subr.mxu0 0.0
        %7325 = vmatpush2.msra.mxu0 %v470
        %7326 = vmatprep.subr.mxu0 0.0
        %7327 = vmatpush2.msra.mxu0 %v469
        %7328 = vmatprep.subr.mxu0 0.0
        %7329 = vmatpush2.msra.mxu0 %v468
        %7330 = vmatprep.subr.mxu0 0.0
        %7331 = vmatpush2.msra.mxu0 %v467
        %7332 = vmatprep.subr.mxu0 0.0
        %7333 = vmatpush2.msra.mxu0 %v466
        %7334 = vmatprep.mubr.f32.mxu0 %v7267
        %7335 = vmatmul.mubr.f32.gmra.mxu0 %v7263
        %v7336 = vpop.f32.mrf.mxu0
        %v7337 = vadd.f32 1e-12, %v7336
        %v7338 = vpop.f32.mrf.mxu0
        %7339 = vdwg.mxu0
        %v7340 = vrsqrt.pop %v7337
        %v7342 = vsel %vm719, %v7340, 0
        %7344 = vmatprep.subr.mxu0 0.0
        %7345 = vmatpush1.msra.mxu0 0.0
        %7346 = vmatprep.subr.mxu0 0.0
        %7347 = vmatpush1.msra.mxu0 0.0
        %7348 = vmatprep.subr.mxu0 0.0
        %7349 = vmatpush1.msra.mxu0 0.0
        %7350 = vmatprep.subr.mxu0 0.0
        %7351 = vmatpush1.msra.mxu0 0.0
        %7352 = vmatprep.subr.mxu0 0.0
        %7353 = vmatpush1.msra.mxu0 0.0
        %7354 = vmatprep.subr.mxu0 0.0
        %7355 = vmatpush1.msra.mxu0 0.0
        %7356 = vmatprep.subr.mxu0 0.0
        %7357 = vmatpush1.msra.mxu0 0.0
        %7358 = vmatprep.subr.mxu0 0.0
        %7359 = vmatpush1.msra.mxu0 0.0
        %7360 = vmatprep.subr.mxu0 0.0
        %7361 = vmatpush1.msra.mxu0 0.0
        %7362 = vmatprep.subr.mxu0 0.0
        %7363 = vmatpush1.msra.mxu0 0.0
        %7364 = vmatprep.subr.mxu0 0.0
        %7365 = vmatpush1.msra.mxu0 0.0
        %7366 = vmatprep.subr.mxu0 0.0
        %7367 = vmatpush1.msra.mxu0 0.0
        %7368 = vmatprep.subr.mxu0 0.0
        %7369 = vmatpush1.msra.mxu0 0.0
        %7370 = vmatprep.subr.mxu0 0.0
        %7371 = vmatpush1.msra.mxu0 0.0
        %7372 = vmatprep.subr.mxu0 0.0
        %7373 = vmatpush1.msra.mxu0 0.0
        %7374 = vmatprep.subr.mxu0 %v483
        %7375 = vmatpush1.msra.mxu0 %v482
        %7376 = vmatprep.subr.mxu0 0.0
        %7377 = vmatpush2.msra.mxu0 0.0
        %7378 = vmatprep.subr.mxu0 0.0
        %7379 = vmatpush2.msra.mxu0 0.0
        %7380 = vmatprep.subr.mxu0 0.0
        %7381 = vmatpush2.msra.mxu0 0.0
        %7382 = vmatprep.subr.mxu0 0.0
        %7383 = vmatpush2.msra.mxu0 0.0
        %7384 = vmatprep.subr.mxu0 0.0
        %7385 = vmatpush2.msra.mxu0 0.0
        %7386 = vmatprep.subr.mxu0 0.0
        %7387 = vmatpush2.msra.mxu0 0.0
        %7388 = vmatprep.subr.mxu0 0.0
        %7389 = vmatpush2.msra.mxu0 0.0
        %7390 = vmatprep.subr.mxu0 0.0
        %7391 = vmatpush2.msra.mxu0 0.0
        %7392 = vmatprep.subr.mxu0 0.0
        %7393 = vmatpush2.msra.mxu0 0.0
        %7394 = vmatprep.subr.mxu0 0.0
        %7395 = vmatpush2.msra.mxu0 0.0
        %7396 = vmatprep.subr.mxu0 0.0
        %7397 = vmatpush2.msra.mxu0 0.0
        %7398 = vmatprep.subr.mxu0 0.0
        %7399 = vmatpush2.msra.mxu0 0.0
        %7400 = vmatprep.subr.mxu0 0.0
        %7401 = vmatpush2.msra.mxu0 0.0
        %7402 = vmatprep.subr.mxu0 0.0
        %7403 = vmatpush2.msra.mxu0 0.0
        %7404 = vmatprep.subr.mxu0 0.0
        %7405 = vmatpush2.msra.mxu0 0.0
        %7406 = vmatprep.subr.mxu0 0.0
        %7407 = vmatpush2.msra.mxu0 0.0
        %7408 = vmatprep.mubr.f32.mxu0 0.0
        %7409 = vmatmul.mubr.f32.gmra.mxu0 %v7342
        %v7410 = vpop.f32.mrf.mxu0
        %v7411 = vadd.f32 0.0, %v7410
        %v7412 = vpop.f32.mrf.mxu0
        %v7413 = vadd.f32 0.0, %v7412
        %7414 = vdwg.mxu0
        %v7415 = vsub.f32 0.0, %v7257
        %v7418 = vcombine.low %v7411, %v7413
        %v7420 = vunpack.c.l.s4 1966171168
        %v7421 = vunpack.c.0.s8 %v7420
        %v7422 = vlaneseq
        %v7423 = vshrl.u32 %v7422, 7
        %v7424 = vsub.s32 %v7421, %v7423
        %v7425 = vrot.slane %v7418, %v7424
        %v7427 = vunpack.c.l.s4 1966171168
        %v7428 = vunpack.c.0.s8 %v7427
        %v7429 = vlaneseq
        %v7430 = vshrl.u32 %v7429, 7
        %v7431 = vsub.s32 %v7428, %v7430
        %v7432 = vrot.slane %v7425, %v7431
        %v7434 = vmul.f32 %v7415, %v7432
        %s7435 = scalar_lea.vmem [#allocation3], 51
        %7436 = vst.msk [vmem:[%s7435] ss:$8 sm:$0x3] %vm819, %v7434
        %7437 = vst.msk [vmem:[%s7435] ss:$8 sm:$0x0] %vm819, %v7434
      $region53: #{tpu_custom_call.1} parent=47 // loop_footer
        %s489 = sadd.s32 1, %s485
      $region54: #{tpu_custom_call.1} parent=47 // loop_footer_branch
        %484 = sbr.rel target = $region50
      $region55: #{tpu_custom_call.1} parent=47 // loop_exit
        _
      %v7438 = vld [vmem:[#allocation3] sm:$0xff]
      %v7439 = vld [vmem:[#allocation3 + $0x8] sm:$0xff]
      %v7440 = vld [vmem:[#allocation3 + $0x10] sm:$0xff]
      %v7441 = vld [vmem:[#allocation3 + $0x18] sm:$0xff]
      %v7442 = vld [vmem:[#allocation3 + $0x20] sm:$0xff]
      %v7443 = vld [vmem:[#allocation3 + $0x28] sm:$0xff]
      %v7444 = vld [vmem:[#allocation3 + $0x30] sm:$0xf]
      %v7445 = vld [vmem:[#allocation3 + $0x38] sm:$0xf]
      %7446 = vst [vmem:[%s298] sm:$0xff] %v7438
      %7447 = vst [vmem:[%s298 + $0x8] sm:$0xff] %v7439
      %7448 = vst [vmem:[%s298 + $0x10] sm:$0xff] %v7440
      %7449 = vst [vmem:[%s298 + $0x18] sm:$0xff] %v7441
      %7450 = vst [vmem:[%s298 + $0x20] sm:$0xff] %v7442
      %7451 = vst [vmem:[%s298 + $0x28] sm:$0xff] %v7443
      %7452 = vst [vmem:[%s298 + $0x30] sm:$0xf] %v7444
      %7453 = vst [vmem:[%s298 + $0x38] sm:$0xf] %v7445
      %p7454 = scmp.lt.s32.totalorder %s18, 3
      %s7455 = scalar_select %p7454, %s18, 3
      %s7456 = smul.addr %s7455, 8
      %s7457 = smul.addr %s7456, 8
      %s7458 = scalar_lea.vmem %s7, %s7457
      // Predicated region
      $region56: #{tpu_custom_call.1} parent=47 // pred_check
        %p7459 = pneg %p193
      $region57: #{tpu_custom_call.1} parent=47 // pred_check_branch
        %7461 = sbr.rel (%p7459) target = $region59
      $region58: #{tpu_custom_call.1} parent=47 // pred_region
        _
      $region59: #{tpu_custom_call.1} parent=47 // pred_fallthru
        _
    $region48: #{tpu_custom_call.1} parent=5 // pred_fallthru
      _
    %p7462 = scmp.le.s32.totalorder 2, %s13
    // Predicated region
    $region60: #{tpu_custom_call.1} parent=5 // pred_check
      %p7463 = pneg %p7462
    $region61: #{tpu_custom_call.1} parent=5 // pred_check_branch
      %7465 = sbr.rel (%p7463) target = $region63
    $region62: #{tpu_custom_call.1} parent=5 // pred_region
      %s7466 = ssub.s32 %s13, 2
      // Predicated region
      $region64: #{tpu_custom_call.1} parent=62 // pred_check
        %p7467 = pneg %p199
      $region65: #{tpu_custom_call.1} parent=62 // pred_check_branch
        %7469 = sbr.rel (%p7467) target = $region67
      $region66: #{tpu_custom_call.1} parent=62 // pred_region
        %p7470 = scmp.lt.s32.totalorder %s19, 3
        %s7471 = scalar_select %p7470, %s19, 3
        %s7472 = smul.addr %s7471, 8
        %s7473 = smul.addr %s7472, 8
        %s7474 = scalar_lea.vmem %s7, %s7473
      $region67: #{tpu_custom_call.1} parent=62 // pred_fallthru
        _
    $region63: #{tpu_custom_call.1} parent=5 // pred_fallthru
      _
  $region6: #{tpu_custom_call.1} parent=0 // loop_footer
    %s17 = sadd.s32 1, %s13
  $region7: #{tpu_custom_call.1} parent=0 // loop_footer_branch
    %12 = sbr.rel target = $region3
  $region8: #{tpu_custom_call.1} parent=0 // loop_exit
    _

</llo_original>
